<compile_context>
chip_gen: v7x
topology: tpu7x:2x2x1
jax: 0.10.0
libtpu: 0.0.40
codegen_flags: <defaults>
</compile_context>

<pallas_src>
import functools

import jax
import jax.numpy as jnp
from jax import lax
from jax.experimental import pallas as pl
from jax.experimental.pallas import tpu as pltpu


def _lstm_encoder_kernel(num_layers, hidden_p, seq_len, b_tile, time_chunk,
                         unroll, approx_sigmoid, *refs):
    """Layer-major LSTM over one batch tile.

    refs = (x_ref,                      # (T*Bt, D)   time-major flattened seq
            [wih_l, whh_l, b_l] * L,    # (Din,4Hp), (Hp,4Hp), (1,4Hp); (i,f,o,g)
            h_out_ref, c_out_ref,       # (L, Bt, Hp)
            gates_scr, hseq_scr)        # (tc*Bt, 4Hp), (T*Bt, Hp) VMEM scratch
    """
    L, Hp, T, Bt = num_layers, hidden_p, seq_len, b_tile
    x_ref = refs[0]
    w_refs = refs[1:1 + 3 * L]
    h_out_ref = refs[1 + 3 * L]
    c_out_ref = refs[2 + 3 * L]
    gates_ref = refs[3 + 3 * L]
    hseq_ref = refs[4 + 3 * L]

    n_chunks = -(-T // time_chunk)

    def sigmoid(v):
        if approx_sigmoid:
            # exp + approximate reciprocal both live on the EUP slot, keeping
            # the divide off the VALU that carries the per-step cell math.
            return pl.reciprocal(1.0 + jnp.exp(-v), approx=True)
        return jax.nn.sigmoid(v)

    for l in range(L):
        wih_ref = w_refs[3 * l]
        whh_ref = w_refs[3 * l + 1]
        bias = w_refs[3 * l + 2][...]          # (1, 4Hp) f32 — tiny, hoist once
        last_layer = (l + 1 == L)
        in_ref = x_ref if l == 0 else hseq_ref

        def step(t, carry, t0):
            """One recurrent step; t is chunk-local (static or traced)."""
            h_prev, c_prev = carry
            off = t * Bt
            if not isinstance(off, int):
                off = pl.multiple_of(off, 8)       # Bt is a multiple of 8
            # whh is read from its VMEM ref here (NOT hoisted into registers:
            # at Hp >= 128 it would pin >= 32 vregs across the unrolled loop).
            g = gates_ref[pl.ds(off, Bt), :] + jnp.dot(
                h_prev.astype(whh_ref.dtype), whh_ref[...],
                preferred_element_type=jnp.float32)
            # Gate columns pre-ordered (i, f, o, g): one sigmoid covers lanes
            # [0:3Hp], one tanh covers [3Hp:4Hp]; all slices are 128-aligned.
            sig = sigmoid(g[:, :3 * Hp])
            g_gate = jnp.tanh(g[:, 3 * Hp:])
            i_g = sig[:, 0:Hp]
            f_g = sig[:, Hp:2 * Hp]
            o_g = sig[:, 2 * Hp:3 * Hp]
            c_new = f_g * c_prev + i_g * g_gate
            h_new = o_g * jnp.tanh(c_new)
            if not last_layer:   # next layer consumes the full hidden sequence
                goff = t0 * Bt + off
                if not isinstance(goff, int):
                    goff = pl.multiple_of(goff, 8)
                # Stored directly in matmul dtype (halves VMEM/stores in bf16).
                hseq_ref[pl.ds(goff, Bt), :] = h_new.astype(hseq_ref.dtype)
            return h_new, c_new

        h_c = jnp.zeros((Bt, Hp), jnp.float32)
        c_c = jnp.zeros((Bt, Hp), jnp.float32)

        for ch in range(n_chunks):
            t0 = ch * time_chunk
            ct = min(time_chunk, T - t0)

            # Hoisted input projection for this time chunk: ONE well-shaped
            # MXU matmul for ct timesteps, bias folded in (single broadcast).
            gates_ref[pl.ds(0, ct * Bt), :] = (
                jnp.dot(in_ref[pl.ds(t0 * Bt, ct * Bt), :], wih_ref[...],
                        preferred_element_type=jnp.float32) + bias)

            carry = (h_c, c_c)
            if ct <= unroll:
                # Short chunk: full Python unroll (LLO scheduling visibility).
                for t in range(ct):
                    carry = step(t, carry, t0)
            else:
                # Partial unroll: fori_loop over macro-steps of `unroll`
                # Python-unrolled steps (bounds vreg pressure at large T).
                n_macro = ct // unroll

                def macro_body(m, carry, _t0=t0):
                    for u in range(unroll):
                        carry = step(m * unroll + u, carry, _t0)
                    return carry

                carry = lax.fori_loop(0, n_macro, macro_body, carry)
                for t in range(n_macro * unroll, ct):
                    carry = step(t, carry, t0)
            h_c, c_c = carry

        # Final state written once per layer (no per-step output-ref traffic).
        h_out_ref[l] = h_c
        c_out_ref[l] = c_c


def _default_num_batch_tiles():
    """One batch tile per TensorCore: 2 on v7x (2 TCs/chip), else 1."""
    try:
        kind = jax.devices()[0].device_kind.lower()
        if "v7" in kind:
            return 2
    except Exception:
        pass
    return 1


def lstm_encoder_forward(x, params, *, num_batch_tiles=None,
                         matmul_dtype=jnp.float32, time_chunk=None,
                         unroll=8, approx_sigmoid=False):
    """x: (B, T, D) float32. params: list of (w_ih, w_hh, b_ih, b_hh) per layer
    with PyTorch shapes: w_ih (4H, D_in), w_hh (4H, H), biases (4H,).
    Returns (h, c), each (num_layers, B, H) float32."""
    B, T, D = x.shape
    L = len(params)
    H = params[0][1].shape[1]          # w_hh: (4H, H)

    # Lane-align the hidden dim (multiple of 128): padded lanes stay exactly
    # zero end-to-end because the padded weight rows/cols and biases are zero.
    Hp = ((H + 127) // 128) * 128
    G = 4 * Hp
    itm = jnp.dtype(matmul_dtype).itemsize

    # ---- batch tiling: as few / as large tiles as possible ------------------
    nt = num_batch_tiles if num_batch_tiles is not None else _default_num_batch_tiles()
    B8 = ((B + 7) // 8) * 8
    n_tiles = max(1, min(int(nt), B8 // 8))

    def _tile_rows(n):
        return ((-(-B8 // n) + 7) // 8) * 8

    def _chunk_for(bt_):
        if time_chunk is not None:
            return max(1, min(T, int(time_chunk)))
        # keep the gates chunk around <= 4 MiB
        return max(1, min(T, (4 * 1024 * 1024) // max(1, bt_ * G * 4)))

    def _vmem_bytes(bt_):
        tc_ = _chunk_for(bt_)
        w = sum(((D if l == 0 else Hp) + Hp) * G * itm + G * 4 for l in range(L))
        x_b = 2 * T * bt_ * D * itm                   # double-buffered input
        out_b = 2 * 2 * L * bt_ * Hp * 4              # double-buffered h & c
        scr = tc_ * bt_ * G * 4 + (T * bt_ * Hp * itm if L > 1 else 8 * Hp * itm)
        return w + x_b + out_b + scr

    bt = _tile_rows(n_tiles)
    vmem_budget = 48 * 1024 * 1024                    # safe on v5e/v6e/v7x
    while _vmem_bytes(bt) > vmem_budget and bt > 8:   # split only if forced
        n_tiles *= 2
        bt = _tile_rows(n_tiles)
    Bp = n_tiles * bt
    tc = _chunk_for(bt)

    # ---- inputs --------------------------------------------------------------
    x_f = jnp.asarray(x, jnp.float32)
    if Bp != B:
        x_f = jnp.pad(x_f, ((0, Bp - B), (0, 0), (0, 0)))
    # (Bp, T, D) -> (n_tiles, T*bt, D): time-major, batch-minor inside a tile.
    x_tiles = (x_f.reshape(n_tiles, bt, T, D)
                  .transpose(0, 2, 1, 3)
                  .reshape(n_tiles, T * bt, D)
                  .astype(matmul_dtype))

    # ---- weights: transpose, gate-reorder (i,f,g,o)->(i,f,o,g), lane-pad ----
    gate_order = (0, 1, 3, 2)
    flat = []
    for l, (w_ih, w_hh, b_ih, b_hh) in enumerate(params):
        d_in = w_ih.shape[1]
        d_in_pad = D if l == 0 else Hp               # layer >0 consumes padded h
        wih = jnp.asarray(w_ih, jnp.float32).T.reshape(d_in, 4, H)
        whh = jnp.asarray(w_hh, jnp.float32).T.reshape(H, 4, H)
        b = (jnp.asarray(b_ih, jnp.float32)
             + jnp.asarray(b_hh, jnp.float32)).reshape(4, H)
        wih = jnp.pad(wih[:, gate_order, :],
                      ((0, d_in_pad - d_in), (0, 0), (0, Hp - H)))
        whh = jnp.pad(whh[:, gate_order, :],
                      ((0, Hp - H), (0, 0), (0, Hp - H)))
        b = jnp.pad(b[gate_order, :], ((0, 0), (0, Hp - H)))
        flat.extend([wih.reshape(d_in_pad, G).astype(matmul_dtype),
                     whh.reshape(Hp, G).astype(matmul_dtype),
                     b.reshape(1, G)])               # bias stays f32

    kernel = functools.partial(_lstm_encoder_kernel, L, Hp, T, bt, tc, unroll,
                               approx_sigmoid)
    out_shape = (jax.ShapeDtypeStruct((L, Bp, Hp), jnp.float32),
                 jax.ShapeDtypeStruct((L, Bp, Hp), jnp.float32))
    # Lane-dense output, produced directly in (L, B, H) layout (no transpose).
    out_specs = (pl.BlockSpec((L, bt, Hp), lambda i: (0, i, 0)),
                 pl.BlockSpec((L, bt, Hp), lambda i: (0, i, 0)))
    hseq_rows = T * bt if L > 1 else 8
    scratch_shapes = [pltpu.VMEM((tc * bt, G), jnp.float32),
                      pltpu.VMEM((hseq_rows, Hp), matmul_dtype)]
    compiler_params = pltpu.CompilerParams(
        dimension_semantics=("parallel",),
        vmem_limit_bytes=64 * 1024 * 1024)   # raise the 16/32 MiB scoped default

    def _run(single_buffer_weights):
        # Weights have a constant index_map across the grid; single-buffer
        # them when the installed API supports it (saves a full VMEM copy).
        wkw = ({"pipeline_mode": pl.Buffered(1)}
               if single_buffer_weights and hasattr(pl, "Buffered") else {})
        in_specs = [pl.BlockSpec((None, T * bt, D), lambda i: (i, 0, 0))]
        for l in range(L):
            d_in = D if l == 0 else Hp
            in_specs.append(pl.BlockSpec((d_in, G), lambda i: (0, 0), **wkw))
            in_specs.append(pl.BlockSpec((Hp, G), lambda i: (0, 0), **wkw))
            in_specs.append(pl.BlockSpec((1, G), lambda i: (0, 0), **wkw))
        return pl.pallas_call(
            kernel, out_shape=out_shape, grid=(n_tiles,),
            in_specs=in_specs, out_specs=out_specs,
            scratch_shapes=scratch_shapes,
            compiler_params=compiler_params,
        )(x_tiles, *flat)

    try:
        h_t, c_t = _run(True)
    except Exception:   # Buffered(1)/pipeline_mode unsupported -> default path
        h_t, c_t = _run(False)

    # Drop batch padding and hidden-lane padding.
    return h_t[:, :B, :H], c_t[:, :B, :H]


def lstm_encoder_reference(x, params):
    """Pure-JAX reference of the same forward pass."""
    B, T, D = x.shape
    L = len(params)
    H = params[0][1].shape[1]
    h = jnp.zeros((L, B, H), jnp.float32)
    c = jnp.zeros((L, B, H), jnp.float32)
    for t in range(T):
        inp = x[:, t, :]
        for l in range(L):
            w_ih, w_hh, b_ih, b_hh = params[l]
            gates = inp @ w_ih.T + h[l] @ w_hh.T + b_ih + b_hh
            i_g = jax.nn.sigmoid(gates[:, 0:H])
            f_g = jax.nn.sigmoid(gates[:, H:2 * H])
            g_g = jnp.tanh(gates[:, 2 * H:3 * H])
            o_g = jax.nn.sigmoid(gates[:, 3 * H:4 * H])
            c_new = f_g * c[l] + i_g * g_g
            h_new = o_g * jnp.tanh(c_new)
            h = h.at[l].set(h_new)
            c = c.at[l].set(c_new)
            inp = h_new
    return h, c


if __name__ == "__main__":
    # FLAGS-implied hyperparameters (small, deterministic)
    B, T, D, H, L = 2, 8, 16, 32, 2   # batch, seq, input_dim, hidden, layers

    key = jax.random.PRNGKey(0)
    key, kx = jax.random.split(key)
    x = jax.random.normal(kx, (B, T, D), dtype=jnp.float32)

    # Deterministic LSTM parameter init (PyTorch-style uniform(-k, k), k=1/sqrt(H))
    k_init = 1.0 / jnp.sqrt(jnp.float32(H))
    params = []
    for l in range(L):
        d_in = D if l == 0 else H
        key, k1, k2, k3, k4 = jax.random.split(key, 5)
        w_ih = jax.random.uniform(k1, (4 * H, d_in), jnp.float32, -k_init, k_init)
        w_hh = jax.random.uniform(k2, (4 * H, H), jnp.float32, -k_init, k_init)
        b_ih = jax.random.uniform(k3, (4 * H,), jnp.float32, -k_init, k_init)
        b_hh = jax.random.uniform(k4, (4 * H,), jnp.float32, -k_init, k_init)
        params.append((w_ih, w_hh, b_ih, b_hh))

    h_ref, c_ref = lstm_encoder_reference(x, params)

    # f32 path (exact match expected)
    h_out, c_out = lstm_encoder_forward(x, params)
    jax.block_until_ready((h_out, c_out))
    assert h_out.shape == (L, B, H) and c_out.shape == (L, B, H)
    assert jnp.allclose(h_out, h_ref, atol=1e-5, rtol=1e-5)
    assert jnp.allclose(c_out, c_ref, atol=1e-5, rtol=1e-5)

    # time-chunked projection + partially-unrolled fori_loop recurrence (exact)
    h_ck, c_ck = lstm_encoder_forward(x, params, time_chunk=4, unroll=2)
    jax.block_until_ready((h_ck, c_ck))
    assert jnp.allclose(h_ck, h_ref, atol=1e-5, rtol=1e-5)
    assert jnp.allclose(c_ck, c_ref, atol=1e-5, rtol=1e-5)

    # bf16 MXU operands + bf16-resident hseq + approx EUP sigmoid (v6e/v7x path)
    h_bf, c_bf = lstm_encoder_forward(x, params, matmul_dtype=jnp.bfloat16,
                                      approx_sigmoid=True)
    jax.block_until_ready((h_bf, c_bf))
    assert jnp.allclose(h_bf, h_ref, atol=5e-2, rtol=5e-2)
    assert jnp.allclose(c_bf, c_ref, atol=5e-2, rtol=5e-2)

    print("KERNEL_OK")
</pallas_src>

<mosaic_0001>
module attributes {stable_mosaic.version = 11 : i64} {
  func.func @_lstm_encoder_kernel(%arg0: i32, %arg1: memref<1x64x16xf32, #tpu.memory_space<vmem>>, %arg2: memref<16x512xf32, #tpu.memory_space<vmem>>, %arg3: memref<128x512xf32, #tpu.memory_space<vmem>>, %arg4: memref<1x512xf32, #tpu.memory_space<vmem>>, %arg5: memref<128x512xf32, #tpu.memory_space<vmem>>, %arg6: memref<128x512xf32, #tpu.memory_space<vmem>>, %arg7: memref<1x512xf32, #tpu.memory_space<vmem>>, %arg8: memref<2x8x128xf32, #tpu.memory_space<vmem>>, %arg9: memref<2x8x128xf32, #tpu.memory_space<vmem>>, %arg10: memref<64x512xf32, #tpu.memory_space<vmem>>, %arg11: memref<64x128xf32, #tpu.memory_space<vmem>>) attributes {dimension_semantics = [#tpu.dimension_semantics<parallel>], iteration_bounds = array<i64: 1>, scalar_prefetch = 0 : i64, scratch_operands = 2 : i64, tpu.core_type = #tpu.core_type<tc>, window_params = [{transform_indices = @transform_0, window_bounds = array<i64: 1, 64, 16>}, {pipeline_mode = #tpu.pipeline_mode<synchronous>, transform_indices = @transform_1, window_bounds = array<i64: 16, 512>}, {pipeline_mode = #tpu.pipeline_mode<synchronous>, transform_indices = @transform_2, window_bounds = array<i64: 128, 512>}, {pipeline_mode = #tpu.pipeline_mode<synchronous>, transform_indices = @transform_3, window_bounds = array<i64: 1, 512>}, {pipeline_mode = #tpu.pipeline_mode<synchronous>, transform_indices = @transform_4, window_bounds = array<i64: 128, 512>}, {pipeline_mode = #tpu.pipeline_mode<synchronous>, transform_indices = @transform_5, window_bounds = array<i64: 128, 512>}, {pipeline_mode = #tpu.pipeline_mode<synchronous>, transform_indices = @transform_6, window_bounds = array<i64: 1, 512>}, {transform_indices = @transform_7, window_bounds = array<i64: 2, 8, 128>}, {transform_indices = @transform_8, window_bounds = array<i64: 2, 8, 128>}]} {
    %c0 = arith.constant 0 : index
    %c0_0 = arith.constant 0 : index
    %0 = vector.load %arg4[%c0, %c0_0] : memref<1x512xf32, #tpu.memory_space<vmem>>, vector<1x512xf32>
    %cst = arith.constant 0.000000e+00 : f32
    %1 = vector.broadcast %cst : f32 to vector<8x128xf32>
    %cst_1 = arith.constant 0.000000e+00 : f32
    %2 = vector.broadcast %cst_1 : f32 to vector<8x128xf32>
    %c0_2 = arith.constant 0 : index
    %c0_3 = arith.constant 0 : index
    %c0_4 = arith.constant 0 : index
    %3 = vector.load %arg1[%c0_2, %c0_3, %c0_4] : memref<1x64x16xf32, #tpu.memory_space<vmem>>, vector<1x64x16xf32>
    %4 = vector.shape_cast %3 : vector<1x64x16xf32> to vector<64x16xf32>
    %c0_5 = arith.constant 0 : index
    %c0_6 = arith.constant 0 : index
    %5 = vector.load %arg2[%c0_5, %c0_6] : memref<16x512xf32, #tpu.memory_space<vmem>>, vector<16x512xf32>
    %cst_7 = arith.constant dense<0.000000e+00> : vector<64x512xf32>
    %6 = tpu.matmul %4, %5, %cst_7 {dimension_numbers = #tpu.dot_dimension_numbers<[1], [0], [0], [1], [0, 0, 1, 1], [], []>} : vector<64x16xf32>, vector<16x512xf32>, vector<64x512xf32> -> vector<64x512xf32>
    %7 = vector.broadcast %0 : vector<1x512xf32> to vector<64x512xf32>
    %8 = arith.addf %6, %7 : vector<64x512xf32>
    %c0_8 = arith.constant 0 : index
    %c0_9 = arith.constant 0 : index
    %9 = vector.load %arg10[%c0_8, %c0_9] : memref<64x512xf32, #tpu.memory_space<vmem>>, vector<64x512xf32>
    tpu.vector_store %arg10[%c0_8, %c0_9], %8 {strides = array<i32>} : memref<64x512xf32, #tpu.memory_space<vmem>>, vector<64x512xf32>,
    %c0_10 = arith.constant 0 : index
    %c0_11 = arith.constant 0 : index
    %10 = vector.load %arg10[%c0_10, %c0_11] : memref<64x512xf32, #tpu.memory_space<vmem>>, vector<8x512xf32>
    %c0_12 = arith.constant 0 : index
    %c0_13 = arith.constant 0 : index
    %11 = vector.load %arg3[%c0_12, %c0_13] : memref<128x512xf32, #tpu.memory_space<vmem>>, vector<128x512xf32>
    %cst_14 = arith.constant dense<0.000000e+00> : vector<8x512xf32>
    %12 = tpu.matmul %1, %11, %cst_14 {dimension_numbers = #tpu.dot_dimension_numbers<[1], [0], [0], [1], [0, 0, 1, 1], [], []>} : vector<8x128xf32>, vector<128x512xf32>, vector<8x512xf32> -> vector<8x512xf32>
    %13 = arith.addf %10, %12 : vector<8x512xf32>
    %14 = vector.extract_strided_slice %13 {offsets = [0, 0], sizes = [8, 384], strides = [1, 1]} : vector<8x512xf32> to vector<8x384xf32>
    %15 = arith.negf %14 : vector<8x384xf32>
    %16 = math.exp %15 : vector<8x384xf32>
    %cst_15 = arith.constant 1.000000e+00 : f32
    %17 = vector.broadcast %cst_15 : f32 to vector<8x384xf32>
    %18 = arith.addf %17, %16 : vector<8x384xf32>
    %19 = arith.divf %17, %18 : vector<8x384xf32>
    %20 = vector.extract_strided_slice %13 {offsets = [0, 384], sizes = [8, 128], strides = [1, 1]} : vector<8x512xf32> to vector<8x128xf32>
    %21 = math.tanh %20 : vector<8x128xf32>
    %22 = vector.extract_strided_slice %19 {offsets = [0, 0], sizes = [8, 128], strides = [1, 1]} : vector<8x384xf32> to vector<8x128xf32>
    %23 = vector.extract_strided_slice %19 {offsets = [0, 128], sizes = [8, 128], strides = [1, 1]} : vector<8x384xf32> to vector<8x128xf32>
    %24 = vector.extract_strided_slice %19 {offsets = [0, 256], sizes = [8, 128], strides = [1, 1]} : vector<8x384xf32> to vector<8x128xf32>
    %25 = arith.mulf %23, %2 : vector<8x128xf32>
    %26 = arith.mulf %22, %21 : vector<8x128xf32>
    %27 = arith.addf %25, %26 : vector<8x128xf32>
    %28 = math.tanh %27 : vector<8x128xf32>
    %29 = arith.mulf %24, %28 : vector<8x128xf32>
    %c0_16 = arith.constant 0 : index
    %c0_17 = arith.constant 0 : index
    %30 = vector.load %arg11[%c0_16, %c0_17] : memref<64x128xf32, #tpu.memory_space<vmem>>, vector<8x128xf32>
    tpu.vector_store %arg11[%c0_16, %c0_17], %29 {strides = array<i32>} : memref<64x128xf32, #tpu.memory_space<vmem>>, vector<8x128xf32>,
    %c8 = arith.constant 8 : index
    %c0_18 = arith.constant 0 : index
    %31 = vector.load %arg10[%c8, %c0_18] : memref<64x512xf32, #tpu.memory_space<vmem>>, vector<8x512xf32>
    %c0_19 = arith.constant 0 : index
    %c0_20 = arith.constant 0 : index
    %32 = vector.load %arg3[%c0_19, %c0_20] : memref<128x512xf32, #tpu.memory_space<vmem>>, vector<128x512xf32>
    %cst_21 = arith.constant dense<0.000000e+00> : vector<8x512xf32>
    %33 = tpu.matmul %29, %32, %cst_21 {dimension_numbers = #tpu.dot_dimension_numbers<[1], [0], [0], [1], [0, 0, 1, 1], [], []>} : vector<8x128xf32>, vector<128x512xf32>, vector<8x512xf32> -> vector<8x512xf32>
    %34 = arith.addf %31, %33 : vector<8x512xf32>
    %35 = vector.extract_strided_slice %34 {offsets = [0, 0], sizes = [8, 384], strides = [1, 1]} : vector<8x512xf32> to vector<8x384xf32>
    %36 = arith.negf %35 : vector<8x384xf32>
    %37 = math.exp %36 : vector<8x384xf32>
    %cst_22 = arith.constant 1.000000e+00 : f32
    %38 = vector.broadcast %cst_22 : f32 to vector<8x384xf32>
    %39 = arith.addf %38, %37 : vector<8x384xf32>
    %40 = arith.divf %38, %39 : vector<8x384xf32>
    %41 = vector.extract_strided_slice %34 {offsets = [0, 384], sizes = [8, 128], strides = [1, 1]} : vector<8x512xf32> to vector<8x128xf32>
    %42 = math.tanh %41 : vector<8x128xf32>
    %43 = vector.extract_strided_slice %40 {offsets = [0, 0], sizes = [8, 128], strides = [1, 1]} : vector<8x384xf32> to vector<8x128xf32>
    %44 = vector.extract_strided_slice %40 {offsets = [0, 128], sizes = [8, 128], strides = [1, 1]} : vector<8x384xf32> to vector<8x128xf32>
    %45 = vector.extract_strided_slice %40 {offsets = [0, 256], sizes = [8, 128], strides = [1, 1]} : vector<8x384xf32> to vector<8x128xf32>
    %46 = arith.mulf %44, %27 : vector<8x128xf32>
    %47 = arith.mulf %43, %42 : vector<8x128xf32>
    %48 = arith.addf %46, %47 : vector<8x128xf32>
    %49 = math.tanh %48 : vector<8x128xf32>
    %50 = arith.mulf %45, %49 : vector<8x128xf32>
    %c8_23 = arith.constant 8 : index
    %c0_24 = arith.constant 0 : index
    %51 = vector.load %arg11[%c8_23, %c0_24] : memref<64x128xf32, #tpu.memory_space<vmem>>, vector<8x128xf32>
    tpu.vector_store %arg11[%c8_23, %c0_24], %50 {strides = array<i32>} : memref<64x128xf32, #tpu.memory_space<vmem>>, vector<8x128xf32>,
    %c16 = arith.constant 16 : index
    %c0_25 = arith.constant 0 : index
    %52 = vector.load %arg10[%c16, %c0_25] : memref<64x512xf32, #tpu.memory_space<vmem>>, vector<8x512xf32>
    %c0_26 = arith.constant 0 : index
    %c0_27 = arith.constant 0 : index
    %53 = vector.load %arg3[%c0_26, %c0_27] : memref<128x512xf32, #tpu.memory_space<vmem>>, vector<128x512xf32>
    %cst_28 = arith.constant dense<0.000000e+00> : vector<8x512xf32>
    %54 = tpu.matmul %50, %53, %cst_28 {dimension_numbers = #tpu.dot_dimension_numbers<[1], [0], [0], [1], [0, 0, 1, 1], [], []>} : vector<8x128xf32>, vector<128x512xf32>, vector<8x512xf32> -> vector<8x512xf32>
    %55 = arith.addf %52, %54 : vector<8x512xf32>
    %56 = vector.extract_strided_slice %55 {offsets = [0, 0], sizes = [8, 384], strides = [1, 1]} : vector<8x512xf32> to vector<8x384xf32>
    %57 = arith.negf %56 : vector<8x384xf32>
    %58 = math.exp %57 : vector<8x384xf32>
    %cst_29 = arith.constant 1.000000e+00 : f32
    %59 = vector.broadcast %cst_29 : f32 to vector<8x384xf32>
    %60 = arith.addf %59, %58 : vector<8x384xf32>
    %61 = arith.divf %59, %60 : vector<8x384xf32>
    %62 = vector.extract_strided_slice %55 {offsets = [0, 384], sizes = [8, 128], strides = [1, 1]} : vector<8x512xf32> to vector<8x128xf32>
    %63 = math.tanh %62 : vector<8x128xf32>
    %64 = vector.extract_strided_slice %61 {offsets = [0, 0], sizes = [8, 128], strides = [1, 1]} : vector<8x384xf32> to vector<8x128xf32>
    %65 = vector.extract_strided_slice %61 {offsets = [0, 128], sizes = [8, 128], strides = [1, 1]} : vector<8x384xf32> to vector<8x128xf32>
    %66 = vector.extract_strided_slice %61 {offsets = [0, 256], sizes = [8, 128], strides = [1, 1]} : vector<8x384xf32> to vector<8x128xf32>
    %67 = arith.mulf %65, %48 : vector<8x128xf32>
    %68 = arith.mulf %64, %63 : vector<8x128xf32>
    %69 = arith.addf %67, %68 : vector<8x128xf32>
    %70 = math.tanh %69 : vector<8x128xf32>
    %71 = arith.mulf %66, %70 : vector<8x128xf32>
    %c16_30 = arith.constant 16 : index
    %c0_31 = arith.constant 0 : index
    %72 = vector.load %arg11[%c16_30, %c0_31] : memref<64x128xf32, #tpu.memory_space<vmem>>, vector<8x128xf32>
    tpu.vector_store %arg11[%c16_30, %c0_31], %71 {strides = array<i32>} : memref<64x128xf32, #tpu.memory_space<vmem>>, vector<8x128xf32>,
    %c24 = arith.constant 24 : index
    %c0_32 = arith.constant 0 : index
    %73 = vector.load %arg10[%c24, %c0_32] : memref<64x512xf32, #tpu.memory_space<vmem>>, vector<8x512xf32>
    %c0_33 = arith.constant 0 : index
    %c0_34 = arith.constant 0 : index
    %74 = vector.load %arg3[%c0_33, %c0_34] : memref<128x512xf32, #tpu.memory_space<vmem>>, vector<128x512xf32>
    %cst_35 = arith.constant dense<0.000000e+00> : vector<8x512xf32>
    %75 = tpu.matmul %71, %74, %cst_35 {dimension_numbers = #tpu.dot_dimension_numbers<[1], [0], [0], [1], [0, 0, 1, 1], [], []>} : vector<8x128xf32>, vector<128x512xf32>, vector<8x512xf32> -> vector<8x512xf32>
    %76 = arith.addf %73, %75 : vector<8x512xf32>
    %77 = vector.extract_strided_slice %76 {offsets = [0, 0], sizes = [8, 384], strides = [1, 1]} : vector<8x512xf32> to vector<8x384xf32>
    %78 = arith.negf %77 : vector<8x384xf32>
    %79 = math.exp %78 : vector<8x384xf32>
    %cst_36 = arith.constant 1.000000e+00 : f32
    %80 = vector.broadcast %cst_36 : f32 to vector<8x384xf32>
    %81 = arith.addf %80, %79 : vector<8x384xf32>
    %82 = arith.divf %80, %81 : vector<8x384xf32>
    %83 = vector.extract_strided_slice %76 {offsets = [0, 384], sizes = [8, 128], strides = [1, 1]} : vector<8x512xf32> to vector<8x128xf32>
    %84 = math.tanh %83 : vector<8x128xf32>
    %85 = vector.extract_strided_slice %82 {offsets = [0, 0], sizes = [8, 128], strides = [1, 1]} : vector<8x384xf32> to vector<8x128xf32>
    %86 = vector.extract_strided_slice %82 {offsets = [0, 128], sizes = [8, 128], strides = [1, 1]} : vector<8x384xf32> to vector<8x128xf32>
    %87 = vector.extract_strided_slice %82 {offsets = [0, 256], sizes = [8, 128], strides = [1, 1]} : vector<8x384xf32> to vector<8x128xf32>
    %88 = arith.mulf %86, %69 : vector<8x128xf32>
    %89 = arith.mulf %85, %84 : vector<8x128xf32>
    %90 = arith.addf %88, %89 : vector<8x128xf32>
    %91 = math.tanh %90 : vector<8x128xf32>
    %92 = arith.mulf %87, %91 : vector<8x128xf32>
    %c24_37 = arith.constant 24 : index
    %c0_38 = arith.constant 0 : index
    %93 = vector.load %arg11[%c24_37, %c0_38] : memref<64x128xf32, #tpu.memory_space<vmem>>, vector<8x128xf32>
    tpu.vector_store %arg11[%c24_37, %c0_38], %92 {strides = array<i32>} : memref<64x128xf32, #tpu.memory_space<vmem>>, vector<8x128xf32>,
    %c32 = arith.constant 32 : index
    %c0_39 = arith.constant 0 : index
    %94 = vector.load %arg10[%c32, %c0_39] : memref<64x512xf32, #tpu.memory_space<vmem>>, vector<8x512xf32>
    %c0_40 = arith.constant 0 : index
    %c0_41 = arith.constant 0 : index
    %95 = vector.load %arg3[%c0_40, %c0_41] : memref<128x512xf32, #tpu.memory_space<vmem>>, vector<128x512xf32>
    %cst_42 = arith.constant dense<0.000000e+00> : vector<8x512xf32>
    %96 = tpu.matmul %92, %95, %cst_42 {dimension_numbers = #tpu.dot_dimension_numbers<[1], [0], [0], [1], [0, 0, 1, 1], [], []>} : vector<8x128xf32>, vector<128x512xf32>, vector<8x512xf32> -> vector<8x512xf32>
    %97 = arith.addf %94, %96 : vector<8x512xf32>
    %98 = vector.extract_strided_slice %97 {offsets = [0, 0], sizes = [8, 384], strides = [1, 1]} : vector<8x512xf32> to vector<8x384xf32>
    %99 = arith.negf %98 : vector<8x384xf32>
    %100 = math.exp %99 : vector<8x384xf32>
    %cst_43 = arith.constant 1.000000e+00 : f32
    %101 = vector.broadcast %cst_43 : f32 to vector<8x384xf32>
    %102 = arith.addf %101, %100 : vector<8x384xf32>
    %103 = arith.divf %101, %102 : vector<8x384xf32>
    %104 = vector.extract_strided_slice %97 {offsets = [0, 384], sizes = [8, 128], strides = [1, 1]} : vector<8x512xf32> to vector<8x128xf32>
    %105 = math.tanh %104 : vector<8x128xf32>
    %106 = vector.extract_strided_slice %103 {offsets = [0, 0], sizes = [8, 128], strides = [1, 1]} : vector<8x384xf32> to vector<8x128xf32>
    %107 = vector.extract_strided_slice %103 {offsets = [0, 128], sizes = [8, 128], strides = [1, 1]} : vector<8x384xf32> to vector<8x128xf32>
    %108 = vector.extract_strided_slice %103 {offsets = [0, 256], sizes = [8, 128], strides = [1, 1]} : vector<8x384xf32> to vector<8x128xf32>
    %109 = arith.mulf %107, %90 : vector<8x128xf32>
    %110 = arith.mulf %106, %105 : vector<8x128xf32>
    %111 = arith.addf %109, %110 : vector<8x128xf32>
    %112 = math.tanh %111 : vector<8x128xf32>
    %113 = arith.mulf %108, %112 : vector<8x128xf32>
    %c32_44 = arith.constant 32 : index
    %c0_45 = arith.constant 0 : index
    %114 = vector.load %arg11[%c32_44, %c0_45] : memref<64x128xf32, #tpu.memory_space<vmem>>, vector<8x128xf32>
    tpu.vector_store %arg11[%c32_44, %c0_45], %113 {strides = array<i32>} : memref<64x128xf32, #tpu.memory_space<vmem>>, vector<8x128xf32>,
    %c40 = arith.constant 40 : index
    %c0_46 = arith.constant 0 : index
    %115 = vector.load %arg10[%c40, %c0_46] : memref<64x512xf32, #tpu.memory_space<vmem>>, vector<8x512xf32>
    %c0_47 = arith.constant 0 : index
    %c0_48 = arith.constant 0 : index
    %116 = vector.load %arg3[%c0_47, %c0_48] : memref<128x512xf32, #tpu.memory_space<vmem>>, vector<128x512xf32>
    %cst_49 = arith.constant dense<0.000000e+00> : vector<8x512xf32>
    %117 = tpu.matmul %113, %116, %cst_49 {dimension_numbers = #tpu.dot_dimension_numbers<[1], [0], [0], [1], [0, 0, 1, 1], [], []>} : vector<8x128xf32>, vector<128x512xf32>, vector<8x512xf32> -> vector<8x512xf32>
    %118 = arith.addf %115, %117 : vector<8x512xf32>
    %119 = vector.extract_strided_slice %118 {offsets = [0, 0], sizes = [8, 384], strides = [1, 1]} : vector<8x512xf32> to vector<8x384xf32>
    %120 = arith.negf %119 : vector<8x384xf32>
    %121 = math.exp %120 : vector<8x384xf32>
    %cst_50 = arith.constant 1.000000e+00 : f32
    %122 = vector.broadcast %cst_50 : f32 to vector<8x384xf32>
    %123 = arith.addf %122, %121 : vector<8x384xf32>
    %124 = arith.divf %122, %123 : vector<8x384xf32>
    %125 = vector.extract_strided_slice %118 {offsets = [0, 384], sizes = [8, 128], strides = [1, 1]} : vector<8x512xf32> to vector<8x128xf32>
    %126 = math.tanh %125 : vector<8x128xf32>
    %127 = vector.extract_strided_slice %124 {offsets = [0, 0], sizes = [8, 128], strides = [1, 1]} : vector<8x384xf32> to vector<8x128xf32>
    %128 = vector.extract_strided_slice %124 {offsets = [0, 128], sizes = [8, 128], strides = [1, 1]} : vector<8x384xf32> to vector<8x128xf32>
    %129 = vector.extract_strided_slice %124 {offsets = [0, 256], sizes = [8, 128], strides = [1, 1]} : vector<8x384xf32> to vector<8x128xf32>
    %130 = arith.mulf %128, %111 : vector<8x128xf32>
    %131 = arith.mulf %127, %126 : vector<8x128xf32>
    %132 = arith.addf %130, %131 : vector<8x128xf32>
    %133 = math.tanh %132 : vector<8x128xf32>
    %134 = arith.mulf %129, %133 : vector<8x128xf32>
    %c40_51 = arith.constant 40 : index
    %c0_52 = arith.constant 0 : index
    %135 = vector.load %arg11[%c40_51, %c0_52] : memref<64x128xf32, #tpu.memory_space<vmem>>, vector<8x128xf32>
    tpu.vector_store %arg11[%c40_51, %c0_52], %134 {strides = array<i32>} : memref<64x128xf32, #tpu.memory_space<vmem>>, vector<8x128xf32>,
    %c48 = arith.constant 48 : index
    %c0_53 = arith.constant 0 : index
    %136 = vector.load %arg10[%c48, %c0_53] : memref<64x512xf32, #tpu.memory_space<vmem>>, vector<8x512xf32>
    %c0_54 = arith.constant 0 : index
    %c0_55 = arith.constant 0 : index
    %137 = vector.load %arg3[%c0_54, %c0_55] : memref<128x512xf32, #tpu.memory_space<vmem>>, vector<128x512xf32>
    %cst_56 = arith.constant dense<0.000000e+00> : vector<8x512xf32>
    %138 = tpu.matmul %134, %137, %cst_56 {dimension_numbers = #tpu.dot_dimension_numbers<[1], [0], [0], [1], [0, 0, 1, 1], [], []>} : vector<8x128xf32>, vector<128x512xf32>, vector<8x512xf32> -> vector<8x512xf32>
    %139 = arith.addf %136, %138 : vector<8x512xf32>
    %140 = vector.extract_strided_slice %139 {offsets = [0, 0], sizes = [8, 384], strides = [1, 1]} : vector<8x512xf32> to vector<8x384xf32>
    %141 = arith.negf %140 : vector<8x384xf32>
    %142 = math.exp %141 : vector<8x384xf32>
    %cst_57 = arith.constant 1.000000e+00 : f32
    %143 = vector.broadcast %cst_57 : f32 to vector<8x384xf32>
    %144 = arith.addf %143, %142 : vector<8x384xf32>
    %145 = arith.divf %143, %144 : vector<8x384xf32>
    %146 = vector.extract_strided_slice %139 {offsets = [0, 384], sizes = [8, 128], strides = [1, 1]} : vector<8x512xf32> to vector<8x128xf32>
    %147 = math.tanh %146 : vector<8x128xf32>
    %148 = vector.extract_strided_slice %145 {offsets = [0, 0], sizes = [8, 128], strides = [1, 1]} : vector<8x384xf32> to vector<8x128xf32>
    %149 = vector.extract_strided_slice %145 {offsets = [0, 128], sizes = [8, 128], strides = [1, 1]} : vector<8x384xf32> to vector<8x128xf32>
    %150 = vector.extract_strided_slice %145 {offsets = [0, 256], sizes = [8, 128], strides = [1, 1]} : vector<8x384xf32> to vector<8x128xf32>
    %151 = arith.mulf %149, %132 : vector<8x128xf32>
    %152 = arith.mulf %148, %147 : vector<8x128xf32>
    %153 = arith.addf %151, %152 : vector<8x128xf32>
    %154 = math.tanh %153 : vector<8x128xf32>
    %155 = arith.mulf %150, %154 : vector<8x128xf32>
    %c48_58 = arith.constant 48 : index
    %c0_59 = arith.constant 0 : index
    %156 = vector.load %arg11[%c48_58, %c0_59] : memref<64x128xf32, #tpu.memory_space<vmem>>, vector<8x128xf32>
    tpu.vector_store %arg11[%c48_58, %c0_59], %155 {strides = array<i32>} : memref<64x128xf32, #tpu.memory_space<vmem>>, vector<8x128xf32>,
    %c56 = arith.constant 56 : index
    %c0_60 = arith.constant 0 : index
    %157 = vector.load %arg10[%c56, %c0_60] : memref<64x512xf32, #tpu.memory_space<vmem>>, vector<8x512xf32>
    %c0_61 = arith.constant 0 : index
    %c0_62 = arith.constant 0 : index
    %158 = vector.load %arg3[%c0_61, %c0_62] : memref<128x512xf32, #tpu.memory_space<vmem>>, vector<128x512xf32>
    %cst_63 = arith.constant dense<0.000000e+00> : vector<8x512xf32>
    %159 = tpu.matmul %155, %158, %cst_63 {dimension_numbers = #tpu.dot_dimension_numbers<[1], [0], [0], [1], [0, 0, 1, 1], [], []>} : vector<8x128xf32>, vector<128x512xf32>, vector<8x512xf32> -> vector<8x512xf32>
    %160 = arith.addf %157, %159 : vector<8x512xf32>
    %161 = vector.extract_strided_slice %160 {offsets = [0, 0], sizes = [8, 384], strides = [1, 1]} : vector<8x512xf32> to vector<8x384xf32>
    %162 = arith.negf %161 : vector<8x384xf32>
    %163 = math.exp %162 : vector<8x384xf32>
    %cst_64 = arith.constant 1.000000e+00 : f32
    %164 = vector.broadcast %cst_64 : f32 to vector<8x384xf32>
    %165 = arith.addf %164, %163 : vector<8x384xf32>
    %166 = arith.divf %164, %165 : vector<8x384xf32>
    %167 = vector.extract_strided_slice %160 {offsets = [0, 384], sizes = [8, 128], strides = [1, 1]} : vector<8x512xf32> to vector<8x128xf32>
    %168 = math.tanh %167 : vector<8x128xf32>
    %169 = vector.extract_strided_slice %166 {offsets = [0, 0], sizes = [8, 128], strides = [1, 1]} : vector<8x384xf32> to vector<8x128xf32>
    %170 = vector.extract_strided_slice %166 {offsets = [0, 128], sizes = [8, 128], strides = [1, 1]} : vector<8x384xf32> to vector<8x128xf32>
    %171 = vector.extract_strided_slice %166 {offsets = [0, 256], sizes = [8, 128], strides = [1, 1]} : vector<8x384xf32> to vector<8x128xf32>
    %172 = arith.mulf %170, %153 : vector<8x128xf32>
    %173 = arith.mulf %169, %168 : vector<8x128xf32>
    %174 = arith.addf %172, %173 : vector<8x128xf32>
    %175 = math.tanh %174 : vector<8x128xf32>
    %176 = arith.mulf %171, %175 : vector<8x128xf32>
    %c56_65 = arith.constant 56 : index
    %c0_66 = arith.constant 0 : index
    %177 = vector.load %arg11[%c56_65, %c0_66] : memref<64x128xf32, #tpu.memory_space<vmem>>, vector<8x128xf32>
    tpu.vector_store %arg11[%c56_65, %c0_66], %176 {strides = array<i32>} : memref<64x128xf32, #tpu.memory_space<vmem>>, vector<8x128xf32>,
    %c0_67 = arith.constant 0 : index
    %c0_68 = arith.constant 0 : index
    %c0_69 = arith.constant 0 : index
    %178 = vector.load %arg8[%c0_67, %c0_68, %c0_69] : memref<2x8x128xf32, #tpu.memory_space<vmem>>, vector<1x8x128xf32>
    %179 = vector.shape_cast %178 : vector<1x8x128xf32> to vector<8x128xf32>
    %180 = vector.shape_cast %176 : vector<8x128xf32> to vector<1x8x128xf32>
    tpu.vector_store %arg8[%c0_67, %c0_68, %c0_69], %180 {strides = array<i32>} : memref<2x8x128xf32, #tpu.memory_space<vmem>>, vector<1x8x128xf32>,
    %c0_70 = arith.constant 0 : index
    %c0_71 = arith.constant 0 : index
    %c0_72 = arith.constant 0 : index
    %181 = vector.load %arg9[%c0_70, %c0_71, %c0_72] : memref<2x8x128xf32, #tpu.memory_space<vmem>>, vector<1x8x128xf32>
    %182 = vector.shape_cast %181 : vector<1x8x128xf32> to vector<8x128xf32>
    %183 = vector.shape_cast %174 : vector<8x128xf32> to vector<1x8x128xf32>
    tpu.vector_store %arg9[%c0_70, %c0_71, %c0_72], %183 {strides = array<i32>} : memref<2x8x128xf32, #tpu.memory_space<vmem>>, vector<1x8x128xf32>,
    %c0_73 = arith.constant 0 : index
    %c0_74 = arith.constant 0 : index
    %184 = vector.load %arg7[%c0_73, %c0_74] : memref<1x512xf32, #tpu.memory_space<vmem>>, vector<1x512xf32>
    %cst_75 = arith.constant 0.000000e+00 : f32
    %185 = vector.broadcast %cst_75 : f32 to vector<8x128xf32>
    %cst_76 = arith.constant 0.000000e+00 : f32
    %186 = vector.broadcast %cst_76 : f32 to vector<8x128xf32>
    %c0_77 = arith.constant 0 : index
    %c0_78 = arith.constant 0 : index
    %187 = vector.load %arg11[%c0_77, %c0_78] : memref<64x128xf32, #tpu.memory_space<vmem>>, vector<64x128xf32>
    %c0_79 = arith.constant 0 : index
    %c0_80 = arith.constant 0 : index
    %188 = vector.load %arg5[%c0_79, %c0_80] : memref<128x512xf32, #tpu.memory_space<vmem>>, vector<128x512xf32>
    %cst_81 = arith.constant dense<0.000000e+00> : vector<64x512xf32>
    %189 = tpu.matmul %187, %188, %cst_81 {dimension_numbers = #tpu.dot_dimension_numbers<[1], [0], [0], [1], [0, 0, 1, 1], [], []>} : vector<64x128xf32>, vector<128x512xf32>, vector<64x512xf32> -> vector<64x512xf32>
    %190 = vector.broadcast %184 : vector<1x512xf32> to vector<64x512xf32>
    %191 = arith.addf %189, %190 : vector<64x512xf32>
    %c0_82 = arith.constant 0 : index
    %c0_83 = arith.constant 0 : index
    %192 = vector.load %arg10[%c0_82, %c0_83] : memref<64x512xf32, #tpu.memory_space<vmem>>, vector<64x512xf32>
    tpu.vector_store %arg10[%c0_82, %c0_83], %191 {strides = array<i32>} : memref<64x512xf32, #tpu.memory_space<vmem>>, vector<64x512xf32>,
    %c0_84 = arith.constant 0 : index
    %c0_85 = arith.constant 0 : index
    %193 = vector.load %arg10[%c0_84, %c0_85] : memref<64x512xf32, #tpu.memory_space<vmem>>, vector<8x512xf32>
    %c0_86 = arith.constant 0 : index
    %c0_87 = arith.constant 0 : index
    %194 = vector.load %arg6[%c0_86, %c0_87] : memref<128x512xf32, #tpu.memory_space<vmem>>, vector<128x512xf32>
    %cst_88 = arith.constant dense<0.000000e+00> : vector<8x512xf32>
    %195 = tpu.matmul %185, %194, %cst_88 {dimension_numbers = #tpu.dot_dimension_numbers<[1], [0], [0], [1], [0, 0, 1, 1], [], []>} : vector<8x128xf32>, vector<128x512xf32>, vector<8x512xf32> -> vector<8x512xf32>
    %196 = arith.addf %193, %195 : vector<8x512xf32>
    %197 = vector.extract_strided_slice %196 {offsets = [0, 0], sizes = [8, 384], strides = [1, 1]} : vector<8x512xf32> to vector<8x384xf32>
    %198 = arith.negf %197 : vector<8x384xf32>
    %199 = math.exp %198 : vector<8x384xf32>
    %cst_89 = arith.constant 1.000000e+00 : f32
    %200 = vector.broadcast %cst_89 : f32 to vector<8x384xf32>
    %201 = arith.addf %200, %199 : vector<8x384xf32>
    %202 = arith.divf %200, %201 : vector<8x384xf32>
    %203 = vector.extract_strided_slice %196 {offsets = [0, 384], sizes = [8, 128], strides = [1, 1]} : vector<8x512xf32> to vector<8x128xf32>
    %204 = math.tanh %203 : vector<8x128xf32>
    %205 = vector.extract_strided_slice %202 {offsets = [0, 0], sizes = [8, 128], strides = [1, 1]} : vector<8x384xf32> to vector<8x128xf32>
    %206 = vector.extract_strided_slice %202 {offsets = [0, 128], sizes = [8, 128], strides = [1, 1]} : vector<8x384xf32> to vector<8x128xf32>
    %207 = vector.extract_strided_slice %202 {offsets = [0, 256], sizes = [8, 128], strides = [1, 1]} : vector<8x384xf32> to vector<8x128xf32>
    %208 = arith.mulf %206, %186 : vector<8x128xf32>
    %209 = arith.mulf %205, %204 : vector<8x128xf32>
    %210 = arith.addf %208, %209 : vector<8x128xf32>
    %211 = math.tanh %210 : vector<8x128xf32>
    %212 = arith.mulf %207, %211 : vector<8x128xf32>
    %c8_90 = arith.constant 8 : index
    %c0_91 = arith.constant 0 : index
    %213 = vector.load %arg10[%c8_90, %c0_91] : memref<64x512xf32, #tpu.memory_space<vmem>>, vector<8x512xf32>
    %c0_92 = arith.constant 0 : index
    %c0_93 = arith.constant 0 : index
    %214 = vector.load %arg6[%c0_92, %c0_93] : memref<128x512xf32, #tpu.memory_space<vmem>>, vector<128x512xf32>
    %cst_94 = arith.constant dense<0.000000e+00> : vector<8x512xf32>
    %215 = tpu.matmul %212, %214, %cst_94 {dimension_numbers = #tpu.dot_dimension_numbers<[1], [0], [0], [1], [0, 0, 1, 1], [], []>} : vector<8x128xf32>, vector<128x512xf32>, vector<8x512xf32> -> vector<8x512xf32>
    %216 = arith.addf %213, %215 : vector<8x512xf32>
    %217 = vector.extract_strided_slice %216 {offsets = [0, 0], sizes = [8, 384], strides = [1, 1]} : vector<8x512xf32> to vector<8x384xf32>
    %218 = arith.negf %217 : vector<8x384xf32>
    %219 = math.exp %218 : vector<8x384xf32>
    %cst_95 = arith.constant 1.000000e+00 : f32
    %220 = vector.broadcast %cst_95 : f32 to vector<8x384xf32>
    %221 = arith.addf %220, %219 : vector<8x384xf32>
    %222 = arith.divf %220, %221 : vector<8x384xf32>
    %223 = vector.extract_strided_slice %216 {offsets = [0, 384], sizes = [8, 128], strides = [1, 1]} : vector<8x512xf32> to vector<8x128xf32>
    %224 = math.tanh %223 : vector<8x128xf32>
    %225 = vector.extract_strided_slice %222 {offsets = [0, 0], sizes = [8, 128], strides = [1, 1]} : vector<8x384xf32> to vector<8x128xf32>
    %226 = vector.extract_strided_slice %222 {offsets = [0, 128], sizes = [8, 128], strides = [1, 1]} : vector<8x384xf32> to vector<8x128xf32>
    %227 = vector.extract_strided_slice %222 {offsets = [0, 256], sizes = [8, 128], strides = [1, 1]} : vector<8x384xf32> to vector<8x128xf32>
    %228 = arith.mulf %226, %210 : vector<8x128xf32>
    %229 = arith.mulf %225, %224 : vector<8x128xf32>
    %230 = arith.addf %228, %229 : vector<8x128xf32>
    %231 = math.tanh %230 : vector<8x128xf32>
    %232 = arith.mulf %227, %231 : vector<8x128xf32>
    %c16_96 = arith.constant 16 : index
    %c0_97 = arith.constant 0 : index
    %233 = vector.load %arg10[%c16_96, %c0_97] : memref<64x512xf32, #tpu.memory_space<vmem>>, vector<8x512xf32>
    %c0_98 = arith.constant 0 : index
    %c0_99 = arith.constant 0 : index
    %234 = vector.load %arg6[%c0_98, %c0_99] : memref<128x512xf32, #tpu.memory_space<vmem>>, vector<128x512xf32>
    %cst_100 = arith.constant dense<0.000000e+00> : vector<8x512xf32>
    %235 = tpu.matmul %232, %234, %cst_100 {dimension_numbers = #tpu.dot_dimension_numbers<[1], [0], [0], [1], [0, 0, 1, 1], [], []>} : vector<8x128xf32>, vector<128x512xf32>, vector<8x512xf32> -> vector<8x512xf32>
    %236 = arith.addf %233, %235 : vector<8x512xf32>
    %237 = vector.extract_strided_slice %236 {offsets = [0, 0], sizes = [8, 384], strides = [1, 1]} : vector<8x512xf32> to vector<8x384xf32>
    %238 = arith.negf %237 : vector<8x384xf32>
    %239 = math.exp %238 : vector<8x384xf32>
    %cst_101 = arith.constant 1.000000e+00 : f32
    %240 = vector.broadcast %cst_101 : f32 to vector<8x384xf32>
    %241 = arith.addf %240, %239 : vector<8x384xf32>
    %242 = arith.divf %240, %241 : vector<8x384xf32>
    %243 = vector.extract_strided_slice %236 {offsets = [0, 384], sizes = [8, 128], strides = [1, 1]} : vector<8x512xf32> to vector<8x128xf32>
    %244 = math.tanh %243 : vector<8x128xf32>
    %245 = vector.extract_strided_slice %242 {offsets = [0, 0], sizes = [8, 128], strides = [1, 1]} : vector<8x384xf32> to vector<8x128xf32>
    %246 = vector.extract_strided_slice %242 {offsets = [0, 128], sizes = [8, 128], strides = [1, 1]} : vector<8x384xf32> to vector<8x128xf32>
    %247 = vector.extract_strided_slice %242 {offsets = [0, 256], sizes = [8, 128], strides = [1, 1]} : vector<8x384xf32> to vector<8x128xf32>
    %248 = arith.mulf %246, %230 : vector<8x128xf32>
    %249 = arith.mulf %245, %244 : vector<8x128xf32>
    %250 = arith.addf %248, %249 : vector<8x128xf32>
    %251 = math.tanh %250 : vector<8x128xf32>
    %252 = arith.mulf %247, %251 : vector<8x128xf32>
    %c24_102 = arith.constant 24 : index
    %c0_103 = arith.constant 0 : index
    %253 = vector.load %arg10[%c24_102, %c0_103] : memref<64x512xf32, #tpu.memory_space<vmem>>, vector<8x512xf32>
    %c0_104 = arith.constant 0 : index
    %c0_105 = arith.constant 0 : index
    %254 = vector.load %arg6[%c0_104, %c0_105] : memref<128x512xf32, #tpu.memory_space<vmem>>, vector<128x512xf32>
    %cst_106 = arith.constant dense<0.000000e+00> : vector<8x512xf32>
    %255 = tpu.matmul %252, %254, %cst_106 {dimension_numbers = #tpu.dot_dimension_numbers<[1], [0], [0], [1], [0, 0, 1, 1], [], []>} : vector<8x128xf32>, vector<128x512xf32>, vector<8x512xf32> -> vector<8x512xf32>
    %256 = arith.addf %253, %255 : vector<8x512xf32>
    %257 = vector.extract_strided_slice %256 {offsets = [0, 0], sizes = [8, 384], strides = [1, 1]} : vector<8x512xf32> to vector<8x384xf32>
    %258 = arith.negf %257 : vector<8x384xf32>
    %259 = math.exp %258 : vector<8x384xf32>
    %cst_107 = arith.constant 1.000000e+00 : f32
    %260 = vector.broadcast %cst_107 : f32 to vector<8x384xf32>
    %261 = arith.addf %260, %259 : vector<8x384xf32>
    %262 = arith.divf %260, %261 : vector<8x384xf32>
    %263 = vector.extract_strided_slice %256 {offsets = [0, 384], sizes = [8, 128], strides = [1, 1]} : vector<8x512xf32> to vector<8x128xf32>
    %264 = math.tanh %263 : vector<8x128xf32>
    %265 = vector.extract_strided_slice %262 {offsets = [0, 0], sizes = [8, 128], strides = [1, 1]} : vector<8x384xf32> to vector<8x128xf32>
    %266 = vector.extract_strided_slice %262 {offsets = [0, 128], sizes = [8, 128], strides = [1, 1]} : vector<8x384xf32> to vector<8x128xf32>
    %267 = vector.extract_strided_slice %262 {offsets = [0, 256], sizes = [8, 128], strides = [1, 1]} : vector<8x384xf32> to vector<8x128xf32>
    %268 = arith.mulf %266, %250 : vector<8x128xf32>
    %269 = arith.mulf %265, %264 : vector<8x128xf32>
    %270 = arith.addf %268, %269 : vector<8x128xf32>
    %271 = math.tanh %270 : vector<8x128xf32>
    %272 = arith.mulf %267, %271 : vector<8x128xf32>
    %c32_108 = arith.constant 32 : index
    %c0_109 = arith.constant 0 : index
    %273 = vector.load %arg10[%c32_108, %c0_109] : memref<64x512xf32, #tpu.memory_space<vmem>>, vector<8x512xf32>
    %c0_110 = arith.constant 0 : index
    %c0_111 = arith.constant 0 : index
    %274 = vector.load %arg6[%c0_110, %c0_111] : memref<128x512xf32, #tpu.memory_space<vmem>>, vector<128x512xf32>
    %cst_112 = arith.constant dense<0.000000e+00> : vector<8x512xf32>
    %275 = tpu.matmul %272, %274, %cst_112 {dimension_numbers = #tpu.dot_dimension_numbers<[1], [0], [0], [1], [0, 0, 1, 1], [], []>} : vector<8x128xf32>, vector<128x512xf32>, vector<8x512xf32> -> vector<8x512xf32>
    %276 = arith.addf %273, %275 : vector<8x512xf32>
    %277 = vector.extract_strided_slice %276 {offsets = [0, 0], sizes = [8, 384], strides = [1, 1]} : vector<8x512xf32> to vector<8x384xf32>
    %278 = arith.negf %277 : vector<8x384xf32>
    %279 = math.exp %278 : vector<8x384xf32>
    %cst_113 = arith.constant 1.000000e+00 : f32
    %280 = vector.broadcast %cst_113 : f32 to vector<8x384xf32>
    %281 = arith.addf %280, %279 : vector<8x384xf32>
    %282 = arith.divf %280, %281 : vector<8x384xf32>
    %283 = vector.extract_strided_slice %276 {offsets = [0, 384], sizes = [8, 128], strides = [1, 1]} : vector<8x512xf32> to vector<8x128xf32>
    %284 = math.tanh %283 : vector<8x128xf32>
    %285 = vector.extract_strided_slice %282 {offsets = [0, 0], sizes = [8, 128], strides = [1, 1]} : vector<8x384xf32> to vector<8x128xf32>
    %286 = vector.extract_strided_slice %282 {offsets = [0, 128], sizes = [8, 128], strides = [1, 1]} : vector<8x384xf32> to vector<8x128xf32>
    %287 = vector.extract_strided_slice %282 {offsets = [0, 256], sizes = [8, 128], strides = [1, 1]} : vector<8x384xf32> to vector<8x128xf32>
    %288 = arith.mulf %286, %270 : vector<8x128xf32>
    %289 = arith.mulf %285, %284 : vector<8x128xf32>
    %290 = arith.addf %288, %289 : vector<8x128xf32>
    %291 = math.tanh %290 : vector<8x128xf32>
    %292 = arith.mulf %287, %291 : vector<8x128xf32>
    %c40_114 = arith.constant 40 : index
    %c0_115 = arith.constant 0 : index
    %293 = vector.load %arg10[%c40_114, %c0_115] : memref<64x512xf32, #tpu.memory_space<vmem>>, vector<8x512xf32>
    %c0_116 = arith.constant 0 : index
    %c0_117 = arith.constant 0 : index
    %294 = vector.load %arg6[%c0_116, %c0_117] : memref<128x512xf32, #tpu.memory_space<vmem>>, vector<128x512xf32>
    %cst_118 = arith.constant dense<0.000000e+00> : vector<8x512xf32>
    %295 = tpu.matmul %292, %294, %cst_118 {dimension_numbers = #tpu.dot_dimension_numbers<[1], [0], [0], [1], [0, 0, 1, 1], [], []>} : vector<8x128xf32>, vector<128x512xf32>, vector<8x512xf32> -> vector<8x512xf32>
    %296 = arith.addf %293, %295 : vector<8x512xf32>
    %297 = vector.extract_strided_slice %296 {offsets = [0, 0], sizes = [8, 384], strides = [1, 1]} : vector<8x512xf32> to vector<8x384xf32>
    %298 = arith.negf %297 : vector<8x384xf32>
    %299 = math.exp %298 : vector<8x384xf32>
    %cst_119 = arith.constant 1.000000e+00 : f32
    %300 = vector.broadcast %cst_119 : f32 to vector<8x384xf32>
    %301 = arith.addf %300, %299 : vector<8x384xf32>
    %302 = arith.divf %300, %301 : vector<8x384xf32>
    %303 = vector.extract_strided_slice %296 {offsets = [0, 384], sizes = [8, 128], strides = [1, 1]} : vector<8x512xf32> to vector<8x128xf32>
    %304 = math.tanh %303 : vector<8x128xf32>
    %305 = vector.extract_strided_slice %302 {offsets = [0, 0], sizes = [8, 128], strides = [1, 1]} : vector<8x384xf32> to vector<8x128xf32>
    %306 = vector.extract_strided_slice %302 {offsets = [0, 128], sizes = [8, 128], strides = [1, 1]} : vector<8x384xf32> to vector<8x128xf32>
    %307 = vector.extract_strided_slice %302 {offsets = [0, 256], sizes = [8, 128], strides = [1, 1]} : vector<8x384xf32> to vector<8x128xf32>
    %308 = arith.mulf %306, %290 : vector<8x128xf32>
    %309 = arith.mulf %305, %304 : vector<8x128xf32>
    %310 = arith.addf %308, %309 : vector<8x128xf32>
    %311 = math.tanh %310 : vector<8x128xf32>
    %312 = arith.mulf %307, %311 : vector<8x128xf32>
    %c48_120 = arith.constant 48 : index
    %c0_121 = arith.constant 0 : index
    %313 = vector.load %arg10[%c48_120, %c0_121] : memref<64x512xf32, #tpu.memory_space<vmem>>, vector<8x512xf32>
    %c0_122 = arith.constant 0 : index
    %c0_123 = arith.constant 0 : index
    %314 = vector.load %arg6[%c0_122, %c0_123] : memref<128x512xf32, #tpu.memory_space<vmem>>, vector<128x512xf32>
    %cst_124 = arith.constant dense<0.000000e+00> : vector<8x512xf32>
    %315 = tpu.matmul %312, %314, %cst_124 {dimension_numbers = #tpu.dot_dimension_numbers<[1], [0], [0], [1], [0, 0, 1, 1], [], []>} : vector<8x128xf32>, vector<128x512xf32>, vector<8x512xf32> -> vector<8x512xf32>
    %316 = arith.addf %313, %315 : vector<8x512xf32>
    %317 = vector.extract_strided_slice %316 {offsets = [0, 0], sizes = [8, 384], strides = [1, 1]} : vector<8x512xf32> to vector<8x384xf32>
    %318 = arith.negf %317 : vector<8x384xf32>
    %319 = math.exp %318 : vector<8x384xf32>
    %cst_125 = arith.constant 1.000000e+00 : f32
    %320 = vector.broadcast %cst_125 : f32 to vector<8x384xf32>
    %321 = arith.addf %320, %319 : vector<8x384xf32>
    %322 = arith.divf %320, %321 : vector<8x384xf32>
    %323 = vector.extract_strided_slice %316 {offsets = [0, 384], sizes = [8, 128], strides = [1, 1]} : vector<8x512xf32> to vector<8x128xf32>
    %324 = math.tanh %323 : vector<8x128xf32>
    %325 = vector.extract_strided_slice %322 {offsets = [0, 0], sizes = [8, 128], strides = [1, 1]} : vector<8x384xf32> to vector<8x128xf32>
    %326 = vector.extract_strided_slice %322 {offsets = [0, 128], sizes = [8, 128], strides = [1, 1]} : vector<8x384xf32> to vector<8x128xf32>
    %327 = vector.extract_strided_slice %322 {offsets = [0, 256], sizes = [8, 128], strides = [1, 1]} : vector<8x384xf32> to vector<8x128xf32>
    %328 = arith.mulf %326, %310 : vector<8x128xf32>
    %329 = arith.mulf %325, %324 : vector<8x128xf32>
    %330 = arith.addf %328, %329 : vector<8x128xf32>
    %331 = math.tanh %330 : vector<8x128xf32>
    %332 = arith.mulf %327, %331 : vector<8x128xf32>
    %c56_126 = arith.constant 56 : index
    %c0_127 = arith.constant 0 : index
    %333 = vector.load %arg10[%c56_126, %c0_127] : memref<64x512xf32, #tpu.memory_space<vmem>>, vector<8x512xf32>
    %c0_128 = arith.constant 0 : index
    %c0_129 = arith.constant 0 : index
    %334 = vector.load %arg6[%c0_128, %c0_129] : memref<128x512xf32, #tpu.memory_space<vmem>>, vector<128x512xf32>
    %cst_130 = arith.constant dense<0.000000e+00> : vector<8x512xf32>
    %335 = tpu.matmul %332, %334, %cst_130 {dimension_numbers = #tpu.dot_dimension_numbers<[1], [0], [0], [1], [0, 0, 1, 1], [], []>} : vector<8x128xf32>, vector<128x512xf32>, vector<8x512xf32> -> vector<8x512xf32>
    %336 = arith.addf %333, %335 : vector<8x512xf32>
    %337 = vector.extract_strided_slice %336 {offsets = [0, 0], sizes = [8, 384], strides = [1, 1]} : vector<8x512xf32> to vector<8x384xf32>
    %338 = arith.negf %337 : vector<8x384xf32>
    %339 = math.exp %338 : vector<8x384xf32>
    %cst_131 = arith.constant 1.000000e+00 : f32
    %340 = vector.broadcast %cst_131 : f32 to vector<8x384xf32>
    %341 = arith.addf %340, %339 : vector<8x384xf32>
    %342 = arith.divf %340, %341 : vector<8x384xf32>
    %343 = vector.extract_strided_slice %336 {offsets = [0, 384], sizes = [8, 128], strides = [1, 1]} : vector<8x512xf32> to vector<8x128xf32>
    %344 = math.tanh %343 : vector<8x128xf32>
    %345 = vector.extract_strided_slice %342 {offsets = [0, 0], sizes = [8, 128], strides = [1, 1]} : vector<8x384xf32> to vector<8x128xf32>
    %346 = vector.extract_strided_slice %342 {offsets = [0, 128], sizes = [8, 128], strides = [1, 1]} : vector<8x384xf32> to vector<8x128xf32>
    %347 = vector.extract_strided_slice %342 {offsets = [0, 256], sizes = [8, 128], strides = [1, 1]} : vector<8x384xf32> to vector<8x128xf32>
    %348 = arith.mulf %346, %330 : vector<8x128xf32>
    %349 = arith.mulf %345, %344 : vector<8x128xf32>
    %350 = arith.addf %348, %349 : vector<8x128xf32>
    %351 = math.tanh %350 : vector<8x128xf32>
    %352 = arith.mulf %347, %351 : vector<8x128xf32>
    %c1 = arith.constant 1 : index
    %c0_132 = arith.constant 0 : index
    %c0_133 = arith.constant 0 : index
    %353 = vector.load %arg8[%c1, %c0_132, %c0_133] : memref<2x8x128xf32, #tpu.memory_space<vmem>>, vector<1x8x128xf32>
    %354 = vector.shape_cast %353 : vector<1x8x128xf32> to vector<8x128xf32>
    %355 = vector.shape_cast %352 : vector<8x128xf32> to vector<1x8x128xf32>
    tpu.vector_store %arg8[%c1, %c0_132, %c0_133], %355 {strides = array<i32>} : memref<2x8x128xf32, #tpu.memory_space<vmem>>, vector<1x8x128xf32>,
    %c1_134 = arith.constant 1 : index
    %c0_135 = arith.constant 0 : index
    %c0_136 = arith.constant 0 : index
    %356 = vector.load %arg9[%c1_134, %c0_135, %c0_136] : memref<2x8x128xf32, #tpu.memory_space<vmem>>, vector<1x8x128xf32>
    %357 = vector.shape_cast %356 : vector<1x8x128xf32> to vector<8x128xf32>
    %358 = vector.shape_cast %350 : vector<8x128xf32> to vector<1x8x128xf32>
    tpu.vector_store %arg9[%c1_134, %c0_135, %c0_136], %358 {strides = array<i32>} : memref<2x8x128xf32, #tpu.memory_space<vmem>>, vector<1x8x128xf32>,
    return
  }
  func.func @transform_0(%arg0: i32) -> (i32, i32, i32) {
    %c0_i32 = arith.constant 0 : i32
    %c0_i32_0 = arith.constant 0 : i32
    %c0_i32_1 = arith.constant 0 : i32
    return %arg0, %c0_i32, %c0_i32_0 : i32, i32, i32
  }
  func.func @transform_1(%arg0: i32) -> (i32, i32) {
    %c0_i32 = arith.constant 0 : i32
    %c0_i32_0 = arith.constant 0 : i32
    %c0_i32_1 = arith.constant 0 : i32
    return %c0_i32, %c0_i32_0 : i32, i32
  }
  func.func @transform_2(%arg0: i32) -> (i32, i32) {
    %c0_i32 = arith.constant 0 : i32
    %c0_i32_0 = arith.constant 0 : i32
    %c0_i32_1 = arith.constant 0 : i32
    return %c0_i32, %c0_i32_0 : i32, i32
  }
  func.func @transform_3(%arg0: i32) -> (i32, i32) {
    %c0_i32 = arith.constant 0 : i32
    %c0_i32_0 = arith.constant 0 : i32
    %c0_i32_1 = arith.constant 0 : i32
    return %c0_i32, %c0_i32_0 : i32, i32
  }
  func.func @transform_4(%arg0: i32) -> (i32, i32) {
    %c0_i32 = arith.constant 0 : i32
    %c0_i32_0 = arith.constant 0 : i32
    %c0_i32_1 = arith.constant 0 : i32
    return %c0_i32, %c0_i32_0 : i32, i32
  }
  func.func @transform_5(%arg0: i32) -> (i32, i32) {
    %c0_i32 = arith.constant 0 : i32
    %c0_i32_0 = arith.constant 0 : i32
    %c0_i32_1 = arith.constant 0 : i32
    return %c0_i32, %c0_i32_0 : i32, i32
  }
  func.func @transform_6(%arg0: i32) -> (i32, i32) {
    %c0_i32 = arith.constant 0 : i32
    %c0_i32_0 = arith.constant 0 : i32
    %c0_i32_1 = arith.constant 0 : i32
    return %c0_i32, %c0_i32_0 : i32, i32
  }
  func.func @transform_7(%arg0: i32) -> (i32, i32, i32) {
    %c0_i32 = arith.constant 0 : i32
    %c0_i32_0 = arith.constant 0 : i32
    %c0_i32_1 = arith.constant 0 : i32
    return %c0_i32, %arg0, %c0_i32_0 : i32, i32, i32
  }
  func.func @transform_8(%arg0: i32) -> (i32, i32, i32) {
    %c0_i32 = arith.constant 0 : i32
    %c0_i32_0 = arith.constant 0 : i32
    %c0_i32_1 = arith.constant 0 : i32
    return %c0_i32, %arg0, %c0_i32_0 : i32, i32, i32
  }
}

module attributes {stable_mosaic.version = 11 : i64} {
  func.func @_lstm_encoder_kernel(%arg0: i32, %arg1: memref<1x64x16xf32, #tpu.memory_space<vmem>>, %arg2: memref<16x512xf32, #tpu.memory_space<vmem>>, %arg3: memref<128x512xf32, #tpu.memory_space<vmem>>, %arg4: memref<1x512xf32, #tpu.memory_space<vmem>>, %arg5: memref<128x512xf32, #tpu.memory_space<vmem>>, %arg6: memref<128x512xf32, #tpu.memory_space<vmem>>, %arg7: memref<1x512xf32, #tpu.memory_space<vmem>>, %arg8: memref<2x8x128xf32, #tpu.memory_space<vmem>>, %arg9: memref<2x8x128xf32, #tpu.memory_space<vmem>>, %arg10: memref<64x512xf32, #tpu.memory_space<vmem>>, %arg11: memref<64x128xf32, #tpu.memory_space<vmem>>) attributes {dimension_semantics = [#tpu.dimension_semantics<parallel>], iteration_bounds = array<i64: 1>, scalar_prefetch = 0 : i64, scratch_operands = 2 : i64, tpu.core_type = #tpu.core_type<tc>, window_params = [{transform_indices = @transform_0, window_bounds = array<i64: 1, 64, 16>}, {pipeline_mode = #tpu.pipeline_mode<synchronous>, transform_indices = @transform_1, window_bounds = array<i64: 16, 512>}, {pipeline_mode = #tpu.pipeline_mode<synchronous>, transform_indices = @transform_2, window_bounds = array<i64: 128, 512>}, {pipeline_mode = #tpu.pipeline_mode<synchronous>, transform_indices = @transform_3, window_bounds = array<i64: 1, 512>}, {pipeline_mode = #tpu.pipeline_mode<synchronous>, transform_indices = @transform_4, window_bounds = array<i64: 128, 512>}, {pipeline_mode = #tpu.pipeline_mode<synchronous>, transform_indices = @transform_5, window_bounds = array<i64: 128, 512>}, {pipeline_mode = #tpu.pipeline_mode<synchronous>, transform_indices = @transform_6, window_bounds = array<i64: 1, 512>}, {transform_indices = @transform_7, window_bounds = array<i64: 2, 8, 128>}, {transform_indices = @transform_8, window_bounds = array<i64: 2, 8, 128>}]} {
    %c0 = arith.constant 0 : index
    %c0_0 = arith.constant 0 : index
    %0 = vector.load %arg4[%c0, %c0_0] : memref<1x512xf32, #tpu.memory_space<vmem>>, vector<1x512xf32>
    %cst = arith.constant 0.000000e+00 : f32
    %1 = vector.broadcast %cst : f32 to vector<8x128xf32>
    %cst_1 = arith.constant 0.000000e+00 : f32
    %2 = vector.broadcast %cst_1 : f32 to vector<8x128xf32>
    %c0_2 = arith.constant 0 : index
    %c0_3 = arith.constant 0 : index
    %c0_4 = arith.constant 0 : index
    %3 = vector.load %arg1[%c0_2, %c0_3, %c0_4] : memref<1x64x16xf32, #tpu.memory_space<vmem>>, vector<1x64x16xf32>
    %4 = vector.shape_cast %3 : vector<1x64x16xf32> to vector<64x16xf32>
    %c0_5 = arith.constant 0 : index
    %c0_6 = arith.constant 0 : index
    %5 = vector.load %arg2[%c0_5, %c0_6] : memref<16x512xf32, #tpu.memory_space<vmem>>, vector<16x512xf32>
    %cst_7 = arith.constant dense<0.000000e+00> : vector<64x512xf32>
    %6 = tpu.matmul %4, %5, %cst_7 {dimension_numbers = #tpu.dot_dimension_numbers<[1], [0], [0], [1], [0, 0, 1, 1], [], []>} : vector<64x16xf32>, vector<16x512xf32>, vector<64x512xf32> -> vector<64x512xf32>
    %7 = vector.broadcast %0 : vector<1x512xf32> to vector<64x512xf32>
    %8 = arith.addf %6, %7 : vector<64x512xf32>
    %c0_8 = arith.constant 0 : index
    %c0_9 = arith.constant 0 : index
    %9 = vector.load %arg10[%c0_8, %c0_9] : memref<64x512xf32, #tpu.memory_space<vmem>>, vector<64x512xf32>
    tpu.vector_store %arg10[%c0_8, %c0_9], %8 {strides = array<i32>} : memref<64x512xf32, #tpu.memory_space<vmem>>, vector<64x512xf32>,
    %c0_10 = arith.constant 0 : index
    %c0_11 = arith.constant 0 : index
    %10 = vector.load %arg10[%c0_10, %c0_11] : memref<64x512xf32, #tpu.memory_space<vmem>>, vector<8x512xf32>
    %c0_12 = arith.constant 0 : index
    %c0_13 = arith.constant 0 : index
    %11 = vector.load %arg3[%c0_12, %c0_13] : memref<128x512xf32, #tpu.memory_space<vmem>>, vector<128x512xf32>
    %cst_14 = arith.constant dense<0.000000e+00> : vector<8x512xf32>
    %12 = tpu.matmul %1, %11, %cst_14 {dimension_numbers = #tpu.dot_dimension_numbers<[1], [0], [0], [1], [0, 0, 1, 1], [], []>} : vector<8x128xf32>, vector<128x512xf32>, vector<8x512xf32> -> vector<8x512xf32>
    %13 = arith.addf %10, %12 : vector<8x512xf32>
    %14 = vector.extract_strided_slice %13 {offsets = [0, 0], sizes = [8, 384], strides = [1, 1]} : vector<8x512xf32> to vector<8x384xf32>
    %15 = arith.negf %14 : vector<8x384xf32>
    %16 = math.exp %15 : vector<8x384xf32>
    %cst_15 = arith.constant 1.000000e+00 : f32
    %17 = vector.broadcast %cst_15 : f32 to vector<8x384xf32>
    %18 = arith.addf %17, %16 : vector<8x384xf32>
    %19 = arith.divf %17, %18 : vector<8x384xf32>
    %20 = vector.extract_strided_slice %13 {offsets = [0, 384], sizes = [8, 128], strides = [1, 1]} : vector<8x512xf32> to vector<8x128xf32>
    %21 = math.tanh %20 : vector<8x128xf32>
    %22 = vector.extract_strided_slice %19 {offsets = [0, 0], sizes = [8, 128], strides = [1, 1]} : vector<8x384xf32> to vector<8x128xf32>
    %23 = vector.extract_strided_slice %19 {offsets = [0, 128], sizes = [8, 128], strides = [1, 1]} : vector<8x384xf32> to vector<8x128xf32>
    %24 = vector.extract_strided_slice %19 {offsets = [0, 256], sizes = [8, 128], strides = [1, 1]} : vector<8x384xf32> to vector<8x128xf32>
    %25 = arith.mulf %23, %2 : vector<8x128xf32>
    %26 = arith.mulf %22, %21 : vector<8x128xf32>
    %27 = arith.addf %25, %26 : vector<8x128xf32>
    %28 = math.tanh %27 : vector<8x128xf32>
    %29 = arith.mulf %24, %28 : vector<8x128xf32>
    %c0_16 = arith.constant 0 : index
    %c0_17 = arith.constant 0 : index
    %30 = vector.load %arg11[%c0_16, %c0_17] : memref<64x128xf32, #tpu.memory_space<vmem>>, vector<8x128xf32>
    tpu.vector_store %arg11[%c0_16, %c0_17], %29 {strides = array<i32>} : memref<64x128xf32, #tpu.memory_space<vmem>>, vector<8x128xf32>,
    %c8 = arith.constant 8 : index
    %c0_18 = arith.constant 0 : index
    %31 = vector.load %arg10[%c8, %c0_18] : memref<64x512xf32, #tpu.memory_space<vmem>>, vector<8x512xf32>
    %c0_19 = arith.constant 0 : index
    %c0_20 = arith.constant 0 : index
    %32 = vector.load %arg3[%c0_19, %c0_20] : memref<128x512xf32, #tpu.memory_space<vmem>>, vector<128x512xf32>
    %cst_21 = arith.constant dense<0.000000e+00> : vector<8x512xf32>
    %33 = tpu.matmul %29, %32, %cst_21 {dimension_numbers = #tpu.dot_dimension_numbers<[1], [0], [0], [1], [0, 0, 1, 1], [], []>} : vector<8x128xf32>, vector<128x512xf32>, vector<8x512xf32> -> vector<8x512xf32>
    %34 = arith.addf %31, %33 : vector<8x512xf32>
    %35 = vector.extract_strided_slice %34 {offsets = [0, 0], sizes = [8, 384], strides = [1, 1]} : vector<8x512xf32> to vector<8x384xf32>
    %36 = arith.negf %35 : vector<8x384xf32>
    %37 = math.exp %36 : vector<8x384xf32>
    %cst_22 = arith.constant 1.000000e+00 : f32
    %38 = vector.broadcast %cst_22 : f32 to vector<8x384xf32>
    %39 = arith.addf %38, %37 : vector<8x384xf32>
    %40 = arith.divf %38, %39 : vector<8x384xf32>
    %41 = vector.extract_strided_slice %34 {offsets = [0, 384], sizes = [8, 128], strides = [1, 1]} : vector<8x512xf32> to vector<8x128xf32>
    %42 = math.tanh %41 : vector<8x128xf32>
    %43 = vector.extract_strided_slice %40 {offsets = [0, 0], sizes = [8, 128], strides = [1, 1]} : vector<8x384xf32> to vector<8x128xf32>
    %44 = vector.extract_strided_slice %40 {offsets = [0, 128], sizes = [8, 128], strides = [1, 1]} : vector<8x384xf32> to vector<8x128xf32>
    %45 = vector.extract_strided_slice %40 {offsets = [0, 256], sizes = [8, 128], strides = [1, 1]} : vector<8x384xf32> to vector<8x128xf32>
    %46 = arith.mulf %44, %27 : vector<8x128xf32>
    %47 = arith.mulf %43, %42 : vector<8x128xf32>
    %48 = arith.addf %46, %47 : vector<8x128xf32>
    %49 = math.tanh %48 : vector<8x128xf32>
    %50 = arith.mulf %45, %49 : vector<8x128xf32>
    %c8_23 = arith.constant 8 : index
    %c0_24 = arith.constant 0 : index
    %51 = vector.load %arg11[%c8_23, %c0_24] : memref<64x128xf32, #tpu.memory_space<vmem>>, vector<8x128xf32>
    tpu.vector_store %arg11[%c8_23, %c0_24], %50 {strides = array<i32>} : memref<64x128xf32, #tpu.memory_space<vmem>>, vector<8x128xf32>,
    %c16 = arith.constant 16 : index
    %c0_25 = arith.constant 0 : index
    %52 = vector.load %arg10[%c16, %c0_25] : memref<64x512xf32, #tpu.memory_space<vmem>>, vector<8x512xf32>
    %c0_26 = arith.constant 0 : index
    %c0_27 = arith.constant 0 : index
    %53 = vector.load %arg3[%c0_26, %c0_27] : memref<128x512xf32, #tpu.memory_space<vmem>>, vector<128x512xf32>
    %cst_28 = arith.constant dense<0.000000e+00> : vector<8x512xf32>
    %54 = tpu.matmul %50, %53, %cst_28 {dimension_numbers = #tpu.dot_dimension_numbers<[1], [0], [0], [1], [0, 0, 1, 1], [], []>} : vector<8x128xf32>, vector<128x512xf32>, vector<8x512xf32> -> vector<8x512xf32>
    %55 = arith.addf %52, %54 : vector<8x512xf32>
    %56 = vector.extract_strided_slice %55 {offsets = [0, 0], sizes = [8, 384], strides = [1, 1]} : vector<8x512xf32> to vector<8x384xf32>
    %57 = arith.negf %56 : vector<8x384xf32>
    %58 = math.exp %57 : vector<8x384xf32>
    %cst_29 = arith.constant 1.000000e+00 : f32
    %59 = vector.broadcast %cst_29 : f32 to vector<8x384xf32>
    %60 = arith.addf %59, %58 : vector<8x384xf32>
    %61 = arith.divf %59, %60 : vector<8x384xf32>
    %62 = vector.extract_strided_slice %55 {offsets = [0, 384], sizes = [8, 128], strides = [1, 1]} : vector<8x512xf32> to vector<8x128xf32>
    %63 = math.tanh %62 : vector<8x128xf32>
    %64 = vector.extract_strided_slice %61 {offsets = [0, 0], sizes = [8, 128], strides = [1, 1]} : vector<8x384xf32> to vector<8x128xf32>
    %65 = vector.extract_strided_slice %61 {offsets = [0, 128], sizes = [8, 128], strides = [1, 1]} : vector<8x384xf32> to vector<8x128xf32>
    %66 = vector.extract_strided_slice %61 {offsets = [0, 256], sizes = [8, 128], strides = [1, 1]} : vector<8x384xf32> to vector<8x128xf32>
    %67 = arith.mulf %65, %48 : vector<8x128xf32>
    %68 = arith.mulf %64, %63 : vector<8x128xf32>
    %69 = arith.addf %67, %68 : vector<8x128xf32>
    %70 = math.tanh %69 : vector<8x128xf32>
    %71 = arith.mulf %66, %70 : vector<8x128xf32>
    %c16_30 = arith.constant 16 : index
    %c0_31 = arith.constant 0 : index
    %72 = vector.load %arg11[%c16_30, %c0_31] : memref<64x128xf32, #tpu.memory_space<vmem>>, vector<8x128xf32>
    tpu.vector_store %arg11[%c16_30, %c0_31], %71 {strides = array<i32>} : memref<64x128xf32, #tpu.memory_space<vmem>>, vector<8x128xf32>,
    %c24 = arith.constant 24 : index
    %c0_32 = arith.constant 0 : index
    %73 = vector.load %arg10[%c24, %c0_32] : memref<64x512xf32, #tpu.memory_space<vmem>>, vector<8x512xf32>
    %c0_33 = arith.constant 0 : index
    %c0_34 = arith.constant 0 : index
    %74 = vector.load %arg3[%c0_33, %c0_34] : memref<128x512xf32, #tpu.memory_space<vmem>>, vector<128x512xf32>
    %cst_35 = arith.constant dense<0.000000e+00> : vector<8x512xf32>
    %75 = tpu.matmul %71, %74, %cst_35 {dimension_numbers = #tpu.dot_dimension_numbers<[1], [0], [0], [1], [0, 0, 1, 1], [], []>} : vector<8x128xf32>, vector<128x512xf32>, vector<8x512xf32> -> vector<8x512xf32>
    %76 = arith.addf %73, %75 : vector<8x512xf32>
    %77 = vector.extract_strided_slice %76 {offsets = [0, 0], sizes = [8, 384], strides = [1, 1]} : vector<8x512xf32> to vector<8x384xf32>
    %78 = arith.negf %77 : vector<8x384xf32>
    %79 = math.exp %78 : vector<8x384xf32>
    %cst_36 = arith.constant 1.000000e+00 : f32
    %80 = vector.broadcast %cst_36 : f32 to vector<8x384xf32>
    %81 = arith.addf %80, %79 : vector<8x384xf32>
    %82 = arith.divf %80, %81 : vector<8x384xf32>
    %83 = vector.extract_strided_slice %76 {offsets = [0, 384], sizes = [8, 128], strides = [1, 1]} : vector<8x512xf32> to vector<8x128xf32>
    %84 = math.tanh %83 : vector<8x128xf32>
    %85 = vector.extract_strided_slice %82 {offsets = [0, 0], sizes = [8, 128], strides = [1, 1]} : vector<8x384xf32> to vector<8x128xf32>
    %86 = vector.extract_strided_slice %82 {offsets = [0, 128], sizes = [8, 128], strides = [1, 1]} : vector<8x384xf32> to vector<8x128xf32>
    %87 = vector.extract_strided_slice %82 {offsets = [0, 256], sizes = [8, 128], strides = [1, 1]} : vector<8x384xf32> to vector<8x128xf32>
    %88 = arith.mulf %86, %69 : vector<8x128xf32>
    %89 = arith.mulf %85, %84 : vector<8x128xf32>
    %90 = arith.addf %88, %89 : vector<8x128xf32>
    %91 = math.tanh %90 : vector<8x128xf32>
    %92 = arith.mulf %87, %91 : vector<8x128xf32>
    %c24_37 = arith.constant 24 : index
    %c0_38 = arith.constant 0 : index
    %93 = vector.load %arg11[%c24_37, %c0_38] : memref<64x128xf32, #tpu.memory_space<vmem>>, vector<8x128xf32>
    tpu.vector_store %arg11[%c24_37, %c0_38], %92 {strides = array<i32>} : memref<64x128xf32, #tpu.memory_space<vmem>>, vector<8x128xf32>,
    %c32 = arith.constant 32 : index
    %c0_39 = arith.constant 0 : index
    %94 = vector.load %arg10[%c32, %c0_39] : memref<64x512xf32, #tpu.memory_space<vmem>>, vector<8x512xf32>
    %c0_40 = arith.constant 0 : index
    %c0_41 = arith.constant 0 : index
    %95 = vector.load %arg3[%c0_40, %c0_41] : memref<128x512xf32, #tpu.memory_space<vmem>>, vector<128x512xf32>
    %cst_42 = arith.constant dense<0.000000e+00> : vector<8x512xf32>
    %96 = tpu.matmul %92, %95, %cst_42 {dimension_numbers = #tpu.dot_dimension_numbers<[1], [0], [0], [1], [0, 0, 1, 1], [], []>} : vector<8x128xf32>, vector<128x512xf32>, vector<8x512xf32> -> vector<8x512xf32>
    %97 = arith.addf %94, %96 : vector<8x512xf32>
    %98 = vector.extract_strided_slice %97 {offsets = [0, 0], sizes = [8, 384], strides = [1, 1]} : vector<8x512xf32> to vector<8x384xf32>
    %99 = arith.negf %98 : vector<8x384xf32>
    %100 = math.exp %99 : vector<8x384xf32>
    %cst_43 = arith.constant 1.000000e+00 : f32
    %101 = vector.broadcast %cst_43 : f32 to vector<8x384xf32>
    %102 = arith.addf %101, %100 : vector<8x384xf32>
    %103 = arith.divf %101, %102 : vector<8x384xf32>
    %104 = vector.extract_strided_slice %97 {offsets = [0, 384], sizes = [8, 128], strides = [1, 1]} : vector<8x512xf32> to vector<8x128xf32>
    %105 = math.tanh %104 : vector<8x128xf32>
    %106 = vector.extract_strided_slice %103 {offsets = [0, 0], sizes = [8, 128], strides = [1, 1]} : vector<8x384xf32> to vector<8x128xf32>
    %107 = vector.extract_strided_slice %103 {offsets = [0, 128], sizes = [8, 128], strides = [1, 1]} : vector<8x384xf32> to vector<8x128xf32>
    %108 = vector.extract_strided_slice %103 {offsets = [0, 256], sizes = [8, 128], strides = [1, 1]} : vector<8x384xf32> to vector<8x128xf32>
    %109 = arith.mulf %107, %90 : vector<8x128xf32>
    %110 = arith.mulf %106, %105 : vector<8x128xf32>
    %111 = arith.addf %109, %110 : vector<8x128xf32>
    %112 = math.tanh %111 : vector<8x128xf32>
    %113 = arith.mulf %108, %112 : vector<8x128xf32>
    %c32_44 = arith.constant 32 : index
    %c0_45 = arith.constant 0 : index
    %114 = vector.load %arg11[%c32_44, %c0_45] : memref<64x128xf32, #tpu.memory_space<vmem>>, vector<8x128xf32>
    tpu.vector_store %arg11[%c32_44, %c0_45], %113 {strides = array<i32>} : memref<64x128xf32, #tpu.memory_space<vmem>>, vector<8x128xf32>,
    %c40 = arith.constant 40 : index
    %c0_46 = arith.constant 0 : index
    %115 = vector.load %arg10[%c40, %c0_46] : memref<64x512xf32, #tpu.memory_space<vmem>>, vector<8x512xf32>
    %c0_47 = arith.constant 0 : index
    %c0_48 = arith.constant 0 : index
    %116 = vector.load %arg3[%c0_47, %c0_48] : memref<128x512xf32, #tpu.memory_space<vmem>>, vector<128x512xf32>
    %cst_49 = arith.constant dense<0.000000e+00> : vector<8x512xf32>
    %117 = tpu.matmul %113, %116, %cst_49 {dimension_numbers = #tpu.dot_dimension_numbers<[1], [0], [0], [1], [0, 0, 1, 1], [], []>} : vector<8x128xf32>, vector<128x512xf32>, vector<8x512xf32> -> vector<8x512xf32>
    %118 = arith.addf %115, %117 : vector<8x512xf32>
    %119 = vector.extract_strided_slice %118 {offsets = [0, 0], sizes = [8, 384], strides = [1, 1]} : vector<8x512xf32> to vector<8x384xf32>
    %120 = arith.negf %119 : vector<8x384xf32>
    %121 = math.exp %120 : vector<8x384xf32>
    %cst_50 = arith.constant 1.000000e+00 : f32
    %122 = vector.broadcast %cst_50 : f32 to vector<8x384xf32>
    %123 = arith.addf %122, %121 : vector<8x384xf32>
    %124 = arith.divf %122, %123 : vector<8x384xf32>
    %125 = vector.extract_strided_slice %118 {offsets = [0, 384], sizes = [8, 128], strides = [1, 1]} : vector<8x512xf32> to vector<8x128xf32>
    %126 = math.tanh %125 : vector<8x128xf32>
    %127 = vector.extract_strided_slice %124 {offsets = [0, 0], sizes = [8, 128], strides = [1, 1]} : vector<8x384xf32> to vector<8x128xf32>
    %128 = vector.extract_strided_slice %124 {offsets = [0, 128], sizes = [8, 128], strides = [1, 1]} : vector<8x384xf32> to vector<8x128xf32>
    %129 = vector.extract_strided_slice %124 {offsets = [0, 256], sizes = [8, 128], strides = [1, 1]} : vector<8x384xf32> to vector<8x128xf32>
    %130 = arith.mulf %128, %111 : vector<8x128xf32>
    %131 = arith.mulf %127, %126 : vector<8x128xf32>
    %132 = arith.addf %130, %131 : vector<8x128xf32>
    %133 = math.tanh %132 : vector<8x128xf32>
    %134 = arith.mulf %129, %133 : vector<8x128xf32>
    %c40_51 = arith.constant 40 : index
    %c0_52 = arith.constant 0 : index
    %135 = vector.load %arg11[%c40_51, %c0_52] : memref<64x128xf32, #tpu.memory_space<vmem>>, vector<8x128xf32>
    tpu.vector_store %arg11[%c40_51, %c0_52], %134 {strides = array<i32>} : memref<64x128xf32, #tpu.memory_space<vmem>>, vector<8x128xf32>,
    %c48 = arith.constant 48 : index
    %c0_53 = arith.constant 0 : index
    %136 = vector.load %arg10[%c48, %c0_53] : memref<64x512xf32, #tpu.memory_space<vmem>>, vector<8x512xf32>
    %c0_54 = arith.constant 0 : index
    %c0_55 = arith.constant 0 : index
    %137 = vector.load %arg3[%c0_54, %c0_55] : memref<128x512xf32, #tpu.memory_space<vmem>>, vector<128x512xf32>
    %cst_56 = arith.constant dense<0.000000e+00> : vector<8x512xf32>
    %138 = tpu.matmul %134, %137, %cst_56 {dimension_numbers = #tpu.dot_dimension_numbers<[1], [0], [0], [1], [0, 0, 1, 1], [], []>} : vector<8x128xf32>, vector<128x512xf32>, vector<8x512xf32> -> vector<8x512xf32>
    %139 = arith.addf %136, %138 : vector<8x512xf32>
    %140 = vector.extract_strided_slice %139 {offsets = [0, 0], sizes = [8, 384], strides = [1, 1]} : vector<8x512xf32> to vector<8x384xf32>
    %141 = arith.negf %140 : vector<8x384xf32>
    %142 = math.exp %141 : vector<8x384xf32>
    %cst_57 = arith.constant 1.000000e+00 : f32
    %143 = vector.broadcast %cst_57 : f32 to vector<8x384xf32>
    %144 = arith.addf %143, %142 : vector<8x384xf32>
    %145 = arith.divf %143, %144 : vector<8x384xf32>
    %146 = vector.extract_strided_slice %139 {offsets = [0, 384], sizes = [8, 128], strides = [1, 1]} : vector<8x512xf32> to vector<8x128xf32>
    %147 = math.tanh %146 : vector<8x128xf32>
    %148 = vector.extract_strided_slice %145 {offsets = [0, 0], sizes = [8, 128], strides = [1, 1]} : vector<8x384xf32> to vector<8x128xf32>
    %149 = vector.extract_strided_slice %145 {offsets = [0, 128], sizes = [8, 128], strides = [1, 1]} : vector<8x384xf32> to vector<8x128xf32>
    %150 = vector.extract_strided_slice %145 {offsets = [0, 256], sizes = [8, 128], strides = [1, 1]} : vector<8x384xf32> to vector<8x128xf32>
    %151 = arith.mulf %149, %132 : vector<8x128xf32>
    %152 = arith.mulf %148, %147 : vector<8x128xf32>
    %153 = arith.addf %151, %152 : vector<8x128xf32>
    %154 = math.tanh %153 : vector<8x128xf32>
    %155 = arith.mulf %150, %154 : vector<8x128xf32>
    %c48_58 = arith.constant 48 : index
    %c0_59 = arith.constant 0 : index
    %156 = vector.load %arg11[%c48_58, %c0_59] : memref<64x128xf32, #tpu.memory_space<vmem>>, vector<8x128xf32>
    tpu.vector_store %arg11[%c48_58, %c0_59], %155 {strides = array<i32>} : memref<64x128xf32, #tpu.memory_space<vmem>>, vector<8x128xf32>,
    %c56 = arith.constant 56 : index
    %c0_60 = arith.constant 0 : index
    %157 = vector.load %arg10[%c56, %c0_60] : memref<64x512xf32, #tpu.memory_space<vmem>>, vector<8x512xf32>
    %c0_61 = arith.constant 0 : index
    %c0_62 = arith.constant 0 : index
    %158 = vector.load %arg3[%c0_61, %c0_62] : memref<128x512xf32, #tpu.memory_space<vmem>>, vector<128x512xf32>
    %cst_63 = arith.constant dense<0.000000e+00> : vector<8x512xf32>
    %159 = tpu.matmul %155, %158, %cst_63 {dimension_numbers = #tpu.dot_dimension_numbers<[1], [0], [0], [1], [0, 0, 1, 1], [], []>} : vector<8x128xf32>, vector<128x512xf32>, vector<8x512xf32> -> vector<8x512xf32>
    %160 = arith.addf %157, %159 : vector<8x512xf32>
    %161 = vector.extract_strided_slice %160 {offsets = [0, 0], sizes = [8, 384], strides = [1, 1]} : vector<8x512xf32> to vector<8x384xf32>
    %162 = arith.negf %161 : vector<8x384xf32>
    %163 = math.exp %162 : vector<8x384xf32>
    %cst_64 = arith.constant 1.000000e+00 : f32
    %164 = vector.broadcast %cst_64 : f32 to vector<8x384xf32>
    %165 = arith.addf %164, %163 : vector<8x384xf32>
    %166 = arith.divf %164, %165 : vector<8x384xf32>
    %167 = vector.extract_strided_slice %160 {offsets = [0, 384], sizes = [8, 128], strides = [1, 1]} : vector<8x512xf32> to vector<8x128xf32>
    %168 = math.tanh %167 : vector<8x128xf32>
    %169 = vector.extract_strided_slice %166 {offsets = [0, 0], sizes = [8, 128], strides = [1, 1]} : vector<8x384xf32> to vector<8x128xf32>
    %170 = vector.extract_strided_slice %166 {offsets = [0, 128], sizes = [8, 128], strides = [1, 1]} : vector<8x384xf32> to vector<8x128xf32>
    %171 = vector.extract_strided_slice %166 {offsets = [0, 256], sizes = [8, 128], strides = [1, 1]} : vector<8x384xf32> to vector<8x128xf32>
    %172 = arith.mulf %170, %153 : vector<8x128xf32>
    %173 = arith.mulf %169, %168 : vector<8x128xf32>
    %174 = arith.addf %172, %173 : vector<8x128xf32>
    %175 = math.tanh %174 : vector<8x128xf32>
    %176 = arith.mulf %171, %175 : vector<8x128xf32>
    %c56_65 = arith.constant 56 : index
    %c0_66 = arith.constant 0 : index
    %177 = vector.load %arg11[%c56_65, %c0_66] : memref<64x128xf32, #tpu.memory_space<vmem>>, vector<8x128xf32>
    tpu.vector_store %arg11[%c56_65, %c0_66], %176 {strides = array<i32>} : memref<64x128xf32, #tpu.memory_space<vmem>>, vector<8x128xf32>,
    %c0_67 = arith.constant 0 : index
    %c0_68 = arith.constant 0 : index
    %c0_69 = arith.constant 0 : index
    %178 = vector.load %arg8[%c0_67, %c0_68, %c0_69] : memref<2x8x128xf32, #tpu.memory_space<vmem>>, vector<1x8x128xf32>
    %179 = vector.shape_cast %178 : vector<1x8x128xf32> to vector<8x128xf32>
    %180 = vector.shape_cast %176 : vector<8x128xf32> to vector<1x8x128xf32>
    tpu.vector_store %arg8[%c0_67, %c0_68, %c0_69], %180 {strides = array<i32>} : memref<2x8x128xf32, #tpu.memory_space<vmem>>, vector<1x8x128xf32>,
    %c0_70 = arith.constant 0 : index
    %c0_71 = arith.constant 0 : index
    %c0_72 = arith.constant 0 : index
    %181 = vector.load %arg9[%c0_70, %c0_71, %c0_72] : memref<2x8x128xf32, #tpu.memory_space<vmem>>, vector<1x8x128xf32>
    %182 = vector.shape_cast %181 : vector<1x8x128xf32> to vector<8x128xf32>
    %183 = vector.shape_cast %174 : vector<8x128xf32> to vector<1x8x128xf32>
    tpu.vector_store %arg9[%c0_70, %c0_71, %c0_72], %183 {strides = array<i32>} : memref<2x8x128xf32, #tpu.memory_space<vmem>>, vector<1x8x128xf32>,
    %c0_73 = arith.constant 0 : index
    %c0_74 = arith.constant 0 : index
    %184 = vector.load %arg7[%c0_73, %c0_74] : memref<1x512xf32, #tpu.memory_space<vmem>>, vector<1x512xf32>
    %cst_75 = arith.constant 0.000000e+00 : f32
    %185 = vector.broadcast %cst_75 : f32 to vector<8x128xf32>
    %cst_76 = arith.constant 0.000000e+00 : f32
    %186 = vector.broadcast %cst_76 : f32 to vector<8x128xf32>
    %c0_77 = arith.constant 0 : index
    %c0_78 = arith.constant 0 : index
    %187 = vector.load %arg11[%c0_77, %c0_78] : memref<64x128xf32, #tpu.memory_space<vmem>>, vector<64x128xf32>
    %c0_79 = arith.constant 0 : index
    %c0_80 = arith.constant 0 : index
    %188 = vector.load %arg5[%c0_79, %c0_80] : memref<128x512xf32, #tpu.memory_space<vmem>>, vector<128x512xf32>
    %cst_81 = arith.constant dense<0.000000e+00> : vector<64x512xf32>
    %189 = tpu.matmul %187, %188, %cst_81 {dimension_numbers = #tpu.dot_dimension_numbers<[1], [0], [0], [1], [0, 0, 1, 1], [], []>} : vector<64x128xf32>, vector<128x512xf32>, vector<64x512xf32> -> vector<64x512xf32>
    %190 = vector.broadcast %184 : vector<1x512xf32> to vector<64x512xf32>
    %191 = arith.addf %189, %190 : vector<64x512xf32>
    %c0_82 = arith.constant 0 : index
    %c0_83 = arith.constant 0 : index
    %192 = vector.load %arg10[%c0_82, %c0_83] : memref<64x512xf32, #tpu.memory_space<vmem>>, vector<64x512xf32>
    tpu.vector_store %arg10[%c0_82, %c0_83], %191 {strides = array<i32>} : memref<64x512xf32, #tpu.memory_space<vmem>>, vector<64x512xf32>,
    %c0_84 = arith.constant 0 : index
    %c0_85 = arith.constant 0 : index
    %193 = vector.load %arg10[%c0_84, %c0_85] : memref<64x512xf32, #tpu.memory_space<vmem>>, vector<8x512xf32>
    %c0_86 = arith.constant 0 : index
    %c0_87 = arith.constant 0 : index
    %194 = vector.load %arg6[%c0_86, %c0_87] : memref<128x512xf32, #tpu.memory_space<vmem>>, vector<128x512xf32>
    %cst_88 = arith.constant dense<0.000000e+00> : vector<8x512xf32>
    %195 = tpu.matmul %185, %194, %cst_88 {dimension_numbers = #tpu.dot_dimension_numbers<[1], [0], [0], [1], [0, 0, 1, 1], [], []>} : vector<8x128xf32>, vector<128x512xf32>, vector<8x512xf32> -> vector<8x512xf32>
    %196 = arith.addf %193, %195 : vector<8x512xf32>
    %197 = vector.extract_strided_slice %196 {offsets = [0, 0], sizes = [8, 384], strides = [1, 1]} : vector<8x512xf32> to vector<8x384xf32>
    %198 = arith.negf %197 : vector<8x384xf32>
    %199 = math.exp %198 : vector<8x384xf32>
    %cst_89 = arith.constant 1.000000e+00 : f32
    %200 = vector.broadcast %cst_89 : f32 to vector<8x384xf32>
    %201 = arith.addf %200, %199 : vector<8x384xf32>
    %202 = arith.divf %200, %201 : vector<8x384xf32>
    %203 = vector.extract_strided_slice %196 {offsets = [0, 384], sizes = [8, 128], strides = [1, 1]} : vector<8x512xf32> to vector<8x128xf32>
    %204 = math.tanh %203 : vector<8x128xf32>
    %205 = vector.extract_strided_slice %202 {offsets = [0, 0], sizes = [8, 128], strides = [1, 1]} : vector<8x384xf32> to vector<8x128xf32>
    %206 = vector.extract_strided_slice %202 {offsets = [0, 128], sizes = [8, 128], strides = [1, 1]} : vector<8x384xf32> to vector<8x128xf32>
    %207 = vector.extract_strided_slice %202 {offsets = [0, 256], sizes = [8, 128], strides = [1, 1]} : vector<8x384xf32> to vector<8x128xf32>
    %208 = arith.mulf %206, %186 : vector<8x128xf32>
    %209 = arith.mulf %205, %204 : vector<8x128xf32>
    %210 = arith.addf %208, %209 : vector<8x128xf32>
    %211 = math.tanh %210 : vector<8x128xf32>
    %212 = arith.mulf %207, %211 : vector<8x128xf32>
    %c8_90 = arith.constant 8 : index
    %c0_91 = arith.constant 0 : index
    %213 = vector.load %arg10[%c8_90, %c0_91] : memref<64x512xf32, #tpu.memory_space<vmem>>, vector<8x512xf32>
    %c0_92 = arith.constant 0 : index
    %c0_93 = arith.constant 0 : index
    %214 = vector.load %arg6[%c0_92, %c0_93] : memref<128x512xf32, #tpu.memory_space<vmem>>, vector<128x512xf32>
    %cst_94 = arith.constant dense<0.000000e+00> : vector<8x512xf32>
    %215 = tpu.matmul %212, %214, %cst_94 {dimension_numbers = #tpu.dot_dimension_numbers<[1], [0], [0], [1], [0, 0, 1, 1], [], []>} : vector<8x128xf32>, vector<128x512xf32>, vector<8x512xf32> -> vector<8x512xf32>
    %216 = arith.addf %213, %215 : vector<8x512xf32>
    %217 = vector.extract_strided_slice %216 {offsets = [0, 0], sizes = [8, 384], strides = [1, 1]} : vector<8x512xf32> to vector<8x384xf32>
    %218 = arith.negf %217 : vector<8x384xf32>
    %219 = math.exp %218 : vector<8x384xf32>
    %cst_95 = arith.constant 1.000000e+00 : f32
    %220 = vector.broadcast %cst_95 : f32 to vector<8x384xf32>
    %221 = arith.addf %220, %219 : vector<8x384xf32>
    %222 = arith.divf %220, %221 : vector<8x384xf32>
    %223 = vector.extract_strided_slice %216 {offsets = [0, 384], sizes = [8, 128], strides = [1, 1]} : vector<8x512xf32> to vector<8x128xf32>
    %224 = math.tanh %223 : vector<8x128xf32>
    %225 = vector.extract_strided_slice %222 {offsets = [0, 0], sizes = [8, 128], strides = [1, 1]} : vector<8x384xf32> to vector<8x128xf32>
    %226 = vector.extract_strided_slice %222 {offsets = [0, 128], sizes = [8, 128], strides = [1, 1]} : vector<8x384xf32> to vector<8x128xf32>
    %227 = vector.extract_strided_slice %222 {offsets = [0, 256], sizes = [8, 128], strides = [1, 1]} : vector<8x384xf32> to vector<8x128xf32>
    %228 = arith.mulf %226, %210 : vector<8x128xf32>
    %229 = arith.mulf %225, %224 : vector<8x128xf32>
    %230 = arith.addf %228, %229 : vector<8x128xf32>
    %231 = math.tanh %230 : vector<8x128xf32>
    %232 = arith.mulf %227, %231 : vector<8x128xf32>
    %c16_96 = arith.constant 16 : index
    %c0_97 = arith.constant 0 : index
    %233 = vector.load %arg10[%c16_96, %c0_97] : memref<64x512xf32, #tpu.memory_space<vmem>>, vector<8x512xf32>
    %c0_98 = arith.constant 0 : index
    %c0_99 = arith.constant 0 : index
    %234 = vector.load %arg6[%c0_98, %c0_99] : memref<128x512xf32, #tpu.memory_space<vmem>>, vector<128x512xf32>
    %cst_100 = arith.constant dense<0.000000e+00> : vector<8x512xf32>
    %235 = tpu.matmul %232, %234, %cst_100 {dimension_numbers = #tpu.dot_dimension_numbers<[1], [0], [0], [1], [0, 0, 1, 1], [], []>} : vector<8x128xf32>, vector<128x512xf32>, vector<8x512xf32> -> vector<8x512xf32>
    %236 = arith.addf %233, %235 : vector<8x512xf32>
    %237 = vector.extract_strided_slice %236 {offsets = [0, 0], sizes = [8, 384], strides = [1, 1]} : vector<8x512xf32> to vector<8x384xf32>
    %238 = arith.negf %237 : vector<8x384xf32>
    %239 = math.exp %238 : vector<8x384xf32>
    %cst_101 = arith.constant 1.000000e+00 : f32
    %240 = vector.broadcast %cst_101 : f32 to vector<8x384xf32>
    %241 = arith.addf %240, %239 : vector<8x384xf32>
    %242 = arith.divf %240, %241 : vector<8x384xf32>
    %243 = vector.extract_strided_slice %236 {offsets = [0, 384], sizes = [8, 128], strides = [1, 1]} : vector<8x512xf32> to vector<8x128xf32>
    %244 = math.tanh %243 : vector<8x128xf32>
    %245 = vector.extract_strided_slice %242 {offsets = [0, 0], sizes = [8, 128], strides = [1, 1]} : vector<8x384xf32> to vector<8x128xf32>
    %246 = vector.extract_strided_slice %242 {offsets = [0, 128], sizes = [8, 128], strides = [1, 1]} : vector<8x384xf32> to vector<8x128xf32>
    %247 = vector.extract_strided_slice %242 {offsets = [0, 256], sizes = [8, 128], strides = [1, 1]} : vector<8x384xf32> to vector<8x128xf32>
    %248 = arith.mulf %246, %230 : vector<8x128xf32>
    %249 = arith.mulf %245, %244 : vector<8x128xf32>
    %250 = arith.addf %248, %249 : vector<8x128xf32>
    %251 = math.tanh %250 : vector<8x128xf32>
    %252 = arith.mulf %247, %251 : vector<8x128xf32>
    %c24_102 = arith.constant 24 : index
    %c0_103 = arith.constant 0 : index
    %253 = vector.load %arg10[%c24_102, %c0_103] : memref<64x512xf32, #tpu.memory_space<vmem>>, vector<8x512xf32>
    %c0_104 = arith.constant 0 : index
    %c0_105 = arith.constant 0 : index
    %254 = vector.load %arg6[%c0_104, %c0_105] : memref<128x512xf32, #tpu.memory_space<vmem>>, vector<128x512xf32>
    %cst_106 = arith.constant dense<0.000000e+00> : vector<8x512xf32>
    %255 = tpu.matmul %252, %254, %cst_106 {dimension_numbers = #tpu.dot_dimension_numbers<[1], [0], [0], [1], [0, 0, 1, 1], [], []>} : vector<8x128xf32>, vector<128x512xf32>, vector<8x512xf32> -> vector<8x512xf32>
    %256 = arith.addf %253, %255 : vector<8x512xf32>
    %257 = vector.extract_strided_slice %256 {offsets = [0, 0], sizes = [8, 384], strides = [1, 1]} : vector<8x512xf32> to vector<8x384xf32>
    %258 = arith.negf %257 : vector<8x384xf32>
    %259 = math.exp %258 : vector<8x384xf32>
    %cst_107 = arith.constant 1.000000e+00 : f32
    %260 = vector.broadcast %cst_107 : f32 to vector<8x384xf32>
    %261 = arith.addf %260, %259 : vector<8x384xf32>
    %262 = arith.divf %260, %261 : vector<8x384xf32>
    %263 = vector.extract_strided_slice %256 {offsets = [0, 384], sizes = [8, 128], strides = [1, 1]} : vector<8x512xf32> to vector<8x128xf32>
    %264 = math.tanh %263 : vector<8x128xf32>
    %265 = vector.extract_strided_slice %262 {offsets = [0, 0], sizes = [8, 128], strides = [1, 1]} : vector<8x384xf32> to vector<8x128xf32>
    %266 = vector.extract_strided_slice %262 {offsets = [0, 128], sizes = [8, 128], strides = [1, 1]} : vector<8x384xf32> to vector<8x128xf32>
    %267 = vector.extract_strided_slice %262 {offsets = [0, 256], sizes = [8, 128], strides = [1, 1]} : vector<8x384xf32> to vector<8x128xf32>
    %268 = arith.mulf %266, %250 : vector<8x128xf32>
    %269 = arith.mulf %265, %264 : vector<8x128xf32>
    %270 = arith.addf %268, %269 : vector<8x128xf32>
    %271 = math.tanh %270 : vector<8x128xf32>
    %272 = arith.mulf %267, %271 : vector<8x128xf32>
    %c32_108 = arith.constant 32 : index
    %c0_109 = arith.constant 0 : index
    %273 = vector.load %arg10[%c32_108, %c0_109] : memref<64x512xf32, #tpu.memory_space<vmem>>, vector<8x512xf32>
    %c0_110 = arith.constant 0 : index
    %c0_111 = arith.constant 0 : index
    %274 = vector.load %arg6[%c0_110, %c0_111] : memref<128x512xf32, #tpu.memory_space<vmem>>, vector<128x512xf32>
    %cst_112 = arith.constant dense<0.000000e+00> : vector<8x512xf32>
    %275 = tpu.matmul %272, %274, %cst_112 {dimension_numbers = #tpu.dot_dimension_numbers<[1], [0], [0], [1], [0, 0, 1, 1], [], []>} : vector<8x128xf32>, vector<128x512xf32>, vector<8x512xf32> -> vector<8x512xf32>
    %276 = arith.addf %273, %275 : vector<8x512xf32>
    %277 = vector.extract_strided_slice %276 {offsets = [0, 0], sizes = [8, 384], strides = [1, 1]} : vector<8x512xf32> to vector<8x384xf32>
    %278 = arith.negf %277 : vector<8x384xf32>
    %279 = math.exp %278 : vector<8x384xf32>
    %cst_113 = arith.constant 1.000000e+00 : f32
    %280 = vector.broadcast %cst_113 : f32 to vector<8x384xf32>
    %281 = arith.addf %280, %279 : vector<8x384xf32>
    %282 = arith.divf %280, %281 : vector<8x384xf32>
    %283 = vector.extract_strided_slice %276 {offsets = [0, 384], sizes = [8, 128], strides = [1, 1]} : vector<8x512xf32> to vector<8x128xf32>
    %284 = math.tanh %283 : vector<8x128xf32>
    %285 = vector.extract_strided_slice %282 {offsets = [0, 0], sizes = [8, 128], strides = [1, 1]} : vector<8x384xf32> to vector<8x128xf32>
    %286 = vector.extract_strided_slice %282 {offsets = [0, 128], sizes = [8, 128], strides = [1, 1]} : vector<8x384xf32> to vector<8x128xf32>
    %287 = vector.extract_strided_slice %282 {offsets = [0, 256], sizes = [8, 128], strides = [1, 1]} : vector<8x384xf32> to vector<8x128xf32>
    %288 = arith.mulf %286, %270 : vector<8x128xf32>
    %289 = arith.mulf %285, %284 : vector<8x128xf32>
    %290 = arith.addf %288, %289 : vector<8x128xf32>
    %291 = math.tanh %290 : vector<8x128xf32>
    %292 = arith.mulf %287, %291 : vector<8x128xf32>
    %c40_114 = arith.constant 40 : index
    %c0_115 = arith.constant 0 : index
    %293 = vector.load %arg10[%c40_114, %c0_115] : memref<64x512xf32, #tpu.memory_space<vmem>>, vector<8x512xf32>
    %c0_116 = arith.constant 0 : index
    %c0_117 = arith.constant 0 : index
    %294 = vector.load %arg6[%c0_116, %c0_117] : memref<128x512xf32, #tpu.memory_space<vmem>>, vector<128x512xf32>
    %cst_118 = arith.constant dense<0.000000e+00> : vector<8x512xf32>
    %295 = tpu.matmul %292, %294, %cst_118 {dimension_numbers = #tpu.dot_dimension_numbers<[1], [0], [0], [1], [0, 0, 1, 1], [], []>} : vector<8x128xf32>, vector<128x512xf32>, vector<8x512xf32> -> vector<8x512xf32>
    %296 = arith.addf %293, %295 : vector<8x512xf32>
    %297 = vector.extract_strided_slice %296 {offsets = [0, 0], sizes = [8, 384], strides = [1, 1]} : vector<8x512xf32> to vector<8x384xf32>
    %298 = arith.negf %297 : vector<8x384xf32>
    %299 = math.exp %298 : vector<8x384xf32>
    %cst_119 = arith.constant 1.000000e+00 : f32
    %300 = vector.broadcast %cst_119 : f32 to vector<8x384xf32>
    %301 = arith.addf %300, %299 : vector<8x384xf32>
    %302 = arith.divf %300, %301 : vector<8x384xf32>
    %303 = vector.extract_strided_slice %296 {offsets = [0, 384], sizes = [8, 128], strides = [1, 1]} : vector<8x512xf32> to vector<8x128xf32>
    %304 = math.tanh %303 : vector<8x128xf32>
    %305 = vector.extract_strided_slice %302 {offsets = [0, 0], sizes = [8, 128], strides = [1, 1]} : vector<8x384xf32> to vector<8x128xf32>
    %306 = vector.extract_strided_slice %302 {offsets = [0, 128], sizes = [8, 128], strides = [1, 1]} : vector<8x384xf32> to vector<8x128xf32>
    %307 = vector.extract_strided_slice %302 {offsets = [0, 256], sizes = [8, 128], strides = [1, 1]} : vector<8x384xf32> to vector<8x128xf32>
    %308 = arith.mulf %306, %290 : vector<8x128xf32>
    %309 = arith.mulf %305, %304 : vector<8x128xf32>
    %310 = arith.addf %308, %309 : vector<8x128xf32>
    %311 = math.tanh %310 : vector<8x128xf32>
    %312 = arith.mulf %307, %311 : vector<8x128xf32>
    %c48_120 = arith.constant 48 : index
    %c0_121 = arith.constant 0 : index
    %313 = vector.load %arg10[%c48_120, %c0_121] : memref<64x512xf32, #tpu.memory_space<vmem>>, vector<8x512xf32>
    %c0_122 = arith.constant 0 : index
    %c0_123 = arith.constant 0 : index
    %314 = vector.load %arg6[%c0_122, %c0_123] : memref<128x512xf32, #tpu.memory_space<vmem>>, vector<128x512xf32>
    %cst_124 = arith.constant dense<0.000000e+00> : vector<8x512xf32>
    %315 = tpu.matmul %312, %314, %cst_124 {dimension_numbers = #tpu.dot_dimension_numbers<[1], [0], [0], [1], [0, 0, 1, 1], [], []>} : vector<8x128xf32>, vector<128x512xf32>, vector<8x512xf32> -> vector<8x512xf32>
    %316 = arith.addf %313, %315 : vector<8x512xf32>
    %317 = vector.extract_strided_slice %316 {offsets = [0, 0], sizes = [8, 384], strides = [1, 1]} : vector<8x512xf32> to vector<8x384xf32>
    %318 = arith.negf %317 : vector<8x384xf32>
    %319 = math.exp %318 : vector<8x384xf32>
    %cst_125 = arith.constant 1.000000e+00 : f32
    %320 = vector.broadcast %cst_125 : f32 to vector<8x384xf32>
    %321 = arith.addf %320, %319 : vector<8x384xf32>
    %322 = arith.divf %320, %321 : vector<8x384xf32>
    %323 = vector.extract_strided_slice %316 {offsets = [0, 384], sizes = [8, 128], strides = [1, 1]} : vector<8x512xf32> to vector<8x128xf32>
    %324 = math.tanh %323 : vector<8x128xf32>
    %325 = vector.extract_strided_slice %322 {offsets = [0, 0], sizes = [8, 128], strides = [1, 1]} : vector<8x384xf32> to vector<8x128xf32>
    %326 = vector.extract_strided_slice %322 {offsets = [0, 128], sizes = [8, 128], strides = [1, 1]} : vector<8x384xf32> to vector<8x128xf32>
    %327 = vector.extract_strided_slice %322 {offsets = [0, 256], sizes = [8, 128], strides = [1, 1]} : vector<8x384xf32> to vector<8x128xf32>
    %328 = arith.mulf %326, %310 : vector<8x128xf32>
    %329 = arith.mulf %325, %324 : vector<8x128xf32>
    %330 = arith.addf %328, %329 : vector<8x128xf32>
    %331 = math.tanh %330 : vector<8x128xf32>
    %332 = arith.mulf %327, %331 : vector<8x128xf32>
    %c56_126 = arith.constant 56 : index
    %c0_127 = arith.constant 0 : index
    %333 = vector.load %arg10[%c56_126, %c0_127] : memref<64x512xf32, #tpu.memory_space<vmem>>, vector<8x512xf32>
    %c0_128 = arith.constant 0 : index
    %c0_129 = arith.constant 0 : index
    %334 = vector.load %arg6[%c0_128, %c0_129] : memref<128x512xf32, #tpu.memory_space<vmem>>, vector<128x512xf32>
    %cst_130 = arith.constant dense<0.000000e+00> : vector<8x512xf32>
    %335 = tpu.matmul %332, %334, %cst_130 {dimension_numbers = #tpu.dot_dimension_numbers<[1], [0], [0], [1], [0, 0, 1, 1], [], []>} : vector<8x128xf32>, vector<128x512xf32>, vector<8x512xf32> -> vector<8x512xf32>
    %336 = arith.addf %333, %335 : vector<8x512xf32>
    %337 = vector.extract_strided_slice %336 {offsets = [0, 0], sizes = [8, 384], strides = [1, 1]} : vector<8x512xf32> to vector<8x384xf32>
    %338 = arith.negf %337 : vector<8x384xf32>
    %339 = math.exp %338 : vector<8x384xf32>
    %cst_131 = arith.constant 1.000000e+00 : f32
    %340 = vector.broadcast %cst_131 : f32 to vector<8x384xf32>
    %341 = arith.addf %340, %339 : vector<8x384xf32>
    %342 = arith.divf %340, %341 : vector<8x384xf32>
    %343 = vector.extract_strided_slice %336 {offsets = [0, 384], sizes = [8, 128], strides = [1, 1]} : vector<8x512xf32> to vector<8x128xf32>
    %344 = math.tanh %343 : vector<8x128xf32>
    %345 = vector.extract_strided_slice %342 {offsets = [0, 0], sizes = [8, 128], strides = [1, 1]} : vector<8x384xf32> to vector<8x128xf32>
    %346 = vector.extract_strided_slice %342 {offsets = [0, 128], sizes = [8, 128], strides = [1, 1]} : vector<8x384xf32> to vector<8x128xf32>
    %347 = vector.extract_strided_slice %342 {offsets = [0, 256], sizes = [8, 128], strides = [1, 1]} : vector<8x384xf32> to vector<8x128xf32>
    %348 = arith.mulf %346, %330 : vector<8x128xf32>
    %349 = arith.mulf %345, %344 : vector<8x128xf32>
    %350 = arith.addf %348, %349 : vector<8x128xf32>
    %351 = math.tanh %350 : vector<8x128xf32>
    %352 = arith.mulf %347, %351 : vector<8x128xf32>
    %c1 = arith.constant 1 : index
    %c0_132 = arith.constant 0 : index
    %c0_133 = arith.constant 0 : index
    %353 = vector.load %arg8[%c1, %c0_132, %c0_133] : memref<2x8x128xf32, #tpu.memory_space<vmem>>, vector<1x8x128xf32>
    %354 = vector.shape_cast %353 : vector<1x8x128xf32> to vector<8x128xf32>
    %355 = vector.shape_cast %352 : vector<8x128xf32> to vector<1x8x128xf32>
    tpu.vector_store %arg8[%c1, %c0_132, %c0_133], %355 {strides = array<i32>} : memref<2x8x128xf32, #tpu.memory_space<vmem>>, vector<1x8x128xf32>,
    %c1_134 = arith.constant 1 : index
    %c0_135 = arith.constant 0 : index
    %c0_136 = arith.constant 0 : index
    %356 = vector.load %arg9[%c1_134, %c0_135, %c0_136] : memref<2x8x128xf32, #tpu.memory_space<vmem>>, vector<1x8x128xf32>
    %357 = vector.shape_cast %356 : vector<1x8x128xf32> to vector<8x128xf32>
    %358 = vector.shape_cast %350 : vector<8x128xf32> to vector<1x8x128xf32>
    tpu.vector_store %arg9[%c1_134, %c0_135, %c0_136], %358 {strides = array<i32>} : memref<2x8x128xf32, #tpu.memory_space<vmem>>, vector<1x8x128xf32>,
    return
  }
  func.func @transform_0(%arg0: i32) -> (i32, i32, i32) {
    %c0_i32 = arith.constant 0 : i32
    %c0_i32_0 = arith.constant 0 : i32
    %c0_i32_1 = arith.constant 0 : i32
    return %arg0, %c0_i32, %c0_i32_0 : i32, i32, i32
  }
  func.func @transform_1(%arg0: i32) -> (i32, i32) {
    %c0_i32 = arith.constant 0 : i32
    %c0_i32_0 = arith.constant 0 : i32
    %c0_i32_1 = arith.constant 0 : i32
    return %c0_i32, %c0_i32_0 : i32, i32
  }
  func.func @transform_2(%arg0: i32) -> (i32, i32) {
    %c0_i32 = arith.constant 0 : i32
    %c0_i32_0 = arith.constant 0 : i32
    %c0_i32_1 = arith.constant 0 : i32
    return %c0_i32, %c0_i32_0 : i32, i32
  }
  func.func @transform_3(%arg0: i32) -> (i32, i32) {
    %c0_i32 = arith.constant 0 : i32
    %c0_i32_0 = arith.constant 0 : i32
    %c0_i32_1 = arith.constant 0 : i32
    return %c0_i32, %c0_i32_0 : i32, i32
  }
  func.func @transform_4(%arg0: i32) -> (i32, i32) {
    %c0_i32 = arith.constant 0 : i32
    %c0_i32_0 = arith.constant 0 : i32
    %c0_i32_1 = arith.constant 0 : i32
    return %c0_i32, %c0_i32_0 : i32, i32
  }
  func.func @transform_5(%arg0: i32) -> (i32, i32) {
    %c0_i32 = arith.constant 0 : i32
    %c0_i32_0 = arith.constant 0 : i32
    %c0_i32_1 = arith.constant 0 : i32
    return %c0_i32, %c0_i32_0 : i32, i32
  }
  func.func @transform_6(%arg0: i32) -> (i32, i32) {
    %c0_i32 = arith.constant 0 : i32
    %c0_i32_0 = arith.constant 0 : i32
    %c0_i32_1 = arith.constant 0 : i32
    return %c0_i32, %c0_i32_0 : i32, i32
  }
  func.func @transform_7(%arg0: i32) -> (i32, i32, i32) {
    %c0_i32 = arith.constant 0 : i32
    %c0_i32_0 = arith.constant 0 : i32
    %c0_i32_1 = arith.constant 0 : i32
    return %c0_i32, %arg0, %c0_i32_0 : i32, i32, i32
  }
  func.func @transform_8(%arg0: i32) -> (i32, i32, i32) {
    %c0_i32 = arith.constant 0 : i32
    %c0_i32_0 = arith.constant 0 : i32
    %c0_i32_1 = arith.constant 0 : i32
    return %c0_i32, %arg0, %c0_i32_0 : i32, i32, i32
  }
}

</mosaic_0001>

<llo_original>
// kernel: tpu_custom_call.1
$region0: #{tpu_custom_call.1}
  #allocation0 [shape = 'u32[]', space=smem, size = 0x4, offset = 0x4, fixed_abs, tag = 'smem constant byte address 0x4 - core index']
  #allocation1 [shape = 'u32[144,128]{1,0:T(1,128)}', space=vmem, size = 0x12000, scoped, tag = 'internal scratch']
  #allocation2 [shape = 'f32[64,512]{1,0:T(8,128)}', space=vmem, size = 0x20000, scoped, tag = 'scratch operand']
  #allocation3 [shape = 'f32[64,128]{1,0:T(8,128)}', space=vmem, size = 0x8000, scoped, tag = 'scratch operand']
  %s0 = inlined_call_operand.hbm [shape: f32[1,64,16], index: 0, kind: input, shape index: {}]
  %s1 = inlined_call_operand.hbm [shape: f32[16,512], index: 1, kind: input, shape index: {}]
  %s2 = inlined_call_operand.hbm [shape: f32[128,512], index: 2, kind: input, shape index: {}]
  %s3 = inlined_call_operand.hbm [shape: f32[1,512], index: 3, kind: input, shape index: {}]
  %s4 = inlined_call_operand.hbm [shape: f32[128,512], index: 4, kind: input, shape index: {}]
  %s5 = inlined_call_operand.hbm [shape: f32[128,512], index: 5, kind: input, shape index: {}]
  %s6 = inlined_call_operand.hbm [shape: f32[1,512], index: 6, kind: input, shape index: {}]
  %s7 = inlined_call_operand.hbm [shape: f32[2,8,128], index: 7, kind: output, shape index: {0}]
  %s8 = inlined_call_operand.hbm [shape: f32[2,8,128], index: 8, kind: output, shape index: {1}]
  %9 = xla_tuple %s7, %s8
  %s10 = sld [smem:[#allocation0]]
  $region74: #{tpu_custom_call.1} parent=0
    _
  %s12 = ssub.s32 1, %s10
  %s13 = scalar_select 0, %s12, %s10
  $region1: #{tpu_custom_call.1} parent=0
    #allocation4 [shape = 'u8[32768]{0}', space=vmem, size = 0x8000, scoped, tag = 'input window, operand 0, single buffered']
    #allocation5 [shape = 's32[1]{0}', space=sflag, size = 0x4, scoped, tag = 'scoped memory for tpu_custom_call.1']
    #allocation6 [shape = 's32[1]{0}', space=sflag, size = 0x4, scoped, tag = 'scoped memory for tpu_custom_call.1']
    #allocation7 [shape = 'u8[32768]{0}', space=vmem, size = 0x8000, scoped, tag = 'input window, operand 1, single buffered']
    #allocation8 [shape = 's32[1]{0}', space=sflag, size = 0x4, scoped, tag = 'scoped memory for tpu_custom_call.1']
    #allocation9 [shape = 'u8[262144]{0}', space=vmem, size = 0x40000, scoped, tag = 'input window, operand 2, single buffered']
    #allocation10 [shape = 'u8[2048]{0}', space=vmem, size = 0x800, scoped, tag = 'input window, operand 3, single buffered']
    #allocation11 [shape = 's32[1]{0}', space=sflag, size = 0x4, scoped, tag = 'scoped memory for tpu_custom_call.1']
    #allocation12 [shape = 'u8[262144]{0}', space=vmem, size = 0x40000, scoped, tag = 'input window, operand 4, single buffered']
    #allocation13 [shape = 'u8[262144]{0}', space=vmem, size = 0x40000, scoped, tag = 'input window, operand 5, single buffered']
    #allocation14 [shape = 's32[1]{0}', space=sflag, size = 0x4, scoped, tag = 'scoped memory for tpu_custom_call.1']
    #allocation15 [shape = 'u8[2048]{0}', space=vmem, size = 0x800, scoped, tag = 'input window, operand 6, single buffered']
    #allocation16 [shape = 'u8[8192]{0}', space=vmem, size = 0x2000, scoped, tag = 'output window, operand 0, single buffered']
    #allocation17 [shape = 'u8[8192]{0}', space=vmem, size = 0x2000, scoped, tag = 'output window, operand 1, single buffered']
    #allocation18 [shape = 's32[1]{0}', space=sflag, size = 0x4, scoped, tag = 'scoped memory for tpu_custom_call.1']
    %14 = vsyncpa [#allocation5], 0
    %15 = vsyncpa [#allocation8], 0
    %16 = vsyncpa [#allocation11], 0
    %17 = vsyncpa [#allocation14], 0
    %18 = vsyncpa [#allocation6], 0
    %19 = vsyncpa [#allocation18], 0
    // Predicated region
    $region2: #{tpu_custom_call.1} parent=1 // pred_check
      _
    $region3: #{tpu_custom_call.1} parent=1 // pred_check_branch
      %21 = sbr.rel (0) target = $region5
    $region4: #{tpu_custom_call.1} parent=1 // pred_region
      %s23 = ssub.s32 1024, 1024
      %24 = vsyncadd [#allocation5], %s23
      %s25 = sshll.u32 [#allocation4], 4
      %s26 = int_to_ptr.vmem [resolvable:$true] %s25
      %31 = dma.hbm_to_vmem [thread:$0]  %s0, 1024, %s26, [#allocation5], 128, 128, 8
    $region5: #{tpu_custom_call.1} parent=1 // pred_fallthru
      _
    // Predicated region
    $region6: #{tpu_custom_call.1} parent=1 // pred_check
      _
    $region7: #{tpu_custom_call.1} parent=1 // pred_check_branch
      %33 = sbr.rel (0) target = $region9
    $region8: #{tpu_custom_call.1} parent=1 // pred_region
      %s35 = ssub.s32 1024, 1024
      %36 = vsyncadd [#allocation8], %s35
      %s37 = sshll.u32 [#allocation7], 4
      %s38 = int_to_ptr.vmem [resolvable:$true] %s37
      %43 = dma.hbm_to_vmem [thread:$0]  %s1, 1024, %s38, [#allocation8], 512, 512, 32
    $region9: #{tpu_custom_call.1} parent=1 // pred_fallthru
      _
    // Predicated region
    $region10: #{tpu_custom_call.1} parent=1 // pred_check
      _
    $region11: #{tpu_custom_call.1} parent=1 // pred_check_branch
      %45 = sbr.rel (0) target = $region13
    $region12: #{tpu_custom_call.1} parent=1 // pred_region
      %s47 = ssub.s32 8192, 8192
      %48 = vsyncadd [#allocation8], %s47
      %s49 = sshll.u32 [#allocation9], 4
      %s50 = int_to_ptr.vmem [resolvable:$true] %s49
      %55 = dma.hbm_to_vmem [thread:$0]  %s2, 8192, %s50, [#allocation8], 512, 512, 32
    $region13: #{tpu_custom_call.1} parent=1 // pred_fallthru
      _
    // Predicated region
    $region14: #{tpu_custom_call.1} parent=1 // pred_check
      _
    $region15: #{tpu_custom_call.1} parent=1 // pred_check_branch
      %57 = sbr.rel (0) target = $region17
    $region16: #{tpu_custom_call.1} parent=1 // pred_region
      %s59 = ssub.s32 64, 64
      %60 = vsyncadd [#allocation11], %s59
      %s62 = sshll.u32 [#allocation10], 4
      %s63 = int_to_ptr.vmem [resolvable:$true] %s62
      %65 = dma.hbm_to_vmem [thread:$0]  %s3, 64, %s63, [#allocation11]
    $region17: #{tpu_custom_call.1} parent=1 // pred_fallthru
      _
    // Predicated region
    $region18: #{tpu_custom_call.1} parent=1 // pred_check
      _
    $region19: #{tpu_custom_call.1} parent=1 // pred_check_branch
      %67 = sbr.rel (0) target = $region21
    $region20: #{tpu_custom_call.1} parent=1 // pred_region
      %s69 = ssub.s32 8192, 8192
      %70 = vsyncadd [#allocation11], %s69
      %s71 = sshll.u32 [#allocation12], 4
      %s72 = int_to_ptr.vmem [resolvable:$true] %s71
      %77 = dma.hbm_to_vmem [thread:$0]  %s4, 8192, %s72, [#allocation11], 512, 512, 32
    $region21: #{tpu_custom_call.1} parent=1 // pred_fallthru
      _
    // Predicated region
    $region22: #{tpu_custom_call.1} parent=1 // pred_check
      _
    $region23: #{tpu_custom_call.1} parent=1 // pred_check_branch
      %79 = sbr.rel (0) target = $region25
    $region24: #{tpu_custom_call.1} parent=1 // pred_region
      %s81 = ssub.s32 8192, 8192
      %82 = vsyncadd [#allocation14], %s81
      %s83 = sshll.u32 [#allocation13], 4
      %s84 = int_to_ptr.vmem [resolvable:$true] %s83
      %89 = dma.hbm_to_vmem [thread:$0]  %s5, 8192, %s84, [#allocation14], 512, 512, 32
    $region25: #{tpu_custom_call.1} parent=1 // pred_fallthru
      _
    // Predicated region
    $region26: #{tpu_custom_call.1} parent=1 // pred_check
      _
    $region27: #{tpu_custom_call.1} parent=1 // pred_check_branch
      %91 = sbr.rel (0) target = $region29
    $region28: #{tpu_custom_call.1} parent=1 // pred_region
      %s93 = ssub.s32 64, 64
      %94 = vsyncadd [#allocation14], %s93
      %s96 = sshll.u32 [#allocation15], 4
      %s97 = int_to_ptr.vmem [resolvable:$true] %s96
      %99 = dma.hbm_to_vmem [thread:$0]  %s6, 64, %s97, [#allocation14]
    $region29: #{tpu_custom_call.1} parent=1 // pred_fallthru
      _
    // Predicated region
    $region30: #{tpu_custom_call.1} parent=1 // pred_check
      _
    $region31: #{tpu_custom_call.1} parent=1 // pred_check_branch
      %101 = sbr.rel (0) target = $region33
    $region32: #{tpu_custom_call.1} parent=1 // pred_region
      %102 = dma.done [#allocation5], 1024
    $region33: #{tpu_custom_call.1} parent=1 // pred_fallthru
      _
    // Predicated region
    $region34: #{tpu_custom_call.1} parent=1 // pred_check
      _
    $region35: #{tpu_custom_call.1} parent=1 // pred_check_branch
      %104 = sbr.rel (0) target = $region37
    $region36: #{tpu_custom_call.1} parent=1 // pred_region
      %105 = dma.done [#allocation8], 1024
    $region37: #{tpu_custom_call.1} parent=1 // pred_fallthru
      _
    // Predicated region
    $region38: #{tpu_custom_call.1} parent=1 // pred_check
      _
    $region39: #{tpu_custom_call.1} parent=1 // pred_check_branch
      %107 = sbr.rel (0) target = $region41
    $region40: #{tpu_custom_call.1} parent=1 // pred_region
      %108 = dma.done [#allocation8], 8192
    $region41: #{tpu_custom_call.1} parent=1 // pred_fallthru
      _
    // Predicated region
    $region42: #{tpu_custom_call.1} parent=1 // pred_check
      _
    $region43: #{tpu_custom_call.1} parent=1 // pred_check_branch
      %110 = sbr.rel (0) target = $region45
    $region44: #{tpu_custom_call.1} parent=1 // pred_region
      %111 = dma.done [#allocation11], 64
    $region45: #{tpu_custom_call.1} parent=1 // pred_fallthru
      _
    // Predicated region
    $region46: #{tpu_custom_call.1} parent=1 // pred_check
      _
    $region47: #{tpu_custom_call.1} parent=1 // pred_check_branch
      %113 = sbr.rel (0) target = $region49
    $region48: #{tpu_custom_call.1} parent=1 // pred_region
      %114 = dma.done [#allocation11], 8192
    $region49: #{tpu_custom_call.1} parent=1 // pred_fallthru
      _
    // Predicated region
    $region50: #{tpu_custom_call.1} parent=1 // pred_check
      _
    $region51: #{tpu_custom_call.1} parent=1 // pred_check_branch
      %116 = sbr.rel (0) target = $region53
    $region52: #{tpu_custom_call.1} parent=1 // pred_region
      %117 = dma.done [#allocation14], 8192
    $region53: #{tpu_custom_call.1} parent=1 // pred_fallthru
      _
    // Predicated region
    $region54: #{tpu_custom_call.1} parent=1 // pred_check
      _
    $region55: #{tpu_custom_call.1} parent=1 // pred_check_branch
      %119 = sbr.rel (0) target = $region57
    $region56: #{tpu_custom_call.1} parent=1 // pred_region
      %120 = dma.done [#allocation14], 64
    $region57: #{tpu_custom_call.1} parent=1 // pred_fallthru
      _
    %v121 = vld [vmem:[#allocation10] sm:$0xf]
    %v122 = vld [vmem:[#allocation4] sm:$0xff]
    %v123 = vld [vmem:[#allocation4 + $0x8] sm:$0xff]
    %v124 = vld [vmem:[#allocation4 + $0x10] sm:$0xff]
    %v125 = vld [vmem:[#allocation4 + $0x18] sm:$0xff]
    %v126 = vld [vmem:[#allocation4 + $0x20] sm:$0xff]
    %v127 = vld [vmem:[#allocation4 + $0x28] sm:$0xff]
    %v128 = vld [vmem:[#allocation4 + $0x30] sm:$0xff]
    %v129 = vld [vmem:[#allocation4 + $0x38] sm:$0xff]
    %v130 = vld [vmem:[#allocation7] sm:$0xff]
    %v131 = vld [vmem:[#allocation7 + $0x8] sm:$0xff]
    %v132 = vld [vmem:[#allocation7 + $0x10] sm:$0xff]
    %v133 = vld [vmem:[#allocation7 + $0x18] sm:$0xff]
    %v134 = vld [vmem:[#allocation7 + $0x20] sm:$0xff]
    %v135 = vld [vmem:[#allocation7 + $0x28] sm:$0xff]
    %v136 = vld [vmem:[#allocation7 + $0x30] sm:$0xff]
    %v137 = vld [vmem:[#allocation7 + $0x38] sm:$0xff]
    %v139 = vlaneseq
    %v140 = vshrl.u32 %v139, 7
    %v141 = vsub.s32 0, %v140
    %v142 = vrot.slane %v121, %v141
    %v143 = vlaneseq
    %v144 = vshrl.u32 %v143, 7
    %v145 = vsub.s32 1, %v144
    %v146 = vrot.slane %v121, %v145
    %v147 = vlaneseq
    %v148 = vshrl.u32 %v147, 7
    %v149 = vsub.s32 2, %v148
    %v150 = vrot.slane %v121, %v149
    %v151 = vlaneseq
    %v152 = vshrl.u32 %v151, 7
    %v153 = vsub.s32 3, %v152
    %v154 = vrot.slane %v121, %v153
    %vm159 = vcmask 130048
    %v161 = vsel %vm159, %v122, 0
    %v164 = vsel %vm159, %v123, 0
    %v167 = vsel %vm159, %v124, 0
    %v170 = vsel %vm159, %v125, 0
    %v173 = vsel %vm159, %v126, 0
    %v176 = vsel %vm159, %v127, 0
    %v179 = vsel %vm159, %v128, 0
    %v182 = vsel %vm159, %v129, 0
    %184 = vmatprep.subr.mxu0 %v131
    %185 = vmatpush1.msra.mxu0 %v130
    %186 = vmatprep.subr.mxu0 %v135
    %187 = vmatpush1.msra.mxu0 %v134
    %188 = vmatprep.subr.mxu0 0.0
    %189 = vmatpush1.msra.mxu0 0.0
    %190 = vmatprep.subr.mxu0 0.0
    %191 = vmatpush1.msra.mxu0 0.0
    %192 = vmatprep.subr.mxu0 0.0
    %193 = vmatpush1.msra.mxu0 0.0
    %194 = vmatprep.subr.mxu0 0.0
    %195 = vmatpush1.msra.mxu0 0.0
    %196 = vmatprep.subr.mxu0 0.0
    %197 = vmatpush1.msra.mxu0 0.0
    %198 = vmatprep.subr.mxu0 0.0
    %199 = vmatpush1.msra.mxu0 0.0
    %200 = vmatprep.subr.mxu0 0.0
    %201 = vmatpush1.msra.mxu0 0.0
    %202 = vmatprep.subr.mxu0 0.0
    %203 = vmatpush1.msra.mxu0 0.0
    %204 = vmatprep.subr.mxu0 0.0
    %205 = vmatpush1.msra.mxu0 0.0
    %206 = vmatprep.subr.mxu0 0.0
    %207 = vmatpush1.msra.mxu0 0.0
    %208 = vmatprep.subr.mxu0 0.0
    %209 = vmatpush1.msra.mxu0 0.0
    %210 = vmatprep.subr.mxu0 0.0
    %211 = vmatpush1.msra.mxu0 0.0
    %212 = vmatprep.subr.mxu0 0.0
    %213 = vmatpush1.msra.mxu0 0.0
    %214 = vmatprep.subr.mxu0 0.0
    %215 = vmatpush1.msra.mxu0 0.0
    %216 = vmatprep.subr.mxu0 0.0
    %217 = vmatpush1.msra.mxu0 0.0
    %218 = vmatprep.subr.mxu0 0.0
    %219 = vmatpush1.msra.mxu0 0.0
    %220 = vmatprep.subr.mxu0 0.0
    %221 = vmatpush1.msra.mxu0 0.0
    %222 = vmatprep.subr.mxu0 0.0
    %223 = vmatpush1.msra.mxu0 0.0
    %224 = vmatprep.subr.mxu0 0.0
    %225 = vmatpush1.msra.mxu0 0.0
    %226 = vmatprep.subr.mxu0 0.0
    %227 = vmatpush1.msra.mxu0 0.0
    %228 = vmatprep.subr.mxu0 0.0
    %229 = vmatpush1.msra.mxu0 0.0
    %230 = vmatprep.subr.mxu0 0.0
    %231 = vmatpush1.msra.mxu0 0.0
    %232 = vmatprep.subr.mxu0 0.0
    %233 = vmatpush1.msra.mxu0 0.0
    %234 = vmatprep.subr.mxu0 0.0
    %235 = vmatpush1.msra.mxu0 0.0
    %236 = vmatprep.subr.mxu0 0.0
    %237 = vmatpush1.msra.mxu0 0.0
    %238 = vmatprep.subr.mxu0 0.0
    %239 = vmatpush1.msra.mxu0 0.0
    %240 = vmatprep.subr.mxu0 0.0
    %241 = vmatpush1.msra.mxu0 0.0
    %242 = vmatprep.subr.mxu0 0.0
    %243 = vmatpush1.msra.mxu0 0.0
    %244 = vmatprep.subr.mxu0 0.0
    %245 = vmatpush1.msra.mxu0 0.0
    %246 = vmatprep.subr.mxu0 0.0
    %247 = vmatpush1.msra.mxu0 0.0
    %248 = vmatprep.mubr.f32.mxu0 0.0
    %249 = vmatmul.mubr.f32.gmra.mrb[0].mxu0 %v161
    %v250 = vpop.f32.mrb[0].mxu0
    %v251 = vadd.f32 %v142, %v250
    %v252 = vpop.f32.mrb[0].mxu0
    %v253 = vadd.f32 %v146, %v252
    %254 = vmatprep.mubr.f32.mxu0 0.0
    %255 = vmatmul.mubr.f32.gmra.mrb[0].mxu0 %v164
    %v256 = vpop.f32.mrb[0].mxu0
    %v257 = vadd.f32 %v142, %v256
    %v258 = vpop.f32.mrb[0].mxu0
    %v259 = vadd.f32 %v146, %v258
    %260 = vmatprep.mubr.f32.mxu0 0.0
    %261 = vmatmul.mubr.f32.gmra.mrb[0].mxu0 %v167
    %v262 = vpop.f32.mrb[0].mxu0
    %v263 = vadd.f32 %v142, %v262
    %v264 = vpop.f32.mrb[0].mxu0
    %v265 = vadd.f32 %v146, %v264
    %266 = vmatprep.mubr.f32.mxu0 0.0
    %267 = vmatmul.mubr.f32.gmra.mrb[0].mxu0 %v170
    %v268 = vpop.f32.mrb[0].mxu0
    %v269 = vadd.f32 %v142, %v268
    %v270 = vpop.f32.mrb[0].mxu0
    %v271 = vadd.f32 %v146, %v270
    %272 = vmatprep.mubr.f32.mxu0 0.0
    %273 = vmatmul.mubr.f32.gmra.mrb[0].mxu0 %v173
    %v274 = vpop.f32.mrb[0].mxu0
    %v275 = vadd.f32 %v142, %v274
    %v276 = vpop.f32.mrb[0].mxu0
    %v277 = vadd.f32 %v146, %v276
    %278 = vmatprep.mubr.f32.mxu0 0.0
    %279 = vmatmul.mubr.f32.gmra.mrb[0].mxu0 %v176
    %v280 = vpop.f32.mrb[0].mxu0
    %v281 = vadd.f32 %v142, %v280
    %v282 = vpop.f32.mrb[0].mxu0
    %v283 = vadd.f32 %v146, %v282
    %284 = vmatprep.mubr.f32.mxu0 0.0
    %285 = vmatmul.mubr.f32.gmra.mrb[0].mxu0 %v179
    %v286 = vpop.f32.mrb[0].mxu0
    %v287 = vadd.f32 %v142, %v286
    %v288 = vpop.f32.mrb[0].mxu0
    %v289 = vadd.f32 %v146, %v288
    %290 = vmatprep.mubr.f32.mxu0 0.0
    %291 = vmatmul.mubr.f32.gmra.mrb[0].mxu0 %v182
    %v292 = vpop.f32.mrb[0].mxu0
    %v293 = vadd.f32 %v142, %v292
    %v294 = vpop.f32.mrb[0].mxu0
    %v295 = vadd.f32 %v146, %v294
    %296 = vdwg.mxu0
    %297 = vmatprep.subr.mxu0 %v133
    %298 = vmatpush1.msra.mxu0 %v132
    %299 = vmatprep.subr.mxu0 %v137
    %300 = vmatpush1.msra.mxu0 %v136
    %301 = vmatprep.subr.mxu0 0.0
    %302 = vmatpush1.msra.mxu0 0.0
    %303 = vmatprep.subr.mxu0 0.0
    %304 = vmatpush1.msra.mxu0 0.0
    %305 = vmatprep.subr.mxu0 0.0
    %306 = vmatpush1.msra.mxu0 0.0
    %307 = vmatprep.subr.mxu0 0.0
    %308 = vmatpush1.msra.mxu0 0.0
    %309 = vmatprep.subr.mxu0 0.0
    %310 = vmatpush1.msra.mxu0 0.0
    %311 = vmatprep.subr.mxu0 0.0
    %312 = vmatpush1.msra.mxu0 0.0
    %313 = vmatprep.subr.mxu0 0.0
    %314 = vmatpush1.msra.mxu0 0.0
    %315 = vmatprep.subr.mxu0 0.0
    %316 = vmatpush1.msra.mxu0 0.0
    %317 = vmatprep.subr.mxu0 0.0
    %318 = vmatpush1.msra.mxu0 0.0
    %319 = vmatprep.subr.mxu0 0.0
    %320 = vmatpush1.msra.mxu0 0.0
    %321 = vmatprep.subr.mxu0 0.0
    %322 = vmatpush1.msra.mxu0 0.0
    %323 = vmatprep.subr.mxu0 0.0
    %324 = vmatpush1.msra.mxu0 0.0
    %325 = vmatprep.subr.mxu0 0.0
    %326 = vmatpush1.msra.mxu0 0.0
    %327 = vmatprep.subr.mxu0 0.0
    %328 = vmatpush1.msra.mxu0 0.0
    %329 = vmatprep.subr.mxu0 0.0
    %330 = vmatpush1.msra.mxu0 0.0
    %331 = vmatprep.subr.mxu0 0.0
    %332 = vmatpush1.msra.mxu0 0.0
    %333 = vmatprep.subr.mxu0 0.0
    %334 = vmatpush1.msra.mxu0 0.0
    %335 = vmatprep.subr.mxu0 0.0
    %336 = vmatpush1.msra.mxu0 0.0
    %337 = vmatprep.subr.mxu0 0.0
    %338 = vmatpush1.msra.mxu0 0.0
    %339 = vmatprep.subr.mxu0 0.0
    %340 = vmatpush1.msra.mxu0 0.0
    %341 = vmatprep.subr.mxu0 0.0
    %342 = vmatpush1.msra.mxu0 0.0
    %343 = vmatprep.subr.mxu0 0.0
    %344 = vmatpush1.msra.mxu0 0.0
    %345 = vmatprep.subr.mxu0 0.0
    %346 = vmatpush1.msra.mxu0 0.0
    %347 = vmatprep.subr.mxu0 0.0
    %348 = vmatpush1.msra.mxu0 0.0
    %349 = vmatprep.subr.mxu0 0.0
    %350 = vmatpush1.msra.mxu0 0.0
    %351 = vmatprep.subr.mxu0 0.0
    %352 = vmatpush1.msra.mxu0 0.0
    %353 = vmatprep.subr.mxu0 0.0
    %354 = vmatpush1.msra.mxu0 0.0
    %355 = vmatprep.subr.mxu0 0.0
    %356 = vmatpush1.msra.mxu0 0.0
    %357 = vmatprep.subr.mxu0 0.0
    %358 = vmatpush1.msra.mxu0 0.0
    %359 = vmatprep.subr.mxu0 0.0
    %360 = vmatpush1.msra.mxu0 0.0
    %361 = vmatprep.mubr.f32.mxu0 0.0
    %362 = vmatmul.mubr.f32.gmra.mrb[0].mxu0 %v161
    %v363 = vpop.f32.mrb[0].mxu0
    %v364 = vadd.f32 %v150, %v363
    %v365 = vpop.f32.mrb[0].mxu0
    %v366 = vadd.f32 %v154, %v365
    %367 = vmatprep.mubr.f32.mxu0 0.0
    %368 = vmatmul.mubr.f32.gmra.mrb[0].mxu0 %v164
    %v369 = vpop.f32.mrb[0].mxu0
    %v370 = vadd.f32 %v150, %v369
    %v371 = vpop.f32.mrb[0].mxu0
    %v372 = vadd.f32 %v154, %v371
    %373 = vmatprep.mubr.f32.mxu0 0.0
    %374 = vmatmul.mubr.f32.gmra.mrb[0].mxu0 %v167
    %v375 = vpop.f32.mrb[0].mxu0
    %v376 = vadd.f32 %v150, %v375
    %v377 = vpop.f32.mrb[0].mxu0
    %v378 = vadd.f32 %v154, %v377
    %379 = vmatprep.mubr.f32.mxu0 0.0
    %380 = vmatmul.mubr.f32.gmra.mrb[0].mxu0 %v170
    %v381 = vpop.f32.mrb[0].mxu0
    %v382 = vadd.f32 %v150, %v381
    %v383 = vpop.f32.mrb[0].mxu0
    %v384 = vadd.f32 %v154, %v383
    %385 = vmatprep.mubr.f32.mxu0 0.0
    %386 = vmatmul.mubr.f32.gmra.mrb[0].mxu0 %v173
    %v387 = vpop.f32.mrb[0].mxu0
    %v388 = vadd.f32 %v150, %v387
    %v389 = vpop.f32.mrb[0].mxu0
    %v390 = vadd.f32 %v154, %v389
    %391 = vmatprep.mubr.f32.mxu0 0.0
    %392 = vmatmul.mubr.f32.gmra.mrb[0].mxu0 %v176
    %v393 = vpop.f32.mrb[0].mxu0
    %v394 = vadd.f32 %v150, %v393
    %v395 = vpop.f32.mrb[0].mxu0
    %v396 = vadd.f32 %v154, %v395
    %397 = vmatprep.mubr.f32.mxu0 0.0
    %398 = vmatmul.mubr.f32.gmra.mrb[0].mxu0 %v179
    %v399 = vpop.f32.mrb[0].mxu0
    %v400 = vadd.f32 %v150, %v399
    %v401 = vpop.f32.mrb[0].mxu0
    %v402 = vadd.f32 %v154, %v401
    %403 = vmatprep.mubr.f32.mxu0 0.0
    %404 = vmatmul.mubr.f32.gmra.mrb[0].mxu0 %v182
    %v405 = vpop.f32.mrb[0].mxu0
    %v406 = vadd.f32 %v150, %v405
    %v407 = vpop.f32.mrb[0].mxu0
    %v408 = vadd.f32 %v154, %v407
    %409 = vdwg.mxu0
    %410 = vst [vmem:[#allocation2] sm:$0xff] %v251
    %411 = vst [vmem:[#allocation2 + $0x8] sm:$0xff] %v253
    %412 = vst [vmem:[#allocation2 + $0x10] sm:$0xff] %v364
    %413 = vst [vmem:[#allocation2 + $0x18] sm:$0xff] %v366
    %414 = vst [vmem:[#allocation2 + $0x20] sm:$0xff] %v257
    %415 = vst [vmem:[#allocation2 + $0x28] sm:$0xff] %v259
    %416 = vst [vmem:[#allocation2 + $0x30] sm:$0xff] %v370
    %417 = vst [vmem:[#allocation2 + $0x38] sm:$0xff] %v372
    %418 = vst [vmem:[#allocation2 + $0x40] sm:$0xff] %v263
    %419 = vst [vmem:[#allocation2 + $0x48] sm:$0xff] %v265
    %420 = vst [vmem:[#allocation2 + $0x50] sm:$0xff] %v376
    %421 = vst [vmem:[#allocation2 + $0x58] sm:$0xff] %v378
    %422 = vst [vmem:[#allocation2 + $0x60] sm:$0xff] %v269
    %423 = vst [vmem:[#allocation2 + $0x68] sm:$0xff] %v271
    %424 = vst [vmem:[#allocation2 + $0x70] sm:$0xff] %v382
    %425 = vst [vmem:[#allocation2 + $0x78] sm:$0xff] %v384
    %426 = vst [vmem:[#allocation2 + $0x80] sm:$0xff] %v275
    %427 = vst [vmem:[#allocation2 + $0x88] sm:$0xff] %v277
    %428 = vst [vmem:[#allocation2 + $0x90] sm:$0xff] %v388
    %429 = vst [vmem:[#allocation2 + $0x98] sm:$0xff] %v390
    %430 = vst [vmem:[#allocation2 + $0xa0] sm:$0xff] %v281
    %431 = vst [vmem:[#allocation2 + $0xa8] sm:$0xff] %v283
    %432 = vst [vmem:[#allocation2 + $0xb0] sm:$0xff] %v394
    %433 = vst [vmem:[#allocation2 + $0xb8] sm:$0xff] %v396
    %434 = vst [vmem:[#allocation2 + $0xc0] sm:$0xff] %v287
    %435 = vst [vmem:[#allocation2 + $0xc8] sm:$0xff] %v289
    %436 = vst [vmem:[#allocation2 + $0xd0] sm:$0xff] %v400
    %437 = vst [vmem:[#allocation2 + $0xd8] sm:$0xff] %v402
    %438 = vst [vmem:[#allocation2 + $0xe0] sm:$0xff] %v293
    %439 = vst [vmem:[#allocation2 + $0xe8] sm:$0xff] %v295
    %440 = vst [vmem:[#allocation2 + $0xf0] sm:$0xff] %v406
    %441 = vst [vmem:[#allocation2 + $0xf8] sm:$0xff] %v408
    %v442 = vld [vmem:[#allocation2] sm:$0xff]
    %v443 = vld [vmem:[#allocation2 + $0x8] sm:$0xff]
    %v444 = vld [vmem:[#allocation2 + $0x10] sm:$0xff]
    %v445 = vld [vmem:[#allocation2 + $0x18] sm:$0xff]
    %v446 = vld [vmem:[#allocation9] sm:$0xff]
    %v447 = vld [vmem:[#allocation9 + $0x8] sm:$0xff]
    %v448 = vld [vmem:[#allocation9 + $0x10] sm:$0xff]
    %v449 = vld [vmem:[#allocation9 + $0x18] sm:$0xff]
    %v450 = vld [vmem:[#allocation9 + $0x20] sm:$0xff]
    %v451 = vld [vmem:[#allocation9 + $0x28] sm:$0xff]
    %v452 = vld [vmem:[#allocation9 + $0x30] sm:$0xff]
    %v453 = vld [vmem:[#allocation9 + $0x38] sm:$0xff]
    %v454 = vld [vmem:[#allocation9 + $0x40] sm:$0xff]
    %v455 = vld [vmem:[#allocation9 + $0x48] sm:$0xff]
    %v456 = vld [vmem:[#allocation9 + $0x50] sm:$0xff]
    %v457 = vld [vmem:[#allocation9 + $0x58] sm:$0xff]
    %v458 = vld [vmem:[#allocation9 + $0x60] sm:$0xff]
    %v459 = vld [vmem:[#allocation9 + $0x68] sm:$0xff]
    %v460 = vld [vmem:[#allocation9 + $0x70] sm:$0xff]
    %v461 = vld [vmem:[#allocation9 + $0x78] sm:$0xff]
    %v462 = vld [vmem:[#allocation9 + $0x80] sm:$0xff]
    %v463 = vld [vmem:[#allocation9 + $0x88] sm:$0xff]
    %v464 = vld [vmem:[#allocation9 + $0x90] sm:$0xff]
    %v465 = vld [vmem:[#allocation9 + $0x98] sm:$0xff]
    %v466 = vld [vmem:[#allocation9 + $0xa0] sm:$0xff]
    %v467 = vld [vmem:[#allocation9 + $0xa8] sm:$0xff]
    %v468 = vld [vmem:[#allocation9 + $0xb0] sm:$0xff]
    %v469 = vld [vmem:[#allocation9 + $0xb8] sm:$0xff]
    %v470 = vld [vmem:[#allocation9 + $0xc0] sm:$0xff]
    %v471 = vld [vmem:[#allocation9 + $0xc8] sm:$0xff]
    %v472 = vld [vmem:[#allocation9 + $0xd0] sm:$0xff]
    %v473 = vld [vmem:[#allocation9 + $0xd8] sm:$0xff]
    %v474 = vld [vmem:[#allocation9 + $0xe0] sm:$0xff]
    %v475 = vld [vmem:[#allocation9 + $0xe8] sm:$0xff]
    %v476 = vld [vmem:[#allocation9 + $0xf0] sm:$0xff]
    %v477 = vld [vmem:[#allocation9 + $0xf8] sm:$0xff]
    %v478 = vld [vmem:[#allocation9 + $0x100] sm:$0xff]
    %v479 = vld [vmem:[#allocation9 + $0x108] sm:$0xff]
    %v480 = vld [vmem:[#allocation9 + $0x110] sm:$0xff]
    %v481 = vld [vmem:[#allocation9 + $0x118] sm:$0xff]
    %v482 = vld [vmem:[#allocation9 + $0x120] sm:$0xff]
    %v483 = vld [vmem:[#allocation9 + $0x128] sm:$0xff]
    %v484 = vld [vmem:[#allocation9 + $0x130] sm:$0xff]
    %v485 = vld [vmem:[#allocation9 + $0x138] sm:$0xff]
    %v486 = vld [vmem:[#allocation9 + $0x140] sm:$0xff]
    %v487 = vld [vmem:[#allocation9 + $0x148] sm:$0xff]
    %v488 = vld [vmem:[#allocation9 + $0x150] sm:$0xff]
    %v489 = vld [vmem:[#allocation9 + $0x158] sm:$0xff]
    %v490 = vld [vmem:[#allocation9 + $0x160] sm:$0xff]
    %v491 = vld [vmem:[#allocation9 + $0x168] sm:$0xff]
    %v492 = vld [vmem:[#allocation9 + $0x170] sm:$0xff]
    %v493 = vld [vmem:[#allocation9 + $0x178] sm:$0xff]
    %v494 = vld [vmem:[#allocation9 + $0x180] sm:$0xff]
    %v495 = vld [vmem:[#allocation9 + $0x188] sm:$0xff]
    %v496 = vld [vmem:[#allocation9 + $0x190] sm:$0xff]
    %v497 = vld [vmem:[#allocation9 + $0x198] sm:$0xff]
    %v498 = vld [vmem:[#allocation9 + $0x1a0] sm:$0xff]
    %v499 = vld [vmem:[#allocation9 + $0x1a8] sm:$0xff]
    %v500 = vld [vmem:[#allocation9 + $0x1b0] sm:$0xff]
    %v501 = vld [vmem:[#allocation9 + $0x1b8] sm:$0xff]
    %v502 = vld [vmem:[#allocation9 + $0x1c0] sm:$0xff]
    %v503 = vld [vmem:[#allocation9 + $0x1c8] sm:$0xff]
    %v504 = vld [vmem:[#allocation9 + $0x1d0] sm:$0xff]
    %v505 = vld [vmem:[#allocation9 + $0x1d8] sm:$0xff]
    %v506 = vld [vmem:[#allocation9 + $0x1e0] sm:$0xff]
    %v507 = vld [vmem:[#allocation9 + $0x1e8] sm:$0xff]
    %v508 = vld [vmem:[#allocation9 + $0x1f0] sm:$0xff]
    %v509 = vld [vmem:[#allocation9 + $0x1f8] sm:$0xff]
    %510 = vmatprep.subr.mxu0 %v447
    %511 = vmatpush1.msra.mxu0 %v446
    %512 = vmatprep.subr.mxu0 %v451
    %513 = vmatpush1.msra.mxu0 %v450
    %514 = vmatprep.subr.mxu0 %v455
    %515 = vmatpush1.msra.mxu0 %v454
    %516 = vmatprep.subr.mxu0 %v459
    %517 = vmatpush1.msra.mxu0 %v458
    %518 = vmatprep.subr.mxu0 %v463
    %519 = vmatpush1.msra.mxu0 %v462
    %520 = vmatprep.subr.mxu0 %v467
    %521 = vmatpush1.msra.mxu0 %v466
    %522 = vmatprep.subr.mxu0 %v471
    %523 = vmatpush1.msra.mxu0 %v470
    %524 = vmatprep.subr.mxu0 %v475
    %525 = vmatpush1.msra.mxu0 %v474
    %526 = vmatprep.subr.mxu0 %v479
    %527 = vmatpush1.msra.mxu0 %v478
    %528 = vmatprep.subr.mxu0 %v483
    %529 = vmatpush1.msra.mxu0 %v482
    %530 = vmatprep.subr.mxu0 %v487
    %531 = vmatpush1.msra.mxu0 %v486
    %532 = vmatprep.subr.mxu0 %v491
    %533 = vmatpush1.msra.mxu0 %v490
    %534 = vmatprep.subr.mxu0 %v495
    %535 = vmatpush1.msra.mxu0 %v494
    %536 = vmatprep.subr.mxu0 %v499
    %537 = vmatpush1.msra.mxu0 %v498
    %538 = vmatprep.subr.mxu0 %v503
    %539 = vmatpush1.msra.mxu0 %v502
    %540 = vmatprep.subr.mxu0 %v507
    %541 = vmatpush1.msra.mxu0 %v506
    %542 = vmatprep.subr.mxu0 0.0
    %543 = vmatpush1.msra.mxu0 0.0
    %544 = vmatprep.subr.mxu0 0.0
    %545 = vmatpush1.msra.mxu0 0.0
    %546 = vmatprep.subr.mxu0 0.0
    %547 = vmatpush1.msra.mxu0 0.0
    %548 = vmatprep.subr.mxu0 0.0
    %549 = vmatpush1.msra.mxu0 0.0
    %550 = vmatprep.subr.mxu0 0.0
    %551 = vmatpush1.msra.mxu0 0.0
    %552 = vmatprep.subr.mxu0 0.0
    %553 = vmatpush1.msra.mxu0 0.0
    %554 = vmatprep.subr.mxu0 0.0
    %555 = vmatpush1.msra.mxu0 0.0
    %556 = vmatprep.subr.mxu0 0.0
    %557 = vmatpush1.msra.mxu0 0.0
    %558 = vmatprep.subr.mxu0 0.0
    %559 = vmatpush1.msra.mxu0 0.0
    %560 = vmatprep.subr.mxu0 0.0
    %561 = vmatpush1.msra.mxu0 0.0
    %562 = vmatprep.subr.mxu0 0.0
    %563 = vmatpush1.msra.mxu0 0.0
    %564 = vmatprep.subr.mxu0 0.0
    %565 = vmatpush1.msra.mxu0 0.0
    %566 = vmatprep.subr.mxu0 0.0
    %567 = vmatpush1.msra.mxu0 0.0
    %568 = vmatprep.subr.mxu0 0.0
    %569 = vmatpush1.msra.mxu0 0.0
    %570 = vmatprep.subr.mxu0 0.0
    %571 = vmatpush1.msra.mxu0 0.0
    %572 = vmatprep.subr.mxu0 0.0
    %573 = vmatpush1.msra.mxu0 0.0
    %574 = vmatprep.mubr.f32.mxu0 0.0
    %575 = vmatmul.mubr.f32.gmra.mrb[0].mxu0 0.0
    %v576 = vpop.f32.mrb[0].mxu0
    %v577 = vadd.f32 0.0, %v576
    %v578 = vpop.f32.mrb[0].mxu0
    %v579 = vadd.f32 0.0, %v578
    %580 = vdwg.mxu0
    %581 = vmatprep.subr.mxu0 %v449
    %582 = vmatpush1.msra.mxu0 %v448
    %583 = vmatprep.subr.mxu0 %v453
    %584 = vmatpush1.msra.mxu0 %v452
    %585 = vmatprep.subr.mxu0 %v457
    %586 = vmatpush1.msra.mxu0 %v456
    %587 = vmatprep.subr.mxu0 %v461
    %588 = vmatpush1.msra.mxu0 %v460
    %589 = vmatprep.subr.mxu0 %v465
    %590 = vmatpush1.msra.mxu0 %v464
    %591 = vmatprep.subr.mxu0 %v469
    %592 = vmatpush1.msra.mxu0 %v468
    %593 = vmatprep.subr.mxu0 %v473
    %594 = vmatpush1.msra.mxu0 %v472
    %595 = vmatprep.subr.mxu0 %v477
    %596 = vmatpush1.msra.mxu0 %v476
    %597 = vmatprep.subr.mxu0 %v481
    %598 = vmatpush1.msra.mxu0 %v480
    %599 = vmatprep.subr.mxu0 %v485
    %600 = vmatpush1.msra.mxu0 %v484
    %601 = vmatprep.subr.mxu0 %v489
    %602 = vmatpush1.msra.mxu0 %v488
    %603 = vmatprep.subr.mxu0 %v493
    %604 = vmatpush1.msra.mxu0 %v492
    %605 = vmatprep.subr.mxu0 %v497
    %606 = vmatpush1.msra.mxu0 %v496
    %607 = vmatprep.subr.mxu0 %v501
    %608 = vmatpush1.msra.mxu0 %v500
    %609 = vmatprep.subr.mxu0 %v505
    %610 = vmatpush1.msra.mxu0 %v504
    %611 = vmatprep.subr.mxu0 %v509
    %612 = vmatpush1.msra.mxu0 %v508
    %613 = vmatprep.subr.mxu0 0.0
    %614 = vmatpush1.msra.mxu0 0.0
    %615 = vmatprep.subr.mxu0 0.0
    %616 = vmatpush1.msra.mxu0 0.0
    %617 = vmatprep.subr.mxu0 0.0
    %618 = vmatpush1.msra.mxu0 0.0
    %619 = vmatprep.subr.mxu0 0.0
    %620 = vmatpush1.msra.mxu0 0.0
    %621 = vmatprep.subr.mxu0 0.0
    %622 = vmatpush1.msra.mxu0 0.0
    %623 = vmatprep.subr.mxu0 0.0
    %624 = vmatpush1.msra.mxu0 0.0
    %625 = vmatprep.subr.mxu0 0.0
    %626 = vmatpush1.msra.mxu0 0.0
    %627 = vmatprep.subr.mxu0 0.0
    %628 = vmatpush1.msra.mxu0 0.0
    %629 = vmatprep.subr.mxu0 0.0
    %630 = vmatpush1.msra.mxu0 0.0
    %631 = vmatprep.subr.mxu0 0.0
    %632 = vmatpush1.msra.mxu0 0.0
    %633 = vmatprep.subr.mxu0 0.0
    %634 = vmatpush1.msra.mxu0 0.0
    %635 = vmatprep.subr.mxu0 0.0
    %636 = vmatpush1.msra.mxu0 0.0
    %637 = vmatprep.subr.mxu0 0.0
    %638 = vmatpush1.msra.mxu0 0.0
    %639 = vmatprep.subr.mxu0 0.0
    %640 = vmatpush1.msra.mxu0 0.0
    %641 = vmatprep.subr.mxu0 0.0
    %642 = vmatpush1.msra.mxu0 0.0
    %643 = vmatprep.subr.mxu0 0.0
    %644 = vmatpush1.msra.mxu0 0.0
    %645 = vmatprep.mubr.f32.mxu0 0.0
    %646 = vmatmul.mubr.f32.gmra.mrb[0].mxu0 0.0
    %v647 = vpop.f32.mrb[0].mxu0
    %v648 = vadd.f32 0.0, %v647
    %v649 = vpop.f32.mrb[0].mxu0
    %v650 = vadd.f32 0.0, %v649
    %651 = vdwg.mxu0
    %v652 = vadd.f32 %v442, %v577
    %v653 = vadd.f32 %v443, %v579
    %v654 = vadd.f32 %v444, %v648
    %v655 = vadd.f32 %v445, %v650
    %v656 = vxor.u32 %v652, 2147483648
    %v657 = vxor.u32 %v653, 2147483648
    %v658 = vxor.u32 %v654, 2147483648
    %v659 = vmul.f32 %v656, 1.442695
    %v660 = vpow.pop %v659
    %v661 = vmul.f32 %v657, 1.442695
    %v662 = vpow.pop %v661
    %v663 = vmul.f32 %v658, 1.442695
    %v664 = vpow.pop %v663
    %v665 = vadd.f32 %v660, 1.0
    %v666 = vadd.f32 %v662, 1.0
    %v667 = vadd.f32 %v664, 1.0
    %v668 = vrcp.pop %v665
    %v669 = vmul.f32 1.0, %v668
    %v670 = vrcp.pop %v666
    %v671 = vmul.f32 1.0, %v670
    %v672 = vrcp.pop %v667
    %v673 = vmul.f32 1.0, %v672
    %v674 = vtanh.pop %v655
    %v675 = vmul.f32 %v671, 0.0
    %v676 = vmul.f32 %v669, %v674
    %v677 = vadd.f32 %v675, %v676
    %v678 = vtanh.pop %v677
    %v679 = vmul.f32 %v673, %v678
    %680 = vst [vmem:[#allocation3] sm:$0xff] %v679
    %v681 = vld [vmem:[#allocation2 + $0x20] sm:$0xff]
    %v682 = vld [vmem:[#allocation2 + $0x28] sm:$0xff]
    %v683 = vld [vmem:[#allocation2 + $0x30] sm:$0xff]
    %v684 = vld [vmem:[#allocation2 + $0x38] sm:$0xff]
    %v685 = vld [vmem:[#allocation9] sm:$0xff]
    %v686 = vld [vmem:[#allocation9 + $0x8] sm:$0xff]
    %v687 = vld [vmem:[#allocation9 + $0x10] sm:$0xff]
    %v688 = vld [vmem:[#allocation9 + $0x18] sm:$0xff]
    %v689 = vld [vmem:[#allocation9 + $0x20] sm:$0xff]
    %v690 = vld [vmem:[#allocation9 + $0x28] sm:$0xff]
    %v691 = vld [vmem:[#allocation9 + $0x30] sm:$0xff]
    %v692 = vld [vmem:[#allocation9 + $0x38] sm:$0xff]
    %v693 = vld [vmem:[#allocation9 + $0x40] sm:$0xff]
    %v694 = vld [vmem:[#allocation9 + $0x48] sm:$0xff]
    %v695 = vld [vmem:[#allocation9 + $0x50] sm:$0xff]
    %v696 = vld [vmem:[#allocation9 + $0x58] sm:$0xff]
    %v697 = vld [vmem:[#allocation9 + $0x60] sm:$0xff]
    %v698 = vld [vmem:[#allocation9 + $0x68] sm:$0xff]
    %v699 = vld [vmem:[#allocation9 + $0x70] sm:$0xff]
    %v700 = vld [vmem:[#allocation9 + $0x78] sm:$0xff]
    %v701 = vld [vmem:[#allocation9 + $0x80] sm:$0xff]
    %v702 = vld [vmem:[#allocation9 + $0x88] sm:$0xff]
    %v703 = vld [vmem:[#allocation9 + $0x90] sm:$0xff]
    %v704 = vld [vmem:[#allocation9 + $0x98] sm:$0xff]
    %v705 = vld [vmem:[#allocation9 + $0xa0] sm:$0xff]
    %v706 = vld [vmem:[#allocation9 + $0xa8] sm:$0xff]
    %v707 = vld [vmem:[#allocation9 + $0xb0] sm:$0xff]
    %v708 = vld [vmem:[#allocation9 + $0xb8] sm:$0xff]
    %v709 = vld [vmem:[#allocation9 + $0xc0] sm:$0xff]
    %v710 = vld [vmem:[#allocation9 + $0xc8] sm:$0xff]
    %v711 = vld [vmem:[#allocation9 + $0xd0] sm:$0xff]
    %v712 = vld [vmem:[#allocation9 + $0xd8] sm:$0xff]
    %v713 = vld [vmem:[#allocation9 + $0xe0] sm:$0xff]
    %v714 = vld [vmem:[#allocation9 + $0xe8] sm:$0xff]
    %v715 = vld [vmem:[#allocation9 + $0xf0] sm:$0xff]
    %v716 = vld [vmem:[#allocation9 + $0xf8] sm:$0xff]
    %v717 = vld [vmem:[#allocation9 + $0x100] sm:$0xff]
    %v718 = vld [vmem:[#allocation9 + $0x108] sm:$0xff]
    %v719 = vld [vmem:[#allocation9 + $0x110] sm:$0xff]
    %v720 = vld [vmem:[#allocation9 + $0x118] sm:$0xff]
    %v721 = vld [vmem:[#allocation9 + $0x120] sm:$0xff]
    %v722 = vld [vmem:[#allocation9 + $0x128] sm:$0xff]
    %v723 = vld [vmem:[#allocation9 + $0x130] sm:$0xff]
    %v724 = vld [vmem:[#allocation9 + $0x138] sm:$0xff]
    %v725 = vld [vmem:[#allocation9 + $0x140] sm:$0xff]
    %v726 = vld [vmem:[#allocation9 + $0x148] sm:$0xff]
    %v727 = vld [vmem:[#allocation9 + $0x150] sm:$0xff]
    %v728 = vld [vmem:[#allocation9 + $0x158] sm:$0xff]
    %v729 = vld [vmem:[#allocation9 + $0x160] sm:$0xff]
    %v730 = vld [vmem:[#allocation9 + $0x168] sm:$0xff]
    %v731 = vld [vmem:[#allocation9 + $0x170] sm:$0xff]
    %v732 = vld [vmem:[#allocation9 + $0x178] sm:$0xff]
    %v733 = vld [vmem:[#allocation9 + $0x180] sm:$0xff]
    %v734 = vld [vmem:[#allocation9 + $0x188] sm:$0xff]
    %v735 = vld [vmem:[#allocation9 + $0x190] sm:$0xff]
    %v736 = vld [vmem:[#allocation9 + $0x198] sm:$0xff]
    %v737 = vld [vmem:[#allocation9 + $0x1a0] sm:$0xff]
    %v738 = vld [vmem:[#allocation9 + $0x1a8] sm:$0xff]
    %v739 = vld [vmem:[#allocation9 + $0x1b0] sm:$0xff]
    %v740 = vld [vmem:[#allocation9 + $0x1b8] sm:$0xff]
    %v741 = vld [vmem:[#allocation9 + $0x1c0] sm:$0xff]
    %v742 = vld [vmem:[#allocation9 + $0x1c8] sm:$0xff]
    %v743 = vld [vmem:[#allocation9 + $0x1d0] sm:$0xff]
    %v744 = vld [vmem:[#allocation9 + $0x1d8] sm:$0xff]
    %v745 = vld [vmem:[#allocation9 + $0x1e0] sm:$0xff]
    %v746 = vld [vmem:[#allocation9 + $0x1e8] sm:$0xff]
    %v747 = vld [vmem:[#allocation9 + $0x1f0] sm:$0xff]
    %v748 = vld [vmem:[#allocation9 + $0x1f8] sm:$0xff]
    %749 = vmatprep.subr.mxu0 %v686
    %750 = vmatpush1.msra.mxu0 %v685
    %751 = vmatprep.subr.mxu0 %v690
    %752 = vmatpush1.msra.mxu0 %v689
    %753 = vmatprep.subr.mxu0 %v694
    %754 = vmatpush1.msra.mxu0 %v693
    %755 = vmatprep.subr.mxu0 %v698
    %756 = vmatpush1.msra.mxu0 %v697
    %757 = vmatprep.subr.mxu0 %v702
    %758 = vmatpush1.msra.mxu0 %v701
    %759 = vmatprep.subr.mxu0 %v706
    %760 = vmatpush1.msra.mxu0 %v705
    %761 = vmatprep.subr.mxu0 %v710
    %762 = vmatpush1.msra.mxu0 %v709
    %763 = vmatprep.subr.mxu0 %v714
    %764 = vmatpush1.msra.mxu0 %v713
    %765 = vmatprep.subr.mxu0 %v718
    %766 = vmatpush1.msra.mxu0 %v717
    %767 = vmatprep.subr.mxu0 %v722
    %768 = vmatpush1.msra.mxu0 %v721
    %769 = vmatprep.subr.mxu0 %v726
    %770 = vmatpush1.msra.mxu0 %v725
    %771 = vmatprep.subr.mxu0 %v730
    %772 = vmatpush1.msra.mxu0 %v729
    %773 = vmatprep.subr.mxu0 %v734
    %774 = vmatpush1.msra.mxu0 %v733
    %775 = vmatprep.subr.mxu0 %v738
    %776 = vmatpush1.msra.mxu0 %v737
    %777 = vmatprep.subr.mxu0 %v742
    %778 = vmatpush1.msra.mxu0 %v741
    %779 = vmatprep.subr.mxu0 %v746
    %780 = vmatpush1.msra.mxu0 %v745
    %781 = vmatprep.subr.mxu0 0.0
    %782 = vmatpush1.msra.mxu0 0.0
    %783 = vmatprep.subr.mxu0 0.0
    %784 = vmatpush1.msra.mxu0 0.0
    %785 = vmatprep.subr.mxu0 0.0
    %786 = vmatpush1.msra.mxu0 0.0
    %787 = vmatprep.subr.mxu0 0.0
    %788 = vmatpush1.msra.mxu0 0.0
    %789 = vmatprep.subr.mxu0 0.0
    %790 = vmatpush1.msra.mxu0 0.0
    %791 = vmatprep.subr.mxu0 0.0
    %792 = vmatpush1.msra.mxu0 0.0
    %793 = vmatprep.subr.mxu0 0.0
    %794 = vmatpush1.msra.mxu0 0.0
    %795 = vmatprep.subr.mxu0 0.0
    %796 = vmatpush1.msra.mxu0 0.0
    %797 = vmatprep.subr.mxu0 0.0
    %798 = vmatpush1.msra.mxu0 0.0
    %799 = vmatprep.subr.mxu0 0.0
    %800 = vmatpush1.msra.mxu0 0.0
    %801 = vmatprep.subr.mxu0 0.0
    %802 = vmatpush1.msra.mxu0 0.0
    %803 = vmatprep.subr.mxu0 0.0
    %804 = vmatpush1.msra.mxu0 0.0
    %805 = vmatprep.subr.mxu0 0.0
    %806 = vmatpush1.msra.mxu0 0.0
    %807 = vmatprep.subr.mxu0 0.0
    %808 = vmatpush1.msra.mxu0 0.0
    %809 = vmatprep.subr.mxu0 0.0
    %810 = vmatpush1.msra.mxu0 0.0
    %811 = vmatprep.subr.mxu0 0.0
    %812 = vmatpush1.msra.mxu0 0.0
    %813 = vmatprep.mubr.f32.mxu0 0.0
    %814 = vmatmul.mubr.f32.gmra.mrb[0].mxu0 %v679
    %v815 = vpop.f32.mrb[0].mxu0
    %v816 = vadd.f32 0.0, %v815
    %v817 = vpop.f32.mrb[0].mxu0
    %v818 = vadd.f32 0.0, %v817
    %819 = vdwg.mxu0
    %820 = vmatprep.subr.mxu0 %v688
    %821 = vmatpush1.msra.mxu0 %v687
    %822 = vmatprep.subr.mxu0 %v692
    %823 = vmatpush1.msra.mxu0 %v691
    %824 = vmatprep.subr.mxu0 %v696
    %825 = vmatpush1.msra.mxu0 %v695
    %826 = vmatprep.subr.mxu0 %v700
    %827 = vmatpush1.msra.mxu0 %v699
    %828 = vmatprep.subr.mxu0 %v704
    %829 = vmatpush1.msra.mxu0 %v703
    %830 = vmatprep.subr.mxu0 %v708
    %831 = vmatpush1.msra.mxu0 %v707
    %832 = vmatprep.subr.mxu0 %v712
    %833 = vmatpush1.msra.mxu0 %v711
    %834 = vmatprep.subr.mxu0 %v716
    %835 = vmatpush1.msra.mxu0 %v715
    %836 = vmatprep.subr.mxu0 %v720
    %837 = vmatpush1.msra.mxu0 %v719
    %838 = vmatprep.subr.mxu0 %v724
    %839 = vmatpush1.msra.mxu0 %v723
    %840 = vmatprep.subr.mxu0 %v728
    %841 = vmatpush1.msra.mxu0 %v727
    %842 = vmatprep.subr.mxu0 %v732
    %843 = vmatpush1.msra.mxu0 %v731
    %844 = vmatprep.subr.mxu0 %v736
    %845 = vmatpush1.msra.mxu0 %v735
    %846 = vmatprep.subr.mxu0 %v740
    %847 = vmatpush1.msra.mxu0 %v739
    %848 = vmatprep.subr.mxu0 %v744
    %849 = vmatpush1.msra.mxu0 %v743
    %850 = vmatprep.subr.mxu0 %v748
    %851 = vmatpush1.msra.mxu0 %v747
    %852 = vmatprep.subr.mxu0 0.0
    %853 = vmatpush1.msra.mxu0 0.0
    %854 = vmatprep.subr.mxu0 0.0
    %855 = vmatpush1.msra.mxu0 0.0
    %856 = vmatprep.subr.mxu0 0.0
    %857 = vmatpush1.msra.mxu0 0.0
    %858 = vmatprep.subr.mxu0 0.0
    %859 = vmatpush1.msra.mxu0 0.0
    %860 = vmatprep.subr.mxu0 0.0
    %861 = vmatpush1.msra.mxu0 0.0
    %862 = vmatprep.subr.mxu0 0.0
    %863 = vmatpush1.msra.mxu0 0.0
    %864 = vmatprep.subr.mxu0 0.0
    %865 = vmatpush1.msra.mxu0 0.0
    %866 = vmatprep.subr.mxu0 0.0
    %867 = vmatpush1.msra.mxu0 0.0
    %868 = vmatprep.subr.mxu0 0.0
    %869 = vmatpush1.msra.mxu0 0.0
    %870 = vmatprep.subr.mxu0 0.0
    %871 = vmatpush1.msra.mxu0 0.0
    %872 = vmatprep.subr.mxu0 0.0
    %873 = vmatpush1.msra.mxu0 0.0
    %874 = vmatprep.subr.mxu0 0.0
    %875 = vmatpush1.msra.mxu0 0.0
    %876 = vmatprep.subr.mxu0 0.0
    %877 = vmatpush1.msra.mxu0 0.0
    %878 = vmatprep.subr.mxu0 0.0
    %879 = vmatpush1.msra.mxu0 0.0
    %880 = vmatprep.subr.mxu0 0.0
    %881 = vmatpush1.msra.mxu0 0.0
    %882 = vmatprep.subr.mxu0 0.0
    %883 = vmatpush1.msra.mxu0 0.0
    %884 = vmatprep.mubr.f32.mxu0 0.0
    %885 = vmatmul.mubr.f32.gmra.mrb[0].mxu0 %v679
    %v886 = vpop.f32.mrb[0].mxu0
    %v887 = vadd.f32 0.0, %v886
    %v888 = vpop.f32.mrb[0].mxu0
    %v889 = vadd.f32 0.0, %v888
    %890 = vdwg.mxu0
    %v891 = vadd.f32 %v681, %v816
    %v892 = vadd.f32 %v682, %v818
    %v893 = vadd.f32 %v683, %v887
    %v894 = vadd.f32 %v684, %v889
    %v895 = vxor.u32 %v891, 2147483648
    %v896 = vxor.u32 %v892, 2147483648
    %v897 = vxor.u32 %v893, 2147483648
    %v898 = vmul.f32 %v895, 1.442695
    %v899 = vpow.pop %v898
    %v900 = vmul.f32 %v896, 1.442695
    %v901 = vpow.pop %v900
    %v902 = vmul.f32 %v897, 1.442695
    %v903 = vpow.pop %v902
    %v904 = vadd.f32 %v899, 1.0
    %v905 = vadd.f32 %v901, 1.0
    %v906 = vadd.f32 %v903, 1.0
    %v907 = vrcp.pop %v904
    %v908 = vmul.f32 1.0, %v907
    %v909 = vrcp.pop %v905
    %v910 = vmul.f32 1.0, %v909
    %v911 = vrcp.pop %v906
    %v912 = vmul.f32 1.0, %v911
    %v913 = vtanh.pop %v894
    %v914 = vmul.f32 %v910, %v677
    %v915 = vmul.f32 %v908, %v913
    %v916 = vadd.f32 %v914, %v915
    %v917 = vtanh.pop %v916
    %v918 = vmul.f32 %v912, %v917
    %919 = vst [vmem:[#allocation3 + $0x8] sm:$0xff] %v918
    %v920 = vld [vmem:[#allocation2 + $0x40] sm:$0xff]
    %v921 = vld [vmem:[#allocation2 + $0x48] sm:$0xff]
    %v922 = vld [vmem:[#allocation2 + $0x50] sm:$0xff]
    %v923 = vld [vmem:[#allocation2 + $0x58] sm:$0xff]
    %v924 = vld [vmem:[#allocation9] sm:$0xff]
    %v925 = vld [vmem:[#allocation9 + $0x8] sm:$0xff]
    %v926 = vld [vmem:[#allocation9 + $0x10] sm:$0xff]
    %v927 = vld [vmem:[#allocation9 + $0x18] sm:$0xff]
    %v928 = vld [vmem:[#allocation9 + $0x20] sm:$0xff]
    %v929 = vld [vmem:[#allocation9 + $0x28] sm:$0xff]
    %v930 = vld [vmem:[#allocation9 + $0x30] sm:$0xff]
    %v931 = vld [vmem:[#allocation9 + $0x38] sm:$0xff]
    %v932 = vld [vmem:[#allocation9 + $0x40] sm:$0xff]
    %v933 = vld [vmem:[#allocation9 + $0x48] sm:$0xff]
    %v934 = vld [vmem:[#allocation9 + $0x50] sm:$0xff]
    %v935 = vld [vmem:[#allocation9 + $0x58] sm:$0xff]
    %v936 = vld [vmem:[#allocation9 + $0x60] sm:$0xff]
    %v937 = vld [vmem:[#allocation9 + $0x68] sm:$0xff]
    %v938 = vld [vmem:[#allocation9 + $0x70] sm:$0xff]
    %v939 = vld [vmem:[#allocation9 + $0x78] sm:$0xff]
    %v940 = vld [vmem:[#allocation9 + $0x80] sm:$0xff]
    %v941 = vld [vmem:[#allocation9 + $0x88] sm:$0xff]
    %v942 = vld [vmem:[#allocation9 + $0x90] sm:$0xff]
    %v943 = vld [vmem:[#allocation9 + $0x98] sm:$0xff]
    %v944 = vld [vmem:[#allocation9 + $0xa0] sm:$0xff]
    %v945 = vld [vmem:[#allocation9 + $0xa8] sm:$0xff]
    %v946 = vld [vmem:[#allocation9 + $0xb0] sm:$0xff]
    %v947 = vld [vmem:[#allocation9 + $0xb8] sm:$0xff]
    %v948 = vld [vmem:[#allocation9 + $0xc0] sm:$0xff]
    %v949 = vld [vmem:[#allocation9 + $0xc8] sm:$0xff]
    %v950 = vld [vmem:[#allocation9 + $0xd0] sm:$0xff]
    %v951 = vld [vmem:[#allocation9 + $0xd8] sm:$0xff]
    %v952 = vld [vmem:[#allocation9 + $0xe0] sm:$0xff]
    %v953 = vld [vmem:[#allocation9 + $0xe8] sm:$0xff]
    %v954 = vld [vmem:[#allocation9 + $0xf0] sm:$0xff]
    %v955 = vld [vmem:[#allocation9 + $0xf8] sm:$0xff]
    %v956 = vld [vmem:[#allocation9 + $0x100] sm:$0xff]
    %v957 = vld [vmem:[#allocation9 + $0x108] sm:$0xff]
    %v958 = vld [vmem:[#allocation9 + $0x110] sm:$0xff]
    %v959 = vld [vmem:[#allocation9 + $0x118] sm:$0xff]
    %v960 = vld [vmem:[#allocation9 + $0x120] sm:$0xff]
    %v961 = vld [vmem:[#allocation9 + $0x128] sm:$0xff]
    %v962 = vld [vmem:[#allocation9 + $0x130] sm:$0xff]
    %v963 = vld [vmem:[#allocation9 + $0x138] sm:$0xff]
    %v964 = vld [vmem:[#allocation9 + $0x140] sm:$0xff]
    %v965 = vld [vmem:[#allocation9 + $0x148] sm:$0xff]
    %v966 = vld [vmem:[#allocation9 + $0x150] sm:$0xff]
    %v967 = vld [vmem:[#allocation9 + $0x158] sm:$0xff]
    %v968 = vld [vmem:[#allocation9 + $0x160] sm:$0xff]
    %v969 = vld [vmem:[#allocation9 + $0x168] sm:$0xff]
    %v970 = vld [vmem:[#allocation9 + $0x170] sm:$0xff]
    %v971 = vld [vmem:[#allocation9 + $0x178] sm:$0xff]
    %v972 = vld [vmem:[#allocation9 + $0x180] sm:$0xff]
    %v973 = vld [vmem:[#allocation9 + $0x188] sm:$0xff]
    %v974 = vld [vmem:[#allocation9 + $0x190] sm:$0xff]
    %v975 = vld [vmem:[#allocation9 + $0x198] sm:$0xff]
    %v976 = vld [vmem:[#allocation9 + $0x1a0] sm:$0xff]
    %v977 = vld [vmem:[#allocation9 + $0x1a8] sm:$0xff]
    %v978 = vld [vmem:[#allocation9 + $0x1b0] sm:$0xff]
    %v979 = vld [vmem:[#allocation9 + $0x1b8] sm:$0xff]
    %v980 = vld [vmem:[#allocation9 + $0x1c0] sm:$0xff]
    %v981 = vld [vmem:[#allocation9 + $0x1c8] sm:$0xff]
    %v982 = vld [vmem:[#allocation9 + $0x1d0] sm:$0xff]
    %v983 = vld [vmem:[#allocation9 + $0x1d8] sm:$0xff]
    %v984 = vld [vmem:[#allocation9 + $0x1e0] sm:$0xff]
    %v985 = vld [vmem:[#allocation9 + $0x1e8] sm:$0xff]
    %v986 = vld [vmem:[#allocation9 + $0x1f0] sm:$0xff]
    %v987 = vld [vmem:[#allocation9 + $0x1f8] sm:$0xff]
    %988 = vmatprep.subr.mxu0 %v925
    %989 = vmatpush1.msra.mxu0 %v924
    %990 = vmatprep.subr.mxu0 %v929
    %991 = vmatpush1.msra.mxu0 %v928
    %992 = vmatprep.subr.mxu0 %v933
    %993 = vmatpush1.msra.mxu0 %v932
    %994 = vmatprep.subr.mxu0 %v937
    %995 = vmatpush1.msra.mxu0 %v936
    %996 = vmatprep.subr.mxu0 %v941
    %997 = vmatpush1.msra.mxu0 %v940
    %998 = vmatprep.subr.mxu0 %v945
    %999 = vmatpush1.msra.mxu0 %v944
    %1000 = vmatprep.subr.mxu0 %v949
    %1001 = vmatpush1.msra.mxu0 %v948
    %1002 = vmatprep.subr.mxu0 %v953
    %1003 = vmatpush1.msra.mxu0 %v952
    %1004 = vmatprep.subr.mxu0 %v957
    %1005 = vmatpush1.msra.mxu0 %v956
    %1006 = vmatprep.subr.mxu0 %v961
    %1007 = vmatpush1.msra.mxu0 %v960
    %1008 = vmatprep.subr.mxu0 %v965
    %1009 = vmatpush1.msra.mxu0 %v964
    %1010 = vmatprep.subr.mxu0 %v969
    %1011 = vmatpush1.msra.mxu0 %v968
    %1012 = vmatprep.subr.mxu0 %v973
    %1013 = vmatpush1.msra.mxu0 %v972
    %1014 = vmatprep.subr.mxu0 %v977
    %1015 = vmatpush1.msra.mxu0 %v976
    %1016 = vmatprep.subr.mxu0 %v981
    %1017 = vmatpush1.msra.mxu0 %v980
    %1018 = vmatprep.subr.mxu0 %v985
    %1019 = vmatpush1.msra.mxu0 %v984
    %1020 = vmatprep.subr.mxu0 0.0
    %1021 = vmatpush1.msra.mxu0 0.0
    %1022 = vmatprep.subr.mxu0 0.0
    %1023 = vmatpush1.msra.mxu0 0.0
    %1024 = vmatprep.subr.mxu0 0.0
    %1025 = vmatpush1.msra.mxu0 0.0
    %1026 = vmatprep.subr.mxu0 0.0
    %1027 = vmatpush1.msra.mxu0 0.0
    %1028 = vmatprep.subr.mxu0 0.0
    %1029 = vmatpush1.msra.mxu0 0.0
    %1030 = vmatprep.subr.mxu0 0.0
    %1031 = vmatpush1.msra.mxu0 0.0
    %1032 = vmatprep.subr.mxu0 0.0
    %1033 = vmatpush1.msra.mxu0 0.0
    %1034 = vmatprep.subr.mxu0 0.0
    %1035 = vmatpush1.msra.mxu0 0.0
    %1036 = vmatprep.subr.mxu0 0.0
    %1037 = vmatpush1.msra.mxu0 0.0
    %1038 = vmatprep.subr.mxu0 0.0
    %1039 = vmatpush1.msra.mxu0 0.0
    %1040 = vmatprep.subr.mxu0 0.0
    %1041 = vmatpush1.msra.mxu0 0.0
    %1042 = vmatprep.subr.mxu0 0.0
    %1043 = vmatpush1.msra.mxu0 0.0
    %1044 = vmatprep.subr.mxu0 0.0
    %1045 = vmatpush1.msra.mxu0 0.0
    %1046 = vmatprep.subr.mxu0 0.0
    %1047 = vmatpush1.msra.mxu0 0.0
    %1048 = vmatprep.subr.mxu0 0.0
    %1049 = vmatpush1.msra.mxu0 0.0
    %1050 = vmatprep.subr.mxu0 0.0
    %1051 = vmatpush1.msra.mxu0 0.0
    %1052 = vmatprep.mubr.f32.mxu0 0.0
    %1053 = vmatmul.mubr.f32.gmra.mrb[0].mxu0 %v918
    %v1054 = vpop.f32.mrb[0].mxu0
    %v1055 = vadd.f32 0.0, %v1054
    %v1056 = vpop.f32.mrb[0].mxu0
    %v1057 = vadd.f32 0.0, %v1056
    %1058 = vdwg.mxu0
    %1059 = vmatprep.subr.mxu0 %v927
    %1060 = vmatpush1.msra.mxu0 %v926
    %1061 = vmatprep.subr.mxu0 %v931
    %1062 = vmatpush1.msra.mxu0 %v930
    %1063 = vmatprep.subr.mxu0 %v935
    %1064 = vmatpush1.msra.mxu0 %v934
    %1065 = vmatprep.subr.mxu0 %v939
    %1066 = vmatpush1.msra.mxu0 %v938
    %1067 = vmatprep.subr.mxu0 %v943
    %1068 = vmatpush1.msra.mxu0 %v942
    %1069 = vmatprep.subr.mxu0 %v947
    %1070 = vmatpush1.msra.mxu0 %v946
    %1071 = vmatprep.subr.mxu0 %v951
    %1072 = vmatpush1.msra.mxu0 %v950
    %1073 = vmatprep.subr.mxu0 %v955
    %1074 = vmatpush1.msra.mxu0 %v954
    %1075 = vmatprep.subr.mxu0 %v959
    %1076 = vmatpush1.msra.mxu0 %v958
    %1077 = vmatprep.subr.mxu0 %v963
    %1078 = vmatpush1.msra.mxu0 %v962
    %1079 = vmatprep.subr.mxu0 %v967
    %1080 = vmatpush1.msra.mxu0 %v966
    %1081 = vmatprep.subr.mxu0 %v971
    %1082 = vmatpush1.msra.mxu0 %v970
    %1083 = vmatprep.subr.mxu0 %v975
    %1084 = vmatpush1.msra.mxu0 %v974
    %1085 = vmatprep.subr.mxu0 %v979
    %1086 = vmatpush1.msra.mxu0 %v978
    %1087 = vmatprep.subr.mxu0 %v983
    %1088 = vmatpush1.msra.mxu0 %v982
    %1089 = vmatprep.subr.mxu0 %v987
    %1090 = vmatpush1.msra.mxu0 %v986
    %1091 = vmatprep.subr.mxu0 0.0
    %1092 = vmatpush1.msra.mxu0 0.0
    %1093 = vmatprep.subr.mxu0 0.0
    %1094 = vmatpush1.msra.mxu0 0.0
    %1095 = vmatprep.subr.mxu0 0.0
    %1096 = vmatpush1.msra.mxu0 0.0
    %1097 = vmatprep.subr.mxu0 0.0
    %1098 = vmatpush1.msra.mxu0 0.0
    %1099 = vmatprep.subr.mxu0 0.0
    %1100 = vmatpush1.msra.mxu0 0.0
    %1101 = vmatprep.subr.mxu0 0.0
    %1102 = vmatpush1.msra.mxu0 0.0
    %1103 = vmatprep.subr.mxu0 0.0
    %1104 = vmatpush1.msra.mxu0 0.0
    %1105 = vmatprep.subr.mxu0 0.0
    %1106 = vmatpush1.msra.mxu0 0.0
    %1107 = vmatprep.subr.mxu0 0.0
    %1108 = vmatpush1.msra.mxu0 0.0
    %1109 = vmatprep.subr.mxu0 0.0
    %1110 = vmatpush1.msra.mxu0 0.0
    %1111 = vmatprep.subr.mxu0 0.0
    %1112 = vmatpush1.msra.mxu0 0.0
    %1113 = vmatprep.subr.mxu0 0.0
    %1114 = vmatpush1.msra.mxu0 0.0
    %1115 = vmatprep.subr.mxu0 0.0
    %1116 = vmatpush1.msra.mxu0 0.0
    %1117 = vmatprep.subr.mxu0 0.0
    %1118 = vmatpush1.msra.mxu0 0.0
    %1119 = vmatprep.subr.mxu0 0.0
    %1120 = vmatpush1.msra.mxu0 0.0
    %1121 = vmatprep.subr.mxu0 0.0
    %1122 = vmatpush1.msra.mxu0 0.0
    %1123 = vmatprep.mubr.f32.mxu0 0.0
    %1124 = vmatmul.mubr.f32.gmra.mrb[0].mxu0 %v918
    %v1125 = vpop.f32.mrb[0].mxu0
    %v1126 = vadd.f32 0.0, %v1125
    %v1127 = vpop.f32.mrb[0].mxu0
    %v1128 = vadd.f32 0.0, %v1127
    %1129 = vdwg.mxu0
    %v1130 = vadd.f32 %v920, %v1055
    %v1131 = vadd.f32 %v921, %v1057
    %v1132 = vadd.f32 %v922, %v1126
    %v1133 = vadd.f32 %v923, %v1128
    %v1134 = vxor.u32 %v1130, 2147483648
    %v1135 = vxor.u32 %v1131, 2147483648
    %v1136 = vxor.u32 %v1132, 2147483648
    %v1137 = vmul.f32 %v1134, 1.442695
    %v1138 = vpow.pop %v1137
    %v1139 = vmul.f32 %v1135, 1.442695
    %v1140 = vpow.pop %v1139
    %v1141 = vmul.f32 %v1136, 1.442695
    %v1142 = vpow.pop %v1141
    %v1143 = vadd.f32 %v1138, 1.0
    %v1144 = vadd.f32 %v1140, 1.0
    %v1145 = vadd.f32 %v1142, 1.0
    %v1146 = vrcp.pop %v1143
    %v1147 = vmul.f32 1.0, %v1146
    %v1148 = vrcp.pop %v1144
    %v1149 = vmul.f32 1.0, %v1148
    %v1150 = vrcp.pop %v1145
    %v1151 = vmul.f32 1.0, %v1150
    %v1152 = vtanh.pop %v1133
    %v1153 = vmul.f32 %v1149, %v916
    %v1154 = vmul.f32 %v1147, %v1152
    %v1155 = vadd.f32 %v1153, %v1154
    %v1156 = vtanh.pop %v1155
    %v1157 = vmul.f32 %v1151, %v1156
    %1158 = vst [vmem:[#allocation3 + $0x10] sm:$0xff] %v1157
    %v1159 = vld [vmem:[#allocation2 + $0x60] sm:$0xff]
    %v1160 = vld [vmem:[#allocation2 + $0x68] sm:$0xff]
    %v1161 = vld [vmem:[#allocation2 + $0x70] sm:$0xff]
    %v1162 = vld [vmem:[#allocation2 + $0x78] sm:$0xff]
    %v1163 = vld [vmem:[#allocation9] sm:$0xff]
    %v1164 = vld [vmem:[#allocation9 + $0x8] sm:$0xff]
    %v1165 = vld [vmem:[#allocation9 + $0x10] sm:$0xff]
    %v1166 = vld [vmem:[#allocation9 + $0x18] sm:$0xff]
    %v1167 = vld [vmem:[#allocation9 + $0x20] sm:$0xff]
    %v1168 = vld [vmem:[#allocation9 + $0x28] sm:$0xff]
    %v1169 = vld [vmem:[#allocation9 + $0x30] sm:$0xff]
    %v1170 = vld [vmem:[#allocation9 + $0x38] sm:$0xff]
    %v1171 = vld [vmem:[#allocation9 + $0x40] sm:$0xff]
    %v1172 = vld [vmem:[#allocation9 + $0x48] sm:$0xff]
    %v1173 = vld [vmem:[#allocation9 + $0x50] sm:$0xff]
    %v1174 = vld [vmem:[#allocation9 + $0x58] sm:$0xff]
    %v1175 = vld [vmem:[#allocation9 + $0x60] sm:$0xff]
    %v1176 = vld [vmem:[#allocation9 + $0x68] sm:$0xff]
    %v1177 = vld [vmem:[#allocation9 + $0x70] sm:$0xff]
    %v1178 = vld [vmem:[#allocation9 + $0x78] sm:$0xff]
    %v1179 = vld [vmem:[#allocation9 + $0x80] sm:$0xff]
    %v1180 = vld [vmem:[#allocation9 + $0x88] sm:$0xff]
    %v1181 = vld [vmem:[#allocation9 + $0x90] sm:$0xff]
    %v1182 = vld [vmem:[#allocation9 + $0x98] sm:$0xff]
    %v1183 = vld [vmem:[#allocation9 + $0xa0] sm:$0xff]
    %v1184 = vld [vmem:[#allocation9 + $0xa8] sm:$0xff]
    %v1185 = vld [vmem:[#allocation9 + $0xb0] sm:$0xff]
    %v1186 = vld [vmem:[#allocation9 + $0xb8] sm:$0xff]
    %v1187 = vld [vmem:[#allocation9 + $0xc0] sm:$0xff]
    %v1188 = vld [vmem:[#allocation9 + $0xc8] sm:$0xff]
    %v1189 = vld [vmem:[#allocation9 + $0xd0] sm:$0xff]
    %v1190 = vld [vmem:[#allocation9 + $0xd8] sm:$0xff]
    %v1191 = vld [vmem:[#allocation9 + $0xe0] sm:$0xff]
    %v1192 = vld [vmem:[#allocation9 + $0xe8] sm:$0xff]
    %v1193 = vld [vmem:[#allocation9 + $0xf0] sm:$0xff]
    %v1194 = vld [vmem:[#allocation9 + $0xf8] sm:$0xff]
    %v1195 = vld [vmem:[#allocation9 + $0x100] sm:$0xff]
    %v1196 = vld [vmem:[#allocation9 + $0x108] sm:$0xff]
    %v1197 = vld [vmem:[#allocation9 + $0x110] sm:$0xff]
    %v1198 = vld [vmem:[#allocation9 + $0x118] sm:$0xff]
    %v1199 = vld [vmem:[#allocation9 + $0x120] sm:$0xff]
    %v1200 = vld [vmem:[#allocation9 + $0x128] sm:$0xff]
    %v1201 = vld [vmem:[#allocation9 + $0x130] sm:$0xff]
    %v1202 = vld [vmem:[#allocation9 + $0x138] sm:$0xff]
    %v1203 = vld [vmem:[#allocation9 + $0x140] sm:$0xff]
    %v1204 = vld [vmem:[#allocation9 + $0x148] sm:$0xff]
    %v1205 = vld [vmem:[#allocation9 + $0x150] sm:$0xff]
    %v1206 = vld [vmem:[#allocation9 + $0x158] sm:$0xff]
    %v1207 = vld [vmem:[#allocation9 + $0x160] sm:$0xff]
    %v1208 = vld [vmem:[#allocation9 + $0x168] sm:$0xff]
    %v1209 = vld [vmem:[#allocation9 + $0x170] sm:$0xff]
    %v1210 = vld [vmem:[#allocation9 + $0x178] sm:$0xff]
    %v1211 = vld [vmem:[#allocation9 + $0x180] sm:$0xff]
    %v1212 = vld [vmem:[#allocation9 + $0x188] sm:$0xff]
    %v1213 = vld [vmem:[#allocation9 + $0x190] sm:$0xff]
    %v1214 = vld [vmem:[#allocation9 + $0x198] sm:$0xff]
    %v1215 = vld [vmem:[#allocation9 + $0x1a0] sm:$0xff]
    %v1216 = vld [vmem:[#allocation9 + $0x1a8] sm:$0xff]
    %v1217 = vld [vmem:[#allocation9 + $0x1b0] sm:$0xff]
    %v1218 = vld [vmem:[#allocation9 + $0x1b8] sm:$0xff]
    %v1219 = vld [vmem:[#allocation9 + $0x1c0] sm:$0xff]
    %v1220 = vld [vmem:[#allocation9 + $0x1c8] sm:$0xff]
    %v1221 = vld [vmem:[#allocation9 + $0x1d0] sm:$0xff]
    %v1222 = vld [vmem:[#allocation9 + $0x1d8] sm:$0xff]
    %v1223 = vld [vmem:[#allocation9 + $0x1e0] sm:$0xff]
    %v1224 = vld [vmem:[#allocation9 + $0x1e8] sm:$0xff]
    %v1225 = vld [vmem:[#allocation9 + $0x1f0] sm:$0xff]
    %v1226 = vld [vmem:[#allocation9 + $0x1f8] sm:$0xff]
    %1227 = vmatprep.subr.mxu0 %v1164
    %1228 = vmatpush1.msra.mxu0 %v1163
    %1229 = vmatprep.subr.mxu0 %v1168
    %1230 = vmatpush1.msra.mxu0 %v1167
    %1231 = vmatprep.subr.mxu0 %v1172
    %1232 = vmatpush1.msra.mxu0 %v1171
    %1233 = vmatprep.subr.mxu0 %v1176
    %1234 = vmatpush1.msra.mxu0 %v1175
    %1235 = vmatprep.subr.mxu0 %v1180
    %1236 = vmatpush1.msra.mxu0 %v1179
    %1237 = vmatprep.subr.mxu0 %v1184
    %1238 = vmatpush1.msra.mxu0 %v1183
    %1239 = vmatprep.subr.mxu0 %v1188
    %1240 = vmatpush1.msra.mxu0 %v1187
    %1241 = vmatprep.subr.mxu0 %v1192
    %1242 = vmatpush1.msra.mxu0 %v1191
    %1243 = vmatprep.subr.mxu0 %v1196
    %1244 = vmatpush1.msra.mxu0 %v1195
    %1245 = vmatprep.subr.mxu0 %v1200
    %1246 = vmatpush1.msra.mxu0 %v1199
    %1247 = vmatprep.subr.mxu0 %v1204
    %1248 = vmatpush1.msra.mxu0 %v1203
    %1249 = vmatprep.subr.mxu0 %v1208
    %1250 = vmatpush1.msra.mxu0 %v1207
    %1251 = vmatprep.subr.mxu0 %v1212
    %1252 = vmatpush1.msra.mxu0 %v1211
    %1253 = vmatprep.subr.mxu0 %v1216
    %1254 = vmatpush1.msra.mxu0 %v1215
    %1255 = vmatprep.subr.mxu0 %v1220
    %1256 = vmatpush1.msra.mxu0 %v1219
    %1257 = vmatprep.subr.mxu0 %v1224
    %1258 = vmatpush1.msra.mxu0 %v1223
    %1259 = vmatprep.subr.mxu0 0.0
    %1260 = vmatpush1.msra.mxu0 0.0
    %1261 = vmatprep.subr.mxu0 0.0
    %1262 = vmatpush1.msra.mxu0 0.0
    %1263 = vmatprep.subr.mxu0 0.0
    %1264 = vmatpush1.msra.mxu0 0.0
    %1265 = vmatprep.subr.mxu0 0.0
    %1266 = vmatpush1.msra.mxu0 0.0
    %1267 = vmatprep.subr.mxu0 0.0
    %1268 = vmatpush1.msra.mxu0 0.0
    %1269 = vmatprep.subr.mxu0 0.0
    %1270 = vmatpush1.msra.mxu0 0.0
    %1271 = vmatprep.subr.mxu0 0.0
    %1272 = vmatpush1.msra.mxu0 0.0
    %1273 = vmatprep.subr.mxu0 0.0
    %1274 = vmatpush1.msra.mxu0 0.0
    %1275 = vmatprep.subr.mxu0 0.0
    %1276 = vmatpush1.msra.mxu0 0.0
    %1277 = vmatprep.subr.mxu0 0.0
    %1278 = vmatpush1.msra.mxu0 0.0
    %1279 = vmatprep.subr.mxu0 0.0
    %1280 = vmatpush1.msra.mxu0 0.0
    %1281 = vmatprep.subr.mxu0 0.0
    %1282 = vmatpush1.msra.mxu0 0.0
    %1283 = vmatprep.subr.mxu0 0.0
    %1284 = vmatpush1.msra.mxu0 0.0
    %1285 = vmatprep.subr.mxu0 0.0
    %1286 = vmatpush1.msra.mxu0 0.0
    %1287 = vmatprep.subr.mxu0 0.0
    %1288 = vmatpush1.msra.mxu0 0.0
    %1289 = vmatprep.subr.mxu0 0.0
    %1290 = vmatpush1.msra.mxu0 0.0
    %1291 = vmatprep.mubr.f32.mxu0 0.0
    %1292 = vmatmul.mubr.f32.gmra.mrb[0].mxu0 %v1157
    %v1293 = vpop.f32.mrb[0].mxu0
    %v1294 = vadd.f32 0.0, %v1293
    %v1295 = vpop.f32.mrb[0].mxu0
    %v1296 = vadd.f32 0.0, %v1295
    %1297 = vdwg.mxu0
    %1298 = vmatprep.subr.mxu0 %v1166
    %1299 = vmatpush1.msra.mxu0 %v1165
    %1300 = vmatprep.subr.mxu0 %v1170
    %1301 = vmatpush1.msra.mxu0 %v1169
    %1302 = vmatprep.subr.mxu0 %v1174
    %1303 = vmatpush1.msra.mxu0 %v1173
    %1304 = vmatprep.subr.mxu0 %v1178
    %1305 = vmatpush1.msra.mxu0 %v1177
    %1306 = vmatprep.subr.mxu0 %v1182
    %1307 = vmatpush1.msra.mxu0 %v1181
    %1308 = vmatprep.subr.mxu0 %v1186
    %1309 = vmatpush1.msra.mxu0 %v1185
    %1310 = vmatprep.subr.mxu0 %v1190
    %1311 = vmatpush1.msra.mxu0 %v1189
    %1312 = vmatprep.subr.mxu0 %v1194
    %1313 = vmatpush1.msra.mxu0 %v1193
    %1314 = vmatprep.subr.mxu0 %v1198
    %1315 = vmatpush1.msra.mxu0 %v1197
    %1316 = vmatprep.subr.mxu0 %v1202
    %1317 = vmatpush1.msra.mxu0 %v1201
    %1318 = vmatprep.subr.mxu0 %v1206
    %1319 = vmatpush1.msra.mxu0 %v1205
    %1320 = vmatprep.subr.mxu0 %v1210
    %1321 = vmatpush1.msra.mxu0 %v1209
    %1322 = vmatprep.subr.mxu0 %v1214
    %1323 = vmatpush1.msra.mxu0 %v1213
    %1324 = vmatprep.subr.mxu0 %v1218
    %1325 = vmatpush1.msra.mxu0 %v1217
    %1326 = vmatprep.subr.mxu0 %v1222
    %1327 = vmatpush1.msra.mxu0 %v1221
    %1328 = vmatprep.subr.mxu0 %v1226
    %1329 = vmatpush1.msra.mxu0 %v1225
    %1330 = vmatprep.subr.mxu0 0.0
    %1331 = vmatpush1.msra.mxu0 0.0
    %1332 = vmatprep.subr.mxu0 0.0
    %1333 = vmatpush1.msra.mxu0 0.0
    %1334 = vmatprep.subr.mxu0 0.0
    %1335 = vmatpush1.msra.mxu0 0.0
    %1336 = vmatprep.subr.mxu0 0.0
    %1337 = vmatpush1.msra.mxu0 0.0
    %1338 = vmatprep.subr.mxu0 0.0
    %1339 = vmatpush1.msra.mxu0 0.0
    %1340 = vmatprep.subr.mxu0 0.0
    %1341 = vmatpush1.msra.mxu0 0.0
    %1342 = vmatprep.subr.mxu0 0.0
    %1343 = vmatpush1.msra.mxu0 0.0
    %1344 = vmatprep.subr.mxu0 0.0
    %1345 = vmatpush1.msra.mxu0 0.0
    %1346 = vmatprep.subr.mxu0 0.0
    %1347 = vmatpush1.msra.mxu0 0.0
    %1348 = vmatprep.subr.mxu0 0.0
    %1349 = vmatpush1.msra.mxu0 0.0
    %1350 = vmatprep.subr.mxu0 0.0
    %1351 = vmatpush1.msra.mxu0 0.0
    %1352 = vmatprep.subr.mxu0 0.0
    %1353 = vmatpush1.msra.mxu0 0.0
    %1354 = vmatprep.subr.mxu0 0.0
    %1355 = vmatpush1.msra.mxu0 0.0
    %1356 = vmatprep.subr.mxu0 0.0
    %1357 = vmatpush1.msra.mxu0 0.0
    %1358 = vmatprep.subr.mxu0 0.0
    %1359 = vmatpush1.msra.mxu0 0.0
    %1360 = vmatprep.subr.mxu0 0.0
    %1361 = vmatpush1.msra.mxu0 0.0
    %1362 = vmatprep.mubr.f32.mxu0 0.0
    %1363 = vmatmul.mubr.f32.gmra.mrb[0].mxu0 %v1157
    %v1364 = vpop.f32.mrb[0].mxu0
    %v1365 = vadd.f32 0.0, %v1364
    %v1366 = vpop.f32.mrb[0].mxu0
    %v1367 = vadd.f32 0.0, %v1366
    %1368 = vdwg.mxu0
    %v1369 = vadd.f32 %v1159, %v1294
    %v1370 = vadd.f32 %v1160, %v1296
    %v1371 = vadd.f32 %v1161, %v1365
    %v1372 = vadd.f32 %v1162, %v1367
    %v1373 = vxor.u32 %v1369, 2147483648
    %v1374 = vxor.u32 %v1370, 2147483648
    %v1375 = vxor.u32 %v1371, 2147483648
    %v1376 = vmul.f32 %v1373, 1.442695
    %v1377 = vpow.pop %v1376
    %v1378 = vmul.f32 %v1374, 1.442695
    %v1379 = vpow.pop %v1378
    %v1380 = vmul.f32 %v1375, 1.442695
    %v1381 = vpow.pop %v1380
    %v1382 = vadd.f32 %v1377, 1.0
    %v1383 = vadd.f32 %v1379, 1.0
    %v1384 = vadd.f32 %v1381, 1.0
    %v1385 = vrcp.pop %v1382
    %v1386 = vmul.f32 1.0, %v1385
    %v1387 = vrcp.pop %v1383
    %v1388 = vmul.f32 1.0, %v1387
    %v1389 = vrcp.pop %v1384
    %v1390 = vmul.f32 1.0, %v1389
    %v1391 = vtanh.pop %v1372
    %v1392 = vmul.f32 %v1388, %v1155
    %v1393 = vmul.f32 %v1386, %v1391
    %v1394 = vadd.f32 %v1392, %v1393
    %v1395 = vtanh.pop %v1394
    %v1396 = vmul.f32 %v1390, %v1395
    %1397 = vst [vmem:[#allocation3 + $0x18] sm:$0xff] %v1396
    %v1398 = vld [vmem:[#allocation2 + $0x80] sm:$0xff]
    %v1399 = vld [vmem:[#allocation2 + $0x88] sm:$0xff]
    %v1400 = vld [vmem:[#allocation2 + $0x90] sm:$0xff]
    %v1401 = vld [vmem:[#allocation2 + $0x98] sm:$0xff]
    %v1402 = vld [vmem:[#allocation9] sm:$0xff]
    %v1403 = vld [vmem:[#allocation9 + $0x8] sm:$0xff]
    %v1404 = vld [vmem:[#allocation9 + $0x10] sm:$0xff]
    %v1405 = vld [vmem:[#allocation9 + $0x18] sm:$0xff]
    %v1406 = vld [vmem:[#allocation9 + $0x20] sm:$0xff]
    %v1407 = vld [vmem:[#allocation9 + $0x28] sm:$0xff]
    %v1408 = vld [vmem:[#allocation9 + $0x30] sm:$0xff]
    %v1409 = vld [vmem:[#allocation9 + $0x38] sm:$0xff]
    %v1410 = vld [vmem:[#allocation9 + $0x40] sm:$0xff]
    %v1411 = vld [vmem:[#allocation9 + $0x48] sm:$0xff]
    %v1412 = vld [vmem:[#allocation9 + $0x50] sm:$0xff]
    %v1413 = vld [vmem:[#allocation9 + $0x58] sm:$0xff]
    %v1414 = vld [vmem:[#allocation9 + $0x60] sm:$0xff]
    %v1415 = vld [vmem:[#allocation9 + $0x68] sm:$0xff]
    %v1416 = vld [vmem:[#allocation9 + $0x70] sm:$0xff]
    %v1417 = vld [vmem:[#allocation9 + $0x78] sm:$0xff]
    %v1418 = vld [vmem:[#allocation9 + $0x80] sm:$0xff]
    %v1419 = vld [vmem:[#allocation9 + $0x88] sm:$0xff]
    %v1420 = vld [vmem:[#allocation9 + $0x90] sm:$0xff]
    %v1421 = vld [vmem:[#allocation9 + $0x98] sm:$0xff]
    %v1422 = vld [vmem:[#allocation9 + $0xa0] sm:$0xff]
    %v1423 = vld [vmem:[#allocation9 + $0xa8] sm:$0xff]
    %v1424 = vld [vmem:[#allocation9 + $0xb0] sm:$0xff]
    %v1425 = vld [vmem:[#allocation9 + $0xb8] sm:$0xff]
    %v1426 = vld [vmem:[#allocation9 + $0xc0] sm:$0xff]
    %v1427 = vld [vmem:[#allocation9 + $0xc8] sm:$0xff]
    %v1428 = vld [vmem:[#allocation9 + $0xd0] sm:$0xff]
    %v1429 = vld [vmem:[#allocation9 + $0xd8] sm:$0xff]
    %v1430 = vld [vmem:[#allocation9 + $0xe0] sm:$0xff]
    %v1431 = vld [vmem:[#allocation9 + $0xe8] sm:$0xff]
    %v1432 = vld [vmem:[#allocation9 + $0xf0] sm:$0xff]
    %v1433 = vld [vmem:[#allocation9 + $0xf8] sm:$0xff]
    %v1434 = vld [vmem:[#allocation9 + $0x100] sm:$0xff]
    %v1435 = vld [vmem:[#allocation9 + $0x108] sm:$0xff]
    %v1436 = vld [vmem:[#allocation9 + $0x110] sm:$0xff]
    %v1437 = vld [vmem:[#allocation9 + $0x118] sm:$0xff]
    %v1438 = vld [vmem:[#allocation9 + $0x120] sm:$0xff]
    %v1439 = vld [vmem:[#allocation9 + $0x128] sm:$0xff]
    %v1440 = vld [vmem:[#allocation9 + $0x130] sm:$0xff]
    %v1441 = vld [vmem:[#allocation9 + $0x138] sm:$0xff]
    %v1442 = vld [vmem:[#allocation9 + $0x140] sm:$0xff]
    %v1443 = vld [vmem:[#allocation9 + $0x148] sm:$0xff]
    %v1444 = vld [vmem:[#allocation9 + $0x150] sm:$0xff]
    %v1445 = vld [vmem:[#allocation9 + $0x158] sm:$0xff]
    %v1446 = vld [vmem:[#allocation9 + $0x160] sm:$0xff]
    %v1447 = vld [vmem:[#allocation9 + $0x168] sm:$0xff]
    %v1448 = vld [vmem:[#allocation9 + $0x170] sm:$0xff]
    %v1449 = vld [vmem:[#allocation9 + $0x178] sm:$0xff]
    %v1450 = vld [vmem:[#allocation9 + $0x180] sm:$0xff]
    %v1451 = vld [vmem:[#allocation9 + $0x188] sm:$0xff]
    %v1452 = vld [vmem:[#allocation9 + $0x190] sm:$0xff]
    %v1453 = vld [vmem:[#allocation9 + $0x198] sm:$0xff]
    %v1454 = vld [vmem:[#allocation9 + $0x1a0] sm:$0xff]
    %v1455 = vld [vmem:[#allocation9 + $0x1a8] sm:$0xff]
    %v1456 = vld [vmem:[#allocation9 + $0x1b0] sm:$0xff]
    %v1457 = vld [vmem:[#allocation9 + $0x1b8] sm:$0xff]
    %v1458 = vld [vmem:[#allocation9 + $0x1c0] sm:$0xff]
    %v1459 = vld [vmem:[#allocation9 + $0x1c8] sm:$0xff]
    %v1460 = vld [vmem:[#allocation9 + $0x1d0] sm:$0xff]
    %v1461 = vld [vmem:[#allocation9 + $0x1d8] sm:$0xff]
    %v1462 = vld [vmem:[#allocation9 + $0x1e0] sm:$0xff]
    %v1463 = vld [vmem:[#allocation9 + $0x1e8] sm:$0xff]
    %v1464 = vld [vmem:[#allocation9 + $0x1f0] sm:$0xff]
    %v1465 = vld [vmem:[#allocation9 + $0x1f8] sm:$0xff]
    %1466 = vmatprep.subr.mxu0 %v1403
    %1467 = vmatpush1.msra.mxu0 %v1402
    %1468 = vmatprep.subr.mxu0 %v1407
    %1469 = vmatpush1.msra.mxu0 %v1406
    %1470 = vmatprep.subr.mxu0 %v1411
    %1471 = vmatpush1.msra.mxu0 %v1410
    %1472 = vmatprep.subr.mxu0 %v1415
    %1473 = vmatpush1.msra.mxu0 %v1414
    %1474 = vmatprep.subr.mxu0 %v1419
    %1475 = vmatpush1.msra.mxu0 %v1418
    %1476 = vmatprep.subr.mxu0 %v1423
    %1477 = vmatpush1.msra.mxu0 %v1422
    %1478 = vmatprep.subr.mxu0 %v1427
    %1479 = vmatpush1.msra.mxu0 %v1426
    %1480 = vmatprep.subr.mxu0 %v1431
    %1481 = vmatpush1.msra.mxu0 %v1430
    %1482 = vmatprep.subr.mxu0 %v1435
    %1483 = vmatpush1.msra.mxu0 %v1434
    %1484 = vmatprep.subr.mxu0 %v1439
    %1485 = vmatpush1.msra.mxu0 %v1438
    %1486 = vmatprep.subr.mxu0 %v1443
    %1487 = vmatpush1.msra.mxu0 %v1442
    %1488 = vmatprep.subr.mxu0 %v1447
    %1489 = vmatpush1.msra.mxu0 %v1446
    %1490 = vmatprep.subr.mxu0 %v1451
    %1491 = vmatpush1.msra.mxu0 %v1450
    %1492 = vmatprep.subr.mxu0 %v1455
    %1493 = vmatpush1.msra.mxu0 %v1454
    %1494 = vmatprep.subr.mxu0 %v1459
    %1495 = vmatpush1.msra.mxu0 %v1458
    %1496 = vmatprep.subr.mxu0 %v1463
    %1497 = vmatpush1.msra.mxu0 %v1462
    %1498 = vmatprep.subr.mxu0 0.0
    %1499 = vmatpush1.msra.mxu0 0.0
    %1500 = vmatprep.subr.mxu0 0.0
    %1501 = vmatpush1.msra.mxu0 0.0
    %1502 = vmatprep.subr.mxu0 0.0
    %1503 = vmatpush1.msra.mxu0 0.0
    %1504 = vmatprep.subr.mxu0 0.0
    %1505 = vmatpush1.msra.mxu0 0.0
    %1506 = vmatprep.subr.mxu0 0.0
    %1507 = vmatpush1.msra.mxu0 0.0
    %1508 = vmatprep.subr.mxu0 0.0
    %1509 = vmatpush1.msra.mxu0 0.0
    %1510 = vmatprep.subr.mxu0 0.0
    %1511 = vmatpush1.msra.mxu0 0.0
    %1512 = vmatprep.subr.mxu0 0.0
    %1513 = vmatpush1.msra.mxu0 0.0
    %1514 = vmatprep.subr.mxu0 0.0
    %1515 = vmatpush1.msra.mxu0 0.0
    %1516 = vmatprep.subr.mxu0 0.0
    %1517 = vmatpush1.msra.mxu0 0.0
    %1518 = vmatprep.subr.mxu0 0.0
    %1519 = vmatpush1.msra.mxu0 0.0
    %1520 = vmatprep.subr.mxu0 0.0
    %1521 = vmatpush1.msra.mxu0 0.0
    %1522 = vmatprep.subr.mxu0 0.0
    %1523 = vmatpush1.msra.mxu0 0.0
    %1524 = vmatprep.subr.mxu0 0.0
    %1525 = vmatpush1.msra.mxu0 0.0
    %1526 = vmatprep.subr.mxu0 0.0
    %1527 = vmatpush1.msra.mxu0 0.0
    %1528 = vmatprep.subr.mxu0 0.0
    %1529 = vmatpush1.msra.mxu0 0.0
    %1530 = vmatprep.mubr.f32.mxu0 0.0
    %1531 = vmatmul.mubr.f32.gmra.mrb[0].mxu0 %v1396
    %v1532 = vpop.f32.mrb[0].mxu0
    %v1533 = vadd.f32 0.0, %v1532
    %v1534 = vpop.f32.mrb[0].mxu0
    %v1535 = vadd.f32 0.0, %v1534
    %1536 = vdwg.mxu0
    %1537 = vmatprep.subr.mxu0 %v1405
    %1538 = vmatpush1.msra.mxu0 %v1404
    %1539 = vmatprep.subr.mxu0 %v1409
    %1540 = vmatpush1.msra.mxu0 %v1408
    %1541 = vmatprep.subr.mxu0 %v1413
    %1542 = vmatpush1.msra.mxu0 %v1412
    %1543 = vmatprep.subr.mxu0 %v1417
    %1544 = vmatpush1.msra.mxu0 %v1416
    %1545 = vmatprep.subr.mxu0 %v1421
    %1546 = vmatpush1.msra.mxu0 %v1420
    %1547 = vmatprep.subr.mxu0 %v1425
    %1548 = vmatpush1.msra.mxu0 %v1424
    %1549 = vmatprep.subr.mxu0 %v1429
    %1550 = vmatpush1.msra.mxu0 %v1428
    %1551 = vmatprep.subr.mxu0 %v1433
    %1552 = vmatpush1.msra.mxu0 %v1432
    %1553 = vmatprep.subr.mxu0 %v1437
    %1554 = vmatpush1.msra.mxu0 %v1436
    %1555 = vmatprep.subr.mxu0 %v1441
    %1556 = vmatpush1.msra.mxu0 %v1440
    %1557 = vmatprep.subr.mxu0 %v1445
    %1558 = vmatpush1.msra.mxu0 %v1444
    %1559 = vmatprep.subr.mxu0 %v1449
    %1560 = vmatpush1.msra.mxu0 %v1448
    %1561 = vmatprep.subr.mxu0 %v1453
    %1562 = vmatpush1.msra.mxu0 %v1452
    %1563 = vmatprep.subr.mxu0 %v1457
    %1564 = vmatpush1.msra.mxu0 %v1456
    %1565 = vmatprep.subr.mxu0 %v1461
    %1566 = vmatpush1.msra.mxu0 %v1460
    %1567 = vmatprep.subr.mxu0 %v1465
    %1568 = vmatpush1.msra.mxu0 %v1464
    %1569 = vmatprep.subr.mxu0 0.0
    %1570 = vmatpush1.msra.mxu0 0.0
    %1571 = vmatprep.subr.mxu0 0.0
    %1572 = vmatpush1.msra.mxu0 0.0
    %1573 = vmatprep.subr.mxu0 0.0
    %1574 = vmatpush1.msra.mxu0 0.0
    %1575 = vmatprep.subr.mxu0 0.0
    %1576 = vmatpush1.msra.mxu0 0.0
    %1577 = vmatprep.subr.mxu0 0.0
    %1578 = vmatpush1.msra.mxu0 0.0
    %1579 = vmatprep.subr.mxu0 0.0
    %1580 = vmatpush1.msra.mxu0 0.0
    %1581 = vmatprep.subr.mxu0 0.0
    %1582 = vmatpush1.msra.mxu0 0.0
    %1583 = vmatprep.subr.mxu0 0.0
    %1584 = vmatpush1.msra.mxu0 0.0
    %1585 = vmatprep.subr.mxu0 0.0
    %1586 = vmatpush1.msra.mxu0 0.0
    %1587 = vmatprep.subr.mxu0 0.0
    %1588 = vmatpush1.msra.mxu0 0.0
    %1589 = vmatprep.subr.mxu0 0.0
    %1590 = vmatpush1.msra.mxu0 0.0
    %1591 = vmatprep.subr.mxu0 0.0
    %1592 = vmatpush1.msra.mxu0 0.0
    %1593 = vmatprep.subr.mxu0 0.0
    %1594 = vmatpush1.msra.mxu0 0.0
    %1595 = vmatprep.subr.mxu0 0.0
    %1596 = vmatpush1.msra.mxu0 0.0
    %1597 = vmatprep.subr.mxu0 0.0
    %1598 = vmatpush1.msra.mxu0 0.0
    %1599 = vmatprep.subr.mxu0 0.0
    %1600 = vmatpush1.msra.mxu0 0.0
    %1601 = vmatprep.mubr.f32.mxu0 0.0
    %1602 = vmatmul.mubr.f32.gmra.mrb[0].mxu0 %v1396
    %v1603 = vpop.f32.mrb[0].mxu0
    %v1604 = vadd.f32 0.0, %v1603
    %v1605 = vpop.f32.mrb[0].mxu0
    %v1606 = vadd.f32 0.0, %v1605
    %1607 = vdwg.mxu0
    %v1608 = vadd.f32 %v1398, %v1533
    %v1609 = vadd.f32 %v1399, %v1535
    %v1610 = vadd.f32 %v1400, %v1604
    %v1611 = vadd.f32 %v1401, %v1606
    %v1612 = vxor.u32 %v1608, 2147483648
    %v1613 = vxor.u32 %v1609, 2147483648
    %v1614 = vxor.u32 %v1610, 2147483648
    %v1615 = vmul.f32 %v1612, 1.442695
    %v1616 = vpow.pop %v1615
    %v1617 = vmul.f32 %v1613, 1.442695
    %v1618 = vpow.pop %v1617
    %v1619 = vmul.f32 %v1614, 1.442695
    %v1620 = vpow.pop %v1619
    %v1621 = vadd.f32 %v1616, 1.0
    %v1622 = vadd.f32 %v1618, 1.0
    %v1623 = vadd.f32 %v1620, 1.0
    %v1624 = vrcp.pop %v1621
    %v1625 = vmul.f32 1.0, %v1624
    %v1626 = vrcp.pop %v1622
    %v1627 = vmul.f32 1.0, %v1626
    %v1628 = vrcp.pop %v1623
    %v1629 = vmul.f32 1.0, %v1628
    %v1630 = vtanh.pop %v1611
    %v1631 = vmul.f32 %v1627, %v1394
    %v1632 = vmul.f32 %v1625, %v1630
    %v1633 = vadd.f32 %v1631, %v1632
    %v1634 = vtanh.pop %v1633
    %v1635 = vmul.f32 %v1629, %v1634
    %1636 = vst [vmem:[#allocation3 + $0x20] sm:$0xff] %v1635
    %v1637 = vld [vmem:[#allocation2 + $0xa0] sm:$0xff]
    %v1638 = vld [vmem:[#allocation2 + $0xa8] sm:$0xff]
    %v1639 = vld [vmem:[#allocation2 + $0xb0] sm:$0xff]
    %v1640 = vld [vmem:[#allocation2 + $0xb8] sm:$0xff]
    %v1641 = vld [vmem:[#allocation9] sm:$0xff]
    %v1642 = vld [vmem:[#allocation9 + $0x8] sm:$0xff]
    %v1643 = vld [vmem:[#allocation9 + $0x10] sm:$0xff]
    %v1644 = vld [vmem:[#allocation9 + $0x18] sm:$0xff]
    %v1645 = vld [vmem:[#allocation9 + $0x20] sm:$0xff]
    %v1646 = vld [vmem:[#allocation9 + $0x28] sm:$0xff]
    %v1647 = vld [vmem:[#allocation9 + $0x30] sm:$0xff]
    %v1648 = vld [vmem:[#allocation9 + $0x38] sm:$0xff]
    %v1649 = vld [vmem:[#allocation9 + $0x40] sm:$0xff]
    %v1650 = vld [vmem:[#allocation9 + $0x48] sm:$0xff]
    %v1651 = vld [vmem:[#allocation9 + $0x50] sm:$0xff]
    %v1652 = vld [vmem:[#allocation9 + $0x58] sm:$0xff]
    %v1653 = vld [vmem:[#allocation9 + $0x60] sm:$0xff]
    %v1654 = vld [vmem:[#allocation9 + $0x68] sm:$0xff]
    %v1655 = vld [vmem:[#allocation9 + $0x70] sm:$0xff]
    %v1656 = vld [vmem:[#allocation9 + $0x78] sm:$0xff]
    %v1657 = vld [vmem:[#allocation9 + $0x80] sm:$0xff]
    %v1658 = vld [vmem:[#allocation9 + $0x88] sm:$0xff]
    %v1659 = vld [vmem:[#allocation9 + $0x90] sm:$0xff]
    %v1660 = vld [vmem:[#allocation9 + $0x98] sm:$0xff]
    %v1661 = vld [vmem:[#allocation9 + $0xa0] sm:$0xff]
    %v1662 = vld [vmem:[#allocation9 + $0xa8] sm:$0xff]
    %v1663 = vld [vmem:[#allocation9 + $0xb0] sm:$0xff]
    %v1664 = vld [vmem:[#allocation9 + $0xb8] sm:$0xff]
    %v1665 = vld [vmem:[#allocation9 + $0xc0] sm:$0xff]
    %v1666 = vld [vmem:[#allocation9 + $0xc8] sm:$0xff]
    %v1667 = vld [vmem:[#allocation9 + $0xd0] sm:$0xff]
    %v1668 = vld [vmem:[#allocation9 + $0xd8] sm:$0xff]
    %v1669 = vld [vmem:[#allocation9 + $0xe0] sm:$0xff]
    %v1670 = vld [vmem:[#allocation9 + $0xe8] sm:$0xff]
    %v1671 = vld [vmem:[#allocation9 + $0xf0] sm:$0xff]
    %v1672 = vld [vmem:[#allocation9 + $0xf8] sm:$0xff]
    %v1673 = vld [vmem:[#allocation9 + $0x100] sm:$0xff]
    %v1674 = vld [vmem:[#allocation9 + $0x108] sm:$0xff]
    %v1675 = vld [vmem:[#allocation9 + $0x110] sm:$0xff]
    %v1676 = vld [vmem:[#allocation9 + $0x118] sm:$0xff]
    %v1677 = vld [vmem:[#allocation9 + $0x120] sm:$0xff]
    %v1678 = vld [vmem:[#allocation9 + $0x128] sm:$0xff]
    %v1679 = vld [vmem:[#allocation9 + $0x130] sm:$0xff]
    %v1680 = vld [vmem:[#allocation9 + $0x138] sm:$0xff]
    %v1681 = vld [vmem:[#allocation9 + $0x140] sm:$0xff]
    %v1682 = vld [vmem:[#allocation9 + $0x148] sm:$0xff]
    %v1683 = vld [vmem:[#allocation9 + $0x150] sm:$0xff]
    %v1684 = vld [vmem:[#allocation9 + $0x158] sm:$0xff]
    %v1685 = vld [vmem:[#allocation9 + $0x160] sm:$0xff]
    %v1686 = vld [vmem:[#allocation9 + $0x168] sm:$0xff]
    %v1687 = vld [vmem:[#allocation9 + $0x170] sm:$0xff]
    %v1688 = vld [vmem:[#allocation9 + $0x178] sm:$0xff]
    %v1689 = vld [vmem:[#allocation9 + $0x180] sm:$0xff]
    %v1690 = vld [vmem:[#allocation9 + $0x188] sm:$0xff]
    %v1691 = vld [vmem:[#allocation9 + $0x190] sm:$0xff]
    %v1692 = vld [vmem:[#allocation9 + $0x198] sm:$0xff]
    %v1693 = vld [vmem:[#allocation9 + $0x1a0] sm:$0xff]
    %v1694 = vld [vmem:[#allocation9 + $0x1a8] sm:$0xff]
    %v1695 = vld [vmem:[#allocation9 + $0x1b0] sm:$0xff]
    %v1696 = vld [vmem:[#allocation9 + $0x1b8] sm:$0xff]
    %v1697 = vld [vmem:[#allocation9 + $0x1c0] sm:$0xff]
    %v1698 = vld [vmem:[#allocation9 + $0x1c8] sm:$0xff]
    %v1699 = vld [vmem:[#allocation9 + $0x1d0] sm:$0xff]
    %v1700 = vld [vmem:[#allocation9 + $0x1d8] sm:$0xff]
    %v1701 = vld [vmem:[#allocation9 + $0x1e0] sm:$0xff]
    %v1702 = vld [vmem:[#allocation9 + $0x1e8] sm:$0xff]
    %v1703 = vld [vmem:[#allocation9 + $0x1f0] sm:$0xff]
    %v1704 = vld [vmem:[#allocation9 + $0x1f8] sm:$0xff]
    %1705 = vmatprep.subr.mxu0 %v1642
    %1706 = vmatpush1.msra.mxu0 %v1641
    %1707 = vmatprep.subr.mxu0 %v1646
    %1708 = vmatpush1.msra.mxu0 %v1645
    %1709 = vmatprep.subr.mxu0 %v1650
    %1710 = vmatpush1.msra.mxu0 %v1649
    %1711 = vmatprep.subr.mxu0 %v1654
    %1712 = vmatpush1.msra.mxu0 %v1653
    %1713 = vmatprep.subr.mxu0 %v1658
    %1714 = vmatpush1.msra.mxu0 %v1657
    %1715 = vmatprep.subr.mxu0 %v1662
    %1716 = vmatpush1.msra.mxu0 %v1661
    %1717 = vmatprep.subr.mxu0 %v1666
    %1718 = vmatpush1.msra.mxu0 %v1665
    %1719 = vmatprep.subr.mxu0 %v1670
    %1720 = vmatpush1.msra.mxu0 %v1669
    %1721 = vmatprep.subr.mxu0 %v1674
    %1722 = vmatpush1.msra.mxu0 %v1673
    %1723 = vmatprep.subr.mxu0 %v1678
    %1724 = vmatpush1.msra.mxu0 %v1677
    %1725 = vmatprep.subr.mxu0 %v1682
    %1726 = vmatpush1.msra.mxu0 %v1681
    %1727 = vmatprep.subr.mxu0 %v1686
    %1728 = vmatpush1.msra.mxu0 %v1685
    %1729 = vmatprep.subr.mxu0 %v1690
    %1730 = vmatpush1.msra.mxu0 %v1689
    %1731 = vmatprep.subr.mxu0 %v1694
    %1732 = vmatpush1.msra.mxu0 %v1693
    %1733 = vmatprep.subr.mxu0 %v1698
    %1734 = vmatpush1.msra.mxu0 %v1697
    %1735 = vmatprep.subr.mxu0 %v1702
    %1736 = vmatpush1.msra.mxu0 %v1701
    %1737 = vmatprep.subr.mxu0 0.0
    %1738 = vmatpush1.msra.mxu0 0.0
    %1739 = vmatprep.subr.mxu0 0.0
    %1740 = vmatpush1.msra.mxu0 0.0
    %1741 = vmatprep.subr.mxu0 0.0
    %1742 = vmatpush1.msra.mxu0 0.0
    %1743 = vmatprep.subr.mxu0 0.0
    %1744 = vmatpush1.msra.mxu0 0.0
    %1745 = vmatprep.subr.mxu0 0.0
    %1746 = vmatpush1.msra.mxu0 0.0
    %1747 = vmatprep.subr.mxu0 0.0
    %1748 = vmatpush1.msra.mxu0 0.0
    %1749 = vmatprep.subr.mxu0 0.0
    %1750 = vmatpush1.msra.mxu0 0.0
    %1751 = vmatprep.subr.mxu0 0.0
    %1752 = vmatpush1.msra.mxu0 0.0
    %1753 = vmatprep.subr.mxu0 0.0
    %1754 = vmatpush1.msra.mxu0 0.0
    %1755 = vmatprep.subr.mxu0 0.0
    %1756 = vmatpush1.msra.mxu0 0.0
    %1757 = vmatprep.subr.mxu0 0.0
    %1758 = vmatpush1.msra.mxu0 0.0
    %1759 = vmatprep.subr.mxu0 0.0
    %1760 = vmatpush1.msra.mxu0 0.0
    %1761 = vmatprep.subr.mxu0 0.0
    %1762 = vmatpush1.msra.mxu0 0.0
    %1763 = vmatprep.subr.mxu0 0.0
    %1764 = vmatpush1.msra.mxu0 0.0
    %1765 = vmatprep.subr.mxu0 0.0
    %1766 = vmatpush1.msra.mxu0 0.0
    %1767 = vmatprep.subr.mxu0 0.0
    %1768 = vmatpush1.msra.mxu0 0.0
    %1769 = vmatprep.mubr.f32.mxu0 0.0
    %1770 = vmatmul.mubr.f32.gmra.mrb[0].mxu0 %v1635
    %v1771 = vpop.f32.mrb[0].mxu0
    %v1772 = vadd.f32 0.0, %v1771
    %v1773 = vpop.f32.mrb[0].mxu0
    %v1774 = vadd.f32 0.0, %v1773
    %1775 = vdwg.mxu0
    %1776 = vmatprep.subr.mxu0 %v1644
    %1777 = vmatpush1.msra.mxu0 %v1643
    %1778 = vmatprep.subr.mxu0 %v1648
    %1779 = vmatpush1.msra.mxu0 %v1647
    %1780 = vmatprep.subr.mxu0 %v1652
    %1781 = vmatpush1.msra.mxu0 %v1651
    %1782 = vmatprep.subr.mxu0 %v1656
    %1783 = vmatpush1.msra.mxu0 %v1655
    %1784 = vmatprep.subr.mxu0 %v1660
    %1785 = vmatpush1.msra.mxu0 %v1659
    %1786 = vmatprep.subr.mxu0 %v1664
    %1787 = vmatpush1.msra.mxu0 %v1663
    %1788 = vmatprep.subr.mxu0 %v1668
    %1789 = vmatpush1.msra.mxu0 %v1667
    %1790 = vmatprep.subr.mxu0 %v1672
    %1791 = vmatpush1.msra.mxu0 %v1671
    %1792 = vmatprep.subr.mxu0 %v1676
    %1793 = vmatpush1.msra.mxu0 %v1675
    %1794 = vmatprep.subr.mxu0 %v1680
    %1795 = vmatpush1.msra.mxu0 %v1679
    %1796 = vmatprep.subr.mxu0 %v1684
    %1797 = vmatpush1.msra.mxu0 %v1683
    %1798 = vmatprep.subr.mxu0 %v1688
    %1799 = vmatpush1.msra.mxu0 %v1687
    %1800 = vmatprep.subr.mxu0 %v1692
    %1801 = vmatpush1.msra.mxu0 %v1691
    %1802 = vmatprep.subr.mxu0 %v1696
    %1803 = vmatpush1.msra.mxu0 %v1695
    %1804 = vmatprep.subr.mxu0 %v1700
    %1805 = vmatpush1.msra.mxu0 %v1699
    %1806 = vmatprep.subr.mxu0 %v1704
    %1807 = vmatpush1.msra.mxu0 %v1703
    %1808 = vmatprep.subr.mxu0 0.0
    %1809 = vmatpush1.msra.mxu0 0.0
    %1810 = vmatprep.subr.mxu0 0.0
    %1811 = vmatpush1.msra.mxu0 0.0
    %1812 = vmatprep.subr.mxu0 0.0
    %1813 = vmatpush1.msra.mxu0 0.0
    %1814 = vmatprep.subr.mxu0 0.0
    %1815 = vmatpush1.msra.mxu0 0.0
    %1816 = vmatprep.subr.mxu0 0.0
    %1817 = vmatpush1.msra.mxu0 0.0
    %1818 = vmatprep.subr.mxu0 0.0
    %1819 = vmatpush1.msra.mxu0 0.0
    %1820 = vmatprep.subr.mxu0 0.0
    %1821 = vmatpush1.msra.mxu0 0.0
    %1822 = vmatprep.subr.mxu0 0.0
    %1823 = vmatpush1.msra.mxu0 0.0
    %1824 = vmatprep.subr.mxu0 0.0
    %1825 = vmatpush1.msra.mxu0 0.0
    %1826 = vmatprep.subr.mxu0 0.0
    %1827 = vmatpush1.msra.mxu0 0.0
    %1828 = vmatprep.subr.mxu0 0.0
    %1829 = vmatpush1.msra.mxu0 0.0
    %1830 = vmatprep.subr.mxu0 0.0
    %1831 = vmatpush1.msra.mxu0 0.0
    %1832 = vmatprep.subr.mxu0 0.0
    %1833 = vmatpush1.msra.mxu0 0.0
    %1834 = vmatprep.subr.mxu0 0.0
    %1835 = vmatpush1.msra.mxu0 0.0
    %1836 = vmatprep.subr.mxu0 0.0
    %1837 = vmatpush1.msra.mxu0 0.0
    %1838 = vmatprep.subr.mxu0 0.0
    %1839 = vmatpush1.msra.mxu0 0.0
    %1840 = vmatprep.mubr.f32.mxu0 0.0
    %1841 = vmatmul.mubr.f32.gmra.mrb[0].mxu0 %v1635
    %v1842 = vpop.f32.mrb[0].mxu0
    %v1843 = vadd.f32 0.0, %v1842
    %v1844 = vpop.f32.mrb[0].mxu0
    %v1845 = vadd.f32 0.0, %v1844
    %1846 = vdwg.mxu0
    %v1847 = vadd.f32 %v1637, %v1772
    %v1848 = vadd.f32 %v1638, %v1774
    %v1849 = vadd.f32 %v1639, %v1843
    %v1850 = vadd.f32 %v1640, %v1845
    %v1851 = vxor.u32 %v1847, 2147483648
    %v1852 = vxor.u32 %v1848, 2147483648
    %v1853 = vxor.u32 %v1849, 2147483648
    %v1854 = vmul.f32 %v1851, 1.442695
    %v1855 = vpow.pop %v1854
    %v1856 = vmul.f32 %v1852, 1.442695
    %v1857 = vpow.pop %v1856
    %v1858 = vmul.f32 %v1853, 1.442695
    %v1859 = vpow.pop %v1858
    %v1860 = vadd.f32 %v1855, 1.0
    %v1861 = vadd.f32 %v1857, 1.0
    %v1862 = vadd.f32 %v1859, 1.0
    %v1863 = vrcp.pop %v1860
    %v1864 = vmul.f32 1.0, %v1863
    %v1865 = vrcp.pop %v1861
    %v1866 = vmul.f32 1.0, %v1865
    %v1867 = vrcp.pop %v1862
    %v1868 = vmul.f32 1.0, %v1867
    %v1869 = vtanh.pop %v1850
    %v1870 = vmul.f32 %v1866, %v1633
    %v1871 = vmul.f32 %v1864, %v1869
    %v1872 = vadd.f32 %v1870, %v1871
    %v1873 = vtanh.pop %v1872
    %v1874 = vmul.f32 %v1868, %v1873
    %1875 = vst [vmem:[#allocation3 + $0x28] sm:$0xff] %v1874
    %v1876 = vld [vmem:[#allocation2 + $0xc0] sm:$0xff]
    %v1877 = vld [vmem:[#allocation2 + $0xc8] sm:$0xff]
    %v1878 = vld [vmem:[#allocation2 + $0xd0] sm:$0xff]
    %v1879 = vld [vmem:[#allocation2 + $0xd8] sm:$0xff]
    %v1880 = vld [vmem:[#allocation9] sm:$0xff]
    %v1881 = vld [vmem:[#allocation9 + $0x8] sm:$0xff]
    %v1882 = vld [vmem:[#allocation9 + $0x10] sm:$0xff]
    %v1883 = vld [vmem:[#allocation9 + $0x18] sm:$0xff]
    %v1884 = vld [vmem:[#allocation9 + $0x20] sm:$0xff]
    %v1885 = vld [vmem:[#allocation9 + $0x28] sm:$0xff]
    %v1886 = vld [vmem:[#allocation9 + $0x30] sm:$0xff]
    %v1887 = vld [vmem:[#allocation9 + $0x38] sm:$0xff]
    %v1888 = vld [vmem:[#allocation9 + $0x40] sm:$0xff]
    %v1889 = vld [vmem:[#allocation9 + $0x48] sm:$0xff]
    %v1890 = vld [vmem:[#allocation9 + $0x50] sm:$0xff]
    %v1891 = vld [vmem:[#allocation9 + $0x58] sm:$0xff]
    %v1892 = vld [vmem:[#allocation9 + $0x60] sm:$0xff]
    %v1893 = vld [vmem:[#allocation9 + $0x68] sm:$0xff]
    %v1894 = vld [vmem:[#allocation9 + $0x70] sm:$0xff]
    %v1895 = vld [vmem:[#allocation9 + $0x78] sm:$0xff]
    %v1896 = vld [vmem:[#allocation9 + $0x80] sm:$0xff]
    %v1897 = vld [vmem:[#allocation9 + $0x88] sm:$0xff]
    %v1898 = vld [vmem:[#allocation9 + $0x90] sm:$0xff]
    %v1899 = vld [vmem:[#allocation9 + $0x98] sm:$0xff]
    %v1900 = vld [vmem:[#allocation9 + $0xa0] sm:$0xff]
    %v1901 = vld [vmem:[#allocation9 + $0xa8] sm:$0xff]
    %v1902 = vld [vmem:[#allocation9 + $0xb0] sm:$0xff]
    %v1903 = vld [vmem:[#allocation9 + $0xb8] sm:$0xff]
    %v1904 = vld [vmem:[#allocation9 + $0xc0] sm:$0xff]
    %v1905 = vld [vmem:[#allocation9 + $0xc8] sm:$0xff]
    %v1906 = vld [vmem:[#allocation9 + $0xd0] sm:$0xff]
    %v1907 = vld [vmem:[#allocation9 + $0xd8] sm:$0xff]
    %v1908 = vld [vmem:[#allocation9 + $0xe0] sm:$0xff]
    %v1909 = vld [vmem:[#allocation9 + $0xe8] sm:$0xff]
    %v1910 = vld [vmem:[#allocation9 + $0xf0] sm:$0xff]
    %v1911 = vld [vmem:[#allocation9 + $0xf8] sm:$0xff]
    %v1912 = vld [vmem:[#allocation9 + $0x100] sm:$0xff]
    %v1913 = vld [vmem:[#allocation9 + $0x108] sm:$0xff]
    %v1914 = vld [vmem:[#allocation9 + $0x110] sm:$0xff]
    %v1915 = vld [vmem:[#allocation9 + $0x118] sm:$0xff]
    %v1916 = vld [vmem:[#allocation9 + $0x120] sm:$0xff]
    %v1917 = vld [vmem:[#allocation9 + $0x128] sm:$0xff]
    %v1918 = vld [vmem:[#allocation9 + $0x130] sm:$0xff]
    %v1919 = vld [vmem:[#allocation9 + $0x138] sm:$0xff]
    %v1920 = vld [vmem:[#allocation9 + $0x140] sm:$0xff]
    %v1921 = vld [vmem:[#allocation9 + $0x148] sm:$0xff]
    %v1922 = vld [vmem:[#allocation9 + $0x150] sm:$0xff]
    %v1923 = vld [vmem:[#allocation9 + $0x158] sm:$0xff]
    %v1924 = vld [vmem:[#allocation9 + $0x160] sm:$0xff]
    %v1925 = vld [vmem:[#allocation9 + $0x168] sm:$0xff]
    %v1926 = vld [vmem:[#allocation9 + $0x170] sm:$0xff]
    %v1927 = vld [vmem:[#allocation9 + $0x178] sm:$0xff]
    %v1928 = vld [vmem:[#allocation9 + $0x180] sm:$0xff]
    %v1929 = vld [vmem:[#allocation9 + $0x188] sm:$0xff]
    %v1930 = vld [vmem:[#allocation9 + $0x190] sm:$0xff]
    %v1931 = vld [vmem:[#allocation9 + $0x198] sm:$0xff]
    %v1932 = vld [vmem:[#allocation9 + $0x1a0] sm:$0xff]
    %v1933 = vld [vmem:[#allocation9 + $0x1a8] sm:$0xff]
    %v1934 = vld [vmem:[#allocation9 + $0x1b0] sm:$0xff]
    %v1935 = vld [vmem:[#allocation9 + $0x1b8] sm:$0xff]
    %v1936 = vld [vmem:[#allocation9 + $0x1c0] sm:$0xff]
    %v1937 = vld [vmem:[#allocation9 + $0x1c8] sm:$0xff]
    %v1938 = vld [vmem:[#allocation9 + $0x1d0] sm:$0xff]
    %v1939 = vld [vmem:[#allocation9 + $0x1d8] sm:$0xff]
    %v1940 = vld [vmem:[#allocation9 + $0x1e0] sm:$0xff]
    %v1941 = vld [vmem:[#allocation9 + $0x1e8] sm:$0xff]
    %v1942 = vld [vmem:[#allocation9 + $0x1f0] sm:$0xff]
    %v1943 = vld [vmem:[#allocation9 + $0x1f8] sm:$0xff]
    %1944 = vmatprep.subr.mxu0 %v1881
    %1945 = vmatpush1.msra.mxu0 %v1880
    %1946 = vmatprep.subr.mxu0 %v1885
    %1947 = vmatpush1.msra.mxu0 %v1884
    %1948 = vmatprep.subr.mxu0 %v1889
    %1949 = vmatpush1.msra.mxu0 %v1888
    %1950 = vmatprep.subr.mxu0 %v1893
    %1951 = vmatpush1.msra.mxu0 %v1892
    %1952 = vmatprep.subr.mxu0 %v1897
    %1953 = vmatpush1.msra.mxu0 %v1896
    %1954 = vmatprep.subr.mxu0 %v1901
    %1955 = vmatpush1.msra.mxu0 %v1900
    %1956 = vmatprep.subr.mxu0 %v1905
    %1957 = vmatpush1.msra.mxu0 %v1904
    %1958 = vmatprep.subr.mxu0 %v1909
    %1959 = vmatpush1.msra.mxu0 %v1908
    %1960 = vmatprep.subr.mxu0 %v1913
    %1961 = vmatpush1.msra.mxu0 %v1912
    %1962 = vmatprep.subr.mxu0 %v1917
    %1963 = vmatpush1.msra.mxu0 %v1916
    %1964 = vmatprep.subr.mxu0 %v1921
    %1965 = vmatpush1.msra.mxu0 %v1920
    %1966 = vmatprep.subr.mxu0 %v1925
    %1967 = vmatpush1.msra.mxu0 %v1924
    %1968 = vmatprep.subr.mxu0 %v1929
    %1969 = vmatpush1.msra.mxu0 %v1928
    %1970 = vmatprep.subr.mxu0 %v1933
    %1971 = vmatpush1.msra.mxu0 %v1932
    %1972 = vmatprep.subr.mxu0 %v1937
    %1973 = vmatpush1.msra.mxu0 %v1936
    %1974 = vmatprep.subr.mxu0 %v1941
    %1975 = vmatpush1.msra.mxu0 %v1940
    %1976 = vmatprep.subr.mxu0 0.0
    %1977 = vmatpush1.msra.mxu0 0.0
    %1978 = vmatprep.subr.mxu0 0.0
    %1979 = vmatpush1.msra.mxu0 0.0
    %1980 = vmatprep.subr.mxu0 0.0
    %1981 = vmatpush1.msra.mxu0 0.0
    %1982 = vmatprep.subr.mxu0 0.0
    %1983 = vmatpush1.msra.mxu0 0.0
    %1984 = vmatprep.subr.mxu0 0.0
    %1985 = vmatpush1.msra.mxu0 0.0
    %1986 = vmatprep.subr.mxu0 0.0
    %1987 = vmatpush1.msra.mxu0 0.0
    %1988 = vmatprep.subr.mxu0 0.0
    %1989 = vmatpush1.msra.mxu0 0.0
    %1990 = vmatprep.subr.mxu0 0.0
    %1991 = vmatpush1.msra.mxu0 0.0
    %1992 = vmatprep.subr.mxu0 0.0
    %1993 = vmatpush1.msra.mxu0 0.0
    %1994 = vmatprep.subr.mxu0 0.0
    %1995 = vmatpush1.msra.mxu0 0.0
    %1996 = vmatprep.subr.mxu0 0.0
    %1997 = vmatpush1.msra.mxu0 0.0
    %1998 = vmatprep.subr.mxu0 0.0
    %1999 = vmatpush1.msra.mxu0 0.0
    %2000 = vmatprep.subr.mxu0 0.0
    %2001 = vmatpush1.msra.mxu0 0.0
    %2002 = vmatprep.subr.mxu0 0.0
    %2003 = vmatpush1.msra.mxu0 0.0
    %2004 = vmatprep.subr.mxu0 0.0
    %2005 = vmatpush1.msra.mxu0 0.0
    %2006 = vmatprep.subr.mxu0 0.0
    %2007 = vmatpush1.msra.mxu0 0.0
    %2008 = vmatprep.mubr.f32.mxu0 0.0
    %2009 = vmatmul.mubr.f32.gmra.mrb[0].mxu0 %v1874
    %v2010 = vpop.f32.mrb[0].mxu0
    %v2011 = vadd.f32 0.0, %v2010
    %v2012 = vpop.f32.mrb[0].mxu0
    %v2013 = vadd.f32 0.0, %v2012
    %2014 = vdwg.mxu0
    %2015 = vmatprep.subr.mxu0 %v1883
    %2016 = vmatpush1.msra.mxu0 %v1882
    %2017 = vmatprep.subr.mxu0 %v1887
    %2018 = vmatpush1.msra.mxu0 %v1886
    %2019 = vmatprep.subr.mxu0 %v1891
    %2020 = vmatpush1.msra.mxu0 %v1890
    %2021 = vmatprep.subr.mxu0 %v1895
    %2022 = vmatpush1.msra.mxu0 %v1894
    %2023 = vmatprep.subr.mxu0 %v1899
    %2024 = vmatpush1.msra.mxu0 %v1898
    %2025 = vmatprep.subr.mxu0 %v1903
    %2026 = vmatpush1.msra.mxu0 %v1902
    %2027 = vmatprep.subr.mxu0 %v1907
    %2028 = vmatpush1.msra.mxu0 %v1906
    %2029 = vmatprep.subr.mxu0 %v1911
    %2030 = vmatpush1.msra.mxu0 %v1910
    %2031 = vmatprep.subr.mxu0 %v1915
    %2032 = vmatpush1.msra.mxu0 %v1914
    %2033 = vmatprep.subr.mxu0 %v1919
    %2034 = vmatpush1.msra.mxu0 %v1918
    %2035 = vmatprep.subr.mxu0 %v1923
    %2036 = vmatpush1.msra.mxu0 %v1922
    %2037 = vmatprep.subr.mxu0 %v1927
    %2038 = vmatpush1.msra.mxu0 %v1926
    %2039 = vmatprep.subr.mxu0 %v1931
    %2040 = vmatpush1.msra.mxu0 %v1930
    %2041 = vmatprep.subr.mxu0 %v1935
    %2042 = vmatpush1.msra.mxu0 %v1934
    %2043 = vmatprep.subr.mxu0 %v1939
    %2044 = vmatpush1.msra.mxu0 %v1938
    %2045 = vmatprep.subr.mxu0 %v1943
    %2046 = vmatpush1.msra.mxu0 %v1942
    %2047 = vmatprep.subr.mxu0 0.0
    %2048 = vmatpush1.msra.mxu0 0.0
    %2049 = vmatprep.subr.mxu0 0.0
    %2050 = vmatpush1.msra.mxu0 0.0
    %2051 = vmatprep.subr.mxu0 0.0
    %2052 = vmatpush1.msra.mxu0 0.0
    %2053 = vmatprep.subr.mxu0 0.0
    %2054 = vmatpush1.msra.mxu0 0.0
    %2055 = vmatprep.subr.mxu0 0.0
    %2056 = vmatpush1.msra.mxu0 0.0
    %2057 = vmatprep.subr.mxu0 0.0
    %2058 = vmatpush1.msra.mxu0 0.0
    %2059 = vmatprep.subr.mxu0 0.0
    %2060 = vmatpush1.msra.mxu0 0.0
    %2061 = vmatprep.subr.mxu0 0.0
    %2062 = vmatpush1.msra.mxu0 0.0
    %2063 = vmatprep.subr.mxu0 0.0
    %2064 = vmatpush1.msra.mxu0 0.0
    %2065 = vmatprep.subr.mxu0 0.0
    %2066 = vmatpush1.msra.mxu0 0.0
    %2067 = vmatprep.subr.mxu0 0.0
    %2068 = vmatpush1.msra.mxu0 0.0
    %2069 = vmatprep.subr.mxu0 0.0
    %2070 = vmatpush1.msra.mxu0 0.0
    %2071 = vmatprep.subr.mxu0 0.0
    %2072 = vmatpush1.msra.mxu0 0.0
    %2073 = vmatprep.subr.mxu0 0.0
    %2074 = vmatpush1.msra.mxu0 0.0
    %2075 = vmatprep.subr.mxu0 0.0
    %2076 = vmatpush1.msra.mxu0 0.0
    %2077 = vmatprep.subr.mxu0 0.0
    %2078 = vmatpush1.msra.mxu0 0.0
    %2079 = vmatprep.mubr.f32.mxu0 0.0
    %2080 = vmatmul.mubr.f32.gmra.mrb[0].mxu0 %v1874
    %v2081 = vpop.f32.mrb[0].mxu0
    %v2082 = vadd.f32 0.0, %v2081
    %v2083 = vpop.f32.mrb[0].mxu0
    %v2084 = vadd.f32 0.0, %v2083
    %2085 = vdwg.mxu0
    %v2086 = vadd.f32 %v1876, %v2011
    %v2087 = vadd.f32 %v1877, %v2013
    %v2088 = vadd.f32 %v1878, %v2082
    %v2089 = vadd.f32 %v1879, %v2084
    %v2090 = vxor.u32 %v2086, 2147483648
    %v2091 = vxor.u32 %v2087, 2147483648
    %v2092 = vxor.u32 %v2088, 2147483648
    %v2093 = vmul.f32 %v2090, 1.442695
    %v2094 = vpow.pop %v2093
    %v2095 = vmul.f32 %v2091, 1.442695
    %v2096 = vpow.pop %v2095
    %v2097 = vmul.f32 %v2092, 1.442695
    %v2098 = vpow.pop %v2097
    %v2099 = vadd.f32 %v2094, 1.0
    %v2100 = vadd.f32 %v2096, 1.0
    %v2101 = vadd.f32 %v2098, 1.0
    %v2102 = vrcp.pop %v2099
    %v2103 = vmul.f32 1.0, %v2102
    %v2104 = vrcp.pop %v2100
    %v2105 = vmul.f32 1.0, %v2104
    %v2106 = vrcp.pop %v2101
    %v2107 = vmul.f32 1.0, %v2106
    %v2108 = vtanh.pop %v2089
    %v2109 = vmul.f32 %v2105, %v1872
    %v2110 = vmul.f32 %v2103, %v2108
    %v2111 = vadd.f32 %v2109, %v2110
    %v2112 = vtanh.pop %v2111
    %v2113 = vmul.f32 %v2107, %v2112
    %2114 = vst [vmem:[#allocation3 + $0x30] sm:$0xff] %v2113
    %v2115 = vld [vmem:[#allocation2 + $0xe0] sm:$0xff]
    %v2116 = vld [vmem:[#allocation2 + $0xe8] sm:$0xff]
    %v2117 = vld [vmem:[#allocation2 + $0xf0] sm:$0xff]
    %v2118 = vld [vmem:[#allocation2 + $0xf8] sm:$0xff]
    %v2119 = vld [vmem:[#allocation9] sm:$0xff]
    %v2120 = vld [vmem:[#allocation9 + $0x8] sm:$0xff]
    %v2121 = vld [vmem:[#allocation9 + $0x10] sm:$0xff]
    %v2122 = vld [vmem:[#allocation9 + $0x18] sm:$0xff]
    %v2123 = vld [vmem:[#allocation9 + $0x20] sm:$0xff]
    %v2124 = vld [vmem:[#allocation9 + $0x28] sm:$0xff]
    %v2125 = vld [vmem:[#allocation9 + $0x30] sm:$0xff]
    %v2126 = vld [vmem:[#allocation9 + $0x38] sm:$0xff]
    %v2127 = vld [vmem:[#allocation9 + $0x40] sm:$0xff]
    %v2128 = vld [vmem:[#allocation9 + $0x48] sm:$0xff]
    %v2129 = vld [vmem:[#allocation9 + $0x50] sm:$0xff]
    %v2130 = vld [vmem:[#allocation9 + $0x58] sm:$0xff]
    %v2131 = vld [vmem:[#allocation9 + $0x60] sm:$0xff]
    %v2132 = vld [vmem:[#allocation9 + $0x68] sm:$0xff]
    %v2133 = vld [vmem:[#allocation9 + $0x70] sm:$0xff]
    %v2134 = vld [vmem:[#allocation9 + $0x78] sm:$0xff]
    %v2135 = vld [vmem:[#allocation9 + $0x80] sm:$0xff]
    %v2136 = vld [vmem:[#allocation9 + $0x88] sm:$0xff]
    %v2137 = vld [vmem:[#allocation9 + $0x90] sm:$0xff]
    %v2138 = vld [vmem:[#allocation9 + $0x98] sm:$0xff]
    %v2139 = vld [vmem:[#allocation9 + $0xa0] sm:$0xff]
    %v2140 = vld [vmem:[#allocation9 + $0xa8] sm:$0xff]
    %v2141 = vld [vmem:[#allocation9 + $0xb0] sm:$0xff]
    %v2142 = vld [vmem:[#allocation9 + $0xb8] sm:$0xff]
    %v2143 = vld [vmem:[#allocation9 + $0xc0] sm:$0xff]
    %v2144 = vld [vmem:[#allocation9 + $0xc8] sm:$0xff]
    %v2145 = vld [vmem:[#allocation9 + $0xd0] sm:$0xff]
    %v2146 = vld [vmem:[#allocation9 + $0xd8] sm:$0xff]
    %v2147 = vld [vmem:[#allocation9 + $0xe0] sm:$0xff]
    %v2148 = vld [vmem:[#allocation9 + $0xe8] sm:$0xff]
    %v2149 = vld [vmem:[#allocation9 + $0xf0] sm:$0xff]
    %v2150 = vld [vmem:[#allocation9 + $0xf8] sm:$0xff]
    %v2151 = vld [vmem:[#allocation9 + $0x100] sm:$0xff]
    %v2152 = vld [vmem:[#allocation9 + $0x108] sm:$0xff]
    %v2153 = vld [vmem:[#allocation9 + $0x110] sm:$0xff]
    %v2154 = vld [vmem:[#allocation9 + $0x118] sm:$0xff]
    %v2155 = vld [vmem:[#allocation9 + $0x120] sm:$0xff]
    %v2156 = vld [vmem:[#allocation9 + $0x128] sm:$0xff]
    %v2157 = vld [vmem:[#allocation9 + $0x130] sm:$0xff]
    %v2158 = vld [vmem:[#allocation9 + $0x138] sm:$0xff]
    %v2159 = vld [vmem:[#allocation9 + $0x140] sm:$0xff]
    %v2160 = vld [vmem:[#allocation9 + $0x148] sm:$0xff]
    %v2161 = vld [vmem:[#allocation9 + $0x150] sm:$0xff]
    %v2162 = vld [vmem:[#allocation9 + $0x158] sm:$0xff]
    %v2163 = vld [vmem:[#allocation9 + $0x160] sm:$0xff]
    %v2164 = vld [vmem:[#allocation9 + $0x168] sm:$0xff]
    %v2165 = vld [vmem:[#allocation9 + $0x170] sm:$0xff]
    %v2166 = vld [vmem:[#allocation9 + $0x178] sm:$0xff]
    %v2167 = vld [vmem:[#allocation9 + $0x180] sm:$0xff]
    %v2168 = vld [vmem:[#allocation9 + $0x188] sm:$0xff]
    %v2169 = vld [vmem:[#allocation9 + $0x190] sm:$0xff]
    %v2170 = vld [vmem:[#allocation9 + $0x198] sm:$0xff]
    %v2171 = vld [vmem:[#allocation9 + $0x1a0] sm:$0xff]
    %v2172 = vld [vmem:[#allocation9 + $0x1a8] sm:$0xff]
    %v2173 = vld [vmem:[#allocation9 + $0x1b0] sm:$0xff]
    %v2174 = vld [vmem:[#allocation9 + $0x1b8] sm:$0xff]
    %v2175 = vld [vmem:[#allocation9 + $0x1c0] sm:$0xff]
    %v2176 = vld [vmem:[#allocation9 + $0x1c8] sm:$0xff]
    %v2177 = vld [vmem:[#allocation9 + $0x1d0] sm:$0xff]
    %v2178 = vld [vmem:[#allocation9 + $0x1d8] sm:$0xff]
    %v2179 = vld [vmem:[#allocation9 + $0x1e0] sm:$0xff]
    %v2180 = vld [vmem:[#allocation9 + $0x1e8] sm:$0xff]
    %v2181 = vld [vmem:[#allocation9 + $0x1f0] sm:$0xff]
    %v2182 = vld [vmem:[#allocation9 + $0x1f8] sm:$0xff]
    %2183 = vmatprep.subr.mxu0 %v2120
    %2184 = vmatpush1.msra.mxu0 %v2119
    %2185 = vmatprep.subr.mxu0 %v2124
    %2186 = vmatpush1.msra.mxu0 %v2123
    %2187 = vmatprep.subr.mxu0 %v2128
    %2188 = vmatpush1.msra.mxu0 %v2127
    %2189 = vmatprep.subr.mxu0 %v2132
    %2190 = vmatpush1.msra.mxu0 %v2131
    %2191 = vmatprep.subr.mxu0 %v2136
    %2192 = vmatpush1.msra.mxu0 %v2135
    %2193 = vmatprep.subr.mxu0 %v2140
    %2194 = vmatpush1.msra.mxu0 %v2139
    %2195 = vmatprep.subr.mxu0 %v2144
    %2196 = vmatpush1.msra.mxu0 %v2143
    %2197 = vmatprep.subr.mxu0 %v2148
    %2198 = vmatpush1.msra.mxu0 %v2147
    %2199 = vmatprep.subr.mxu0 %v2152
    %2200 = vmatpush1.msra.mxu0 %v2151
    %2201 = vmatprep.subr.mxu0 %v2156
    %2202 = vmatpush1.msra.mxu0 %v2155
    %2203 = vmatprep.subr.mxu0 %v2160
    %2204 = vmatpush1.msra.mxu0 %v2159
    %2205 = vmatprep.subr.mxu0 %v2164
    %2206 = vmatpush1.msra.mxu0 %v2163
    %2207 = vmatprep.subr.mxu0 %v2168
    %2208 = vmatpush1.msra.mxu0 %v2167
    %2209 = vmatprep.subr.mxu0 %v2172
    %2210 = vmatpush1.msra.mxu0 %v2171
    %2211 = vmatprep.subr.mxu0 %v2176
    %2212 = vmatpush1.msra.mxu0 %v2175
    %2213 = vmatprep.subr.mxu0 %v2180
    %2214 = vmatpush1.msra.mxu0 %v2179
    %2215 = vmatprep.subr.mxu0 0.0
    %2216 = vmatpush1.msra.mxu0 0.0
    %2217 = vmatprep.subr.mxu0 0.0
    %2218 = vmatpush1.msra.mxu0 0.0
    %2219 = vmatprep.subr.mxu0 0.0
    %2220 = vmatpush1.msra.mxu0 0.0
    %2221 = vmatprep.subr.mxu0 0.0
    %2222 = vmatpush1.msra.mxu0 0.0
    %2223 = vmatprep.subr.mxu0 0.0
    %2224 = vmatpush1.msra.mxu0 0.0
    %2225 = vmatprep.subr.mxu0 0.0
    %2226 = vmatpush1.msra.mxu0 0.0
    %2227 = vmatprep.subr.mxu0 0.0
    %2228 = vmatpush1.msra.mxu0 0.0
    %2229 = vmatprep.subr.mxu0 0.0
    %2230 = vmatpush1.msra.mxu0 0.0
    %2231 = vmatprep.subr.mxu0 0.0
    %2232 = vmatpush1.msra.mxu0 0.0
    %2233 = vmatprep.subr.mxu0 0.0
    %2234 = vmatpush1.msra.mxu0 0.0
    %2235 = vmatprep.subr.mxu0 0.0
    %2236 = vmatpush1.msra.mxu0 0.0
    %2237 = vmatprep.subr.mxu0 0.0
    %2238 = vmatpush1.msra.mxu0 0.0
    %2239 = vmatprep.subr.mxu0 0.0
    %2240 = vmatpush1.msra.mxu0 0.0
    %2241 = vmatprep.subr.mxu0 0.0
    %2242 = vmatpush1.msra.mxu0 0.0
    %2243 = vmatprep.subr.mxu0 0.0
    %2244 = vmatpush1.msra.mxu0 0.0
    %2245 = vmatprep.subr.mxu0 0.0
    %2246 = vmatpush1.msra.mxu0 0.0
    %2247 = vmatprep.mubr.f32.mxu0 0.0
    %2248 = vmatmul.mubr.f32.gmra.mrb[0].mxu0 %v2113
    %v2249 = vpop.f32.mrb[0].mxu0
    %v2250 = vadd.f32 0.0, %v2249
    %v2251 = vpop.f32.mrb[0].mxu0
    %v2252 = vadd.f32 0.0, %v2251
    %2253 = vdwg.mxu0
    %2254 = vmatprep.subr.mxu0 %v2122
    %2255 = vmatpush1.msra.mxu0 %v2121
    %2256 = vmatprep.subr.mxu0 %v2126
    %2257 = vmatpush1.msra.mxu0 %v2125
    %2258 = vmatprep.subr.mxu0 %v2130
    %2259 = vmatpush1.msra.mxu0 %v2129
    %2260 = vmatprep.subr.mxu0 %v2134
    %2261 = vmatpush1.msra.mxu0 %v2133
    %2262 = vmatprep.subr.mxu0 %v2138
    %2263 = vmatpush1.msra.mxu0 %v2137
    %2264 = vmatprep.subr.mxu0 %v2142
    %2265 = vmatpush1.msra.mxu0 %v2141
    %2266 = vmatprep.subr.mxu0 %v2146
    %2267 = vmatpush1.msra.mxu0 %v2145
    %2268 = vmatprep.subr.mxu0 %v2150
    %2269 = vmatpush1.msra.mxu0 %v2149
    %2270 = vmatprep.subr.mxu0 %v2154
    %2271 = vmatpush1.msra.mxu0 %v2153
    %2272 = vmatprep.subr.mxu0 %v2158
    %2273 = vmatpush1.msra.mxu0 %v2157
    %2274 = vmatprep.subr.mxu0 %v2162
    %2275 = vmatpush1.msra.mxu0 %v2161
    %2276 = vmatprep.subr.mxu0 %v2166
    %2277 = vmatpush1.msra.mxu0 %v2165
    %2278 = vmatprep.subr.mxu0 %v2170
    %2279 = vmatpush1.msra.mxu0 %v2169
    %2280 = vmatprep.subr.mxu0 %v2174
    %2281 = vmatpush1.msra.mxu0 %v2173
    %2282 = vmatprep.subr.mxu0 %v2178
    %2283 = vmatpush1.msra.mxu0 %v2177
    %2284 = vmatprep.subr.mxu0 %v2182
    %2285 = vmatpush1.msra.mxu0 %v2181
    %2286 = vmatprep.subr.mxu0 0.0
    %2287 = vmatpush1.msra.mxu0 0.0
    %2288 = vmatprep.subr.mxu0 0.0
    %2289 = vmatpush1.msra.mxu0 0.0
    %2290 = vmatprep.subr.mxu0 0.0
    %2291 = vmatpush1.msra.mxu0 0.0
    %2292 = vmatprep.subr.mxu0 0.0
    %2293 = vmatpush1.msra.mxu0 0.0
    %2294 = vmatprep.subr.mxu0 0.0
    %2295 = vmatpush1.msra.mxu0 0.0
    %2296 = vmatprep.subr.mxu0 0.0
    %2297 = vmatpush1.msra.mxu0 0.0
    %2298 = vmatprep.subr.mxu0 0.0
    %2299 = vmatpush1.msra.mxu0 0.0
    %2300 = vmatprep.subr.mxu0 0.0
    %2301 = vmatpush1.msra.mxu0 0.0
    %2302 = vmatprep.subr.mxu0 0.0
    %2303 = vmatpush1.msra.mxu0 0.0
    %2304 = vmatprep.subr.mxu0 0.0
    %2305 = vmatpush1.msra.mxu0 0.0
    %2306 = vmatprep.subr.mxu0 0.0
    %2307 = vmatpush1.msra.mxu0 0.0
    %2308 = vmatprep.subr.mxu0 0.0
    %2309 = vmatpush1.msra.mxu0 0.0
    %2310 = vmatprep.subr.mxu0 0.0
    %2311 = vmatpush1.msra.mxu0 0.0
    %2312 = vmatprep.subr.mxu0 0.0
    %2313 = vmatpush1.msra.mxu0 0.0
    %2314 = vmatprep.subr.mxu0 0.0
    %2315 = vmatpush1.msra.mxu0 0.0
    %2316 = vmatprep.subr.mxu0 0.0
    %2317 = vmatpush1.msra.mxu0 0.0
    %2318 = vmatprep.mubr.f32.mxu0 0.0
    %2319 = vmatmul.mubr.f32.gmra.mrb[0].mxu0 %v2113
    %v2320 = vpop.f32.mrb[0].mxu0
    %v2321 = vadd.f32 0.0, %v2320
    %v2322 = vpop.f32.mrb[0].mxu0
    %v2323 = vadd.f32 0.0, %v2322
    %2324 = vdwg.mxu0
    %v2325 = vadd.f32 %v2115, %v2250
    %v2326 = vadd.f32 %v2116, %v2252
    %v2327 = vadd.f32 %v2117, %v2321
    %v2328 = vadd.f32 %v2118, %v2323
    %v2329 = vxor.u32 %v2325, 2147483648
    %v2330 = vxor.u32 %v2326, 2147483648
    %v2331 = vxor.u32 %v2327, 2147483648
    %v2332 = vmul.f32 %v2329, 1.442695
    %v2333 = vpow.pop %v2332
    %v2334 = vmul.f32 %v2330, 1.442695
    %v2335 = vpow.pop %v2334
    %v2336 = vmul.f32 %v2331, 1.442695
    %v2337 = vpow.pop %v2336
    %v2338 = vadd.f32 %v2333, 1.0
    %v2339 = vadd.f32 %v2335, 1.0
    %v2340 = vadd.f32 %v2337, 1.0
    %v2341 = vrcp.pop %v2338
    %v2342 = vmul.f32 1.0, %v2341
    %v2343 = vrcp.pop %v2339
    %v2344 = vmul.f32 1.0, %v2343
    %v2345 = vrcp.pop %v2340
    %v2346 = vmul.f32 1.0, %v2345
    %v2347 = vtanh.pop %v2328
    %v2348 = vmul.f32 %v2344, %v2111
    %v2349 = vmul.f32 %v2342, %v2347
    %v2350 = vadd.f32 %v2348, %v2349
    %v2351 = vtanh.pop %v2350
    %v2352 = vmul.f32 %v2346, %v2351
    %2353 = vst [vmem:[#allocation3 + $0x38] sm:$0xff] %v2352
    %2354 = vst [vmem:[#allocation16] sm:$0xff] %v2352
    %2355 = vst [vmem:[#allocation17] sm:$0xff] %v2350
    %v2356 = vld [vmem:[#allocation15] sm:$0xf]
    %v2357 = vld [vmem:[#allocation3] sm:$0xff]
    %v2358 = vld [vmem:[#allocation3 + $0x8] sm:$0xff]
    %v2359 = vld [vmem:[#allocation3 + $0x10] sm:$0xff]
    %v2360 = vld [vmem:[#allocation3 + $0x18] sm:$0xff]
    %v2361 = vld [vmem:[#allocation3 + $0x20] sm:$0xff]
    %v2362 = vld [vmem:[#allocation3 + $0x28] sm:$0xff]
    %v2363 = vld [vmem:[#allocation3 + $0x30] sm:$0xff]
    %v2364 = vld [vmem:[#allocation3 + $0x38] sm:$0xff]
    %v2365 = vld [vmem:[#allocation12] sm:$0xff]
    %v2366 = vld [vmem:[#allocation12 + $0x8] sm:$0xff]
    %v2367 = vld [vmem:[#allocation12 + $0x10] sm:$0xff]
    %v2368 = vld [vmem:[#allocation12 + $0x18] sm:$0xff]
    %v2369 = vld [vmem:[#allocation12 + $0x20] sm:$0xff]
    %v2370 = vld [vmem:[#allocation12 + $0x28] sm:$0xff]
    %v2371 = vld [vmem:[#allocation12 + $0x30] sm:$0xff]
    %v2372 = vld [vmem:[#allocation12 + $0x38] sm:$0xff]
    %v2373 = vld [vmem:[#allocation12 + $0x40] sm:$0xff]
    %v2374 = vld [vmem:[#allocation12 + $0x48] sm:$0xff]
    %v2375 = vld [vmem:[#allocation12 + $0x50] sm:$0xff]
    %v2376 = vld [vmem:[#allocation12 + $0x58] sm:$0xff]
    %v2377 = vld [vmem:[#allocation12 + $0x60] sm:$0xff]
    %v2378 = vld [vmem:[#allocation12 + $0x68] sm:$0xff]
    %v2379 = vld [vmem:[#allocation12 + $0x70] sm:$0xff]
    %v2380 = vld [vmem:[#allocation12 + $0x78] sm:$0xff]
    %v2381 = vld [vmem:[#allocation12 + $0x80] sm:$0xff]
    %v2382 = vld [vmem:[#allocation12 + $0x88] sm:$0xff]
    %v2383 = vld [vmem:[#allocation12 + $0x90] sm:$0xff]
    %v2384 = vld [vmem:[#allocation12 + $0x98] sm:$0xff]
    %v2385 = vld [vmem:[#allocation12 + $0xa0] sm:$0xff]
    %v2386 = vld [vmem:[#allocation12 + $0xa8] sm:$0xff]
    %v2387 = vld [vmem:[#allocation12 + $0xb0] sm:$0xff]
    %v2388 = vld [vmem:[#allocation12 + $0xb8] sm:$0xff]
    %v2389 = vld [vmem:[#allocation12 + $0xc0] sm:$0xff]
    %v2390 = vld [vmem:[#allocation12 + $0xc8] sm:$0xff]
    %v2391 = vld [vmem:[#allocation12 + $0xd0] sm:$0xff]
    %v2392 = vld [vmem:[#allocation12 + $0xd8] sm:$0xff]
    %v2393 = vld [vmem:[#allocation12 + $0xe0] sm:$0xff]
    %v2394 = vld [vmem:[#allocation12 + $0xe8] sm:$0xff]
    %v2395 = vld [vmem:[#allocation12 + $0xf0] sm:$0xff]
    %v2396 = vld [vmem:[#allocation12 + $0xf8] sm:$0xff]
    %v2397 = vld [vmem:[#allocation12 + $0x100] sm:$0xff]
    %v2398 = vld [vmem:[#allocation12 + $0x108] sm:$0xff]
    %v2399 = vld [vmem:[#allocation12 + $0x110] sm:$0xff]
    %v2400 = vld [vmem:[#allocation12 + $0x118] sm:$0xff]
    %v2401 = vld [vmem:[#allocation12 + $0x120] sm:$0xff]
    %v2402 = vld [vmem:[#allocation12 + $0x128] sm:$0xff]
    %v2403 = vld [vmem:[#allocation12 + $0x130] sm:$0xff]
    %v2404 = vld [vmem:[#allocation12 + $0x138] sm:$0xff]
    %v2405 = vld [vmem:[#allocation12 + $0x140] sm:$0xff]
    %v2406 = vld [vmem:[#allocation12 + $0x148] sm:$0xff]
    %v2407 = vld [vmem:[#allocation12 + $0x150] sm:$0xff]
    %v2408 = vld [vmem:[#allocation12 + $0x158] sm:$0xff]
    %v2409 = vld [vmem:[#allocation12 + $0x160] sm:$0xff]
    %v2410 = vld [vmem:[#allocation12 + $0x168] sm:$0xff]
    %v2411 = vld [vmem:[#allocation12 + $0x170] sm:$0xff]
    %v2412 = vld [vmem:[#allocation12 + $0x178] sm:$0xff]
    %v2413 = vld [vmem:[#allocation12 + $0x180] sm:$0xff]
    %v2414 = vld [vmem:[#allocation12 + $0x188] sm:$0xff]
    %v2415 = vld [vmem:[#allocation12 + $0x190] sm:$0xff]
    %v2416 = vld [vmem:[#allocation12 + $0x198] sm:$0xff]
    %v2417 = vld [vmem:[#allocation12 + $0x1a0] sm:$0xff]
    %v2418 = vld [vmem:[#allocation12 + $0x1a8] sm:$0xff]
    %v2419 = vld [vmem:[#allocation12 + $0x1b0] sm:$0xff]
    %v2420 = vld [vmem:[#allocation12 + $0x1b8] sm:$0xff]
    %v2421 = vld [vmem:[#allocation12 + $0x1c0] sm:$0xff]
    %v2422 = vld [vmem:[#allocation12 + $0x1c8] sm:$0xff]
    %v2423 = vld [vmem:[#allocation12 + $0x1d0] sm:$0xff]
    %v2424 = vld [vmem:[#allocation12 + $0x1d8] sm:$0xff]
    %v2425 = vld [vmem:[#allocation12 + $0x1e0] sm:$0xff]
    %v2426 = vld [vmem:[#allocation12 + $0x1e8] sm:$0xff]
    %v2427 = vld [vmem:[#allocation12 + $0x1f0] sm:$0xff]
    %v2428 = vld [vmem:[#allocation12 + $0x1f8] sm:$0xff]
    %v2430 = vlaneseq
    %v2431 = vshrl.u32 %v2430, 7
    %v2432 = vsub.s32 0, %v2431
    %v2433 = vrot.slane %v2356, %v2432
    %v2434 = vlaneseq
    %v2435 = vshrl.u32 %v2434, 7
    %v2436 = vsub.s32 1, %v2435
    %v2437 = vrot.slane %v2356, %v2436
    %v2438 = vlaneseq
    %v2439 = vshrl.u32 %v2438, 7
    %v2440 = vsub.s32 2, %v2439
    %v2441 = vrot.slane %v2356, %v2440
    %v2442 = vlaneseq
    %v2443 = vshrl.u32 %v2442, 7
    %v2444 = vsub.s32 3, %v2443
    %v2445 = vrot.slane %v2356, %v2444
    %2450 = vmatprep.subr.mxu0 %v2366
    %2451 = vmatpush1.msra.mxu0 %v2365
    %2452 = vmatprep.subr.mxu0 %v2370
    %2453 = vmatpush1.msra.mxu0 %v2369
    %2454 = vmatprep.subr.mxu0 %v2374
    %2455 = vmatpush1.msra.mxu0 %v2373
    %2456 = vmatprep.subr.mxu0 %v2378
    %2457 = vmatpush1.msra.mxu0 %v2377
    %2458 = vmatprep.subr.mxu0 %v2382
    %2459 = vmatpush1.msra.mxu0 %v2381
    %2460 = vmatprep.subr.mxu0 %v2386
    %2461 = vmatpush1.msra.mxu0 %v2385
    %2462 = vmatprep.subr.mxu0 %v2390
    %2463 = vmatpush1.msra.mxu0 %v2389
    %2464 = vmatprep.subr.mxu0 %v2394
    %2465 = vmatpush1.msra.mxu0 %v2393
    %2466 = vmatprep.subr.mxu0 %v2398
    %2467 = vmatpush1.msra.mxu0 %v2397
    %2468 = vmatprep.subr.mxu0 %v2402
    %2469 = vmatpush1.msra.mxu0 %v2401
    %2470 = vmatprep.subr.mxu0 %v2406
    %2471 = vmatpush1.msra.mxu0 %v2405
    %2472 = vmatprep.subr.mxu0 %v2410
    %2473 = vmatpush1.msra.mxu0 %v2409
    %2474 = vmatprep.subr.mxu0 %v2414
    %2475 = vmatpush1.msra.mxu0 %v2413
    %2476 = vmatprep.subr.mxu0 %v2418
    %2477 = vmatpush1.msra.mxu0 %v2417
    %2478 = vmatprep.subr.mxu0 %v2422
    %2479 = vmatpush1.msra.mxu0 %v2421
    %2480 = vmatprep.subr.mxu0 %v2426
    %2481 = vmatpush1.msra.mxu0 %v2425
    %2482 = vmatprep.subr.mxu0 0.0
    %2483 = vmatpush1.msra.mxu0 0.0
    %2484 = vmatprep.subr.mxu0 0.0
    %2485 = vmatpush1.msra.mxu0 0.0
    %2486 = vmatprep.subr.mxu0 0.0
    %2487 = vmatpush1.msra.mxu0 0.0
    %2488 = vmatprep.subr.mxu0 0.0
    %2489 = vmatpush1.msra.mxu0 0.0
    %2490 = vmatprep.subr.mxu0 0.0
    %2491 = vmatpush1.msra.mxu0 0.0
    %2492 = vmatprep.subr.mxu0 0.0
    %2493 = vmatpush1.msra.mxu0 0.0
    %2494 = vmatprep.subr.mxu0 0.0
    %2495 = vmatpush1.msra.mxu0 0.0
    %2496 = vmatprep.subr.mxu0 0.0
    %2497 = vmatpush1.msra.mxu0 0.0
    %2498 = vmatprep.subr.mxu0 0.0
    %2499 = vmatpush1.msra.mxu0 0.0
    %2500 = vmatprep.subr.mxu0 0.0
    %2501 = vmatpush1.msra.mxu0 0.0
    %2502 = vmatprep.subr.mxu0 0.0
    %2503 = vmatpush1.msra.mxu0 0.0
    %2504 = vmatprep.subr.mxu0 0.0
    %2505 = vmatpush1.msra.mxu0 0.0
    %2506 = vmatprep.subr.mxu0 0.0
    %2507 = vmatpush1.msra.mxu0 0.0
    %2508 = vmatprep.subr.mxu0 0.0
    %2509 = vmatpush1.msra.mxu0 0.0
    %2510 = vmatprep.subr.mxu0 0.0
    %2511 = vmatpush1.msra.mxu0 0.0
    %2512 = vmatprep.subr.mxu0 0.0
    %2513 = vmatpush1.msra.mxu0 0.0
    %2514 = vmatprep.mubr.f32.mxu0 0.0
    %2515 = vmatmul.mubr.f32.gmra.mrb[0].mxu0 %v2357
    %v2516 = vpop.f32.mrb[0].mxu0
    %v2517 = vadd.f32 %v2433, %v2516
    %v2518 = vpop.f32.mrb[0].mxu0
    %v2519 = vadd.f32 %v2437, %v2518
    %2520 = vmatprep.mubr.f32.mxu0 0.0
    %2521 = vmatmul.mubr.f32.gmra.mrb[0].mxu0 %v2358
    %v2522 = vpop.f32.mrb[0].mxu0
    %v2523 = vadd.f32 %v2433, %v2522
    %v2524 = vpop.f32.mrb[0].mxu0
    %v2525 = vadd.f32 %v2437, %v2524
    %2526 = vmatprep.mubr.f32.mxu0 0.0
    %2527 = vmatmul.mubr.f32.gmra.mrb[0].mxu0 %v2359
    %v2528 = vpop.f32.mrb[0].mxu0
    %v2529 = vadd.f32 %v2433, %v2528
    %v2530 = vpop.f32.mrb[0].mxu0
    %v2531 = vadd.f32 %v2437, %v2530
    %2532 = vmatprep.mubr.f32.mxu0 0.0
    %2533 = vmatmul.mubr.f32.gmra.mrb[0].mxu0 %v2360
    %v2534 = vpop.f32.mrb[0].mxu0
    %v2535 = vadd.f32 %v2433, %v2534
    %v2536 = vpop.f32.mrb[0].mxu0
    %v2537 = vadd.f32 %v2437, %v2536
    %2538 = vmatprep.mubr.f32.mxu0 0.0
    %2539 = vmatmul.mubr.f32.gmra.mrb[0].mxu0 %v2361
    %v2540 = vpop.f32.mrb[0].mxu0
    %v2541 = vadd.f32 %v2433, %v2540
    %v2542 = vpop.f32.mrb[0].mxu0
    %v2543 = vadd.f32 %v2437, %v2542
    %2544 = vmatprep.mubr.f32.mxu0 0.0
    %2545 = vmatmul.mubr.f32.gmra.mrb[0].mxu0 %v2362
    %v2546 = vpop.f32.mrb[0].mxu0
    %v2547 = vadd.f32 %v2433, %v2546
    %v2548 = vpop.f32.mrb[0].mxu0
    %v2549 = vadd.f32 %v2437, %v2548
    %2550 = vmatprep.mubr.f32.mxu0 0.0
    %2551 = vmatmul.mubr.f32.gmra.mrb[0].mxu0 %v2363
    %v2552 = vpop.f32.mrb[0].mxu0
    %v2553 = vadd.f32 %v2433, %v2552
    %v2554 = vpop.f32.mrb[0].mxu0
    %v2555 = vadd.f32 %v2437, %v2554
    %2556 = vmatprep.mubr.f32.mxu0 0.0
    %2557 = vmatmul.mubr.f32.gmra.mrb[0].mxu0 %v2364
    %v2558 = vpop.f32.mrb[0].mxu0
    %v2559 = vadd.f32 %v2433, %v2558
    %v2560 = vpop.f32.mrb[0].mxu0
    %v2561 = vadd.f32 %v2437, %v2560
    %2562 = vdwg.mxu0
    %2563 = vmatprep.subr.mxu0 %v2368
    %2564 = vmatpush1.msra.mxu0 %v2367
    %2565 = vmatprep.subr.mxu0 %v2372
    %2566 = vmatpush1.msra.mxu0 %v2371
    %2567 = vmatprep.subr.mxu0 %v2376
    %2568 = vmatpush1.msra.mxu0 %v2375
    %2569 = vmatprep.subr.mxu0 %v2380
    %2570 = vmatpush1.msra.mxu0 %v2379
    %2571 = vmatprep.subr.mxu0 %v2384
    %2572 = vmatpush1.msra.mxu0 %v2383
    %2573 = vmatprep.subr.mxu0 %v2388
    %2574 = vmatpush1.msra.mxu0 %v2387
    %2575 = vmatprep.subr.mxu0 %v2392
    %2576 = vmatpush1.msra.mxu0 %v2391
    %2577 = vmatprep.subr.mxu0 %v2396
    %2578 = vmatpush1.msra.mxu0 %v2395
    %2579 = vmatprep.subr.mxu0 %v2400
    %2580 = vmatpush1.msra.mxu0 %v2399
    %2581 = vmatprep.subr.mxu0 %v2404
    %2582 = vmatpush1.msra.mxu0 %v2403
    %2583 = vmatprep.subr.mxu0 %v2408
    %2584 = vmatpush1.msra.mxu0 %v2407
    %2585 = vmatprep.subr.mxu0 %v2412
    %2586 = vmatpush1.msra.mxu0 %v2411
    %2587 = vmatprep.subr.mxu0 %v2416
    %2588 = vmatpush1.msra.mxu0 %v2415
    %2589 = vmatprep.subr.mxu0 %v2420
    %2590 = vmatpush1.msra.mxu0 %v2419
    %2591 = vmatprep.subr.mxu0 %v2424
    %2592 = vmatpush1.msra.mxu0 %v2423
    %2593 = vmatprep.subr.mxu0 %v2428
    %2594 = vmatpush1.msra.mxu0 %v2427
    %2595 = vmatprep.subr.mxu0 0.0
    %2596 = vmatpush1.msra.mxu0 0.0
    %2597 = vmatprep.subr.mxu0 0.0
    %2598 = vmatpush1.msra.mxu0 0.0
    %2599 = vmatprep.subr.mxu0 0.0
    %2600 = vmatpush1.msra.mxu0 0.0
    %2601 = vmatprep.subr.mxu0 0.0
    %2602 = vmatpush1.msra.mxu0 0.0
    %2603 = vmatprep.subr.mxu0 0.0
    %2604 = vmatpush1.msra.mxu0 0.0
    %2605 = vmatprep.subr.mxu0 0.0
    %2606 = vmatpush1.msra.mxu0 0.0
    %2607 = vmatprep.subr.mxu0 0.0
    %2608 = vmatpush1.msra.mxu0 0.0
    %2609 = vmatprep.subr.mxu0 0.0
    %2610 = vmatpush1.msra.mxu0 0.0
    %2611 = vmatprep.subr.mxu0 0.0
    %2612 = vmatpush1.msra.mxu0 0.0
    %2613 = vmatprep.subr.mxu0 0.0
    %2614 = vmatpush1.msra.mxu0 0.0
    %2615 = vmatprep.subr.mxu0 0.0
    %2616 = vmatpush1.msra.mxu0 0.0
    %2617 = vmatprep.subr.mxu0 0.0
    %2618 = vmatpush1.msra.mxu0 0.0
    %2619 = vmatprep.subr.mxu0 0.0
    %2620 = vmatpush1.msra.mxu0 0.0
    %2621 = vmatprep.subr.mxu0 0.0
    %2622 = vmatpush1.msra.mxu0 0.0
    %2623 = vmatprep.subr.mxu0 0.0
    %2624 = vmatpush1.msra.mxu0 0.0
    %2625 = vmatprep.subr.mxu0 0.0
    %2626 = vmatpush1.msra.mxu0 0.0
    %2627 = vmatprep.mubr.f32.mxu0 0.0
    %2628 = vmatmul.mubr.f32.gmra.mrb[0].mxu0 %v2357
    %v2629 = vpop.f32.mrb[0].mxu0
    %v2630 = vadd.f32 %v2441, %v2629
    %v2631 = vpop.f32.mrb[0].mxu0
    %v2632 = vadd.f32 %v2445, %v2631
    %2633 = vmatprep.mubr.f32.mxu0 0.0
    %2634 = vmatmul.mubr.f32.gmra.mrb[0].mxu0 %v2358
    %v2635 = vpop.f32.mrb[0].mxu0
    %v2636 = vadd.f32 %v2441, %v2635
    %v2637 = vpop.f32.mrb[0].mxu0
    %v2638 = vadd.f32 %v2445, %v2637
    %2639 = vmatprep.mubr.f32.mxu0 0.0
    %2640 = vmatmul.mubr.f32.gmra.mrb[0].mxu0 %v2359
    %v2641 = vpop.f32.mrb[0].mxu0
    %v2642 = vadd.f32 %v2441, %v2641
    %v2643 = vpop.f32.mrb[0].mxu0
    %v2644 = vadd.f32 %v2445, %v2643
    %2645 = vmatprep.mubr.f32.mxu0 0.0
    %2646 = vmatmul.mubr.f32.gmra.mrb[0].mxu0 %v2360
    %v2647 = vpop.f32.mrb[0].mxu0
    %v2648 = vadd.f32 %v2441, %v2647
    %v2649 = vpop.f32.mrb[0].mxu0
    %v2650 = vadd.f32 %v2445, %v2649
    %2651 = vmatprep.mubr.f32.mxu0 0.0
    %2652 = vmatmul.mubr.f32.gmra.mrb[0].mxu0 %v2361
    %v2653 = vpop.f32.mrb[0].mxu0
    %v2654 = vadd.f32 %v2441, %v2653
    %v2655 = vpop.f32.mrb[0].mxu0
    %v2656 = vadd.f32 %v2445, %v2655
    %2657 = vmatprep.mubr.f32.mxu0 0.0
    %2658 = vmatmul.mubr.f32.gmra.mrb[0].mxu0 %v2362
    %v2659 = vpop.f32.mrb[0].mxu0
    %v2660 = vadd.f32 %v2441, %v2659
    %v2661 = vpop.f32.mrb[0].mxu0
    %v2662 = vadd.f32 %v2445, %v2661
    %2663 = vmatprep.mubr.f32.mxu0 0.0
    %2664 = vmatmul.mubr.f32.gmra.mrb[0].mxu0 %v2363
    %v2665 = vpop.f32.mrb[0].mxu0
    %v2666 = vadd.f32 %v2441, %v2665
    %v2667 = vpop.f32.mrb[0].mxu0
    %v2668 = vadd.f32 %v2445, %v2667
    %2669 = vmatprep.mubr.f32.mxu0 0.0
    %2670 = vmatmul.mubr.f32.gmra.mrb[0].mxu0 %v2364
    %v2671 = vpop.f32.mrb[0].mxu0
    %v2672 = vadd.f32 %v2441, %v2671
    %v2673 = vpop.f32.mrb[0].mxu0
    %v2674 = vadd.f32 %v2445, %v2673
    %2675 = vdwg.mxu0
    %2676 = vst [vmem:[#allocation2] sm:$0xff] %v2517
    %2677 = vst [vmem:[#allocation2 + $0x8] sm:$0xff] %v2519
    %2678 = vst [vmem:[#allocation2 + $0x10] sm:$0xff] %v2630
    %2679 = vst [vmem:[#allocation2 + $0x18] sm:$0xff] %v2632
    %2680 = vst [vmem:[#allocation2 + $0x20] sm:$0xff] %v2523
    %2681 = vst [vmem:[#allocation2 + $0x28] sm:$0xff] %v2525
    %2682 = vst [vmem:[#allocation2 + $0x30] sm:$0xff] %v2636
    %2683 = vst [vmem:[#allocation2 + $0x38] sm:$0xff] %v2638
    %2684 = vst [vmem:[#allocation2 + $0x40] sm:$0xff] %v2529
    %2685 = vst [vmem:[#allocation2 + $0x48] sm:$0xff] %v2531
    %2686 = vst [vmem:[#allocation2 + $0x50] sm:$0xff] %v2642
    %2687 = vst [vmem:[#allocation2 + $0x58] sm:$0xff] %v2644
    %2688 = vst [vmem:[#allocation2 + $0x60] sm:$0xff] %v2535
    %2689 = vst [vmem:[#allocation2 + $0x68] sm:$0xff] %v2537
    %2690 = vst [vmem:[#allocation2 + $0x70] sm:$0xff] %v2648
    %2691 = vst [vmem:[#allocation2 + $0x78] sm:$0xff] %v2650
    %2692 = vst [vmem:[#allocation2 + $0x80] sm:$0xff] %v2541
    %2693 = vst [vmem:[#allocation2 + $0x88] sm:$0xff] %v2543
    %2694 = vst [vmem:[#allocation2 + $0x90] sm:$0xff] %v2654
    %2695 = vst [vmem:[#allocation2 + $0x98] sm:$0xff] %v2656
    %2696 = vst [vmem:[#allocation2 + $0xa0] sm:$0xff] %v2547
    %2697 = vst [vmem:[#allocation2 + $0xa8] sm:$0xff] %v2549
    %2698 = vst [vmem:[#allocation2 + $0xb0] sm:$0xff] %v2660
    %2699 = vst [vmem:[#allocation2 + $0xb8] sm:$0xff] %v2662
    %2700 = vst [vmem:[#allocation2 + $0xc0] sm:$0xff] %v2553
    %2701 = vst [vmem:[#allocation2 + $0xc8] sm:$0xff] %v2555
    %2702 = vst [vmem:[#allocation2 + $0xd0] sm:$0xff] %v2666
    %2703 = vst [vmem:[#allocation2 + $0xd8] sm:$0xff] %v2668
    %2704 = vst [vmem:[#allocation2 + $0xe0] sm:$0xff] %v2559
    %2705 = vst [vmem:[#allocation2 + $0xe8] sm:$0xff] %v2561
    %2706 = vst [vmem:[#allocation2 + $0xf0] sm:$0xff] %v2672
    %2707 = vst [vmem:[#allocation2 + $0xf8] sm:$0xff] %v2674
    %v2708 = vld [vmem:[#allocation2] sm:$0xff]
    %v2709 = vld [vmem:[#allocation2 + $0x8] sm:$0xff]
    %v2710 = vld [vmem:[#allocation2 + $0x10] sm:$0xff]
    %v2711 = vld [vmem:[#allocation2 + $0x18] sm:$0xff]
    %v2712 = vld [vmem:[#allocation13] sm:$0xff]
    %v2713 = vld [vmem:[#allocation13 + $0x8] sm:$0xff]
    %v2714 = vld [vmem:[#allocation13 + $0x10] sm:$0xff]
    %v2715 = vld [vmem:[#allocation13 + $0x18] sm:$0xff]
    %v2716 = vld [vmem:[#allocation13 + $0x20] sm:$0xff]
    %v2717 = vld [vmem:[#allocation13 + $0x28] sm:$0xff]
    %v2718 = vld [vmem:[#allocation13 + $0x30] sm:$0xff]
    %v2719 = vld [vmem:[#allocation13 + $0x38] sm:$0xff]
    %v2720 = vld [vmem:[#allocation13 + $0x40] sm:$0xff]
    %v2721 = vld [vmem:[#allocation13 + $0x48] sm:$0xff]
    %v2722 = vld [vmem:[#allocation13 + $0x50] sm:$0xff]
    %v2723 = vld [vmem:[#allocation13 + $0x58] sm:$0xff]
    %v2724 = vld [vmem:[#allocation13 + $0x60] sm:$0xff]
    %v2725 = vld [vmem:[#allocation13 + $0x68] sm:$0xff]
    %v2726 = vld [vmem:[#allocation13 + $0x70] sm:$0xff]
    %v2727 = vld [vmem:[#allocation13 + $0x78] sm:$0xff]
    %v2728 = vld [vmem:[#allocation13 + $0x80] sm:$0xff]
    %v2729 = vld [vmem:[#allocation13 + $0x88] sm:$0xff]
    %v2730 = vld [vmem:[#allocation13 + $0x90] sm:$0xff]
    %v2731 = vld [vmem:[#allocation13 + $0x98] sm:$0xff]
    %v2732 = vld [vmem:[#allocation13 + $0xa0] sm:$0xff]
    %v2733 = vld [vmem:[#allocation13 + $0xa8] sm:$0xff]
    %v2734 = vld [vmem:[#allocation13 + $0xb0] sm:$0xff]
    %v2735 = vld [vmem:[#allocation13 + $0xb8] sm:$0xff]
    %v2736 = vld [vmem:[#allocation13 + $0xc0] sm:$0xff]
    %v2737 = vld [vmem:[#allocation13 + $0xc8] sm:$0xff]
    %v2738 = vld [vmem:[#allocation13 + $0xd0] sm:$0xff]
    %v2739 = vld [vmem:[#allocation13 + $0xd8] sm:$0xff]
    %v2740 = vld [vmem:[#allocation13 + $0xe0] sm:$0xff]
    %v2741 = vld [vmem:[#allocation13 + $0xe8] sm:$0xff]
    %v2742 = vld [vmem:[#allocation13 + $0xf0] sm:$0xff]
    %v2743 = vld [vmem:[#allocation13 + $0xf8] sm:$0xff]
    %v2744 = vld [vmem:[#allocation13 + $0x100] sm:$0xff]
    %v2745 = vld [vmem:[#allocation13 + $0x108] sm:$0xff]
    %v2746 = vld [vmem:[#allocation13 + $0x110] sm:$0xff]
    %v2747 = vld [vmem:[#allocation13 + $0x118] sm:$0xff]
    %v2748 = vld [vmem:[#allocation13 + $0x120] sm:$0xff]
    %v2749 = vld [vmem:[#allocation13 + $0x128] sm:$0xff]
    %v2750 = vld [vmem:[#allocation13 + $0x130] sm:$0xff]
    %v2751 = vld [vmem:[#allocation13 + $0x138] sm:$0xff]
    %v2752 = vld [vmem:[#allocation13 + $0x140] sm:$0xff]
    %v2753 = vld [vmem:[#allocation13 + $0x148] sm:$0xff]
    %v2754 = vld [vmem:[#allocation13 + $0x150] sm:$0xff]
    %v2755 = vld [vmem:[#allocation13 + $0x158] sm:$0xff]
    %v2756 = vld [vmem:[#allocation13 + $0x160] sm:$0xff]
    %v2757 = vld [vmem:[#allocation13 + $0x168] sm:$0xff]
    %v2758 = vld [vmem:[#allocation13 + $0x170] sm:$0xff]
    %v2759 = vld [vmem:[#allocation13 + $0x178] sm:$0xff]
    %v2760 = vld [vmem:[#allocation13 + $0x180] sm:$0xff]
    %v2761 = vld [vmem:[#allocation13 + $0x188] sm:$0xff]
    %v2762 = vld [vmem:[#allocation13 + $0x190] sm:$0xff]
    %v2763 = vld [vmem:[#allocation13 + $0x198] sm:$0xff]
    %v2764 = vld [vmem:[#allocation13 + $0x1a0] sm:$0xff]
    %v2765 = vld [vmem:[#allocation13 + $0x1a8] sm:$0xff]
    %v2766 = vld [vmem:[#allocation13 + $0x1b0] sm:$0xff]
    %v2767 = vld [vmem:[#allocation13 + $0x1b8] sm:$0xff]
    %v2768 = vld [vmem:[#allocation13 + $0x1c0] sm:$0xff]
    %v2769 = vld [vmem:[#allocation13 + $0x1c8] sm:$0xff]
    %v2770 = vld [vmem:[#allocation13 + $0x1d0] sm:$0xff]
    %v2771 = vld [vmem:[#allocation13 + $0x1d8] sm:$0xff]
    %v2772 = vld [vmem:[#allocation13 + $0x1e0] sm:$0xff]
    %v2773 = vld [vmem:[#allocation13 + $0x1e8] sm:$0xff]
    %v2774 = vld [vmem:[#allocation13 + $0x1f0] sm:$0xff]
    %v2775 = vld [vmem:[#allocation13 + $0x1f8] sm:$0xff]
    %2776 = vmatprep.subr.mxu0 %v2713
    %2777 = vmatpush1.msra.mxu0 %v2712
    %2778 = vmatprep.subr.mxu0 %v2717
    %2779 = vmatpush1.msra.mxu0 %v2716
    %2780 = vmatprep.subr.mxu0 %v2721
    %2781 = vmatpush1.msra.mxu0 %v2720
    %2782 = vmatprep.subr.mxu0 %v2725
    %2783 = vmatpush1.msra.mxu0 %v2724
    %2784 = vmatprep.subr.mxu0 %v2729
    %2785 = vmatpush1.msra.mxu0 %v2728
    %2786 = vmatprep.subr.mxu0 %v2733
    %2787 = vmatpush1.msra.mxu0 %v2732
    %2788 = vmatprep.subr.mxu0 %v2737
    %2789 = vmatpush1.msra.mxu0 %v2736
    %2790 = vmatprep.subr.mxu0 %v2741
    %2791 = vmatpush1.msra.mxu0 %v2740
    %2792 = vmatprep.subr.mxu0 %v2745
    %2793 = vmatpush1.msra.mxu0 %v2744
    %2794 = vmatprep.subr.mxu0 %v2749
    %2795 = vmatpush1.msra.mxu0 %v2748
    %2796 = vmatprep.subr.mxu0 %v2753
    %2797 = vmatpush1.msra.mxu0 %v2752
    %2798 = vmatprep.subr.mxu0 %v2757
    %2799 = vmatpush1.msra.mxu0 %v2756
    %2800 = vmatprep.subr.mxu0 %v2761
    %2801 = vmatpush1.msra.mxu0 %v2760
    %2802 = vmatprep.subr.mxu0 %v2765
    %2803 = vmatpush1.msra.mxu0 %v2764
    %2804 = vmatprep.subr.mxu0 %v2769
    %2805 = vmatpush1.msra.mxu0 %v2768
    %2806 = vmatprep.subr.mxu0 %v2773
    %2807 = vmatpush1.msra.mxu0 %v2772
    %2808 = vmatprep.subr.mxu0 0.0
    %2809 = vmatpush1.msra.mxu0 0.0
    %2810 = vmatprep.subr.mxu0 0.0
    %2811 = vmatpush1.msra.mxu0 0.0
    %2812 = vmatprep.subr.mxu0 0.0
    %2813 = vmatpush1.msra.mxu0 0.0
    %2814 = vmatprep.subr.mxu0 0.0
    %2815 = vmatpush1.msra.mxu0 0.0
    %2816 = vmatprep.subr.mxu0 0.0
    %2817 = vmatpush1.msra.mxu0 0.0
    %2818 = vmatprep.subr.mxu0 0.0
    %2819 = vmatpush1.msra.mxu0 0.0
    %2820 = vmatprep.subr.mxu0 0.0
    %2821 = vmatpush1.msra.mxu0 0.0
    %2822 = vmatprep.subr.mxu0 0.0
    %2823 = vmatpush1.msra.mxu0 0.0
    %2824 = vmatprep.subr.mxu0 0.0
    %2825 = vmatpush1.msra.mxu0 0.0
    %2826 = vmatprep.subr.mxu0 0.0
    %2827 = vmatpush1.msra.mxu0 0.0
    %2828 = vmatprep.subr.mxu0 0.0
    %2829 = vmatpush1.msra.mxu0 0.0
    %2830 = vmatprep.subr.mxu0 0.0
    %2831 = vmatpush1.msra.mxu0 0.0
    %2832 = vmatprep.subr.mxu0 0.0
    %2833 = vmatpush1.msra.mxu0 0.0
    %2834 = vmatprep.subr.mxu0 0.0
    %2835 = vmatpush1.msra.mxu0 0.0
    %2836 = vmatprep.subr.mxu0 0.0
    %2837 = vmatpush1.msra.mxu0 0.0
    %2838 = vmatprep.subr.mxu0 0.0
    %2839 = vmatpush1.msra.mxu0 0.0
    %2840 = vmatprep.mubr.f32.mxu0 0.0
    %2841 = vmatmul.mubr.f32.gmra.mrb[0].mxu0 0.0
    %v2842 = vpop.f32.mrb[0].mxu0
    %v2843 = vadd.f32 0.0, %v2842
    %v2844 = vpop.f32.mrb[0].mxu0
    %v2845 = vadd.f32 0.0, %v2844
    %2846 = vdwg.mxu0
    %2847 = vmatprep.subr.mxu0 %v2715
    %2848 = vmatpush1.msra.mxu0 %v2714
    %2849 = vmatprep.subr.mxu0 %v2719
    %2850 = vmatpush1.msra.mxu0 %v2718
    %2851 = vmatprep.subr.mxu0 %v2723
    %2852 = vmatpush1.msra.mxu0 %v2722
    %2853 = vmatprep.subr.mxu0 %v2727
    %2854 = vmatpush1.msra.mxu0 %v2726
    %2855 = vmatprep.subr.mxu0 %v2731
    %2856 = vmatpush1.msra.mxu0 %v2730
    %2857 = vmatprep.subr.mxu0 %v2735
    %2858 = vmatpush1.msra.mxu0 %v2734
    %2859 = vmatprep.subr.mxu0 %v2739
    %2860 = vmatpush1.msra.mxu0 %v2738
    %2861 = vmatprep.subr.mxu0 %v2743
    %2862 = vmatpush1.msra.mxu0 %v2742
    %2863 = vmatprep.subr.mxu0 %v2747
    %2864 = vmatpush1.msra.mxu0 %v2746
    %2865 = vmatprep.subr.mxu0 %v2751
    %2866 = vmatpush1.msra.mxu0 %v2750
    %2867 = vmatprep.subr.mxu0 %v2755
    %2868 = vmatpush1.msra.mxu0 %v2754
    %2869 = vmatprep.subr.mxu0 %v2759
    %2870 = vmatpush1.msra.mxu0 %v2758
    %2871 = vmatprep.subr.mxu0 %v2763
    %2872 = vmatpush1.msra.mxu0 %v2762
    %2873 = vmatprep.subr.mxu0 %v2767
    %2874 = vmatpush1.msra.mxu0 %v2766
    %2875 = vmatprep.subr.mxu0 %v2771
    %2876 = vmatpush1.msra.mxu0 %v2770
    %2877 = vmatprep.subr.mxu0 %v2775
    %2878 = vmatpush1.msra.mxu0 %v2774
    %2879 = vmatprep.subr.mxu0 0.0
    %2880 = vmatpush1.msra.mxu0 0.0
    %2881 = vmatprep.subr.mxu0 0.0
    %2882 = vmatpush1.msra.mxu0 0.0
    %2883 = vmatprep.subr.mxu0 0.0
    %2884 = vmatpush1.msra.mxu0 0.0
    %2885 = vmatprep.subr.mxu0 0.0
    %2886 = vmatpush1.msra.mxu0 0.0
    %2887 = vmatprep.subr.mxu0 0.0
    %2888 = vmatpush1.msra.mxu0 0.0
    %2889 = vmatprep.subr.mxu0 0.0
    %2890 = vmatpush1.msra.mxu0 0.0
    %2891 = vmatprep.subr.mxu0 0.0
    %2892 = vmatpush1.msra.mxu0 0.0
    %2893 = vmatprep.subr.mxu0 0.0
    %2894 = vmatpush1.msra.mxu0 0.0
    %2895 = vmatprep.subr.mxu0 0.0
    %2896 = vmatpush1.msra.mxu0 0.0
    %2897 = vmatprep.subr.mxu0 0.0
    %2898 = vmatpush1.msra.mxu0 0.0
    %2899 = vmatprep.subr.mxu0 0.0
    %2900 = vmatpush1.msra.mxu0 0.0
    %2901 = vmatprep.subr.mxu0 0.0
    %2902 = vmatpush1.msra.mxu0 0.0
    %2903 = vmatprep.subr.mxu0 0.0
    %2904 = vmatpush1.msra.mxu0 0.0
    %2905 = vmatprep.subr.mxu0 0.0
    %2906 = vmatpush1.msra.mxu0 0.0
    %2907 = vmatprep.subr.mxu0 0.0
    %2908 = vmatpush1.msra.mxu0 0.0
    %2909 = vmatprep.subr.mxu0 0.0
    %2910 = vmatpush1.msra.mxu0 0.0
    %2911 = vmatprep.mubr.f32.mxu0 0.0
    %2912 = vmatmul.mubr.f32.gmra.mrb[0].mxu0 0.0
    %v2913 = vpop.f32.mrb[0].mxu0
    %v2914 = vadd.f32 0.0, %v2913
    %v2915 = vpop.f32.mrb[0].mxu0
    %v2916 = vadd.f32 0.0, %v2915
    %2917 = vdwg.mxu0
    %v2918 = vadd.f32 %v2708, %v2843
    %v2919 = vadd.f32 %v2709, %v2845
    %v2920 = vadd.f32 %v2710, %v2914
    %v2921 = vadd.f32 %v2711, %v2916
    %v2922 = vxor.u32 %v2918, 2147483648
    %v2923 = vxor.u32 %v2919, 2147483648
    %v2924 = vxor.u32 %v2920, 2147483648
    %v2925 = vmul.f32 %v2922, 1.442695
    %v2926 = vpow.pop %v2925
    %v2927 = vmul.f32 %v2923, 1.442695
    %v2928 = vpow.pop %v2927
    %v2929 = vmul.f32 %v2924, 1.442695
    %v2930 = vpow.pop %v2929
    %v2931 = vadd.f32 %v2926, 1.0
    %v2932 = vadd.f32 %v2928, 1.0
    %v2933 = vadd.f32 %v2930, 1.0
    %v2934 = vrcp.pop %v2931
    %v2935 = vmul.f32 1.0, %v2934
    %v2936 = vrcp.pop %v2932
    %v2937 = vmul.f32 1.0, %v2936
    %v2938 = vrcp.pop %v2933
    %v2939 = vmul.f32 1.0, %v2938
    %v2940 = vtanh.pop %v2921
    %v2941 = vmul.f32 %v2937, 0.0
    %v2942 = vmul.f32 %v2935, %v2940
    %v2943 = vadd.f32 %v2941, %v2942
    %v2944 = vtanh.pop %v2943
    %v2945 = vmul.f32 %v2939, %v2944
    %v2946 = vld [vmem:[#allocation2 + $0x20] sm:$0xff]
    %v2947 = vld [vmem:[#allocation2 + $0x28] sm:$0xff]
    %v2948 = vld [vmem:[#allocation2 + $0x30] sm:$0xff]
    %v2949 = vld [vmem:[#allocation2 + $0x38] sm:$0xff]
    %2950 = vmatprep.subr.mxu0 %v2713
    %2951 = vmatpush1.msra.mxu0 %v2712
    %2952 = vmatprep.subr.mxu0 %v2717
    %2953 = vmatpush1.msra.mxu0 %v2716
    %2954 = vmatprep.subr.mxu0 %v2721
    %2955 = vmatpush1.msra.mxu0 %v2720
    %2956 = vmatprep.subr.mxu0 %v2725
    %2957 = vmatpush1.msra.mxu0 %v2724
    %2958 = vmatprep.subr.mxu0 %v2729
    %2959 = vmatpush1.msra.mxu0 %v2728
    %2960 = vmatprep.subr.mxu0 %v2733
    %2961 = vmatpush1.msra.mxu0 %v2732
    %2962 = vmatprep.subr.mxu0 %v2737
    %2963 = vmatpush1.msra.mxu0 %v2736
    %2964 = vmatprep.subr.mxu0 %v2741
    %2965 = vmatpush1.msra.mxu0 %v2740
    %2966 = vmatprep.subr.mxu0 %v2745
    %2967 = vmatpush1.msra.mxu0 %v2744
    %2968 = vmatprep.subr.mxu0 %v2749
    %2969 = vmatpush1.msra.mxu0 %v2748
    %2970 = vmatprep.subr.mxu0 %v2753
    %2971 = vmatpush1.msra.mxu0 %v2752
    %2972 = vmatprep.subr.mxu0 %v2757
    %2973 = vmatpush1.msra.mxu0 %v2756
    %2974 = vmatprep.subr.mxu0 %v2761
    %2975 = vmatpush1.msra.mxu0 %v2760
    %2976 = vmatprep.subr.mxu0 %v2765
    %2977 = vmatpush1.msra.mxu0 %v2764
    %2978 = vmatprep.subr.mxu0 %v2769
    %2979 = vmatpush1.msra.mxu0 %v2768
    %2980 = vmatprep.subr.mxu0 %v2773
    %2981 = vmatpush1.msra.mxu0 %v2772
    %2982 = vmatprep.subr.mxu0 0.0
    %2983 = vmatpush1.msra.mxu0 0.0
    %2984 = vmatprep.subr.mxu0 0.0
    %2985 = vmatpush1.msra.mxu0 0.0
    %2986 = vmatprep.subr.mxu0 0.0
    %2987 = vmatpush1.msra.mxu0 0.0
    %2988 = vmatprep.subr.mxu0 0.0
    %2989 = vmatpush1.msra.mxu0 0.0
    %2990 = vmatprep.subr.mxu0 0.0
    %2991 = vmatpush1.msra.mxu0 0.0
    %2992 = vmatprep.subr.mxu0 0.0
    %2993 = vmatpush1.msra.mxu0 0.0
    %2994 = vmatprep.subr.mxu0 0.0
    %2995 = vmatpush1.msra.mxu0 0.0
    %2996 = vmatprep.subr.mxu0 0.0
    %2997 = vmatpush1.msra.mxu0 0.0
    %2998 = vmatprep.subr.mxu0 0.0
    %2999 = vmatpush1.msra.mxu0 0.0
    %3000 = vmatprep.subr.mxu0 0.0
    %3001 = vmatpush1.msra.mxu0 0.0
    %3002 = vmatprep.subr.mxu0 0.0
    %3003 = vmatpush1.msra.mxu0 0.0
    %3004 = vmatprep.subr.mxu0 0.0
    %3005 = vmatpush1.msra.mxu0 0.0
    %3006 = vmatprep.subr.mxu0 0.0
    %3007 = vmatpush1.msra.mxu0 0.0
    %3008 = vmatprep.subr.mxu0 0.0
    %3009 = vmatpush1.msra.mxu0 0.0
    %3010 = vmatprep.subr.mxu0 0.0
    %3011 = vmatpush1.msra.mxu0 0.0
    %3012 = vmatprep.subr.mxu0 0.0
    %3013 = vmatpush1.msra.mxu0 0.0
    %3014 = vmatprep.mubr.f32.mxu0 0.0
    %3015 = vmatmul.mubr.f32.gmra.mrb[0].mxu0 %v2945
    %v3016 = vpop.f32.mrb[0].mxu0
    %v3017 = vadd.f32 0.0, %v3016
    %v3018 = vpop.f32.mrb[0].mxu0
    %v3019 = vadd.f32 0.0, %v3018
    %3020 = vdwg.mxu0
    %3021 = vmatprep.subr.mxu0 %v2715
    %3022 = vmatpush1.msra.mxu0 %v2714
    %3023 = vmatprep.subr.mxu0 %v2719
    %3024 = vmatpush1.msra.mxu0 %v2718
    %3025 = vmatprep.subr.mxu0 %v2723
    %3026 = vmatpush1.msra.mxu0 %v2722
    %3027 = vmatprep.subr.mxu0 %v2727
    %3028 = vmatpush1.msra.mxu0 %v2726
    %3029 = vmatprep.subr.mxu0 %v2731
    %3030 = vmatpush1.msra.mxu0 %v2730
    %3031 = vmatprep.subr.mxu0 %v2735
    %3032 = vmatpush1.msra.mxu0 %v2734
    %3033 = vmatprep.subr.mxu0 %v2739
    %3034 = vmatpush1.msra.mxu0 %v2738
    %3035 = vmatprep.subr.mxu0 %v2743
    %3036 = vmatpush1.msra.mxu0 %v2742
    %3037 = vmatprep.subr.mxu0 %v2747
    %3038 = vmatpush1.msra.mxu0 %v2746
    %3039 = vmatprep.subr.mxu0 %v2751
    %3040 = vmatpush1.msra.mxu0 %v2750
    %3041 = vmatprep.subr.mxu0 %v2755
    %3042 = vmatpush1.msra.mxu0 %v2754
    %3043 = vmatprep.subr.mxu0 %v2759
    %3044 = vmatpush1.msra.mxu0 %v2758
    %3045 = vmatprep.subr.mxu0 %v2763
    %3046 = vmatpush1.msra.mxu0 %v2762
    %3047 = vmatprep.subr.mxu0 %v2767
    %3048 = vmatpush1.msra.mxu0 %v2766
    %3049 = vmatprep.subr.mxu0 %v2771
    %3050 = vmatpush1.msra.mxu0 %v2770
    %3051 = vmatprep.subr.mxu0 %v2775
    %3052 = vmatpush1.msra.mxu0 %v2774
    %3053 = vmatprep.subr.mxu0 0.0
    %3054 = vmatpush1.msra.mxu0 0.0
    %3055 = vmatprep.subr.mxu0 0.0
    %3056 = vmatpush1.msra.mxu0 0.0
    %3057 = vmatprep.subr.mxu0 0.0
    %3058 = vmatpush1.msra.mxu0 0.0
    %3059 = vmatprep.subr.mxu0 0.0
    %3060 = vmatpush1.msra.mxu0 0.0
    %3061 = vmatprep.subr.mxu0 0.0
    %3062 = vmatpush1.msra.mxu0 0.0
    %3063 = vmatprep.subr.mxu0 0.0
    %3064 = vmatpush1.msra.mxu0 0.0
    %3065 = vmatprep.subr.mxu0 0.0
    %3066 = vmatpush1.msra.mxu0 0.0
    %3067 = vmatprep.subr.mxu0 0.0
    %3068 = vmatpush1.msra.mxu0 0.0
    %3069 = vmatprep.subr.mxu0 0.0
    %3070 = vmatpush1.msra.mxu0 0.0
    %3071 = vmatprep.subr.mxu0 0.0
    %3072 = vmatpush1.msra.mxu0 0.0
    %3073 = vmatprep.subr.mxu0 0.0
    %3074 = vmatpush1.msra.mxu0 0.0
    %3075 = vmatprep.subr.mxu0 0.0
    %3076 = vmatpush1.msra.mxu0 0.0
    %3077 = vmatprep.subr.mxu0 0.0
    %3078 = vmatpush1.msra.mxu0 0.0
    %3079 = vmatprep.subr.mxu0 0.0
    %3080 = vmatpush1.msra.mxu0 0.0
    %3081 = vmatprep.subr.mxu0 0.0
    %3082 = vmatpush1.msra.mxu0 0.0
    %3083 = vmatprep.subr.mxu0 0.0
    %3084 = vmatpush1.msra.mxu0 0.0
    %3085 = vmatprep.mubr.f32.mxu0 0.0
    %3086 = vmatmul.mubr.f32.gmra.mrb[0].mxu0 %v2945
    %v3087 = vpop.f32.mrb[0].mxu0
    %v3088 = vadd.f32 0.0, %v3087
    %v3089 = vpop.f32.mrb[0].mxu0
    %v3090 = vadd.f32 0.0, %v3089
    %3091 = vdwg.mxu0
    %v3092 = vadd.f32 %v2946, %v3017
    %v3093 = vadd.f32 %v2947, %v3019
    %v3094 = vadd.f32 %v2948, %v3088
    %v3095 = vadd.f32 %v2949, %v3090
    %v3096 = vxor.u32 %v3092, 2147483648
    %v3097 = vxor.u32 %v3093, 2147483648
    %v3098 = vxor.u32 %v3094, 2147483648
    %v3099 = vmul.f32 %v3096, 1.442695
    %v3100 = vpow.pop %v3099
    %v3101 = vmul.f32 %v3097, 1.442695
    %v3102 = vpow.pop %v3101
    %v3103 = vmul.f32 %v3098, 1.442695
    %v3104 = vpow.pop %v3103
    %v3105 = vadd.f32 %v3100, 1.0
    %v3106 = vadd.f32 %v3102, 1.0
    %v3107 = vadd.f32 %v3104, 1.0
    %v3108 = vrcp.pop %v3105
    %v3109 = vmul.f32 1.0, %v3108
    %v3110 = vrcp.pop %v3106
    %v3111 = vmul.f32 1.0, %v3110
    %v3112 = vrcp.pop %v3107
    %v3113 = vmul.f32 1.0, %v3112
    %v3114 = vtanh.pop %v3095
    %v3115 = vmul.f32 %v3111, %v2943
    %v3116 = vmul.f32 %v3109, %v3114
    %v3117 = vadd.f32 %v3115, %v3116
    %v3118 = vtanh.pop %v3117
    %v3119 = vmul.f32 %v3113, %v3118
    %v3120 = vld [vmem:[#allocation2 + $0x40] sm:$0xff]
    %v3121 = vld [vmem:[#allocation2 + $0x48] sm:$0xff]
    %v3122 = vld [vmem:[#allocation2 + $0x50] sm:$0xff]
    %v3123 = vld [vmem:[#allocation2 + $0x58] sm:$0xff]
    %3124 = vmatprep.subr.mxu0 %v2713
    %3125 = vmatpush1.msra.mxu0 %v2712
    %3126 = vmatprep.subr.mxu0 %v2717
    %3127 = vmatpush1.msra.mxu0 %v2716
    %3128 = vmatprep.subr.mxu0 %v2721
    %3129 = vmatpush1.msra.mxu0 %v2720
    %3130 = vmatprep.subr.mxu0 %v2725
    %3131 = vmatpush1.msra.mxu0 %v2724
    %3132 = vmatprep.subr.mxu0 %v2729
    %3133 = vmatpush1.msra.mxu0 %v2728
    %3134 = vmatprep.subr.mxu0 %v2733
    %3135 = vmatpush1.msra.mxu0 %v2732
    %3136 = vmatprep.subr.mxu0 %v2737
    %3137 = vmatpush1.msra.mxu0 %v2736
    %3138 = vmatprep.subr.mxu0 %v2741
    %3139 = vmatpush1.msra.mxu0 %v2740
    %3140 = vmatprep.subr.mxu0 %v2745
    %3141 = vmatpush1.msra.mxu0 %v2744
    %3142 = vmatprep.subr.mxu0 %v2749
    %3143 = vmatpush1.msra.mxu0 %v2748
    %3144 = vmatprep.subr.mxu0 %v2753
    %3145 = vmatpush1.msra.mxu0 %v2752
    %3146 = vmatprep.subr.mxu0 %v2757
    %3147 = vmatpush1.msra.mxu0 %v2756
    %3148 = vmatprep.subr.mxu0 %v2761
    %3149 = vmatpush1.msra.mxu0 %v2760
    %3150 = vmatprep.subr.mxu0 %v2765
    %3151 = vmatpush1.msra.mxu0 %v2764
    %3152 = vmatprep.subr.mxu0 %v2769
    %3153 = vmatpush1.msra.mxu0 %v2768
    %3154 = vmatprep.subr.mxu0 %v2773
    %3155 = vmatpush1.msra.mxu0 %v2772
    %3156 = vmatprep.subr.mxu0 0.0
    %3157 = vmatpush1.msra.mxu0 0.0
    %3158 = vmatprep.subr.mxu0 0.0
    %3159 = vmatpush1.msra.mxu0 0.0
    %3160 = vmatprep.subr.mxu0 0.0
    %3161 = vmatpush1.msra.mxu0 0.0
    %3162 = vmatprep.subr.mxu0 0.0
    %3163 = vmatpush1.msra.mxu0 0.0
    %3164 = vmatprep.subr.mxu0 0.0
    %3165 = vmatpush1.msra.mxu0 0.0
    %3166 = vmatprep.subr.mxu0 0.0
    %3167 = vmatpush1.msra.mxu0 0.0
    %3168 = vmatprep.subr.mxu0 0.0
    %3169 = vmatpush1.msra.mxu0 0.0
    %3170 = vmatprep.subr.mxu0 0.0
    %3171 = vmatpush1.msra.mxu0 0.0
    %3172 = vmatprep.subr.mxu0 0.0
    %3173 = vmatpush1.msra.mxu0 0.0
    %3174 = vmatprep.subr.mxu0 0.0
    %3175 = vmatpush1.msra.mxu0 0.0
    %3176 = vmatprep.subr.mxu0 0.0
    %3177 = vmatpush1.msra.mxu0 0.0
    %3178 = vmatprep.subr.mxu0 0.0
    %3179 = vmatpush1.msra.mxu0 0.0
    %3180 = vmatprep.subr.mxu0 0.0
    %3181 = vmatpush1.msra.mxu0 0.0
    %3182 = vmatprep.subr.mxu0 0.0
    %3183 = vmatpush1.msra.mxu0 0.0
    %3184 = vmatprep.subr.mxu0 0.0
    %3185 = vmatpush1.msra.mxu0 0.0
    %3186 = vmatprep.subr.mxu0 0.0
    %3187 = vmatpush1.msra.mxu0 0.0
    %3188 = vmatprep.mubr.f32.mxu0 0.0
    %3189 = vmatmul.mubr.f32.gmra.mrb[0].mxu0 %v3119
    %v3190 = vpop.f32.mrb[0].mxu0
    %v3191 = vadd.f32 0.0, %v3190
    %v3192 = vpop.f32.mrb[0].mxu0
    %v3193 = vadd.f32 0.0, %v3192
    %3194 = vdwg.mxu0
    %3195 = vmatprep.subr.mxu0 %v2715
    %3196 = vmatpush1.msra.mxu0 %v2714
    %3197 = vmatprep.subr.mxu0 %v2719
    %3198 = vmatpush1.msra.mxu0 %v2718
    %3199 = vmatprep.subr.mxu0 %v2723
    %3200 = vmatpush1.msra.mxu0 %v2722
    %3201 = vmatprep.subr.mxu0 %v2727
    %3202 = vmatpush1.msra.mxu0 %v2726
    %3203 = vmatprep.subr.mxu0 %v2731
    %3204 = vmatpush1.msra.mxu0 %v2730
    %3205 = vmatprep.subr.mxu0 %v2735
    %3206 = vmatpush1.msra.mxu0 %v2734
    %3207 = vmatprep.subr.mxu0 %v2739
    %3208 = vmatpush1.msra.mxu0 %v2738
    %3209 = vmatprep.subr.mxu0 %v2743
    %3210 = vmatpush1.msra.mxu0 %v2742
    %3211 = vmatprep.subr.mxu0 %v2747
    %3212 = vmatpush1.msra.mxu0 %v2746
    %3213 = vmatprep.subr.mxu0 %v2751
    %3214 = vmatpush1.msra.mxu0 %v2750
    %3215 = vmatprep.subr.mxu0 %v2755
    %3216 = vmatpush1.msra.mxu0 %v2754
    %3217 = vmatprep.subr.mxu0 %v2759
    %3218 = vmatpush1.msra.mxu0 %v2758
    %3219 = vmatprep.subr.mxu0 %v2763
    %3220 = vmatpush1.msra.mxu0 %v2762
    %3221 = vmatprep.subr.mxu0 %v2767
    %3222 = vmatpush1.msra.mxu0 %v2766
    %3223 = vmatprep.subr.mxu0 %v2771
    %3224 = vmatpush1.msra.mxu0 %v2770
    %3225 = vmatprep.subr.mxu0 %v2775
    %3226 = vmatpush1.msra.mxu0 %v2774
    %3227 = vmatprep.subr.mxu0 0.0
    %3228 = vmatpush1.msra.mxu0 0.0
    %3229 = vmatprep.subr.mxu0 0.0
    %3230 = vmatpush1.msra.mxu0 0.0
    %3231 = vmatprep.subr.mxu0 0.0
    %3232 = vmatpush1.msra.mxu0 0.0
    %3233 = vmatprep.subr.mxu0 0.0
    %3234 = vmatpush1.msra.mxu0 0.0
    %3235 = vmatprep.subr.mxu0 0.0
    %3236 = vmatpush1.msra.mxu0 0.0
    %3237 = vmatprep.subr.mxu0 0.0
    %3238 = vmatpush1.msra.mxu0 0.0
    %3239 = vmatprep.subr.mxu0 0.0
    %3240 = vmatpush1.msra.mxu0 0.0
    %3241 = vmatprep.subr.mxu0 0.0
    %3242 = vmatpush1.msra.mxu0 0.0
    %3243 = vmatprep.subr.mxu0 0.0
    %3244 = vmatpush1.msra.mxu0 0.0
    %3245 = vmatprep.subr.mxu0 0.0
    %3246 = vmatpush1.msra.mxu0 0.0
    %3247 = vmatprep.subr.mxu0 0.0
    %3248 = vmatpush1.msra.mxu0 0.0
    %3249 = vmatprep.subr.mxu0 0.0
    %3250 = vmatpush1.msra.mxu0 0.0
    %3251 = vmatprep.subr.mxu0 0.0
    %3252 = vmatpush1.msra.mxu0 0.0
    %3253 = vmatprep.subr.mxu0 0.0
    %3254 = vmatpush1.msra.mxu0 0.0
    %3255 = vmatprep.subr.mxu0 0.0
    %3256 = vmatpush1.msra.mxu0 0.0
    %3257 = vmatprep.subr.mxu0 0.0
    %3258 = vmatpush1.msra.mxu0 0.0
    %3259 = vmatprep.mubr.f32.mxu0 0.0
    %3260 = vmatmul.mubr.f32.gmra.mrb[0].mxu0 %v3119
    %v3261 = vpop.f32.mrb[0].mxu0
    %v3262 = vadd.f32 0.0, %v3261
    %v3263 = vpop.f32.mrb[0].mxu0
    %v3264 = vadd.f32 0.0, %v3263
    %3265 = vdwg.mxu0
    %v3266 = vadd.f32 %v3120, %v3191
    %v3267 = vadd.f32 %v3121, %v3193
    %v3268 = vadd.f32 %v3122, %v3262
    %v3269 = vadd.f32 %v3123, %v3264
    %v3270 = vxor.u32 %v3266, 2147483648
    %v3271 = vxor.u32 %v3267, 2147483648
    %v3272 = vxor.u32 %v3268, 2147483648
    %v3273 = vmul.f32 %v3270, 1.442695
    %v3274 = vpow.pop %v3273
    %v3275 = vmul.f32 %v3271, 1.442695
    %v3276 = vpow.pop %v3275
    %v3277 = vmul.f32 %v3272, 1.442695
    %v3278 = vpow.pop %v3277
    %v3279 = vadd.f32 %v3274, 1.0
    %v3280 = vadd.f32 %v3276, 1.0
    %v3281 = vadd.f32 %v3278, 1.0
    %v3282 = vrcp.pop %v3279
    %v3283 = vmul.f32 1.0, %v3282
    %v3284 = vrcp.pop %v3280
    %v3285 = vmul.f32 1.0, %v3284
    %v3286 = vrcp.pop %v3281
    %v3287 = vmul.f32 1.0, %v3286
    %v3288 = vtanh.pop %v3269
    %v3289 = vmul.f32 %v3285, %v3117
    %v3290 = vmul.f32 %v3283, %v3288
    %v3291 = vadd.f32 %v3289, %v3290
    %v3292 = vtanh.pop %v3291
    %v3293 = vmul.f32 %v3287, %v3292
    %v3294 = vld [vmem:[#allocation2 + $0x60] sm:$0xff]
    %v3295 = vld [vmem:[#allocation2 + $0x68] sm:$0xff]
    %v3296 = vld [vmem:[#allocation2 + $0x70] sm:$0xff]
    %v3297 = vld [vmem:[#allocation2 + $0x78] sm:$0xff]
    %3298 = vmatprep.subr.mxu0 %v2713
    %3299 = vmatpush1.msra.mxu0 %v2712
    %3300 = vmatprep.subr.mxu0 %v2717
    %3301 = vmatpush1.msra.mxu0 %v2716
    %3302 = vmatprep.subr.mxu0 %v2721
    %3303 = vmatpush1.msra.mxu0 %v2720
    %3304 = vmatprep.subr.mxu0 %v2725
    %3305 = vmatpush1.msra.mxu0 %v2724
    %3306 = vmatprep.subr.mxu0 %v2729
    %3307 = vmatpush1.msra.mxu0 %v2728
    %3308 = vmatprep.subr.mxu0 %v2733
    %3309 = vmatpush1.msra.mxu0 %v2732
    %3310 = vmatprep.subr.mxu0 %v2737
    %3311 = vmatpush1.msra.mxu0 %v2736
    %3312 = vmatprep.subr.mxu0 %v2741
    %3313 = vmatpush1.msra.mxu0 %v2740
    %3314 = vmatprep.subr.mxu0 %v2745
    %3315 = vmatpush1.msra.mxu0 %v2744
    %3316 = vmatprep.subr.mxu0 %v2749
    %3317 = vmatpush1.msra.mxu0 %v2748
    %3318 = vmatprep.subr.mxu0 %v2753
    %3319 = vmatpush1.msra.mxu0 %v2752
    %3320 = vmatprep.subr.mxu0 %v2757
    %3321 = vmatpush1.msra.mxu0 %v2756
    %3322 = vmatprep.subr.mxu0 %v2761
    %3323 = vmatpush1.msra.mxu0 %v2760
    %3324 = vmatprep.subr.mxu0 %v2765
    %3325 = vmatpush1.msra.mxu0 %v2764
    %3326 = vmatprep.subr.mxu0 %v2769
    %3327 = vmatpush1.msra.mxu0 %v2768
    %3328 = vmatprep.subr.mxu0 %v2773
    %3329 = vmatpush1.msra.mxu0 %v2772
    %3330 = vmatprep.subr.mxu0 0.0
    %3331 = vmatpush1.msra.mxu0 0.0
    %3332 = vmatprep.subr.mxu0 0.0
    %3333 = vmatpush1.msra.mxu0 0.0
    %3334 = vmatprep.subr.mxu0 0.0
    %3335 = vmatpush1.msra.mxu0 0.0
    %3336 = vmatprep.subr.mxu0 0.0
    %3337 = vmatpush1.msra.mxu0 0.0
    %3338 = vmatprep.subr.mxu0 0.0
    %3339 = vmatpush1.msra.mxu0 0.0
    %3340 = vmatprep.subr.mxu0 0.0
    %3341 = vmatpush1.msra.mxu0 0.0
    %3342 = vmatprep.subr.mxu0 0.0
    %3343 = vmatpush1.msra.mxu0 0.0
    %3344 = vmatprep.subr.mxu0 0.0
    %3345 = vmatpush1.msra.mxu0 0.0
    %3346 = vmatprep.subr.mxu0 0.0
    %3347 = vmatpush1.msra.mxu0 0.0
    %3348 = vmatprep.subr.mxu0 0.0
    %3349 = vmatpush1.msra.mxu0 0.0
    %3350 = vmatprep.subr.mxu0 0.0
    %3351 = vmatpush1.msra.mxu0 0.0
    %3352 = vmatprep.subr.mxu0 0.0
    %3353 = vmatpush1.msra.mxu0 0.0
    %3354 = vmatprep.subr.mxu0 0.0
    %3355 = vmatpush1.msra.mxu0 0.0
    %3356 = vmatprep.subr.mxu0 0.0
    %3357 = vmatpush1.msra.mxu0 0.0
    %3358 = vmatprep.subr.mxu0 0.0
    %3359 = vmatpush1.msra.mxu0 0.0
    %3360 = vmatprep.subr.mxu0 0.0
    %3361 = vmatpush1.msra.mxu0 0.0
    %3362 = vmatprep.mubr.f32.mxu0 0.0
    %3363 = vmatmul.mubr.f32.gmra.mrb[0].mxu0 %v3293
    %v3364 = vpop.f32.mrb[0].mxu0
    %v3365 = vadd.f32 0.0, %v3364
    %v3366 = vpop.f32.mrb[0].mxu0
    %v3367 = vadd.f32 0.0, %v3366
    %3368 = vdwg.mxu0
    %3369 = vmatprep.subr.mxu0 %v2715
    %3370 = vmatpush1.msra.mxu0 %v2714
    %3371 = vmatprep.subr.mxu0 %v2719
    %3372 = vmatpush1.msra.mxu0 %v2718
    %3373 = vmatprep.subr.mxu0 %v2723
    %3374 = vmatpush1.msra.mxu0 %v2722
    %3375 = vmatprep.subr.mxu0 %v2727
    %3376 = vmatpush1.msra.mxu0 %v2726
    %3377 = vmatprep.subr.mxu0 %v2731
    %3378 = vmatpush1.msra.mxu0 %v2730
    %3379 = vmatprep.subr.mxu0 %v2735
    %3380 = vmatpush1.msra.mxu0 %v2734
    %3381 = vmatprep.subr.mxu0 %v2739
    %3382 = vmatpush1.msra.mxu0 %v2738
    %3383 = vmatprep.subr.mxu0 %v2743
    %3384 = vmatpush1.msra.mxu0 %v2742
    %3385 = vmatprep.subr.mxu0 %v2747
    %3386 = vmatpush1.msra.mxu0 %v2746
    %3387 = vmatprep.subr.mxu0 %v2751
    %3388 = vmatpush1.msra.mxu0 %v2750
    %3389 = vmatprep.subr.mxu0 %v2755
    %3390 = vmatpush1.msra.mxu0 %v2754
    %3391 = vmatprep.subr.mxu0 %v2759
    %3392 = vmatpush1.msra.mxu0 %v2758
    %3393 = vmatprep.subr.mxu0 %v2763
    %3394 = vmatpush1.msra.mxu0 %v2762
    %3395 = vmatprep.subr.mxu0 %v2767
    %3396 = vmatpush1.msra.mxu0 %v2766
    %3397 = vmatprep.subr.mxu0 %v2771
    %3398 = vmatpush1.msra.mxu0 %v2770
    %3399 = vmatprep.subr.mxu0 %v2775
    %3400 = vmatpush1.msra.mxu0 %v2774
    %3401 = vmatprep.subr.mxu0 0.0
    %3402 = vmatpush1.msra.mxu0 0.0
    %3403 = vmatprep.subr.mxu0 0.0
    %3404 = vmatpush1.msra.mxu0 0.0
    %3405 = vmatprep.subr.mxu0 0.0
    %3406 = vmatpush1.msra.mxu0 0.0
    %3407 = vmatprep.subr.mxu0 0.0
    %3408 = vmatpush1.msra.mxu0 0.0
    %3409 = vmatprep.subr.mxu0 0.0
    %3410 = vmatpush1.msra.mxu0 0.0
    %3411 = vmatprep.subr.mxu0 0.0
    %3412 = vmatpush1.msra.mxu0 0.0
    %3413 = vmatprep.subr.mxu0 0.0
    %3414 = vmatpush1.msra.mxu0 0.0
    %3415 = vmatprep.subr.mxu0 0.0
    %3416 = vmatpush1.msra.mxu0 0.0
    %3417 = vmatprep.subr.mxu0 0.0
    %3418 = vmatpush1.msra.mxu0 0.0
    %3419 = vmatprep.subr.mxu0 0.0
    %3420 = vmatpush1.msra.mxu0 0.0
    %3421 = vmatprep.subr.mxu0 0.0
    %3422 = vmatpush1.msra.mxu0 0.0
    %3423 = vmatprep.subr.mxu0 0.0
    %3424 = vmatpush1.msra.mxu0 0.0
    %3425 = vmatprep.subr.mxu0 0.0
    %3426 = vmatpush1.msra.mxu0 0.0
    %3427 = vmatprep.subr.mxu0 0.0
    %3428 = vmatpush1.msra.mxu0 0.0
    %3429 = vmatprep.subr.mxu0 0.0
    %3430 = vmatpush1.msra.mxu0 0.0
    %3431 = vmatprep.subr.mxu0 0.0
    %3432 = vmatpush1.msra.mxu0 0.0
    %3433 = vmatprep.mubr.f32.mxu0 0.0
    %3434 = vmatmul.mubr.f32.gmra.mrb[0].mxu0 %v3293
    %v3435 = vpop.f32.mrb[0].mxu0
    %v3436 = vadd.f32 0.0, %v3435
    %v3437 = vpop.f32.mrb[0].mxu0
    %v3438 = vadd.f32 0.0, %v3437
    %3439 = vdwg.mxu0
    %v3440 = vadd.f32 %v3294, %v3365
    %v3441 = vadd.f32 %v3295, %v3367
    %v3442 = vadd.f32 %v3296, %v3436
    %v3443 = vadd.f32 %v3297, %v3438
    %v3444 = vxor.u32 %v3440, 2147483648
    %v3445 = vxor.u32 %v3441, 2147483648
    %v3446 = vxor.u32 %v3442, 2147483648
    %v3447 = vmul.f32 %v3444, 1.442695
    %v3448 = vpow.pop %v3447
    %v3449 = vmul.f32 %v3445, 1.442695
    %v3450 = vpow.pop %v3449
    %v3451 = vmul.f32 %v3446, 1.442695
    %v3452 = vpow.pop %v3451
    %v3453 = vadd.f32 %v3448, 1.0
    %v3454 = vadd.f32 %v3450, 1.0
    %v3455 = vadd.f32 %v3452, 1.0
    %v3456 = vrcp.pop %v3453
    %v3457 = vmul.f32 1.0, %v3456
    %v3458 = vrcp.pop %v3454
    %v3459 = vmul.f32 1.0, %v3458
    %v3460 = vrcp.pop %v3455
    %v3461 = vmul.f32 1.0, %v3460
    %v3462 = vtanh.pop %v3443
    %v3463 = vmul.f32 %v3459, %v3291
    %v3464 = vmul.f32 %v3457, %v3462
    %v3465 = vadd.f32 %v3463, %v3464
    %v3466 = vtanh.pop %v3465
    %v3467 = vmul.f32 %v3461, %v3466
    %v3468 = vld [vmem:[#allocation2 + $0x80] sm:$0xff]
    %v3469 = vld [vmem:[#allocation2 + $0x88] sm:$0xff]
    %v3470 = vld [vmem:[#allocation2 + $0x90] sm:$0xff]
    %v3471 = vld [vmem:[#allocation2 + $0x98] sm:$0xff]
    %3472 = vmatprep.subr.mxu0 %v2713
    %3473 = vmatpush1.msra.mxu0 %v2712
    %3474 = vmatprep.subr.mxu0 %v2717
    %3475 = vmatpush1.msra.mxu0 %v2716
    %3476 = vmatprep.subr.mxu0 %v2721
    %3477 = vmatpush1.msra.mxu0 %v2720
    %3478 = vmatprep.subr.mxu0 %v2725
    %3479 = vmatpush1.msra.mxu0 %v2724
    %3480 = vmatprep.subr.mxu0 %v2729
    %3481 = vmatpush1.msra.mxu0 %v2728
    %3482 = vmatprep.subr.mxu0 %v2733
    %3483 = vmatpush1.msra.mxu0 %v2732
    %3484 = vmatprep.subr.mxu0 %v2737
    %3485 = vmatpush1.msra.mxu0 %v2736
    %3486 = vmatprep.subr.mxu0 %v2741
    %3487 = vmatpush1.msra.mxu0 %v2740
    %3488 = vmatprep.subr.mxu0 %v2745
    %3489 = vmatpush1.msra.mxu0 %v2744
    %3490 = vmatprep.subr.mxu0 %v2749
    %3491 = vmatpush1.msra.mxu0 %v2748
    %3492 = vmatprep.subr.mxu0 %v2753
    %3493 = vmatpush1.msra.mxu0 %v2752
    %3494 = vmatprep.subr.mxu0 %v2757
    %3495 = vmatpush1.msra.mxu0 %v2756
    %3496 = vmatprep.subr.mxu0 %v2761
    %3497 = vmatpush1.msra.mxu0 %v2760
    %3498 = vmatprep.subr.mxu0 %v2765
    %3499 = vmatpush1.msra.mxu0 %v2764
    %3500 = vmatprep.subr.mxu0 %v2769
    %3501 = vmatpush1.msra.mxu0 %v2768
    %3502 = vmatprep.subr.mxu0 %v2773
    %3503 = vmatpush1.msra.mxu0 %v2772
    %3504 = vmatprep.subr.mxu0 0.0
    %3505 = vmatpush1.msra.mxu0 0.0
    %3506 = vmatprep.subr.mxu0 0.0
    %3507 = vmatpush1.msra.mxu0 0.0
    %3508 = vmatprep.subr.mxu0 0.0
    %3509 = vmatpush1.msra.mxu0 0.0
    %3510 = vmatprep.subr.mxu0 0.0
    %3511 = vmatpush1.msra.mxu0 0.0
    %3512 = vmatprep.subr.mxu0 0.0
    %3513 = vmatpush1.msra.mxu0 0.0
    %3514 = vmatprep.subr.mxu0 0.0
    %3515 = vmatpush1.msra.mxu0 0.0
    %3516 = vmatprep.subr.mxu0 0.0
    %3517 = vmatpush1.msra.mxu0 0.0
    %3518 = vmatprep.subr.mxu0 0.0
    %3519 = vmatpush1.msra.mxu0 0.0
    %3520 = vmatprep.subr.mxu0 0.0
    %3521 = vmatpush1.msra.mxu0 0.0
    %3522 = vmatprep.subr.mxu0 0.0
    %3523 = vmatpush1.msra.mxu0 0.0
    %3524 = vmatprep.subr.mxu0 0.0
    %3525 = vmatpush1.msra.mxu0 0.0
    %3526 = vmatprep.subr.mxu0 0.0
    %3527 = vmatpush1.msra.mxu0 0.0
    %3528 = vmatprep.subr.mxu0 0.0
    %3529 = vmatpush1.msra.mxu0 0.0
    %3530 = vmatprep.subr.mxu0 0.0
    %3531 = vmatpush1.msra.mxu0 0.0
    %3532 = vmatprep.subr.mxu0 0.0
    %3533 = vmatpush1.msra.mxu0 0.0
    %3534 = vmatprep.subr.mxu0 0.0
    %3535 = vmatpush1.msra.mxu0 0.0
    %3536 = vmatprep.mubr.f32.mxu0 0.0
    %3537 = vmatmul.mubr.f32.gmra.mrb[0].mxu0 %v3467
    %v3538 = vpop.f32.mrb[0].mxu0
    %v3539 = vadd.f32 0.0, %v3538
    %v3540 = vpop.f32.mrb[0].mxu0
    %v3541 = vadd.f32 0.0, %v3540
    %3542 = vdwg.mxu0
    %3543 = vmatprep.subr.mxu0 %v2715
    %3544 = vmatpush1.msra.mxu0 %v2714
    %3545 = vmatprep.subr.mxu0 %v2719
    %3546 = vmatpush1.msra.mxu0 %v2718
    %3547 = vmatprep.subr.mxu0 %v2723
    %3548 = vmatpush1.msra.mxu0 %v2722
    %3549 = vmatprep.subr.mxu0 %v2727
    %3550 = vmatpush1.msra.mxu0 %v2726
    %3551 = vmatprep.subr.mxu0 %v2731
    %3552 = vmatpush1.msra.mxu0 %v2730
    %3553 = vmatprep.subr.mxu0 %v2735
    %3554 = vmatpush1.msra.mxu0 %v2734
    %3555 = vmatprep.subr.mxu0 %v2739
    %3556 = vmatpush1.msra.mxu0 %v2738
    %3557 = vmatprep.subr.mxu0 %v2743
    %3558 = vmatpush1.msra.mxu0 %v2742
    %3559 = vmatprep.subr.mxu0 %v2747
    %3560 = vmatpush1.msra.mxu0 %v2746
    %3561 = vmatprep.subr.mxu0 %v2751
    %3562 = vmatpush1.msra.mxu0 %v2750
    %3563 = vmatprep.subr.mxu0 %v2755
    %3564 = vmatpush1.msra.mxu0 %v2754
    %3565 = vmatprep.subr.mxu0 %v2759
    %3566 = vmatpush1.msra.mxu0 %v2758
    %3567 = vmatprep.subr.mxu0 %v2763
    %3568 = vmatpush1.msra.mxu0 %v2762
    %3569 = vmatprep.subr.mxu0 %v2767
    %3570 = vmatpush1.msra.mxu0 %v2766
    %3571 = vmatprep.subr.mxu0 %v2771
    %3572 = vmatpush1.msra.mxu0 %v2770
    %3573 = vmatprep.subr.mxu0 %v2775
    %3574 = vmatpush1.msra.mxu0 %v2774
    %3575 = vmatprep.subr.mxu0 0.0
    %3576 = vmatpush1.msra.mxu0 0.0
    %3577 = vmatprep.subr.mxu0 0.0
    %3578 = vmatpush1.msra.mxu0 0.0
    %3579 = vmatprep.subr.mxu0 0.0
    %3580 = vmatpush1.msra.mxu0 0.0
    %3581 = vmatprep.subr.mxu0 0.0
    %3582 = vmatpush1.msra.mxu0 0.0
    %3583 = vmatprep.subr.mxu0 0.0
    %3584 = vmatpush1.msra.mxu0 0.0
    %3585 = vmatprep.subr.mxu0 0.0
    %3586 = vmatpush1.msra.mxu0 0.0
    %3587 = vmatprep.subr.mxu0 0.0
    %3588 = vmatpush1.msra.mxu0 0.0
    %3589 = vmatprep.subr.mxu0 0.0
    %3590 = vmatpush1.msra.mxu0 0.0
    %3591 = vmatprep.subr.mxu0 0.0
    %3592 = vmatpush1.msra.mxu0 0.0
    %3593 = vmatprep.subr.mxu0 0.0
    %3594 = vmatpush1.msra.mxu0 0.0
    %3595 = vmatprep.subr.mxu0 0.0
    %3596 = vmatpush1.msra.mxu0 0.0
    %3597 = vmatprep.subr.mxu0 0.0
    %3598 = vmatpush1.msra.mxu0 0.0
    %3599 = vmatprep.subr.mxu0 0.0
    %3600 = vmatpush1.msra.mxu0 0.0
    %3601 = vmatprep.subr.mxu0 0.0
    %3602 = vmatpush1.msra.mxu0 0.0
    %3603 = vmatprep.subr.mxu0 0.0
    %3604 = vmatpush1.msra.mxu0 0.0
    %3605 = vmatprep.subr.mxu0 0.0
    %3606 = vmatpush1.msra.mxu0 0.0
    %3607 = vmatprep.mubr.f32.mxu0 0.0
    %3608 = vmatmul.mubr.f32.gmra.mrb[0].mxu0 %v3467
    %v3609 = vpop.f32.mrb[0].mxu0
    %v3610 = vadd.f32 0.0, %v3609
    %v3611 = vpop.f32.mrb[0].mxu0
    %v3612 = vadd.f32 0.0, %v3611
    %3613 = vdwg.mxu0
    %v3614 = vadd.f32 %v3468, %v3539
    %v3615 = vadd.f32 %v3469, %v3541
    %v3616 = vadd.f32 %v3470, %v3610
    %v3617 = vadd.f32 %v3471, %v3612
    %v3618 = vxor.u32 %v3614, 2147483648
    %v3619 = vxor.u32 %v3615, 2147483648
    %v3620 = vxor.u32 %v3616, 2147483648
    %v3621 = vmul.f32 %v3618, 1.442695
    %v3622 = vpow.pop %v3621
    %v3623 = vmul.f32 %v3619, 1.442695
    %v3624 = vpow.pop %v3623
    %v3625 = vmul.f32 %v3620, 1.442695
    %v3626 = vpow.pop %v3625
    %v3627 = vadd.f32 %v3622, 1.0
    %v3628 = vadd.f32 %v3624, 1.0
    %v3629 = vadd.f32 %v3626, 1.0
    %v3630 = vrcp.pop %v3627
    %v3631 = vmul.f32 1.0, %v3630
    %v3632 = vrcp.pop %v3628
    %v3633 = vmul.f32 1.0, %v3632
    %v3634 = vrcp.pop %v3629
    %v3635 = vmul.f32 1.0, %v3634
    %v3636 = vtanh.pop %v3617
    %v3637 = vmul.f32 %v3633, %v3465
    %v3638 = vmul.f32 %v3631, %v3636
    %v3639 = vadd.f32 %v3637, %v3638
    %v3640 = vtanh.pop %v3639
    %v3641 = vmul.f32 %v3635, %v3640
    %v3642 = vld [vmem:[#allocation2 + $0xa0] sm:$0xff]
    %v3643 = vld [vmem:[#allocation2 + $0xa8] sm:$0xff]
    %v3644 = vld [vmem:[#allocation2 + $0xb0] sm:$0xff]
    %v3645 = vld [vmem:[#allocation2 + $0xb8] sm:$0xff]
    %3646 = vmatprep.subr.mxu0 %v2713
    %3647 = vmatpush1.msra.mxu0 %v2712
    %3648 = vmatprep.subr.mxu0 %v2717
    %3649 = vmatpush1.msra.mxu0 %v2716
    %3650 = vmatprep.subr.mxu0 %v2721
    %3651 = vmatpush1.msra.mxu0 %v2720
    %3652 = vmatprep.subr.mxu0 %v2725
    %3653 = vmatpush1.msra.mxu0 %v2724
    %3654 = vmatprep.subr.mxu0 %v2729
    %3655 = vmatpush1.msra.mxu0 %v2728
    %3656 = vmatprep.subr.mxu0 %v2733
    %3657 = vmatpush1.msra.mxu0 %v2732
    %3658 = vmatprep.subr.mxu0 %v2737
    %3659 = vmatpush1.msra.mxu0 %v2736
    %3660 = vmatprep.subr.mxu0 %v2741
    %3661 = vmatpush1.msra.mxu0 %v2740
    %3662 = vmatprep.subr.mxu0 %v2745
    %3663 = vmatpush1.msra.mxu0 %v2744
    %3664 = vmatprep.subr.mxu0 %v2749
    %3665 = vmatpush1.msra.mxu0 %v2748
    %3666 = vmatprep.subr.mxu0 %v2753
    %3667 = vmatpush1.msra.mxu0 %v2752
    %3668 = vmatprep.subr.mxu0 %v2757
    %3669 = vmatpush1.msra.mxu0 %v2756
    %3670 = vmatprep.subr.mxu0 %v2761
    %3671 = vmatpush1.msra.mxu0 %v2760
    %3672 = vmatprep.subr.mxu0 %v2765
    %3673 = vmatpush1.msra.mxu0 %v2764
    %3674 = vmatprep.subr.mxu0 %v2769
    %3675 = vmatpush1.msra.mxu0 %v2768
    %3676 = vmatprep.subr.mxu0 %v2773
    %3677 = vmatpush1.msra.mxu0 %v2772
    %3678 = vmatprep.subr.mxu0 0.0
    %3679 = vmatpush1.msra.mxu0 0.0
    %3680 = vmatprep.subr.mxu0 0.0
    %3681 = vmatpush1.msra.mxu0 0.0
    %3682 = vmatprep.subr.mxu0 0.0
    %3683 = vmatpush1.msra.mxu0 0.0
    %3684 = vmatprep.subr.mxu0 0.0
    %3685 = vmatpush1.msra.mxu0 0.0
    %3686 = vmatprep.subr.mxu0 0.0
    %3687 = vmatpush1.msra.mxu0 0.0
    %3688 = vmatprep.subr.mxu0 0.0
    %3689 = vmatpush1.msra.mxu0 0.0
    %3690 = vmatprep.subr.mxu0 0.0
    %3691 = vmatpush1.msra.mxu0 0.0
    %3692 = vmatprep.subr.mxu0 0.0
    %3693 = vmatpush1.msra.mxu0 0.0
    %3694 = vmatprep.subr.mxu0 0.0
    %3695 = vmatpush1.msra.mxu0 0.0
    %3696 = vmatprep.subr.mxu0 0.0
    %3697 = vmatpush1.msra.mxu0 0.0
    %3698 = vmatprep.subr.mxu0 0.0
    %3699 = vmatpush1.msra.mxu0 0.0
    %3700 = vmatprep.subr.mxu0 0.0
    %3701 = vmatpush1.msra.mxu0 0.0
    %3702 = vmatprep.subr.mxu0 0.0
    %3703 = vmatpush1.msra.mxu0 0.0
    %3704 = vmatprep.subr.mxu0 0.0
    %3705 = vmatpush1.msra.mxu0 0.0
    %3706 = vmatprep.subr.mxu0 0.0
    %3707 = vmatpush1.msra.mxu0 0.0
    %3708 = vmatprep.subr.mxu0 0.0
    %3709 = vmatpush1.msra.mxu0 0.0
    %3710 = vmatprep.mubr.f32.mxu0 0.0
    %3711 = vmatmul.mubr.f32.gmra.mrb[0].mxu0 %v3641
    %v3712 = vpop.f32.mrb[0].mxu0
    %v3713 = vadd.f32 0.0, %v3712
    %v3714 = vpop.f32.mrb[0].mxu0
    %v3715 = vadd.f32 0.0, %v3714
    %3716 = vdwg.mxu0
    %3717 = vmatprep.subr.mxu0 %v2715
    %3718 = vmatpush1.msra.mxu0 %v2714
    %3719 = vmatprep.subr.mxu0 %v2719
    %3720 = vmatpush1.msra.mxu0 %v2718
    %3721 = vmatprep.subr.mxu0 %v2723
    %3722 = vmatpush1.msra.mxu0 %v2722
    %3723 = vmatprep.subr.mxu0 %v2727
    %3724 = vmatpush1.msra.mxu0 %v2726
    %3725 = vmatprep.subr.mxu0 %v2731
    %3726 = vmatpush1.msra.mxu0 %v2730
    %3727 = vmatprep.subr.mxu0 %v2735
    %3728 = vmatpush1.msra.mxu0 %v2734
    %3729 = vmatprep.subr.mxu0 %v2739
    %3730 = vmatpush1.msra.mxu0 %v2738
    %3731 = vmatprep.subr.mxu0 %v2743
    %3732 = vmatpush1.msra.mxu0 %v2742
    %3733 = vmatprep.subr.mxu0 %v2747
    %3734 = vmatpush1.msra.mxu0 %v2746
    %3735 = vmatprep.subr.mxu0 %v2751
    %3736 = vmatpush1.msra.mxu0 %v2750
    %3737 = vmatprep.subr.mxu0 %v2755
    %3738 = vmatpush1.msra.mxu0 %v2754
    %3739 = vmatprep.subr.mxu0 %v2759
    %3740 = vmatpush1.msra.mxu0 %v2758
    %3741 = vmatprep.subr.mxu0 %v2763
    %3742 = vmatpush1.msra.mxu0 %v2762
    %3743 = vmatprep.subr.mxu0 %v2767
    %3744 = vmatpush1.msra.mxu0 %v2766
    %3745 = vmatprep.subr.mxu0 %v2771
    %3746 = vmatpush1.msra.mxu0 %v2770
    %3747 = vmatprep.subr.mxu0 %v2775
    %3748 = vmatpush1.msra.mxu0 %v2774
    %3749 = vmatprep.subr.mxu0 0.0
    %3750 = vmatpush1.msra.mxu0 0.0
    %3751 = vmatprep.subr.mxu0 0.0
    %3752 = vmatpush1.msra.mxu0 0.0
    %3753 = vmatprep.subr.mxu0 0.0
    %3754 = vmatpush1.msra.mxu0 0.0
    %3755 = vmatprep.subr.mxu0 0.0
    %3756 = vmatpush1.msra.mxu0 0.0
    %3757 = vmatprep.subr.mxu0 0.0
    %3758 = vmatpush1.msra.mxu0 0.0
    %3759 = vmatprep.subr.mxu0 0.0
    %3760 = vmatpush1.msra.mxu0 0.0
    %3761 = vmatprep.subr.mxu0 0.0
    %3762 = vmatpush1.msra.mxu0 0.0
    %3763 = vmatprep.subr.mxu0 0.0
    %3764 = vmatpush1.msra.mxu0 0.0
    %3765 = vmatprep.subr.mxu0 0.0
    %3766 = vmatpush1.msra.mxu0 0.0
    %3767 = vmatprep.subr.mxu0 0.0
    %3768 = vmatpush1.msra.mxu0 0.0
    %3769 = vmatprep.subr.mxu0 0.0
    %3770 = vmatpush1.msra.mxu0 0.0
    %3771 = vmatprep.subr.mxu0 0.0
    %3772 = vmatpush1.msra.mxu0 0.0
    %3773 = vmatprep.subr.mxu0 0.0
    %3774 = vmatpush1.msra.mxu0 0.0
    %3775 = vmatprep.subr.mxu0 0.0
    %3776 = vmatpush1.msra.mxu0 0.0
    %3777 = vmatprep.subr.mxu0 0.0
    %3778 = vmatpush1.msra.mxu0 0.0
    %3779 = vmatprep.subr.mxu0 0.0
    %3780 = vmatpush1.msra.mxu0 0.0
    %3781 = vmatprep.mubr.f32.mxu0 0.0
    %3782 = vmatmul.mubr.f32.gmra.mrb[0].mxu0 %v3641
    %v3783 = vpop.f32.mrb[0].mxu0
    %v3784 = vadd.f32 0.0, %v3783
    %v3785 = vpop.f32.mrb[0].mxu0
    %v3786 = vadd.f32 0.0, %v3785
    %3787 = vdwg.mxu0
    %v3788 = vadd.f32 %v3642, %v3713
    %v3789 = vadd.f32 %v3643, %v3715
    %v3790 = vadd.f32 %v3644, %v3784
    %v3791 = vadd.f32 %v3645, %v3786
    %v3792 = vxor.u32 %v3788, 2147483648
    %v3793 = vxor.u32 %v3789, 2147483648
    %v3794 = vxor.u32 %v3790, 2147483648
    %v3795 = vmul.f32 %v3792, 1.442695
    %v3796 = vpow.pop %v3795
    %v3797 = vmul.f32 %v3793, 1.442695
    %v3798 = vpow.pop %v3797
    %v3799 = vmul.f32 %v3794, 1.442695
    %v3800 = vpow.pop %v3799
    %v3801 = vadd.f32 %v3796, 1.0
    %v3802 = vadd.f32 %v3798, 1.0
    %v3803 = vadd.f32 %v3800, 1.0
    %v3804 = vrcp.pop %v3801
    %v3805 = vmul.f32 1.0, %v3804
    %v3806 = vrcp.pop %v3802
    %v3807 = vmul.f32 1.0, %v3806
    %v3808 = vrcp.pop %v3803
    %v3809 = vmul.f32 1.0, %v3808
    %v3810 = vtanh.pop %v3791
    %v3811 = vmul.f32 %v3807, %v3639
    %v3812 = vmul.f32 %v3805, %v3810
    %v3813 = vadd.f32 %v3811, %v3812
    %v3814 = vtanh.pop %v3813
    %v3815 = vmul.f32 %v3809, %v3814
    %v3816 = vld [vmem:[#allocation2 + $0xc0] sm:$0xff]
    %v3817 = vld [vmem:[#allocation2 + $0xc8] sm:$0xff]
    %v3818 = vld [vmem:[#allocation2 + $0xd0] sm:$0xff]
    %v3819 = vld [vmem:[#allocation2 + $0xd8] sm:$0xff]
    %3820 = vmatprep.subr.mxu0 %v2713
    %3821 = vmatpush1.msra.mxu0 %v2712
    %3822 = vmatprep.subr.mxu0 %v2717
    %3823 = vmatpush1.msra.mxu0 %v2716
    %3824 = vmatprep.subr.mxu0 %v2721
    %3825 = vmatpush1.msra.mxu0 %v2720
    %3826 = vmatprep.subr.mxu0 %v2725
    %3827 = vmatpush1.msra.mxu0 %v2724
    %3828 = vmatprep.subr.mxu0 %v2729
    %3829 = vmatpush1.msra.mxu0 %v2728
    %3830 = vmatprep.subr.mxu0 %v2733
    %3831 = vmatpush1.msra.mxu0 %v2732
    %3832 = vmatprep.subr.mxu0 %v2737
    %3833 = vmatpush1.msra.mxu0 %v2736
    %3834 = vmatprep.subr.mxu0 %v2741
    %3835 = vmatpush1.msra.mxu0 %v2740
    %3836 = vmatprep.subr.mxu0 %v2745
    %3837 = vmatpush1.msra.mxu0 %v2744
    %3838 = vmatprep.subr.mxu0 %v2749
    %3839 = vmatpush1.msra.mxu0 %v2748
    %3840 = vmatprep.subr.mxu0 %v2753
    %3841 = vmatpush1.msra.mxu0 %v2752
    %3842 = vmatprep.subr.mxu0 %v2757
    %3843 = vmatpush1.msra.mxu0 %v2756
    %3844 = vmatprep.subr.mxu0 %v2761
    %3845 = vmatpush1.msra.mxu0 %v2760
    %3846 = vmatprep.subr.mxu0 %v2765
    %3847 = vmatpush1.msra.mxu0 %v2764
    %3848 = vmatprep.subr.mxu0 %v2769
    %3849 = vmatpush1.msra.mxu0 %v2768
    %3850 = vmatprep.subr.mxu0 %v2773
    %3851 = vmatpush1.msra.mxu0 %v2772
    %3852 = vmatprep.subr.mxu0 0.0
    %3853 = vmatpush1.msra.mxu0 0.0
    %3854 = vmatprep.subr.mxu0 0.0
    %3855 = vmatpush1.msra.mxu0 0.0
    %3856 = vmatprep.subr.mxu0 0.0
    %3857 = vmatpush1.msra.mxu0 0.0
    %3858 = vmatprep.subr.mxu0 0.0
    %3859 = vmatpush1.msra.mxu0 0.0
    %3860 = vmatprep.subr.mxu0 0.0
    %3861 = vmatpush1.msra.mxu0 0.0
    %3862 = vmatprep.subr.mxu0 0.0
    %3863 = vmatpush1.msra.mxu0 0.0
    %3864 = vmatprep.subr.mxu0 0.0
    %3865 = vmatpush1.msra.mxu0 0.0
    %3866 = vmatprep.subr.mxu0 0.0
    %3867 = vmatpush1.msra.mxu0 0.0
    %3868 = vmatprep.subr.mxu0 0.0
    %3869 = vmatpush1.msra.mxu0 0.0
    %3870 = vmatprep.subr.mxu0 0.0
    %3871 = vmatpush1.msra.mxu0 0.0
    %3872 = vmatprep.subr.mxu0 0.0
    %3873 = vmatpush1.msra.mxu0 0.0
    %3874 = vmatprep.subr.mxu0 0.0
    %3875 = vmatpush1.msra.mxu0 0.0
    %3876 = vmatprep.subr.mxu0 0.0
    %3877 = vmatpush1.msra.mxu0 0.0
    %3878 = vmatprep.subr.mxu0 0.0
    %3879 = vmatpush1.msra.mxu0 0.0
    %3880 = vmatprep.subr.mxu0 0.0
    %3881 = vmatpush1.msra.mxu0 0.0
    %3882 = vmatprep.subr.mxu0 0.0
    %3883 = vmatpush1.msra.mxu0 0.0
    %3884 = vmatprep.mubr.f32.mxu0 0.0
    %3885 = vmatmul.mubr.f32.gmra.mrb[0].mxu0 %v3815
    %v3886 = vpop.f32.mrb[0].mxu0
    %v3887 = vadd.f32 0.0, %v3886
    %v3888 = vpop.f32.mrb[0].mxu0
    %v3889 = vadd.f32 0.0, %v3888
    %3890 = vdwg.mxu0
    %3891 = vmatprep.subr.mxu0 %v2715
    %3892 = vmatpush1.msra.mxu0 %v2714
    %3893 = vmatprep.subr.mxu0 %v2719
    %3894 = vmatpush1.msra.mxu0 %v2718
    %3895 = vmatprep.subr.mxu0 %v2723
    %3896 = vmatpush1.msra.mxu0 %v2722
    %3897 = vmatprep.subr.mxu0 %v2727
    %3898 = vmatpush1.msra.mxu0 %v2726
    %3899 = vmatprep.subr.mxu0 %v2731
    %3900 = vmatpush1.msra.mxu0 %v2730
    %3901 = vmatprep.subr.mxu0 %v2735
    %3902 = vmatpush1.msra.mxu0 %v2734
    %3903 = vmatprep.subr.mxu0 %v2739
    %3904 = vmatpush1.msra.mxu0 %v2738
    %3905 = vmatprep.subr.mxu0 %v2743
    %3906 = vmatpush1.msra.mxu0 %v2742
    %3907 = vmatprep.subr.mxu0 %v2747
    %3908 = vmatpush1.msra.mxu0 %v2746
    %3909 = vmatprep.subr.mxu0 %v2751
    %3910 = vmatpush1.msra.mxu0 %v2750
    %3911 = vmatprep.subr.mxu0 %v2755
    %3912 = vmatpush1.msra.mxu0 %v2754
    %3913 = vmatprep.subr.mxu0 %v2759
    %3914 = vmatpush1.msra.mxu0 %v2758
    %3915 = vmatprep.subr.mxu0 %v2763
    %3916 = vmatpush1.msra.mxu0 %v2762
    %3917 = vmatprep.subr.mxu0 %v2767
    %3918 = vmatpush1.msra.mxu0 %v2766
    %3919 = vmatprep.subr.mxu0 %v2771
    %3920 = vmatpush1.msra.mxu0 %v2770
    %3921 = vmatprep.subr.mxu0 %v2775
    %3922 = vmatpush1.msra.mxu0 %v2774
    %3923 = vmatprep.subr.mxu0 0.0
    %3924 = vmatpush1.msra.mxu0 0.0
    %3925 = vmatprep.subr.mxu0 0.0
    %3926 = vmatpush1.msra.mxu0 0.0
    %3927 = vmatprep.subr.mxu0 0.0
    %3928 = vmatpush1.msra.mxu0 0.0
    %3929 = vmatprep.subr.mxu0 0.0
    %3930 = vmatpush1.msra.mxu0 0.0
    %3931 = vmatprep.subr.mxu0 0.0
    %3932 = vmatpush1.msra.mxu0 0.0
    %3933 = vmatprep.subr.mxu0 0.0
    %3934 = vmatpush1.msra.mxu0 0.0
    %3935 = vmatprep.subr.mxu0 0.0
    %3936 = vmatpush1.msra.mxu0 0.0
    %3937 = vmatprep.subr.mxu0 0.0
    %3938 = vmatpush1.msra.mxu0 0.0
    %3939 = vmatprep.subr.mxu0 0.0
    %3940 = vmatpush1.msra.mxu0 0.0
    %3941 = vmatprep.subr.mxu0 0.0
    %3942 = vmatpush1.msra.mxu0 0.0
    %3943 = vmatprep.subr.mxu0 0.0
    %3944 = vmatpush1.msra.mxu0 0.0
    %3945 = vmatprep.subr.mxu0 0.0
    %3946 = vmatpush1.msra.mxu0 0.0
    %3947 = vmatprep.subr.mxu0 0.0
    %3948 = vmatpush1.msra.mxu0 0.0
    %3949 = vmatprep.subr.mxu0 0.0
    %3950 = vmatpush1.msra.mxu0 0.0
    %3951 = vmatprep.subr.mxu0 0.0
    %3952 = vmatpush1.msra.mxu0 0.0
    %3953 = vmatprep.subr.mxu0 0.0
    %3954 = vmatpush1.msra.mxu0 0.0
    %3955 = vmatprep.mubr.f32.mxu0 0.0
    %3956 = vmatmul.mubr.f32.gmra.mrb[0].mxu0 %v3815
    %v3957 = vpop.f32.mrb[0].mxu0
    %v3958 = vadd.f32 0.0, %v3957
    %v3959 = vpop.f32.mrb[0].mxu0
    %v3960 = vadd.f32 0.0, %v3959
    %3961 = vdwg.mxu0
    %v3962 = vadd.f32 %v3816, %v3887
    %v3963 = vadd.f32 %v3817, %v3889
    %v3964 = vadd.f32 %v3818, %v3958
    %v3965 = vadd.f32 %v3819, %v3960
    %v3966 = vxor.u32 %v3962, 2147483648
    %v3967 = vxor.u32 %v3963, 2147483648
    %v3968 = vxor.u32 %v3964, 2147483648
    %v3969 = vmul.f32 %v3966, 1.442695
    %v3970 = vpow.pop %v3969
    %v3971 = vmul.f32 %v3967, 1.442695
    %v3972 = vpow.pop %v3971
    %v3973 = vmul.f32 %v3968, 1.442695
    %v3974 = vpow.pop %v3973
    %v3975 = vadd.f32 %v3970, 1.0
    %v3976 = vadd.f32 %v3972, 1.0
    %v3977 = vadd.f32 %v3974, 1.0
    %v3978 = vrcp.pop %v3975
    %v3979 = vmul.f32 1.0, %v3978
    %v3980 = vrcp.pop %v3976
    %v3981 = vmul.f32 1.0, %v3980
    %v3982 = vrcp.pop %v3977
    %v3983 = vmul.f32 1.0, %v3982
    %v3984 = vtanh.pop %v3965
    %v3985 = vmul.f32 %v3981, %v3813
    %v3986 = vmul.f32 %v3979, %v3984
    %v3987 = vadd.f32 %v3985, %v3986
    %v3988 = vtanh.pop %v3987
    %v3989 = vmul.f32 %v3983, %v3988
    %v3990 = vld [vmem:[#allocation2 + $0xe0] sm:$0xff]
    %v3991 = vld [vmem:[#allocation2 + $0xe8] sm:$0xff]
    %v3992 = vld [vmem:[#allocation2 + $0xf0] sm:$0xff]
    %v3993 = vld [vmem:[#allocation2 + $0xf8] sm:$0xff]
    %3994 = vmatprep.subr.mxu0 %v2713
    %3995 = vmatpush1.msra.mxu0 %v2712
    %3996 = vmatprep.subr.mxu0 %v2717
    %3997 = vmatpush1.msra.mxu0 %v2716
    %3998 = vmatprep.subr.mxu0 %v2721
    %3999 = vmatpush1.msra.mxu0 %v2720
    %4000 = vmatprep.subr.mxu0 %v2725
    %4001 = vmatpush1.msra.mxu0 %v2724
    %4002 = vmatprep.subr.mxu0 %v2729
    %4003 = vmatpush1.msra.mxu0 %v2728
    %4004 = vmatprep.subr.mxu0 %v2733
    %4005 = vmatpush1.msra.mxu0 %v2732
    %4006 = vmatprep.subr.mxu0 %v2737
    %4007 = vmatpush1.msra.mxu0 %v2736
    %4008 = vmatprep.subr.mxu0 %v2741
    %4009 = vmatpush1.msra.mxu0 %v2740
    %4010 = vmatprep.subr.mxu0 %v2745
    %4011 = vmatpush1.msra.mxu0 %v2744
    %4012 = vmatprep.subr.mxu0 %v2749
    %4013 = vmatpush1.msra.mxu0 %v2748
    %4014 = vmatprep.subr.mxu0 %v2753
    %4015 = vmatpush1.msra.mxu0 %v2752
    %4016 = vmatprep.subr.mxu0 %v2757
    %4017 = vmatpush1.msra.mxu0 %v2756
    %4018 = vmatprep.subr.mxu0 %v2761
    %4019 = vmatpush1.msra.mxu0 %v2760
    %4020 = vmatprep.subr.mxu0 %v2765
    %4021 = vmatpush1.msra.mxu0 %v2764
    %4022 = vmatprep.subr.mxu0 %v2769
    %4023 = vmatpush1.msra.mxu0 %v2768
    %4024 = vmatprep.subr.mxu0 %v2773
    %4025 = vmatpush1.msra.mxu0 %v2772
    %4026 = vmatprep.subr.mxu0 0.0
    %4027 = vmatpush1.msra.mxu0 0.0
    %4028 = vmatprep.subr.mxu0 0.0
    %4029 = vmatpush1.msra.mxu0 0.0
    %4030 = vmatprep.subr.mxu0 0.0
    %4031 = vmatpush1.msra.mxu0 0.0
    %4032 = vmatprep.subr.mxu0 0.0
    %4033 = vmatpush1.msra.mxu0 0.0
    %4034 = vmatprep.subr.mxu0 0.0
    %4035 = vmatpush1.msra.mxu0 0.0
    %4036 = vmatprep.subr.mxu0 0.0
    %4037 = vmatpush1.msra.mxu0 0.0
    %4038 = vmatprep.subr.mxu0 0.0
    %4039 = vmatpush1.msra.mxu0 0.0
    %4040 = vmatprep.subr.mxu0 0.0
    %4041 = vmatpush1.msra.mxu0 0.0
    %4042 = vmatprep.subr.mxu0 0.0
    %4043 = vmatpush1.msra.mxu0 0.0
    %4044 = vmatprep.subr.mxu0 0.0
    %4045 = vmatpush1.msra.mxu0 0.0
    %4046 = vmatprep.subr.mxu0 0.0
    %4047 = vmatpush1.msra.mxu0 0.0
    %4048 = vmatprep.subr.mxu0 0.0
    %4049 = vmatpush1.msra.mxu0 0.0
    %4050 = vmatprep.subr.mxu0 0.0
    %4051 = vmatpush1.msra.mxu0 0.0
    %4052 = vmatprep.subr.mxu0 0.0
    %4053 = vmatpush1.msra.mxu0 0.0
    %4054 = vmatprep.subr.mxu0 0.0
    %4055 = vmatpush1.msra.mxu0 0.0
    %4056 = vmatprep.subr.mxu0 0.0
    %4057 = vmatpush1.msra.mxu0 0.0
    %4058 = vmatprep.mubr.f32.mxu0 0.0
    %4059 = vmatmul.mubr.f32.gmra.mrb[0].mxu0 %v3989
    %v4060 = vpop.f32.mrb[0].mxu0
    %v4061 = vadd.f32 0.0, %v4060
    %v4062 = vpop.f32.mrb[0].mxu0
    %v4063 = vadd.f32 0.0, %v4062
    %4064 = vdwg.mxu0
    %4065 = vmatprep.subr.mxu0 %v2715
    %4066 = vmatpush1.msra.mxu0 %v2714
    %4067 = vmatprep.subr.mxu0 %v2719
    %4068 = vmatpush1.msra.mxu0 %v2718
    %4069 = vmatprep.subr.mxu0 %v2723
    %4070 = vmatpush1.msra.mxu0 %v2722
    %4071 = vmatprep.subr.mxu0 %v2727
    %4072 = vmatpush1.msra.mxu0 %v2726
    %4073 = vmatprep.subr.mxu0 %v2731
    %4074 = vmatpush1.msra.mxu0 %v2730
    %4075 = vmatprep.subr.mxu0 %v2735
    %4076 = vmatpush1.msra.mxu0 %v2734
    %4077 = vmatprep.subr.mxu0 %v2739
    %4078 = vmatpush1.msra.mxu0 %v2738
    %4079 = vmatprep.subr.mxu0 %v2743
    %4080 = vmatpush1.msra.mxu0 %v2742
    %4081 = vmatprep.subr.mxu0 %v2747
    %4082 = vmatpush1.msra.mxu0 %v2746
    %4083 = vmatprep.subr.mxu0 %v2751
    %4084 = vmatpush1.msra.mxu0 %v2750
    %4085 = vmatprep.subr.mxu0 %v2755
    %4086 = vmatpush1.msra.mxu0 %v2754
    %4087 = vmatprep.subr.mxu0 %v2759
    %4088 = vmatpush1.msra.mxu0 %v2758
    %4089 = vmatprep.subr.mxu0 %v2763
    %4090 = vmatpush1.msra.mxu0 %v2762
    %4091 = vmatprep.subr.mxu0 %v2767
    %4092 = vmatpush1.msra.mxu0 %v2766
    %4093 = vmatprep.subr.mxu0 %v2771
    %4094 = vmatpush1.msra.mxu0 %v2770
    %4095 = vmatprep.subr.mxu0 %v2775
    %4096 = vmatpush1.msra.mxu0 %v2774
    %4097 = vmatprep.subr.mxu0 0.0
    %4098 = vmatpush1.msra.mxu0 0.0
    %4099 = vmatprep.subr.mxu0 0.0
    %4100 = vmatpush1.msra.mxu0 0.0
    %4101 = vmatprep.subr.mxu0 0.0
    %4102 = vmatpush1.msra.mxu0 0.0
    %4103 = vmatprep.subr.mxu0 0.0
    %4104 = vmatpush1.msra.mxu0 0.0
    %4105 = vmatprep.subr.mxu0 0.0
    %4106 = vmatpush1.msra.mxu0 0.0
    %4107 = vmatprep.subr.mxu0 0.0
    %4108 = vmatpush1.msra.mxu0 0.0
    %4109 = vmatprep.subr.mxu0 0.0
    %4110 = vmatpush1.msra.mxu0 0.0
    %4111 = vmatprep.subr.mxu0 0.0
    %4112 = vmatpush1.msra.mxu0 0.0
    %4113 = vmatprep.subr.mxu0 0.0
    %4114 = vmatpush1.msra.mxu0 0.0
    %4115 = vmatprep.subr.mxu0 0.0
    %4116 = vmatpush1.msra.mxu0 0.0
    %4117 = vmatprep.subr.mxu0 0.0
    %4118 = vmatpush1.msra.mxu0 0.0
    %4119 = vmatprep.subr.mxu0 0.0
    %4120 = vmatpush1.msra.mxu0 0.0
    %4121 = vmatprep.subr.mxu0 0.0
    %4122 = vmatpush1.msra.mxu0 0.0
    %4123 = vmatprep.subr.mxu0 0.0
    %4124 = vmatpush1.msra.mxu0 0.0
    %4125 = vmatprep.subr.mxu0 0.0
    %4126 = vmatpush1.msra.mxu0 0.0
    %4127 = vmatprep.subr.mxu0 0.0
    %4128 = vmatpush1.msra.mxu0 0.0
    %4129 = vmatprep.mubr.f32.mxu0 0.0
    %4130 = vmatmul.mubr.f32.gmra.mrb[0].mxu0 %v3989
    %v4131 = vpop.f32.mrb[0].mxu0
    %v4132 = vadd.f32 0.0, %v4131
    %v4133 = vpop.f32.mrb[0].mxu0
    %v4134 = vadd.f32 0.0, %v4133
    %4135 = vdwg.mxu0
    %v4136 = vadd.f32 %v3990, %v4061
    %v4137 = vadd.f32 %v3991, %v4063
    %v4138 = vadd.f32 %v3992, %v4132
    %v4139 = vadd.f32 %v3993, %v4134
    %v4140 = vxor.u32 %v4136, 2147483648
    %v4141 = vxor.u32 %v4137, 2147483648
    %v4142 = vxor.u32 %v4138, 2147483648
    %v4143 = vmul.f32 %v4140, 1.442695
    %v4144 = vpow.pop %v4143
    %v4145 = vmul.f32 %v4141, 1.442695
    %v4146 = vpow.pop %v4145
    %v4147 = vmul.f32 %v4142, 1.442695
    %v4148 = vpow.pop %v4147
    %v4149 = vadd.f32 %v4144, 1.0
    %v4150 = vadd.f32 %v4146, 1.0
    %v4151 = vadd.f32 %v4148, 1.0
    %v4152 = vrcp.pop %v4149
    %v4153 = vmul.f32 1.0, %v4152
    %v4154 = vrcp.pop %v4150
    %v4155 = vmul.f32 1.0, %v4154
    %v4156 = vrcp.pop %v4151
    %v4157 = vmul.f32 1.0, %v4156
    %v4158 = vtanh.pop %v4139
    %v4159 = vmul.f32 %v4155, %v3987
    %v4160 = vmul.f32 %v4153, %v4158
    %v4161 = vadd.f32 %v4159, %v4160
    %v4162 = vtanh.pop %v4161
    %v4163 = vmul.f32 %v4157, %v4162
    %s4164 = scalar_lea.vmem [#allocation16], 8
    %4165 = vst [vmem:[%s4164] sm:$0xff] %v4163
    %s4166 = scalar_lea.vmem [#allocation17], 8
    %4167 = vst [vmem:[%s4166] sm:$0xff] %v4161
    // Predicated region
    $region58: #{tpu_custom_call.1} parent=1 // pred_check
      _
    $region59: #{tpu_custom_call.1} parent=1 // pred_check_branch
      %4169 = sbr.rel (0) target = $region61
    $region60: #{tpu_custom_call.1} parent=1 // pred_region
      %s4171 = ssub.s32 256, 256
      %4172 = vsyncadd [#allocation6], %s4171
      %s4173 = sshll.u32 [#allocation16], 4
      %s4174 = int_to_ptr.vmem [resolvable:$true] %s4173
      %4179 = dma.vmem_to_hbm [thread:$0]  %s4174, 256, %s7, [#allocation6], 128, 128, 8
    $region61: #{tpu_custom_call.1} parent=1 // pred_fallthru
      _
    // Predicated region
    $region62: #{tpu_custom_call.1} parent=1 // pred_check
      _
    $region63: #{tpu_custom_call.1} parent=1 // pred_check_branch
      %4181 = sbr.rel (0) target = $region65
    $region64: #{tpu_custom_call.1} parent=1 // pred_region
      %s4183 = ssub.s32 256, 256
      %4184 = vsyncadd [#allocation18], %s4183
      %s4185 = sshll.u32 [#allocation17], 4
      %s4186 = int_to_ptr.vmem [resolvable:$true] %s4185
      %4191 = dma.vmem_to_hbm [thread:$0]  %s4186, 256, %s8, [#allocation18], 128, 128, 8
    $region65: #{tpu_custom_call.1} parent=1 // pred_fallthru
      _
    // Predicated region
    $region66: #{tpu_custom_call.1} parent=1 // pred_check
      _
    $region67: #{tpu_custom_call.1} parent=1 // pred_check_branch
      %4193 = sbr.rel (0) target = $region69
    $region68: #{tpu_custom_call.1} parent=1 // pred_region
      %4194 = dma.done [#allocation6], 256
    $region69: #{tpu_custom_call.1} parent=1 // pred_fallthru
      _
    // Predicated region
    $region70: #{tpu_custom_call.1} parent=1 // pred_check
      _
    $region71: #{tpu_custom_call.1} parent=1 // pred_check_branch
      %4196 = sbr.rel (0) target = $region73
    $region72: #{tpu_custom_call.1} parent=1 // pred_region
      %4197 = dma.done [#allocation18], 256
    $region73: #{tpu_custom_call.1} parent=1 // pred_fallthru
      _
    %4198 = vsyncpa [#allocation5], 1
    %4199 = vsyncpa [#allocation8], 1
    %4200 = vsyncpa [#allocation11], 1
    %4201 = vsyncpa [#allocation14], 1
    %4202 = vsyncpa [#allocation6], 1
    %4203 = vsyncpa [#allocation18], 1

// kernel: tpu_custom_call.1
$region0: #{tpu_custom_call.1}
  #allocation0 [shape = 'u32[]', space=smem, size = 0x4, offset = 0x4, fixed_abs, tag = 'smem constant byte address 0x4 - core index']
  #allocation1 [shape = 'u32[144,128]{1,0:T(1,128)}', space=vmem, size = 0x12000, scoped, tag = 'internal scratch']
  #allocation2 [shape = 'f32[64,512]{1,0:T(8,128)}', space=vmem, size = 0x20000, scoped, tag = 'scratch operand']
  #allocation3 [shape = 'f32[64,128]{1,0:T(8,128)}', space=vmem, size = 0x8000, scoped, tag = 'scratch operand']
  %s0 = inlined_call_operand.hbm [shape: f32[1,64,16], index: 0, kind: input, shape index: {}]
  %s1 = inlined_call_operand.hbm [shape: f32[16,512], index: 1, kind: input, shape index: {}]
  %s2 = inlined_call_operand.hbm [shape: f32[128,512], index: 2, kind: input, shape index: {}]
  %s3 = inlined_call_operand.hbm [shape: f32[1,512], index: 3, kind: input, shape index: {}]
  %s4 = inlined_call_operand.hbm [shape: f32[128,512], index: 4, kind: input, shape index: {}]
  %s5 = inlined_call_operand.hbm [shape: f32[128,512], index: 5, kind: input, shape index: {}]
  %s6 = inlined_call_operand.hbm [shape: f32[1,512], index: 6, kind: input, shape index: {}]
  %s7 = inlined_call_operand.hbm [shape: f32[2,8,128], index: 7, kind: output, shape index: {0}]
  %s8 = inlined_call_operand.hbm [shape: f32[2,8,128], index: 8, kind: output, shape index: {1}]
  %9 = xla_tuple %s7, %s8
  %s10 = sld [smem:[#allocation0]]
  $region74: #{tpu_custom_call.1} parent=0
    _
  %s12 = ssub.s32 1, %s10
  %s13 = scalar_select 0, %s12, %s10
  $region1: #{tpu_custom_call.1} parent=0
    #allocation4 [shape = 'u8[32768]{0}', space=vmem, size = 0x8000, scoped, tag = 'input window, operand 0, single buffered']
    #allocation5 [shape = 's32[1]{0}', space=sflag, size = 0x4, scoped, tag = 'scoped memory for tpu_custom_call.1']
    #allocation6 [shape = 's32[1]{0}', space=sflag, size = 0x4, scoped, tag = 'scoped memory for tpu_custom_call.1']
    #allocation7 [shape = 'u8[32768]{0}', space=vmem, size = 0x8000, scoped, tag = 'input window, operand 1, single buffered']
    #allocation8 [shape = 's32[1]{0}', space=sflag, size = 0x4, scoped, tag = 'scoped memory for tpu_custom_call.1']
    #allocation9 [shape = 'u8[262144]{0}', space=vmem, size = 0x40000, scoped, tag = 'input window, operand 2, single buffered']
    #allocation10 [shape = 'u8[2048]{0}', space=vmem, size = 0x800, scoped, tag = 'input window, operand 3, single buffered']
    #allocation11 [shape = 's32[1]{0}', space=sflag, size = 0x4, scoped, tag = 'scoped memory for tpu_custom_call.1']
    #allocation12 [shape = 'u8[262144]{0}', space=vmem, size = 0x40000, scoped, tag = 'input window, operand 4, single buffered']
    #allocation13 [shape = 'u8[262144]{0}', space=vmem, size = 0x40000, scoped, tag = 'input window, operand 5, single buffered']
    #allocation14 [shape = 's32[1]{0}', space=sflag, size = 0x4, scoped, tag = 'scoped memory for tpu_custom_call.1']
    #allocation15 [shape = 'u8[2048]{0}', space=vmem, size = 0x800, scoped, tag = 'input window, operand 6, single buffered']
    #allocation16 [shape = 'u8[8192]{0}', space=vmem, size = 0x2000, scoped, tag = 'output window, operand 0, single buffered']
    #allocation17 [shape = 'u8[8192]{0}', space=vmem, size = 0x2000, scoped, tag = 'output window, operand 1, single buffered']
    #allocation18 [shape = 's32[1]{0}', space=sflag, size = 0x4, scoped, tag = 'scoped memory for tpu_custom_call.1']
    %14 = vsyncpa [#allocation5], 0
    %15 = vsyncpa [#allocation8], 0
    %16 = vsyncpa [#allocation11], 0
    %17 = vsyncpa [#allocation14], 0
    %18 = vsyncpa [#allocation6], 0
    %19 = vsyncpa [#allocation18], 0
    // Predicated region
    $region2: #{tpu_custom_call.1} parent=1 // pred_check
      _
    $region3: #{tpu_custom_call.1} parent=1 // pred_check_branch
      %21 = sbr.rel (0) target = $region5
    $region4: #{tpu_custom_call.1} parent=1 // pred_region
      %s23 = ssub.s32 1024, 1024
      %24 = vsyncadd [#allocation5], %s23
      %s25 = sshll.u32 [#allocation4], 4
      %s26 = int_to_ptr.vmem [resolvable:$true] %s25
      %31 = dma.hbm_to_vmem [thread:$0]  %s0, 1024, %s26, [#allocation5], 128, 128, 8
    $region5: #{tpu_custom_call.1} parent=1 // pred_fallthru
      _
    // Predicated region
    $region6: #{tpu_custom_call.1} parent=1 // pred_check
      _
    $region7: #{tpu_custom_call.1} parent=1 // pred_check_branch
      %33 = sbr.rel (0) target = $region9
    $region8: #{tpu_custom_call.1} parent=1 // pred_region
      %s35 = ssub.s32 1024, 1024
      %36 = vsyncadd [#allocation8], %s35
      %s37 = sshll.u32 [#allocation7], 4
      %s38 = int_to_ptr.vmem [resolvable:$true] %s37
      %43 = dma.hbm_to_vmem [thread:$0]  %s1, 1024, %s38, [#allocation8], 512, 512, 32
    $region9: #{tpu_custom_call.1} parent=1 // pred_fallthru
      _
    // Predicated region
    $region10: #{tpu_custom_call.1} parent=1 // pred_check
      _
    $region11: #{tpu_custom_call.1} parent=1 // pred_check_branch
      %45 = sbr.rel (0) target = $region13
    $region12: #{tpu_custom_call.1} parent=1 // pred_region
      %s47 = ssub.s32 8192, 8192
      %48 = vsyncadd [#allocation8], %s47
      %s49 = sshll.u32 [#allocation9], 4
      %s50 = int_to_ptr.vmem [resolvable:$true] %s49
      %55 = dma.hbm_to_vmem [thread:$0]  %s2, 8192, %s50, [#allocation8], 512, 512, 32
    $region13: #{tpu_custom_call.1} parent=1 // pred_fallthru
      _
    // Predicated region
    $region14: #{tpu_custom_call.1} parent=1 // pred_check
      _
    $region15: #{tpu_custom_call.1} parent=1 // pred_check_branch
      %57 = sbr.rel (0) target = $region17
    $region16: #{tpu_custom_call.1} parent=1 // pred_region
      %s59 = ssub.s32 64, 64
      %60 = vsyncadd [#allocation11], %s59
      %s62 = sshll.u32 [#allocation10], 4
      %s63 = int_to_ptr.vmem [resolvable:$true] %s62
      %65 = dma.hbm_to_vmem [thread:$0]  %s3, 64, %s63, [#allocation11]
    $region17: #{tpu_custom_call.1} parent=1 // pred_fallthru
      _
    // Predicated region
    $region18: #{tpu_custom_call.1} parent=1 // pred_check
      _
    $region19: #{tpu_custom_call.1} parent=1 // pred_check_branch
      %67 = sbr.rel (0) target = $region21
    $region20: #{tpu_custom_call.1} parent=1 // pred_region
      %s69 = ssub.s32 8192, 8192
      %70 = vsyncadd [#allocation11], %s69
      %s71 = sshll.u32 [#allocation12], 4
      %s72 = int_to_ptr.vmem [resolvable:$true] %s71
      %77 = dma.hbm_to_vmem [thread:$0]  %s4, 8192, %s72, [#allocation11], 512, 512, 32
    $region21: #{tpu_custom_call.1} parent=1 // pred_fallthru
      _
    // Predicated region
    $region22: #{tpu_custom_call.1} parent=1 // pred_check
      _
    $region23: #{tpu_custom_call.1} parent=1 // pred_check_branch
      %79 = sbr.rel (0) target = $region25
    $region24: #{tpu_custom_call.1} parent=1 // pred_region
      %s81 = ssub.s32 8192, 8192
      %82 = vsyncadd [#allocation14], %s81
      %s83 = sshll.u32 [#allocation13], 4
      %s84 = int_to_ptr.vmem [resolvable:$true] %s83
      %89 = dma.hbm_to_vmem [thread:$0]  %s5, 8192, %s84, [#allocation14], 512, 512, 32
    $region25: #{tpu_custom_call.1} parent=1 // pred_fallthru
      _
    // Predicated region
    $region26: #{tpu_custom_call.1} parent=1 // pred_check
      _
    $region27: #{tpu_custom_call.1} parent=1 // pred_check_branch
      %91 = sbr.rel (0) target = $region29
    $region28: #{tpu_custom_call.1} parent=1 // pred_region
      %s93 = ssub.s32 64, 64
      %94 = vsyncadd [#allocation14], %s93
      %s96 = sshll.u32 [#allocation15], 4
      %s97 = int_to_ptr.vmem [resolvable:$true] %s96
      %99 = dma.hbm_to_vmem [thread:$0]  %s6, 64, %s97, [#allocation14]
    $region29: #{tpu_custom_call.1} parent=1 // pred_fallthru
      _
    // Predicated region
    $region30: #{tpu_custom_call.1} parent=1 // pred_check
      _
    $region31: #{tpu_custom_call.1} parent=1 // pred_check_branch
      %101 = sbr.rel (0) target = $region33
    $region32: #{tpu_custom_call.1} parent=1 // pred_region
      %102 = dma.done [#allocation5], 1024
    $region33: #{tpu_custom_call.1} parent=1 // pred_fallthru
      _
    // Predicated region
    $region34: #{tpu_custom_call.1} parent=1 // pred_check
      _
    $region35: #{tpu_custom_call.1} parent=1 // pred_check_branch
      %104 = sbr.rel (0) target = $region37
    $region36: #{tpu_custom_call.1} parent=1 // pred_region
      %105 = dma.done [#allocation8], 1024
    $region37: #{tpu_custom_call.1} parent=1 // pred_fallthru
      _
    // Predicated region
    $region38: #{tpu_custom_call.1} parent=1 // pred_check
      _
    $region39: #{tpu_custom_call.1} parent=1 // pred_check_branch
      %107 = sbr.rel (0) target = $region41
    $region40: #{tpu_custom_call.1} parent=1 // pred_region
      %108 = dma.done [#allocation8], 8192
    $region41: #{tpu_custom_call.1} parent=1 // pred_fallthru
      _
    // Predicated region
    $region42: #{tpu_custom_call.1} parent=1 // pred_check
      _
    $region43: #{tpu_custom_call.1} parent=1 // pred_check_branch
      %110 = sbr.rel (0) target = $region45
    $region44: #{tpu_custom_call.1} parent=1 // pred_region
      %111 = dma.done [#allocation11], 64
    $region45: #{tpu_custom_call.1} parent=1 // pred_fallthru
      _
    // Predicated region
    $region46: #{tpu_custom_call.1} parent=1 // pred_check
      _
    $region47: #{tpu_custom_call.1} parent=1 // pred_check_branch
      %113 = sbr.rel (0) target = $region49
    $region48: #{tpu_custom_call.1} parent=1 // pred_region
      %114 = dma.done [#allocation11], 8192
    $region49: #{tpu_custom_call.1} parent=1 // pred_fallthru
      _
    // Predicated region
    $region50: #{tpu_custom_call.1} parent=1 // pred_check
      _
    $region51: #{tpu_custom_call.1} parent=1 // pred_check_branch
      %116 = sbr.rel (0) target = $region53
    $region52: #{tpu_custom_call.1} parent=1 // pred_region
      %117 = dma.done [#allocation14], 8192
    $region53: #{tpu_custom_call.1} parent=1 // pred_fallthru
      _
    // Predicated region
    $region54: #{tpu_custom_call.1} parent=1 // pred_check
      _
    $region55: #{tpu_custom_call.1} parent=1 // pred_check_branch
      %119 = sbr.rel (0) target = $region57
    $region56: #{tpu_custom_call.1} parent=1 // pred_region
      %120 = dma.done [#allocation14], 64
    $region57: #{tpu_custom_call.1} parent=1 // pred_fallthru
      _
    %v121 = vld [vmem:[#allocation10] sm:$0xf]
    %v122 = vld [vmem:[#allocation4] sm:$0xff]
    %v123 = vld [vmem:[#allocation4 + $0x8] sm:$0xff]
    %v124 = vld [vmem:[#allocation4 + $0x10] sm:$0xff]
    %v125 = vld [vmem:[#allocation4 + $0x18] sm:$0xff]
    %v126 = vld [vmem:[#allocation4 + $0x20] sm:$0xff]
    %v127 = vld [vmem:[#allocation4 + $0x28] sm:$0xff]
    %v128 = vld [vmem:[#allocation4 + $0x30] sm:$0xff]
    %v129 = vld [vmem:[#allocation4 + $0x38] sm:$0xff]
    %v130 = vld [vmem:[#allocation7] sm:$0xff]
    %v131 = vld [vmem:[#allocation7 + $0x8] sm:$0xff]
    %v132 = vld [vmem:[#allocation7 + $0x10] sm:$0xff]
    %v133 = vld [vmem:[#allocation7 + $0x18] sm:$0xff]
    %v134 = vld [vmem:[#allocation7 + $0x20] sm:$0xff]
    %v135 = vld [vmem:[#allocation7 + $0x28] sm:$0xff]
    %v136 = vld [vmem:[#allocation7 + $0x30] sm:$0xff]
    %v137 = vld [vmem:[#allocation7 + $0x38] sm:$0xff]
    %v139 = vlaneseq
    %v140 = vshrl.u32 %v139, 7
    %v141 = vsub.s32 0, %v140
    %v142 = vrot.slane %v121, %v141
    %v143 = vlaneseq
    %v144 = vshrl.u32 %v143, 7
    %v145 = vsub.s32 1, %v144
    %v146 = vrot.slane %v121, %v145
    %v147 = vlaneseq
    %v148 = vshrl.u32 %v147, 7
    %v149 = vsub.s32 2, %v148
    %v150 = vrot.slane %v121, %v149
    %v151 = vlaneseq
    %v152 = vshrl.u32 %v151, 7
    %v153 = vsub.s32 3, %v152
    %v154 = vrot.slane %v121, %v153
    %vm159 = vcmask 130048
    %v161 = vsel %vm159, %v122, 0
    %v164 = vsel %vm159, %v123, 0
    %v167 = vsel %vm159, %v124, 0
    %v170 = vsel %vm159, %v125, 0
    %v173 = vsel %vm159, %v126, 0
    %v176 = vsel %vm159, %v127, 0
    %v179 = vsel %vm159, %v128, 0
    %v182 = vsel %vm159, %v129, 0
    %184 = vmatprep.subr.mxu0 %v131
    %185 = vmatpush1.msra.mxu0 %v130
    %186 = vmatprep.subr.mxu0 %v135
    %187 = vmatpush1.msra.mxu0 %v134
    %188 = vmatprep.subr.mxu0 0.0
    %189 = vmatpush1.msra.mxu0 0.0
    %190 = vmatprep.subr.mxu0 0.0
    %191 = vmatpush1.msra.mxu0 0.0
    %192 = vmatprep.subr.mxu0 0.0
    %193 = vmatpush1.msra.mxu0 0.0
    %194 = vmatprep.subr.mxu0 0.0
    %195 = vmatpush1.msra.mxu0 0.0
    %196 = vmatprep.subr.mxu0 0.0
    %197 = vmatpush1.msra.mxu0 0.0
    %198 = vmatprep.subr.mxu0 0.0
    %199 = vmatpush1.msra.mxu0 0.0
    %200 = vmatprep.subr.mxu0 0.0
    %201 = vmatpush1.msra.mxu0 0.0
    %202 = vmatprep.subr.mxu0 0.0
    %203 = vmatpush1.msra.mxu0 0.0
    %204 = vmatprep.subr.mxu0 0.0
    %205 = vmatpush1.msra.mxu0 0.0
    %206 = vmatprep.subr.mxu0 0.0
    %207 = vmatpush1.msra.mxu0 0.0
    %208 = vmatprep.subr.mxu0 0.0
    %209 = vmatpush1.msra.mxu0 0.0
    %210 = vmatprep.subr.mxu0 0.0
    %211 = vmatpush1.msra.mxu0 0.0
    %212 = vmatprep.subr.mxu0 0.0
    %213 = vmatpush1.msra.mxu0 0.0
    %214 = vmatprep.subr.mxu0 0.0
    %215 = vmatpush1.msra.mxu0 0.0
    %216 = vmatprep.subr.mxu0 0.0
    %217 = vmatpush1.msra.mxu0 0.0
    %218 = vmatprep.subr.mxu0 0.0
    %219 = vmatpush1.msra.mxu0 0.0
    %220 = vmatprep.subr.mxu0 0.0
    %221 = vmatpush1.msra.mxu0 0.0
    %222 = vmatprep.subr.mxu0 0.0
    %223 = vmatpush1.msra.mxu0 0.0
    %224 = vmatprep.subr.mxu0 0.0
    %225 = vmatpush1.msra.mxu0 0.0
    %226 = vmatprep.subr.mxu0 0.0
    %227 = vmatpush1.msra.mxu0 0.0
    %228 = vmatprep.subr.mxu0 0.0
    %229 = vmatpush1.msra.mxu0 0.0
    %230 = vmatprep.subr.mxu0 0.0
    %231 = vmatpush1.msra.mxu0 0.0
    %232 = vmatprep.subr.mxu0 0.0
    %233 = vmatpush1.msra.mxu0 0.0
    %234 = vmatprep.subr.mxu0 0.0
    %235 = vmatpush1.msra.mxu0 0.0
    %236 = vmatprep.subr.mxu0 0.0
    %237 = vmatpush1.msra.mxu0 0.0
    %238 = vmatprep.subr.mxu0 0.0
    %239 = vmatpush1.msra.mxu0 0.0
    %240 = vmatprep.subr.mxu0 0.0
    %241 = vmatpush1.msra.mxu0 0.0
    %242 = vmatprep.subr.mxu0 0.0
    %243 = vmatpush1.msra.mxu0 0.0
    %244 = vmatprep.subr.mxu0 0.0
    %245 = vmatpush1.msra.mxu0 0.0
    %246 = vmatprep.subr.mxu0 0.0
    %247 = vmatpush1.msra.mxu0 0.0
    %248 = vmatprep.mubr.f32.mxu0 0.0
    %249 = vmatmul.mubr.f32.gmra.mrb[0].mxu0 %v161
    %v250 = vpop.f32.mrb[0].mxu0
    %v251 = vadd.f32 %v142, %v250
    %v252 = vpop.f32.mrb[0].mxu0
    %v253 = vadd.f32 %v146, %v252
    %254 = vmatprep.mubr.f32.mxu0 0.0
    %255 = vmatmul.mubr.f32.gmra.mrb[0].mxu0 %v164
    %v256 = vpop.f32.mrb[0].mxu0
    %v257 = vadd.f32 %v142, %v256
    %v258 = vpop.f32.mrb[0].mxu0
    %v259 = vadd.f32 %v146, %v258
    %260 = vmatprep.mubr.f32.mxu0 0.0
    %261 = vmatmul.mubr.f32.gmra.mrb[0].mxu0 %v167
    %v262 = vpop.f32.mrb[0].mxu0
    %v263 = vadd.f32 %v142, %v262
    %v264 = vpop.f32.mrb[0].mxu0
    %v265 = vadd.f32 %v146, %v264
    %266 = vmatprep.mubr.f32.mxu0 0.0
    %267 = vmatmul.mubr.f32.gmra.mrb[0].mxu0 %v170
    %v268 = vpop.f32.mrb[0].mxu0
    %v269 = vadd.f32 %v142, %v268
    %v270 = vpop.f32.mrb[0].mxu0
    %v271 = vadd.f32 %v146, %v270
    %272 = vmatprep.mubr.f32.mxu0 0.0
    %273 = vmatmul.mubr.f32.gmra.mrb[0].mxu0 %v173
    %v274 = vpop.f32.mrb[0].mxu0
    %v275 = vadd.f32 %v142, %v274
    %v276 = vpop.f32.mrb[0].mxu0
    %v277 = vadd.f32 %v146, %v276
    %278 = vmatprep.mubr.f32.mxu0 0.0
    %279 = vmatmul.mubr.f32.gmra.mrb[0].mxu0 %v176
    %v280 = vpop.f32.mrb[0].mxu0
    %v281 = vadd.f32 %v142, %v280
    %v282 = vpop.f32.mrb[0].mxu0
    %v283 = vadd.f32 %v146, %v282
    %284 = vmatprep.mubr.f32.mxu0 0.0
    %285 = vmatmul.mubr.f32.gmra.mrb[0].mxu0 %v179
    %v286 = vpop.f32.mrb[0].mxu0
    %v287 = vadd.f32 %v142, %v286
    %v288 = vpop.f32.mrb[0].mxu0
    %v289 = vadd.f32 %v146, %v288
    %290 = vmatprep.mubr.f32.mxu0 0.0
    %291 = vmatmul.mubr.f32.gmra.mrb[0].mxu0 %v182
    %v292 = vpop.f32.mrb[0].mxu0
    %v293 = vadd.f32 %v142, %v292
    %v294 = vpop.f32.mrb[0].mxu0
    %v295 = vadd.f32 %v146, %v294
    %296 = vdwg.mxu0
    %297 = vmatprep.subr.mxu0 %v133
    %298 = vmatpush1.msra.mxu0 %v132
    %299 = vmatprep.subr.mxu0 %v137
    %300 = vmatpush1.msra.mxu0 %v136
    %301 = vmatprep.subr.mxu0 0.0
    %302 = vmatpush1.msra.mxu0 0.0
    %303 = vmatprep.subr.mxu0 0.0
    %304 = vmatpush1.msra.mxu0 0.0
    %305 = vmatprep.subr.mxu0 0.0
    %306 = vmatpush1.msra.mxu0 0.0
    %307 = vmatprep.subr.mxu0 0.0
    %308 = vmatpush1.msra.mxu0 0.0
    %309 = vmatprep.subr.mxu0 0.0
    %310 = vmatpush1.msra.mxu0 0.0
    %311 = vmatprep.subr.mxu0 0.0
    %312 = vmatpush1.msra.mxu0 0.0
    %313 = vmatprep.subr.mxu0 0.0
    %314 = vmatpush1.msra.mxu0 0.0
    %315 = vmatprep.subr.mxu0 0.0
    %316 = vmatpush1.msra.mxu0 0.0
    %317 = vmatprep.subr.mxu0 0.0
    %318 = vmatpush1.msra.mxu0 0.0
    %319 = vmatprep.subr.mxu0 0.0
    %320 = vmatpush1.msra.mxu0 0.0
    %321 = vmatprep.subr.mxu0 0.0
    %322 = vmatpush1.msra.mxu0 0.0
    %323 = vmatprep.subr.mxu0 0.0
    %324 = vmatpush1.msra.mxu0 0.0
    %325 = vmatprep.subr.mxu0 0.0
    %326 = vmatpush1.msra.mxu0 0.0
    %327 = vmatprep.subr.mxu0 0.0
    %328 = vmatpush1.msra.mxu0 0.0
    %329 = vmatprep.subr.mxu0 0.0
    %330 = vmatpush1.msra.mxu0 0.0
    %331 = vmatprep.subr.mxu0 0.0
    %332 = vmatpush1.msra.mxu0 0.0
    %333 = vmatprep.subr.mxu0 0.0
    %334 = vmatpush1.msra.mxu0 0.0
    %335 = vmatprep.subr.mxu0 0.0
    %336 = vmatpush1.msra.mxu0 0.0
    %337 = vmatprep.subr.mxu0 0.0
    %338 = vmatpush1.msra.mxu0 0.0
    %339 = vmatprep.subr.mxu0 0.0
    %340 = vmatpush1.msra.mxu0 0.0
    %341 = vmatprep.subr.mxu0 0.0
    %342 = vmatpush1.msra.mxu0 0.0
    %343 = vmatprep.subr.mxu0 0.0
    %344 = vmatpush1.msra.mxu0 0.0
    %345 = vmatprep.subr.mxu0 0.0
    %346 = vmatpush1.msra.mxu0 0.0
    %347 = vmatprep.subr.mxu0 0.0
    %348 = vmatpush1.msra.mxu0 0.0
    %349 = vmatprep.subr.mxu0 0.0
    %350 = vmatpush1.msra.mxu0 0.0
    %351 = vmatprep.subr.mxu0 0.0
    %352 = vmatpush1.msra.mxu0 0.0
    %353 = vmatprep.subr.mxu0 0.0
    %354 = vmatpush1.msra.mxu0 0.0
    %355 = vmatprep.subr.mxu0 0.0
    %356 = vmatpush1.msra.mxu0 0.0
    %357 = vmatprep.subr.mxu0 0.0
    %358 = vmatpush1.msra.mxu0 0.0
    %359 = vmatprep.subr.mxu0 0.0
    %360 = vmatpush1.msra.mxu0 0.0
    %361 = vmatprep.mubr.f32.mxu0 0.0
    %362 = vmatmul.mubr.f32.gmra.mrb[0].mxu0 %v161
    %v363 = vpop.f32.mrb[0].mxu0
    %v364 = vadd.f32 %v150, %v363
    %v365 = vpop.f32.mrb[0].mxu0
    %v366 = vadd.f32 %v154, %v365
    %367 = vmatprep.mubr.f32.mxu0 0.0
    %368 = vmatmul.mubr.f32.gmra.mrb[0].mxu0 %v164
    %v369 = vpop.f32.mrb[0].mxu0
    %v370 = vadd.f32 %v150, %v369
    %v371 = vpop.f32.mrb[0].mxu0
    %v372 = vadd.f32 %v154, %v371
    %373 = vmatprep.mubr.f32.mxu0 0.0
    %374 = vmatmul.mubr.f32.gmra.mrb[0].mxu0 %v167
    %v375 = vpop.f32.mrb[0].mxu0
    %v376 = vadd.f32 %v150, %v375
    %v377 = vpop.f32.mrb[0].mxu0
    %v378 = vadd.f32 %v154, %v377
    %379 = vmatprep.mubr.f32.mxu0 0.0
    %380 = vmatmul.mubr.f32.gmra.mrb[0].mxu0 %v170
    %v381 = vpop.f32.mrb[0].mxu0
    %v382 = vadd.f32 %v150, %v381
    %v383 = vpop.f32.mrb[0].mxu0
    %v384 = vadd.f32 %v154, %v383
    %385 = vmatprep.mubr.f32.mxu0 0.0
    %386 = vmatmul.mubr.f32.gmra.mrb[0].mxu0 %v173
    %v387 = vpop.f32.mrb[0].mxu0
    %v388 = vadd.f32 %v150, %v387
    %v389 = vpop.f32.mrb[0].mxu0
    %v390 = vadd.f32 %v154, %v389
    %391 = vmatprep.mubr.f32.mxu0 0.0
    %392 = vmatmul.mubr.f32.gmra.mrb[0].mxu0 %v176
    %v393 = vpop.f32.mrb[0].mxu0
    %v394 = vadd.f32 %v150, %v393
    %v395 = vpop.f32.mrb[0].mxu0
    %v396 = vadd.f32 %v154, %v395
    %397 = vmatprep.mubr.f32.mxu0 0.0
    %398 = vmatmul.mubr.f32.gmra.mrb[0].mxu0 %v179
    %v399 = vpop.f32.mrb[0].mxu0
    %v400 = vadd.f32 %v150, %v399
    %v401 = vpop.f32.mrb[0].mxu0
    %v402 = vadd.f32 %v154, %v401
    %403 = vmatprep.mubr.f32.mxu0 0.0
    %404 = vmatmul.mubr.f32.gmra.mrb[0].mxu0 %v182
    %v405 = vpop.f32.mrb[0].mxu0
    %v406 = vadd.f32 %v150, %v405
    %v407 = vpop.f32.mrb[0].mxu0
    %v408 = vadd.f32 %v154, %v407
    %409 = vdwg.mxu0
    %410 = vst [vmem:[#allocation2] sm:$0xff] %v251
    %411 = vst [vmem:[#allocation2 + $0x8] sm:$0xff] %v253
    %412 = vst [vmem:[#allocation2 + $0x10] sm:$0xff] %v364
    %413 = vst [vmem:[#allocation2 + $0x18] sm:$0xff] %v366
    %414 = vst [vmem:[#allocation2 + $0x20] sm:$0xff] %v257
    %415 = vst [vmem:[#allocation2 + $0x28] sm:$0xff] %v259
    %416 = vst [vmem:[#allocation2 + $0x30] sm:$0xff] %v370
    %417 = vst [vmem:[#allocation2 + $0x38] sm:$0xff] %v372
    %418 = vst [vmem:[#allocation2 + $0x40] sm:$0xff] %v263
    %419 = vst [vmem:[#allocation2 + $0x48] sm:$0xff] %v265
    %420 = vst [vmem:[#allocation2 + $0x50] sm:$0xff] %v376
    %421 = vst [vmem:[#allocation2 + $0x58] sm:$0xff] %v378
    %422 = vst [vmem:[#allocation2 + $0x60] sm:$0xff] %v269
    %423 = vst [vmem:[#allocation2 + $0x68] sm:$0xff] %v271
    %424 = vst [vmem:[#allocation2 + $0x70] sm:$0xff] %v382
    %425 = vst [vmem:[#allocation2 + $0x78] sm:$0xff] %v384
    %426 = vst [vmem:[#allocation2 + $0x80] sm:$0xff] %v275
    %427 = vst [vmem:[#allocation2 + $0x88] sm:$0xff] %v277
    %428 = vst [vmem:[#allocation2 + $0x90] sm:$0xff] %v388
    %429 = vst [vmem:[#allocation2 + $0x98] sm:$0xff] %v390
    %430 = vst [vmem:[#allocation2 + $0xa0] sm:$0xff] %v281
    %431 = vst [vmem:[#allocation2 + $0xa8] sm:$0xff] %v283
    %432 = vst [vmem:[#allocation2 + $0xb0] sm:$0xff] %v394
    %433 = vst [vmem:[#allocation2 + $0xb8] sm:$0xff] %v396
    %434 = vst [vmem:[#allocation2 + $0xc0] sm:$0xff] %v287
    %435 = vst [vmem:[#allocation2 + $0xc8] sm:$0xff] %v289
    %436 = vst [vmem:[#allocation2 + $0xd0] sm:$0xff] %v400
    %437 = vst [vmem:[#allocation2 + $0xd8] sm:$0xff] %v402
    %438 = vst [vmem:[#allocation2 + $0xe0] sm:$0xff] %v293
    %439 = vst [vmem:[#allocation2 + $0xe8] sm:$0xff] %v295
    %440 = vst [vmem:[#allocation2 + $0xf0] sm:$0xff] %v406
    %441 = vst [vmem:[#allocation2 + $0xf8] sm:$0xff] %v408
    %v442 = vld [vmem:[#allocation2] sm:$0xff]
    %v443 = vld [vmem:[#allocation2 + $0x8] sm:$0xff]
    %v444 = vld [vmem:[#allocation2 + $0x10] sm:$0xff]
    %v445 = vld [vmem:[#allocation2 + $0x18] sm:$0xff]
    %v446 = vld [vmem:[#allocation9] sm:$0xff]
    %v447 = vld [vmem:[#allocation9 + $0x8] sm:$0xff]
    %v448 = vld [vmem:[#allocation9 + $0x10] sm:$0xff]
    %v449 = vld [vmem:[#allocation9 + $0x18] sm:$0xff]
    %v450 = vld [vmem:[#allocation9 + $0x20] sm:$0xff]
    %v451 = vld [vmem:[#allocation9 + $0x28] sm:$0xff]
    %v452 = vld [vmem:[#allocation9 + $0x30] sm:$0xff]
    %v453 = vld [vmem:[#allocation9 + $0x38] sm:$0xff]
    %v454 = vld [vmem:[#allocation9 + $0x40] sm:$0xff]
    %v455 = vld [vmem:[#allocation9 + $0x48] sm:$0xff]
    %v456 = vld [vmem:[#allocation9 + $0x50] sm:$0xff]
    %v457 = vld [vmem:[#allocation9 + $0x58] sm:$0xff]
    %v458 = vld [vmem:[#allocation9 + $0x60] sm:$0xff]
    %v459 = vld [vmem:[#allocation9 + $0x68] sm:$0xff]
    %v460 = vld [vmem:[#allocation9 + $0x70] sm:$0xff]
    %v461 = vld [vmem:[#allocation9 + $0x78] sm:$0xff]
    %v462 = vld [vmem:[#allocation9 + $0x80] sm:$0xff]
    %v463 = vld [vmem:[#allocation9 + $0x88] sm:$0xff]
    %v464 = vld [vmem:[#allocation9 + $0x90] sm:$0xff]
    %v465 = vld [vmem:[#allocation9 + $0x98] sm:$0xff]
    %v466 = vld [vmem:[#allocation9 + $0xa0] sm:$0xff]
    %v467 = vld [vmem:[#allocation9 + $0xa8] sm:$0xff]
    %v468 = vld [vmem:[#allocation9 + $0xb0] sm:$0xff]
    %v469 = vld [vmem:[#allocation9 + $0xb8] sm:$0xff]
    %v470 = vld [vmem:[#allocation9 + $0xc0] sm:$0xff]
    %v471 = vld [vmem:[#allocation9 + $0xc8] sm:$0xff]
    %v472 = vld [vmem:[#allocation9 + $0xd0] sm:$0xff]
    %v473 = vld [vmem:[#allocation9 + $0xd8] sm:$0xff]
    %v474 = vld [vmem:[#allocation9 + $0xe0] sm:$0xff]
    %v475 = vld [vmem:[#allocation9 + $0xe8] sm:$0xff]
    %v476 = vld [vmem:[#allocation9 + $0xf0] sm:$0xff]
    %v477 = vld [vmem:[#allocation9 + $0xf8] sm:$0xff]
    %v478 = vld [vmem:[#allocation9 + $0x100] sm:$0xff]
    %v479 = vld [vmem:[#allocation9 + $0x108] sm:$0xff]
    %v480 = vld [vmem:[#allocation9 + $0x110] sm:$0xff]
    %v481 = vld [vmem:[#allocation9 + $0x118] sm:$0xff]
    %v482 = vld [vmem:[#allocation9 + $0x120] sm:$0xff]
    %v483 = vld [vmem:[#allocation9 + $0x128] sm:$0xff]
    %v484 = vld [vmem:[#allocation9 + $0x130] sm:$0xff]
    %v485 = vld [vmem:[#allocation9 + $0x138] sm:$0xff]
    %v486 = vld [vmem:[#allocation9 + $0x140] sm:$0xff]
    %v487 = vld [vmem:[#allocation9 + $0x148] sm:$0xff]
    %v488 = vld [vmem:[#allocation9 + $0x150] sm:$0xff]
    %v489 = vld [vmem:[#allocation9 + $0x158] sm:$0xff]
    %v490 = vld [vmem:[#allocation9 + $0x160] sm:$0xff]
    %v491 = vld [vmem:[#allocation9 + $0x168] sm:$0xff]
    %v492 = vld [vmem:[#allocation9 + $0x170] sm:$0xff]
    %v493 = vld [vmem:[#allocation9 + $0x178] sm:$0xff]
    %v494 = vld [vmem:[#allocation9 + $0x180] sm:$0xff]
    %v495 = vld [vmem:[#allocation9 + $0x188] sm:$0xff]
    %v496 = vld [vmem:[#allocation9 + $0x190] sm:$0xff]
    %v497 = vld [vmem:[#allocation9 + $0x198] sm:$0xff]
    %v498 = vld [vmem:[#allocation9 + $0x1a0] sm:$0xff]
    %v499 = vld [vmem:[#allocation9 + $0x1a8] sm:$0xff]
    %v500 = vld [vmem:[#allocation9 + $0x1b0] sm:$0xff]
    %v501 = vld [vmem:[#allocation9 + $0x1b8] sm:$0xff]
    %v502 = vld [vmem:[#allocation9 + $0x1c0] sm:$0xff]
    %v503 = vld [vmem:[#allocation9 + $0x1c8] sm:$0xff]
    %v504 = vld [vmem:[#allocation9 + $0x1d0] sm:$0xff]
    %v505 = vld [vmem:[#allocation9 + $0x1d8] sm:$0xff]
    %v506 = vld [vmem:[#allocation9 + $0x1e0] sm:$0xff]
    %v507 = vld [vmem:[#allocation9 + $0x1e8] sm:$0xff]
    %v508 = vld [vmem:[#allocation9 + $0x1f0] sm:$0xff]
    %v509 = vld [vmem:[#allocation9 + $0x1f8] sm:$0xff]
    %510 = vmatprep.subr.mxu0 %v447
    %511 = vmatpush1.msra.mxu0 %v446
    %512 = vmatprep.subr.mxu0 %v451
    %513 = vmatpush1.msra.mxu0 %v450
    %514 = vmatprep.subr.mxu0 %v455
    %515 = vmatpush1.msra.mxu0 %v454
    %516 = vmatprep.subr.mxu0 %v459
    %517 = vmatpush1.msra.mxu0 %v458
    %518 = vmatprep.subr.mxu0 %v463
    %519 = vmatpush1.msra.mxu0 %v462
    %520 = vmatprep.subr.mxu0 %v467
    %521 = vmatpush1.msra.mxu0 %v466
    %522 = vmatprep.subr.mxu0 %v471
    %523 = vmatpush1.msra.mxu0 %v470
    %524 = vmatprep.subr.mxu0 %v475
    %525 = vmatpush1.msra.mxu0 %v474
    %526 = vmatprep.subr.mxu0 %v479
    %527 = vmatpush1.msra.mxu0 %v478
    %528 = vmatprep.subr.mxu0 %v483
    %529 = vmatpush1.msra.mxu0 %v482
    %530 = vmatprep.subr.mxu0 %v487
    %531 = vmatpush1.msra.mxu0 %v486
    %532 = vmatprep.subr.mxu0 %v491
    %533 = vmatpush1.msra.mxu0 %v490
    %534 = vmatprep.subr.mxu0 %v495
    %535 = vmatpush1.msra.mxu0 %v494
    %536 = vmatprep.subr.mxu0 %v499
    %537 = vmatpush1.msra.mxu0 %v498
    %538 = vmatprep.subr.mxu0 %v503
    %539 = vmatpush1.msra.mxu0 %v502
    %540 = vmatprep.subr.mxu0 %v507
    %541 = vmatpush1.msra.mxu0 %v506
    %542 = vmatprep.subr.mxu0 0.0
    %543 = vmatpush1.msra.mxu0 0.0
    %544 = vmatprep.subr.mxu0 0.0
    %545 = vmatpush1.msra.mxu0 0.0
    %546 = vmatprep.subr.mxu0 0.0
    %547 = vmatpush1.msra.mxu0 0.0
    %548 = vmatprep.subr.mxu0 0.0
    %549 = vmatpush1.msra.mxu0 0.0
    %550 = vmatprep.subr.mxu0 0.0
    %551 = vmatpush1.msra.mxu0 0.0
    %552 = vmatprep.subr.mxu0 0.0
    %553 = vmatpush1.msra.mxu0 0.0
    %554 = vmatprep.subr.mxu0 0.0
    %555 = vmatpush1.msra.mxu0 0.0
    %556 = vmatprep.subr.mxu0 0.0
    %557 = vmatpush1.msra.mxu0 0.0
    %558 = vmatprep.subr.mxu0 0.0
    %559 = vmatpush1.msra.mxu0 0.0
    %560 = vmatprep.subr.mxu0 0.0
    %561 = vmatpush1.msra.mxu0 0.0
    %562 = vmatprep.subr.mxu0 0.0
    %563 = vmatpush1.msra.mxu0 0.0
    %564 = vmatprep.subr.mxu0 0.0
    %565 = vmatpush1.msra.mxu0 0.0
    %566 = vmatprep.subr.mxu0 0.0
    %567 = vmatpush1.msra.mxu0 0.0
    %568 = vmatprep.subr.mxu0 0.0
    %569 = vmatpush1.msra.mxu0 0.0
    %570 = vmatprep.subr.mxu0 0.0
    %571 = vmatpush1.msra.mxu0 0.0
    %572 = vmatprep.subr.mxu0 0.0
    %573 = vmatpush1.msra.mxu0 0.0
    %574 = vmatprep.mubr.f32.mxu0 0.0
    %575 = vmatmul.mubr.f32.gmra.mrb[0].mxu0 0.0
    %v576 = vpop.f32.mrb[0].mxu0
    %v577 = vadd.f32 0.0, %v576
    %v578 = vpop.f32.mrb[0].mxu0
    %v579 = vadd.f32 0.0, %v578
    %580 = vdwg.mxu0
    %581 = vmatprep.subr.mxu0 %v449
    %582 = vmatpush1.msra.mxu0 %v448
    %583 = vmatprep.subr.mxu0 %v453
    %584 = vmatpush1.msra.mxu0 %v452
    %585 = vmatprep.subr.mxu0 %v457
    %586 = vmatpush1.msra.mxu0 %v456
    %587 = vmatprep.subr.mxu0 %v461
    %588 = vmatpush1.msra.mxu0 %v460
    %589 = vmatprep.subr.mxu0 %v465
    %590 = vmatpush1.msra.mxu0 %v464
    %591 = vmatprep.subr.mxu0 %v469
    %592 = vmatpush1.msra.mxu0 %v468
    %593 = vmatprep.subr.mxu0 %v473
    %594 = vmatpush1.msra.mxu0 %v472
    %595 = vmatprep.subr.mxu0 %v477
    %596 = vmatpush1.msra.mxu0 %v476
    %597 = vmatprep.subr.mxu0 %v481
    %598 = vmatpush1.msra.mxu0 %v480
    %599 = vmatprep.subr.mxu0 %v485
    %600 = vmatpush1.msra.mxu0 %v484
    %601 = vmatprep.subr.mxu0 %v489
    %602 = vmatpush1.msra.mxu0 %v488
    %603 = vmatprep.subr.mxu0 %v493
    %604 = vmatpush1.msra.mxu0 %v492
    %605 = vmatprep.subr.mxu0 %v497
    %606 = vmatpush1.msra.mxu0 %v496
    %607 = vmatprep.subr.mxu0 %v501
    %608 = vmatpush1.msra.mxu0 %v500
    %609 = vmatprep.subr.mxu0 %v505
    %610 = vmatpush1.msra.mxu0 %v504
    %611 = vmatprep.subr.mxu0 %v509
    %612 = vmatpush1.msra.mxu0 %v508
    %613 = vmatprep.subr.mxu0 0.0
    %614 = vmatpush1.msra.mxu0 0.0
    %615 = vmatprep.subr.mxu0 0.0
    %616 = vmatpush1.msra.mxu0 0.0
    %617 = vmatprep.subr.mxu0 0.0
    %618 = vmatpush1.msra.mxu0 0.0
    %619 = vmatprep.subr.mxu0 0.0
    %620 = vmatpush1.msra.mxu0 0.0
    %621 = vmatprep.subr.mxu0 0.0
    %622 = vmatpush1.msra.mxu0 0.0
    %623 = vmatprep.subr.mxu0 0.0
    %624 = vmatpush1.msra.mxu0 0.0
    %625 = vmatprep.subr.mxu0 0.0
    %626 = vmatpush1.msra.mxu0 0.0
    %627 = vmatprep.subr.mxu0 0.0
    %628 = vmatpush1.msra.mxu0 0.0
    %629 = vmatprep.subr.mxu0 0.0
    %630 = vmatpush1.msra.mxu0 0.0
    %631 = vmatprep.subr.mxu0 0.0
    %632 = vmatpush1.msra.mxu0 0.0
    %633 = vmatprep.subr.mxu0 0.0
    %634 = vmatpush1.msra.mxu0 0.0
    %635 = vmatprep.subr.mxu0 0.0
    %636 = vmatpush1.msra.mxu0 0.0
    %637 = vmatprep.subr.mxu0 0.0
    %638 = vmatpush1.msra.mxu0 0.0
    %639 = vmatprep.subr.mxu0 0.0
    %640 = vmatpush1.msra.mxu0 0.0
    %641 = vmatprep.subr.mxu0 0.0
    %642 = vmatpush1.msra.mxu0 0.0
    %643 = vmatprep.subr.mxu0 0.0
    %644 = vmatpush1.msra.mxu0 0.0
    %645 = vmatprep.mubr.f32.mxu0 0.0
    %646 = vmatmul.mubr.f32.gmra.mrb[0].mxu0 0.0
    %v647 = vpop.f32.mrb[0].mxu0
    %v648 = vadd.f32 0.0, %v647
    %v649 = vpop.f32.mrb[0].mxu0
    %v650 = vadd.f32 0.0, %v649
    %651 = vdwg.mxu0
    %v652 = vadd.f32 %v442, %v577
    %v653 = vadd.f32 %v443, %v579
    %v654 = vadd.f32 %v444, %v648
    %v655 = vadd.f32 %v445, %v650
    %v656 = vxor.u32 %v652, 2147483648
    %v657 = vxor.u32 %v653, 2147483648
    %v658 = vxor.u32 %v654, 2147483648
    %v659 = vmul.f32 %v656, 1.442695
    %v660 = vpow.pop %v659
    %v661 = vmul.f32 %v657, 1.442695
    %v662 = vpow.pop %v661
    %v663 = vmul.f32 %v658, 1.442695
    %v664 = vpow.pop %v663
    %v665 = vadd.f32 %v660, 1.0
    %v666 = vadd.f32 %v662, 1.0
    %v667 = vadd.f32 %v664, 1.0
    %v668 = vrcp.pop %v665
    %v669 = vmul.f32 1.0, %v668
    %v670 = vrcp.pop %v666
    %v671 = vmul.f32 1.0, %v670
    %v672 = vrcp.pop %v667
    %v673 = vmul.f32 1.0, %v672
    %v674 = vtanh.pop %v655
    %v675 = vmul.f32 %v671, 0.0
    %v676 = vmul.f32 %v669, %v674
    %v677 = vadd.f32 %v675, %v676
    %v678 = vtanh.pop %v677
    %v679 = vmul.f32 %v673, %v678
    %680 = vst [vmem:[#allocation3] sm:$0xff] %v679
    %v681 = vld [vmem:[#allocation2 + $0x20] sm:$0xff]
    %v682 = vld [vmem:[#allocation2 + $0x28] sm:$0xff]
    %v683 = vld [vmem:[#allocation2 + $0x30] sm:$0xff]
    %v684 = vld [vmem:[#allocation2 + $0x38] sm:$0xff]
    %v685 = vld [vmem:[#allocation9] sm:$0xff]
    %v686 = vld [vmem:[#allocation9 + $0x8] sm:$0xff]
    %v687 = vld [vmem:[#allocation9 + $0x10] sm:$0xff]
    %v688 = vld [vmem:[#allocation9 + $0x18] sm:$0xff]
    %v689 = vld [vmem:[#allocation9 + $0x20] sm:$0xff]
    %v690 = vld [vmem:[#allocation9 + $0x28] sm:$0xff]
    %v691 = vld [vmem:[#allocation9 + $0x30] sm:$0xff]
    %v692 = vld [vmem:[#allocation9 + $0x38] sm:$0xff]
    %v693 = vld [vmem:[#allocation9 + $0x40] sm:$0xff]
    %v694 = vld [vmem:[#allocation9 + $0x48] sm:$0xff]
    %v695 = vld [vmem:[#allocation9 + $0x50] sm:$0xff]
    %v696 = vld [vmem:[#allocation9 + $0x58] sm:$0xff]
    %v697 = vld [vmem:[#allocation9 + $0x60] sm:$0xff]
    %v698 = vld [vmem:[#allocation9 + $0x68] sm:$0xff]
    %v699 = vld [vmem:[#allocation9 + $0x70] sm:$0xff]
    %v700 = vld [vmem:[#allocation9 + $0x78] sm:$0xff]
    %v701 = vld [vmem:[#allocation9 + $0x80] sm:$0xff]
    %v702 = vld [vmem:[#allocation9 + $0x88] sm:$0xff]
    %v703 = vld [vmem:[#allocation9 + $0x90] sm:$0xff]
    %v704 = vld [vmem:[#allocation9 + $0x98] sm:$0xff]
    %v705 = vld [vmem:[#allocation9 + $0xa0] sm:$0xff]
    %v706 = vld [vmem:[#allocation9 + $0xa8] sm:$0xff]
    %v707 = vld [vmem:[#allocation9 + $0xb0] sm:$0xff]
    %v708 = vld [vmem:[#allocation9 + $0xb8] sm:$0xff]
    %v709 = vld [vmem:[#allocation9 + $0xc0] sm:$0xff]
    %v710 = vld [vmem:[#allocation9 + $0xc8] sm:$0xff]
    %v711 = vld [vmem:[#allocation9 + $0xd0] sm:$0xff]
    %v712 = vld [vmem:[#allocation9 + $0xd8] sm:$0xff]
    %v713 = vld [vmem:[#allocation9 + $0xe0] sm:$0xff]
    %v714 = vld [vmem:[#allocation9 + $0xe8] sm:$0xff]
    %v715 = vld [vmem:[#allocation9 + $0xf0] sm:$0xff]
    %v716 = vld [vmem:[#allocation9 + $0xf8] sm:$0xff]
    %v717 = vld [vmem:[#allocation9 + $0x100] sm:$0xff]
    %v718 = vld [vmem:[#allocation9 + $0x108] sm:$0xff]
    %v719 = vld [vmem:[#allocation9 + $0x110] sm:$0xff]
    %v720 = vld [vmem:[#allocation9 + $0x118] sm:$0xff]
    %v721 = vld [vmem:[#allocation9 + $0x120] sm:$0xff]
    %v722 = vld [vmem:[#allocation9 + $0x128] sm:$0xff]
    %v723 = vld [vmem:[#allocation9 + $0x130] sm:$0xff]
    %v724 = vld [vmem:[#allocation9 + $0x138] sm:$0xff]
    %v725 = vld [vmem:[#allocation9 + $0x140] sm:$0xff]
    %v726 = vld [vmem:[#allocation9 + $0x148] sm:$0xff]
    %v727 = vld [vmem:[#allocation9 + $0x150] sm:$0xff]
    %v728 = vld [vmem:[#allocation9 + $0x158] sm:$0xff]
    %v729 = vld [vmem:[#allocation9 + $0x160] sm:$0xff]
    %v730 = vld [vmem:[#allocation9 + $0x168] sm:$0xff]
    %v731 = vld [vmem:[#allocation9 + $0x170] sm:$0xff]
    %v732 = vld [vmem:[#allocation9 + $0x178] sm:$0xff]
    %v733 = vld [vmem:[#allocation9 + $0x180] sm:$0xff]
    %v734 = vld [vmem:[#allocation9 + $0x188] sm:$0xff]
    %v735 = vld [vmem:[#allocation9 + $0x190] sm:$0xff]
    %v736 = vld [vmem:[#allocation9 + $0x198] sm:$0xff]
    %v737 = vld [vmem:[#allocation9 + $0x1a0] sm:$0xff]
    %v738 = vld [vmem:[#allocation9 + $0x1a8] sm:$0xff]
    %v739 = vld [vmem:[#allocation9 + $0x1b0] sm:$0xff]
    %v740 = vld [vmem:[#allocation9 + $0x1b8] sm:$0xff]
    %v741 = vld [vmem:[#allocation9 + $0x1c0] sm:$0xff]
    %v742 = vld [vmem:[#allocation9 + $0x1c8] sm:$0xff]
    %v743 = vld [vmem:[#allocation9 + $0x1d0] sm:$0xff]
    %v744 = vld [vmem:[#allocation9 + $0x1d8] sm:$0xff]
    %v745 = vld [vmem:[#allocation9 + $0x1e0] sm:$0xff]
    %v746 = vld [vmem:[#allocation9 + $0x1e8] sm:$0xff]
    %v747 = vld [vmem:[#allocation9 + $0x1f0] sm:$0xff]
    %v748 = vld [vmem:[#allocation9 + $0x1f8] sm:$0xff]
    %749 = vmatprep.subr.mxu0 %v686
    %750 = vmatpush1.msra.mxu0 %v685
    %751 = vmatprep.subr.mxu0 %v690
    %752 = vmatpush1.msra.mxu0 %v689
    %753 = vmatprep.subr.mxu0 %v694
    %754 = vmatpush1.msra.mxu0 %v693
    %755 = vmatprep.subr.mxu0 %v698
    %756 = vmatpush1.msra.mxu0 %v697
    %757 = vmatprep.subr.mxu0 %v702
    %758 = vmatpush1.msra.mxu0 %v701
    %759 = vmatprep.subr.mxu0 %v706
    %760 = vmatpush1.msra.mxu0 %v705
    %761 = vmatprep.subr.mxu0 %v710
    %762 = vmatpush1.msra.mxu0 %v709
    %763 = vmatprep.subr.mxu0 %v714
    %764 = vmatpush1.msra.mxu0 %v713
    %765 = vmatprep.subr.mxu0 %v718
    %766 = vmatpush1.msra.mxu0 %v717
    %767 = vmatprep.subr.mxu0 %v722
    %768 = vmatpush1.msra.mxu0 %v721
    %769 = vmatprep.subr.mxu0 %v726
    %770 = vmatpush1.msra.mxu0 %v725
    %771 = vmatprep.subr.mxu0 %v730
    %772 = vmatpush1.msra.mxu0 %v729
    %773 = vmatprep.subr.mxu0 %v734
    %774 = vmatpush1.msra.mxu0 %v733
    %775 = vmatprep.subr.mxu0 %v738
    %776 = vmatpush1.msra.mxu0 %v737
    %777 = vmatprep.subr.mxu0 %v742
    %778 = vmatpush1.msra.mxu0 %v741
    %779 = vmatprep.subr.mxu0 %v746
    %780 = vmatpush1.msra.mxu0 %v745
    %781 = vmatprep.subr.mxu0 0.0
    %782 = vmatpush1.msra.mxu0 0.0
    %783 = vmatprep.subr.mxu0 0.0
    %784 = vmatpush1.msra.mxu0 0.0
    %785 = vmatprep.subr.mxu0 0.0
    %786 = vmatpush1.msra.mxu0 0.0
    %787 = vmatprep.subr.mxu0 0.0
    %788 = vmatpush1.msra.mxu0 0.0
    %789 = vmatprep.subr.mxu0 0.0
    %790 = vmatpush1.msra.mxu0 0.0
    %791 = vmatprep.subr.mxu0 0.0
    %792 = vmatpush1.msra.mxu0 0.0
    %793 = vmatprep.subr.mxu0 0.0
    %794 = vmatpush1.msra.mxu0 0.0
    %795 = vmatprep.subr.mxu0 0.0
    %796 = vmatpush1.msra.mxu0 0.0
    %797 = vmatprep.subr.mxu0 0.0
    %798 = vmatpush1.msra.mxu0 0.0
    %799 = vmatprep.subr.mxu0 0.0
    %800 = vmatpush1.msra.mxu0 0.0
    %801 = vmatprep.subr.mxu0 0.0
    %802 = vmatpush1.msra.mxu0 0.0
    %803 = vmatprep.subr.mxu0 0.0
    %804 = vmatpush1.msra.mxu0 0.0
    %805 = vmatprep.subr.mxu0 0.0
    %806 = vmatpush1.msra.mxu0 0.0
    %807 = vmatprep.subr.mxu0 0.0
    %808 = vmatpush1.msra.mxu0 0.0
    %809 = vmatprep.subr.mxu0 0.0
    %810 = vmatpush1.msra.mxu0 0.0
    %811 = vmatprep.subr.mxu0 0.0
    %812 = vmatpush1.msra.mxu0 0.0
    %813 = vmatprep.mubr.f32.mxu0 0.0
    %814 = vmatmul.mubr.f32.gmra.mrb[0].mxu0 %v679
    %v815 = vpop.f32.mrb[0].mxu0
    %v816 = vadd.f32 0.0, %v815
    %v817 = vpop.f32.mrb[0].mxu0
    %v818 = vadd.f32 0.0, %v817
    %819 = vdwg.mxu0
    %820 = vmatprep.subr.mxu0 %v688
    %821 = vmatpush1.msra.mxu0 %v687
    %822 = vmatprep.subr.mxu0 %v692
    %823 = vmatpush1.msra.mxu0 %v691
    %824 = vmatprep.subr.mxu0 %v696
    %825 = vmatpush1.msra.mxu0 %v695
    %826 = vmatprep.subr.mxu0 %v700
    %827 = vmatpush1.msra.mxu0 %v699
    %828 = vmatprep.subr.mxu0 %v704
    %829 = vmatpush1.msra.mxu0 %v703
    %830 = vmatprep.subr.mxu0 %v708
    %831 = vmatpush1.msra.mxu0 %v707
    %832 = vmatprep.subr.mxu0 %v712
    %833 = vmatpush1.msra.mxu0 %v711
    %834 = vmatprep.subr.mxu0 %v716
    %835 = vmatpush1.msra.mxu0 %v715
    %836 = vmatprep.subr.mxu0 %v720
    %837 = vmatpush1.msra.mxu0 %v719
    %838 = vmatprep.subr.mxu0 %v724
    %839 = vmatpush1.msra.mxu0 %v723
    %840 = vmatprep.subr.mxu0 %v728
    %841 = vmatpush1.msra.mxu0 %v727
    %842 = vmatprep.subr.mxu0 %v732
    %843 = vmatpush1.msra.mxu0 %v731
    %844 = vmatprep.subr.mxu0 %v736
    %845 = vmatpush1.msra.mxu0 %v735
    %846 = vmatprep.subr.mxu0 %v740
    %847 = vmatpush1.msra.mxu0 %v739
    %848 = vmatprep.subr.mxu0 %v744
    %849 = vmatpush1.msra.mxu0 %v743
    %850 = vmatprep.subr.mxu0 %v748
    %851 = vmatpush1.msra.mxu0 %v747
    %852 = vmatprep.subr.mxu0 0.0
    %853 = vmatpush1.msra.mxu0 0.0
    %854 = vmatprep.subr.mxu0 0.0
    %855 = vmatpush1.msra.mxu0 0.0
    %856 = vmatprep.subr.mxu0 0.0
    %857 = vmatpush1.msra.mxu0 0.0
    %858 = vmatprep.subr.mxu0 0.0
    %859 = vmatpush1.msra.mxu0 0.0
    %860 = vmatprep.subr.mxu0 0.0
    %861 = vmatpush1.msra.mxu0 0.0
    %862 = vmatprep.subr.mxu0 0.0
    %863 = vmatpush1.msra.mxu0 0.0
    %864 = vmatprep.subr.mxu0 0.0
    %865 = vmatpush1.msra.mxu0 0.0
    %866 = vmatprep.subr.mxu0 0.0
    %867 = vmatpush1.msra.mxu0 0.0
    %868 = vmatprep.subr.mxu0 0.0
    %869 = vmatpush1.msra.mxu0 0.0
    %870 = vmatprep.subr.mxu0 0.0
    %871 = vmatpush1.msra.mxu0 0.0
    %872 = vmatprep.subr.mxu0 0.0
    %873 = vmatpush1.msra.mxu0 0.0
    %874 = vmatprep.subr.mxu0 0.0
    %875 = vmatpush1.msra.mxu0 0.0
    %876 = vmatprep.subr.mxu0 0.0
    %877 = vmatpush1.msra.mxu0 0.0
    %878 = vmatprep.subr.mxu0 0.0
    %879 = vmatpush1.msra.mxu0 0.0
    %880 = vmatprep.subr.mxu0 0.0
    %881 = vmatpush1.msra.mxu0 0.0
    %882 = vmatprep.subr.mxu0 0.0
    %883 = vmatpush1.msra.mxu0 0.0
    %884 = vmatprep.mubr.f32.mxu0 0.0
    %885 = vmatmul.mubr.f32.gmra.mrb[0].mxu0 %v679
    %v886 = vpop.f32.mrb[0].mxu0
    %v887 = vadd.f32 0.0, %v886
    %v888 = vpop.f32.mrb[0].mxu0
    %v889 = vadd.f32 0.0, %v888
    %890 = vdwg.mxu0
    %v891 = vadd.f32 %v681, %v816
    %v892 = vadd.f32 %v682, %v818
    %v893 = vadd.f32 %v683, %v887
    %v894 = vadd.f32 %v684, %v889
    %v895 = vxor.u32 %v891, 2147483648
    %v896 = vxor.u32 %v892, 2147483648
    %v897 = vxor.u32 %v893, 2147483648
    %v898 = vmul.f32 %v895, 1.442695
    %v899 = vpow.pop %v898
    %v900 = vmul.f32 %v896, 1.442695
    %v901 = vpow.pop %v900
    %v902 = vmul.f32 %v897, 1.442695
    %v903 = vpow.pop %v902
    %v904 = vadd.f32 %v899, 1.0
    %v905 = vadd.f32 %v901, 1.0
    %v906 = vadd.f32 %v903, 1.0
    %v907 = vrcp.pop %v904
    %v908 = vmul.f32 1.0, %v907
    %v909 = vrcp.pop %v905
    %v910 = vmul.f32 1.0, %v909
    %v911 = vrcp.pop %v906
    %v912 = vmul.f32 1.0, %v911
    %v913 = vtanh.pop %v894
    %v914 = vmul.f32 %v910, %v677
    %v915 = vmul.f32 %v908, %v913
    %v916 = vadd.f32 %v914, %v915
    %v917 = vtanh.pop %v916
    %v918 = vmul.f32 %v912, %v917
    %919 = vst [vmem:[#allocation3 + $0x8] sm:$0xff] %v918
    %v920 = vld [vmem:[#allocation2 + $0x40] sm:$0xff]
    %v921 = vld [vmem:[#allocation2 + $0x48] sm:$0xff]
    %v922 = vld [vmem:[#allocation2 + $0x50] sm:$0xff]
    %v923 = vld [vmem:[#allocation2 + $0x58] sm:$0xff]
    %v924 = vld [vmem:[#allocation9] sm:$0xff]
    %v925 = vld [vmem:[#allocation9 + $0x8] sm:$0xff]
    %v926 = vld [vmem:[#allocation9 + $0x10] sm:$0xff]
    %v927 = vld [vmem:[#allocation9 + $0x18] sm:$0xff]
    %v928 = vld [vmem:[#allocation9 + $0x20] sm:$0xff]
    %v929 = vld [vmem:[#allocation9 + $0x28] sm:$0xff]
    %v930 = vld [vmem:[#allocation9 + $0x30] sm:$0xff]
    %v931 = vld [vmem:[#allocation9 + $0x38] sm:$0xff]
    %v932 = vld [vmem:[#allocation9 + $0x40] sm:$0xff]
    %v933 = vld [vmem:[#allocation9 + $0x48] sm:$0xff]
    %v934 = vld [vmem:[#allocation9 + $0x50] sm:$0xff]
    %v935 = vld [vmem:[#allocation9 + $0x58] sm:$0xff]
    %v936 = vld [vmem:[#allocation9 + $0x60] sm:$0xff]
    %v937 = vld [vmem:[#allocation9 + $0x68] sm:$0xff]
    %v938 = vld [vmem:[#allocation9 + $0x70] sm:$0xff]
    %v939 = vld [vmem:[#allocation9 + $0x78] sm:$0xff]
    %v940 = vld [vmem:[#allocation9 + $0x80] sm:$0xff]
    %v941 = vld [vmem:[#allocation9 + $0x88] sm:$0xff]
    %v942 = vld [vmem:[#allocation9 + $0x90] sm:$0xff]
    %v943 = vld [vmem:[#allocation9 + $0x98] sm:$0xff]
    %v944 = vld [vmem:[#allocation9 + $0xa0] sm:$0xff]
    %v945 = vld [vmem:[#allocation9 + $0xa8] sm:$0xff]
    %v946 = vld [vmem:[#allocation9 + $0xb0] sm:$0xff]
    %v947 = vld [vmem:[#allocation9 + $0xb8] sm:$0xff]
    %v948 = vld [vmem:[#allocation9 + $0xc0] sm:$0xff]
    %v949 = vld [vmem:[#allocation9 + $0xc8] sm:$0xff]
    %v950 = vld [vmem:[#allocation9 + $0xd0] sm:$0xff]
    %v951 = vld [vmem:[#allocation9 + $0xd8] sm:$0xff]
    %v952 = vld [vmem:[#allocation9 + $0xe0] sm:$0xff]
    %v953 = vld [vmem:[#allocation9 + $0xe8] sm:$0xff]
    %v954 = vld [vmem:[#allocation9 + $0xf0] sm:$0xff]
    %v955 = vld [vmem:[#allocation9 + $0xf8] sm:$0xff]
    %v956 = vld [vmem:[#allocation9 + $0x100] sm:$0xff]
    %v957 = vld [vmem:[#allocation9 + $0x108] sm:$0xff]
    %v958 = vld [vmem:[#allocation9 + $0x110] sm:$0xff]
    %v959 = vld [vmem:[#allocation9 + $0x118] sm:$0xff]
    %v960 = vld [vmem:[#allocation9 + $0x120] sm:$0xff]
    %v961 = vld [vmem:[#allocation9 + $0x128] sm:$0xff]
    %v962 = vld [vmem:[#allocation9 + $0x130] sm:$0xff]
    %v963 = vld [vmem:[#allocation9 + $0x138] sm:$0xff]
    %v964 = vld [vmem:[#allocation9 + $0x140] sm:$0xff]
    %v965 = vld [vmem:[#allocation9 + $0x148] sm:$0xff]
    %v966 = vld [vmem:[#allocation9 + $0x150] sm:$0xff]
    %v967 = vld [vmem:[#allocation9 + $0x158] sm:$0xff]
    %v968 = vld [vmem:[#allocation9 + $0x160] sm:$0xff]
    %v969 = vld [vmem:[#allocation9 + $0x168] sm:$0xff]
    %v970 = vld [vmem:[#allocation9 + $0x170] sm:$0xff]
    %v971 = vld [vmem:[#allocation9 + $0x178] sm:$0xff]
    %v972 = vld [vmem:[#allocation9 + $0x180] sm:$0xff]
    %v973 = vld [vmem:[#allocation9 + $0x188] sm:$0xff]
    %v974 = vld [vmem:[#allocation9 + $0x190] sm:$0xff]
    %v975 = vld [vmem:[#allocation9 + $0x198] sm:$0xff]
    %v976 = vld [vmem:[#allocation9 + $0x1a0] sm:$0xff]
    %v977 = vld [vmem:[#allocation9 + $0x1a8] sm:$0xff]
    %v978 = vld [vmem:[#allocation9 + $0x1b0] sm:$0xff]
    %v979 = vld [vmem:[#allocation9 + $0x1b8] sm:$0xff]
    %v980 = vld [vmem:[#allocation9 + $0x1c0] sm:$0xff]
    %v981 = vld [vmem:[#allocation9 + $0x1c8] sm:$0xff]
    %v982 = vld [vmem:[#allocation9 + $0x1d0] sm:$0xff]
    %v983 = vld [vmem:[#allocation9 + $0x1d8] sm:$0xff]
    %v984 = vld [vmem:[#allocation9 + $0x1e0] sm:$0xff]
    %v985 = vld [vmem:[#allocation9 + $0x1e8] sm:$0xff]
    %v986 = vld [vmem:[#allocation9 + $0x1f0] sm:$0xff]
    %v987 = vld [vmem:[#allocation9 + $0x1f8] sm:$0xff]
    %988 = vmatprep.subr.mxu0 %v925
    %989 = vmatpush1.msra.mxu0 %v924
    %990 = vmatprep.subr.mxu0 %v929
    %991 = vmatpush1.msra.mxu0 %v928
    %992 = vmatprep.subr.mxu0 %v933
    %993 = vmatpush1.msra.mxu0 %v932
    %994 = vmatprep.subr.mxu0 %v937
    %995 = vmatpush1.msra.mxu0 %v936
    %996 = vmatprep.subr.mxu0 %v941
    %997 = vmatpush1.msra.mxu0 %v940
    %998 = vmatprep.subr.mxu0 %v945
    %999 = vmatpush1.msra.mxu0 %v944
    %1000 = vmatprep.subr.mxu0 %v949
    %1001 = vmatpush1.msra.mxu0 %v948
    %1002 = vmatprep.subr.mxu0 %v953
    %1003 = vmatpush1.msra.mxu0 %v952
    %1004 = vmatprep.subr.mxu0 %v957
    %1005 = vmatpush1.msra.mxu0 %v956
    %1006 = vmatprep.subr.mxu0 %v961
    %1007 = vmatpush1.msra.mxu0 %v960
    %1008 = vmatprep.subr.mxu0 %v965
    %1009 = vmatpush1.msra.mxu0 %v964
    %1010 = vmatprep.subr.mxu0 %v969
    %1011 = vmatpush1.msra.mxu0 %v968
    %1012 = vmatprep.subr.mxu0 %v973
    %1013 = vmatpush1.msra.mxu0 %v972
    %1014 = vmatprep.subr.mxu0 %v977
    %1015 = vmatpush1.msra.mxu0 %v976
    %1016 = vmatprep.subr.mxu0 %v981
    %1017 = vmatpush1.msra.mxu0 %v980
    %1018 = vmatprep.subr.mxu0 %v985
    %1019 = vmatpush1.msra.mxu0 %v984
    %1020 = vmatprep.subr.mxu0 0.0
    %1021 = vmatpush1.msra.mxu0 0.0
    %1022 = vmatprep.subr.mxu0 0.0
    %1023 = vmatpush1.msra.mxu0 0.0
    %1024 = vmatprep.subr.mxu0 0.0
    %1025 = vmatpush1.msra.mxu0 0.0
    %1026 = vmatprep.subr.mxu0 0.0
    %1027 = vmatpush1.msra.mxu0 0.0
    %1028 = vmatprep.subr.mxu0 0.0
    %1029 = vmatpush1.msra.mxu0 0.0
    %1030 = vmatprep.subr.mxu0 0.0
    %1031 = vmatpush1.msra.mxu0 0.0
    %1032 = vmatprep.subr.mxu0 0.0
    %1033 = vmatpush1.msra.mxu0 0.0
    %1034 = vmatprep.subr.mxu0 0.0
    %1035 = vmatpush1.msra.mxu0 0.0
    %1036 = vmatprep.subr.mxu0 0.0
    %1037 = vmatpush1.msra.mxu0 0.0
    %1038 = vmatprep.subr.mxu0 0.0
    %1039 = vmatpush1.msra.mxu0 0.0
    %1040 = vmatprep.subr.mxu0 0.0
    %1041 = vmatpush1.msra.mxu0 0.0
    %1042 = vmatprep.subr.mxu0 0.0
    %1043 = vmatpush1.msra.mxu0 0.0
    %1044 = vmatprep.subr.mxu0 0.0
    %1045 = vmatpush1.msra.mxu0 0.0
    %1046 = vmatprep.subr.mxu0 0.0
    %1047 = vmatpush1.msra.mxu0 0.0
    %1048 = vmatprep.subr.mxu0 0.0
    %1049 = vmatpush1.msra.mxu0 0.0
    %1050 = vmatprep.subr.mxu0 0.0
    %1051 = vmatpush1.msra.mxu0 0.0
    %1052 = vmatprep.mubr.f32.mxu0 0.0
    %1053 = vmatmul.mubr.f32.gmra.mrb[0].mxu0 %v918
    %v1054 = vpop.f32.mrb[0].mxu0
    %v1055 = vadd.f32 0.0, %v1054
    %v1056 = vpop.f32.mrb[0].mxu0
    %v1057 = vadd.f32 0.0, %v1056
    %1058 = vdwg.mxu0
    %1059 = vmatprep.subr.mxu0 %v927
    %1060 = vmatpush1.msra.mxu0 %v926
    %1061 = vmatprep.subr.mxu0 %v931
    %1062 = vmatpush1.msra.mxu0 %v930
    %1063 = vmatprep.subr.mxu0 %v935
    %1064 = vmatpush1.msra.mxu0 %v934
    %1065 = vmatprep.subr.mxu0 %v939
    %1066 = vmatpush1.msra.mxu0 %v938
    %1067 = vmatprep.subr.mxu0 %v943
    %1068 = vmatpush1.msra.mxu0 %v942
    %1069 = vmatprep.subr.mxu0 %v947
    %1070 = vmatpush1.msra.mxu0 %v946
    %1071 = vmatprep.subr.mxu0 %v951
    %1072 = vmatpush1.msra.mxu0 %v950
    %1073 = vmatprep.subr.mxu0 %v955
    %1074 = vmatpush1.msra.mxu0 %v954
    %1075 = vmatprep.subr.mxu0 %v959
    %1076 = vmatpush1.msra.mxu0 %v958
    %1077 = vmatprep.subr.mxu0 %v963
    %1078 = vmatpush1.msra.mxu0 %v962
    %1079 = vmatprep.subr.mxu0 %v967
    %1080 = vmatpush1.msra.mxu0 %v966
    %1081 = vmatprep.subr.mxu0 %v971
    %1082 = vmatpush1.msra.mxu0 %v970
    %1083 = vmatprep.subr.mxu0 %v975
    %1084 = vmatpush1.msra.mxu0 %v974
    %1085 = vmatprep.subr.mxu0 %v979
    %1086 = vmatpush1.msra.mxu0 %v978
    %1087 = vmatprep.subr.mxu0 %v983
    %1088 = vmatpush1.msra.mxu0 %v982
    %1089 = vmatprep.subr.mxu0 %v987
    %1090 = vmatpush1.msra.mxu0 %v986
    %1091 = vmatprep.subr.mxu0 0.0
    %1092 = vmatpush1.msra.mxu0 0.0
    %1093 = vmatprep.subr.mxu0 0.0
    %1094 = vmatpush1.msra.mxu0 0.0
    %1095 = vmatprep.subr.mxu0 0.0
    %1096 = vmatpush1.msra.mxu0 0.0
    %1097 = vmatprep.subr.mxu0 0.0
    %1098 = vmatpush1.msra.mxu0 0.0
    %1099 = vmatprep.subr.mxu0 0.0
    %1100 = vmatpush1.msra.mxu0 0.0
    %1101 = vmatprep.subr.mxu0 0.0
    %1102 = vmatpush1.msra.mxu0 0.0
    %1103 = vmatprep.subr.mxu0 0.0
    %1104 = vmatpush1.msra.mxu0 0.0
    %1105 = vmatprep.subr.mxu0 0.0
    %1106 = vmatpush1.msra.mxu0 0.0
    %1107 = vmatprep.subr.mxu0 0.0
    %1108 = vmatpush1.msra.mxu0 0.0
    %1109 = vmatprep.subr.mxu0 0.0
    %1110 = vmatpush1.msra.mxu0 0.0
    %1111 = vmatprep.subr.mxu0 0.0
    %1112 = vmatpush1.msra.mxu0 0.0
    %1113 = vmatprep.subr.mxu0 0.0
    %1114 = vmatpush1.msra.mxu0 0.0
    %1115 = vmatprep.subr.mxu0 0.0
    %1116 = vmatpush1.msra.mxu0 0.0
    %1117 = vmatprep.subr.mxu0 0.0
    %1118 = vmatpush1.msra.mxu0 0.0
    %1119 = vmatprep.subr.mxu0 0.0
    %1120 = vmatpush1.msra.mxu0 0.0
    %1121 = vmatprep.subr.mxu0 0.0
    %1122 = vmatpush1.msra.mxu0 0.0
    %1123 = vmatprep.mubr.f32.mxu0 0.0
    %1124 = vmatmul.mubr.f32.gmra.mrb[0].mxu0 %v918
    %v1125 = vpop.f32.mrb[0].mxu0
    %v1126 = vadd.f32 0.0, %v1125
    %v1127 = vpop.f32.mrb[0].mxu0
    %v1128 = vadd.f32 0.0, %v1127
    %1129 = vdwg.mxu0
    %v1130 = vadd.f32 %v920, %v1055
    %v1131 = vadd.f32 %v921, %v1057
    %v1132 = vadd.f32 %v922, %v1126
    %v1133 = vadd.f32 %v923, %v1128
    %v1134 = vxor.u32 %v1130, 2147483648
    %v1135 = vxor.u32 %v1131, 2147483648
    %v1136 = vxor.u32 %v1132, 2147483648
    %v1137 = vmul.f32 %v1134, 1.442695
    %v1138 = vpow.pop %v1137
    %v1139 = vmul.f32 %v1135, 1.442695
    %v1140 = vpow.pop %v1139
    %v1141 = vmul.f32 %v1136, 1.442695
    %v1142 = vpow.pop %v1141
    %v1143 = vadd.f32 %v1138, 1.0
    %v1144 = vadd.f32 %v1140, 1.0
    %v1145 = vadd.f32 %v1142, 1.0
    %v1146 = vrcp.pop %v1143
    %v1147 = vmul.f32 1.0, %v1146
    %v1148 = vrcp.pop %v1144
    %v1149 = vmul.f32 1.0, %v1148
    %v1150 = vrcp.pop %v1145
    %v1151 = vmul.f32 1.0, %v1150
    %v1152 = vtanh.pop %v1133
    %v1153 = vmul.f32 %v1149, %v916
    %v1154 = vmul.f32 %v1147, %v1152
    %v1155 = vadd.f32 %v1153, %v1154
    %v1156 = vtanh.pop %v1155
    %v1157 = vmul.f32 %v1151, %v1156
    %1158 = vst [vmem:[#allocation3 + $0x10] sm:$0xff] %v1157
    %v1159 = vld [vmem:[#allocation2 + $0x60] sm:$0xff]
    %v1160 = vld [vmem:[#allocation2 + $0x68] sm:$0xff]
    %v1161 = vld [vmem:[#allocation2 + $0x70] sm:$0xff]
    %v1162 = vld [vmem:[#allocation2 + $0x78] sm:$0xff]
    %v1163 = vld [vmem:[#allocation9] sm:$0xff]
    %v1164 = vld [vmem:[#allocation9 + $0x8] sm:$0xff]
    %v1165 = vld [vmem:[#allocation9 + $0x10] sm:$0xff]
    %v1166 = vld [vmem:[#allocation9 + $0x18] sm:$0xff]
    %v1167 = vld [vmem:[#allocation9 + $0x20] sm:$0xff]
    %v1168 = vld [vmem:[#allocation9 + $0x28] sm:$0xff]
    %v1169 = vld [vmem:[#allocation9 + $0x30] sm:$0xff]
    %v1170 = vld [vmem:[#allocation9 + $0x38] sm:$0xff]
    %v1171 = vld [vmem:[#allocation9 + $0x40] sm:$0xff]
    %v1172 = vld [vmem:[#allocation9 + $0x48] sm:$0xff]
    %v1173 = vld [vmem:[#allocation9 + $0x50] sm:$0xff]
    %v1174 = vld [vmem:[#allocation9 + $0x58] sm:$0xff]
    %v1175 = vld [vmem:[#allocation9 + $0x60] sm:$0xff]
    %v1176 = vld [vmem:[#allocation9 + $0x68] sm:$0xff]
    %v1177 = vld [vmem:[#allocation9 + $0x70] sm:$0xff]
    %v1178 = vld [vmem:[#allocation9 + $0x78] sm:$0xff]
    %v1179 = vld [vmem:[#allocation9 + $0x80] sm:$0xff]
    %v1180 = vld [vmem:[#allocation9 + $0x88] sm:$0xff]
    %v1181 = vld [vmem:[#allocation9 + $0x90] sm:$0xff]
    %v1182 = vld [vmem:[#allocation9 + $0x98] sm:$0xff]
    %v1183 = vld [vmem:[#allocation9 + $0xa0] sm:$0xff]
    %v1184 = vld [vmem:[#allocation9 + $0xa8] sm:$0xff]
    %v1185 = vld [vmem:[#allocation9 + $0xb0] sm:$0xff]
    %v1186 = vld [vmem:[#allocation9 + $0xb8] sm:$0xff]
    %v1187 = vld [vmem:[#allocation9 + $0xc0] sm:$0xff]
    %v1188 = vld [vmem:[#allocation9 + $0xc8] sm:$0xff]
    %v1189 = vld [vmem:[#allocation9 + $0xd0] sm:$0xff]
    %v1190 = vld [vmem:[#allocation9 + $0xd8] sm:$0xff]
    %v1191 = vld [vmem:[#allocation9 + $0xe0] sm:$0xff]
    %v1192 = vld [vmem:[#allocation9 + $0xe8] sm:$0xff]
    %v1193 = vld [vmem:[#allocation9 + $0xf0] sm:$0xff]
    %v1194 = vld [vmem:[#allocation9 + $0xf8] sm:$0xff]
    %v1195 = vld [vmem:[#allocation9 + $0x100] sm:$0xff]
    %v1196 = vld [vmem:[#allocation9 + $0x108] sm:$0xff]
    %v1197 = vld [vmem:[#allocation9 + $0x110] sm:$0xff]
    %v1198 = vld [vmem:[#allocation9 + $0x118] sm:$0xff]
    %v1199 = vld [vmem:[#allocation9 + $0x120] sm:$0xff]
    %v1200 = vld [vmem:[#allocation9 + $0x128] sm:$0xff]
    %v1201 = vld [vmem:[#allocation9 + $0x130] sm:$0xff]
    %v1202 = vld [vmem:[#allocation9 + $0x138] sm:$0xff]
    %v1203 = vld [vmem:[#allocation9 + $0x140] sm:$0xff]
    %v1204 = vld [vmem:[#allocation9 + $0x148] sm:$0xff]
    %v1205 = vld [vmem:[#allocation9 + $0x150] sm:$0xff]
    %v1206 = vld [vmem:[#allocation9 + $0x158] sm:$0xff]
    %v1207 = vld [vmem:[#allocation9 + $0x160] sm:$0xff]
    %v1208 = vld [vmem:[#allocation9 + $0x168] sm:$0xff]
    %v1209 = vld [vmem:[#allocation9 + $0x170] sm:$0xff]
    %v1210 = vld [vmem:[#allocation9 + $0x178] sm:$0xff]
    %v1211 = vld [vmem:[#allocation9 + $0x180] sm:$0xff]
    %v1212 = vld [vmem:[#allocation9 + $0x188] sm:$0xff]
    %v1213 = vld [vmem:[#allocation9 + $0x190] sm:$0xff]
    %v1214 = vld [vmem:[#allocation9 + $0x198] sm:$0xff]
    %v1215 = vld [vmem:[#allocation9 + $0x1a0] sm:$0xff]
    %v1216 = vld [vmem:[#allocation9 + $0x1a8] sm:$0xff]
    %v1217 = vld [vmem:[#allocation9 + $0x1b0] sm:$0xff]
    %v1218 = vld [vmem:[#allocation9 + $0x1b8] sm:$0xff]
    %v1219 = vld [vmem:[#allocation9 + $0x1c0] sm:$0xff]
    %v1220 = vld [vmem:[#allocation9 + $0x1c8] sm:$0xff]
    %v1221 = vld [vmem:[#allocation9 + $0x1d0] sm:$0xff]
    %v1222 = vld [vmem:[#allocation9 + $0x1d8] sm:$0xff]
    %v1223 = vld [vmem:[#allocation9 + $0x1e0] sm:$0xff]
    %v1224 = vld [vmem:[#allocation9 + $0x1e8] sm:$0xff]
    %v1225 = vld [vmem:[#allocation9 + $0x1f0] sm:$0xff]
    %v1226 = vld [vmem:[#allocation9 + $0x1f8] sm:$0xff]
    %1227 = vmatprep.subr.mxu0 %v1164
    %1228 = vmatpush1.msra.mxu0 %v1163
    %1229 = vmatprep.subr.mxu0 %v1168
    %1230 = vmatpush1.msra.mxu0 %v1167
    %1231 = vmatprep.subr.mxu0 %v1172
    %1232 = vmatpush1.msra.mxu0 %v1171
    %1233 = vmatprep.subr.mxu0 %v1176
    %1234 = vmatpush1.msra.mxu0 %v1175
    %1235 = vmatprep.subr.mxu0 %v1180
    %1236 = vmatpush1.msra.mxu0 %v1179
    %1237 = vmatprep.subr.mxu0 %v1184
    %1238 = vmatpush1.msra.mxu0 %v1183
    %1239 = vmatprep.subr.mxu0 %v1188
    %1240 = vmatpush1.msra.mxu0 %v1187
    %1241 = vmatprep.subr.mxu0 %v1192
    %1242 = vmatpush1.msra.mxu0 %v1191
    %1243 = vmatprep.subr.mxu0 %v1196
    %1244 = vmatpush1.msra.mxu0 %v1195
    %1245 = vmatprep.subr.mxu0 %v1200
    %1246 = vmatpush1.msra.mxu0 %v1199
    %1247 = vmatprep.subr.mxu0 %v1204
    %1248 = vmatpush1.msra.mxu0 %v1203
    %1249 = vmatprep.subr.mxu0 %v1208
    %1250 = vmatpush1.msra.mxu0 %v1207
    %1251 = vmatprep.subr.mxu0 %v1212
    %1252 = vmatpush1.msra.mxu0 %v1211
    %1253 = vmatprep.subr.mxu0 %v1216
    %1254 = vmatpush1.msra.mxu0 %v1215
    %1255 = vmatprep.subr.mxu0 %v1220
    %1256 = vmatpush1.msra.mxu0 %v1219
    %1257 = vmatprep.subr.mxu0 %v1224
    %1258 = vmatpush1.msra.mxu0 %v1223
    %1259 = vmatprep.subr.mxu0 0.0
    %1260 = vmatpush1.msra.mxu0 0.0
    %1261 = vmatprep.subr.mxu0 0.0
    %1262 = vmatpush1.msra.mxu0 0.0
    %1263 = vmatprep.subr.mxu0 0.0
    %1264 = vmatpush1.msra.mxu0 0.0
    %1265 = vmatprep.subr.mxu0 0.0
    %1266 = vmatpush1.msra.mxu0 0.0
    %1267 = vmatprep.subr.mxu0 0.0
    %1268 = vmatpush1.msra.mxu0 0.0
    %1269 = vmatprep.subr.mxu0 0.0
    %1270 = vmatpush1.msra.mxu0 0.0
    %1271 = vmatprep.subr.mxu0 0.0
    %1272 = vmatpush1.msra.mxu0 0.0
    %1273 = vmatprep.subr.mxu0 0.0
    %1274 = vmatpush1.msra.mxu0 0.0
    %1275 = vmatprep.subr.mxu0 0.0
    %1276 = vmatpush1.msra.mxu0 0.0
    %1277 = vmatprep.subr.mxu0 0.0
    %1278 = vmatpush1.msra.mxu0 0.0
    %1279 = vmatprep.subr.mxu0 0.0
    %1280 = vmatpush1.msra.mxu0 0.0
    %1281 = vmatprep.subr.mxu0 0.0
    %1282 = vmatpush1.msra.mxu0 0.0
    %1283 = vmatprep.subr.mxu0 0.0
    %1284 = vmatpush1.msra.mxu0 0.0
    %1285 = vmatprep.subr.mxu0 0.0
    %1286 = vmatpush1.msra.mxu0 0.0
    %1287 = vmatprep.subr.mxu0 0.0
    %1288 = vmatpush1.msra.mxu0 0.0
    %1289 = vmatprep.subr.mxu0 0.0
    %1290 = vmatpush1.msra.mxu0 0.0
    %1291 = vmatprep.mubr.f32.mxu0 0.0
    %1292 = vmatmul.mubr.f32.gmra.mrb[0].mxu0 %v1157
    %v1293 = vpop.f32.mrb[0].mxu0
    %v1294 = vadd.f32 0.0, %v1293
    %v1295 = vpop.f32.mrb[0].mxu0
    %v1296 = vadd.f32 0.0, %v1295
    %1297 = vdwg.mxu0
    %1298 = vmatprep.subr.mxu0 %v1166
    %1299 = vmatpush1.msra.mxu0 %v1165
    %1300 = vmatprep.subr.mxu0 %v1170
    %1301 = vmatpush1.msra.mxu0 %v1169
    %1302 = vmatprep.subr.mxu0 %v1174
    %1303 = vmatpush1.msra.mxu0 %v1173
    %1304 = vmatprep.subr.mxu0 %v1178
    %1305 = vmatpush1.msra.mxu0 %v1177
    %1306 = vmatprep.subr.mxu0 %v1182
    %1307 = vmatpush1.msra.mxu0 %v1181
    %1308 = vmatprep.subr.mxu0 %v1186
    %1309 = vmatpush1.msra.mxu0 %v1185
    %1310 = vmatprep.subr.mxu0 %v1190
    %1311 = vmatpush1.msra.mxu0 %v1189
    %1312 = vmatprep.subr.mxu0 %v1194
    %1313 = vmatpush1.msra.mxu0 %v1193
    %1314 = vmatprep.subr.mxu0 %v1198
    %1315 = vmatpush1.msra.mxu0 %v1197
    %1316 = vmatprep.subr.mxu0 %v1202
    %1317 = vmatpush1.msra.mxu0 %v1201
    %1318 = vmatprep.subr.mxu0 %v1206
    %1319 = vmatpush1.msra.mxu0 %v1205
    %1320 = vmatprep.subr.mxu0 %v1210
    %1321 = vmatpush1.msra.mxu0 %v1209
    %1322 = vmatprep.subr.mxu0 %v1214
    %1323 = vmatpush1.msra.mxu0 %v1213
    %1324 = vmatprep.subr.mxu0 %v1218
    %1325 = vmatpush1.msra.mxu0 %v1217
    %1326 = vmatprep.subr.mxu0 %v1222
    %1327 = vmatpush1.msra.mxu0 %v1221
    %1328 = vmatprep.subr.mxu0 %v1226
    %1329 = vmatpush1.msra.mxu0 %v1225
    %1330 = vmatprep.subr.mxu0 0.0
    %1331 = vmatpush1.msra.mxu0 0.0
    %1332 = vmatprep.subr.mxu0 0.0
    %1333 = vmatpush1.msra.mxu0 0.0
    %1334 = vmatprep.subr.mxu0 0.0
    %1335 = vmatpush1.msra.mxu0 0.0
    %1336 = vmatprep.subr.mxu0 0.0
    %1337 = vmatpush1.msra.mxu0 0.0
    %1338 = vmatprep.subr.mxu0 0.0
    %1339 = vmatpush1.msra.mxu0 0.0
    %1340 = vmatprep.subr.mxu0 0.0
    %1341 = vmatpush1.msra.mxu0 0.0
    %1342 = vmatprep.subr.mxu0 0.0
    %1343 = vmatpush1.msra.mxu0 0.0
    %1344 = vmatprep.subr.mxu0 0.0
    %1345 = vmatpush1.msra.mxu0 0.0
    %1346 = vmatprep.subr.mxu0 0.0
    %1347 = vmatpush1.msra.mxu0 0.0
    %1348 = vmatprep.subr.mxu0 0.0
    %1349 = vmatpush1.msra.mxu0 0.0
    %1350 = vmatprep.subr.mxu0 0.0
    %1351 = vmatpush1.msra.mxu0 0.0
    %1352 = vmatprep.subr.mxu0 0.0
    %1353 = vmatpush1.msra.mxu0 0.0
    %1354 = vmatprep.subr.mxu0 0.0
    %1355 = vmatpush1.msra.mxu0 0.0
    %1356 = vmatprep.subr.mxu0 0.0
    %1357 = vmatpush1.msra.mxu0 0.0
    %1358 = vmatprep.subr.mxu0 0.0
    %1359 = vmatpush1.msra.mxu0 0.0
    %1360 = vmatprep.subr.mxu0 0.0
    %1361 = vmatpush1.msra.mxu0 0.0
    %1362 = vmatprep.mubr.f32.mxu0 0.0
    %1363 = vmatmul.mubr.f32.gmra.mrb[0].mxu0 %v1157
    %v1364 = vpop.f32.mrb[0].mxu0
    %v1365 = vadd.f32 0.0, %v1364
    %v1366 = vpop.f32.mrb[0].mxu0
    %v1367 = vadd.f32 0.0, %v1366
    %1368 = vdwg.mxu0
    %v1369 = vadd.f32 %v1159, %v1294
    %v1370 = vadd.f32 %v1160, %v1296
    %v1371 = vadd.f32 %v1161, %v1365
    %v1372 = vadd.f32 %v1162, %v1367
    %v1373 = vxor.u32 %v1369, 2147483648
    %v1374 = vxor.u32 %v1370, 2147483648
    %v1375 = vxor.u32 %v1371, 2147483648
    %v1376 = vmul.f32 %v1373, 1.442695
    %v1377 = vpow.pop %v1376
    %v1378 = vmul.f32 %v1374, 1.442695
    %v1379 = vpow.pop %v1378
    %v1380 = vmul.f32 %v1375, 1.442695
    %v1381 = vpow.pop %v1380
    %v1382 = vadd.f32 %v1377, 1.0
    %v1383 = vadd.f32 %v1379, 1.0
    %v1384 = vadd.f32 %v1381, 1.0
    %v1385 = vrcp.pop %v1382
    %v1386 = vmul.f32 1.0, %v1385
    %v1387 = vrcp.pop %v1383
    %v1388 = vmul.f32 1.0, %v1387
    %v1389 = vrcp.pop %v1384
    %v1390 = vmul.f32 1.0, %v1389
    %v1391 = vtanh.pop %v1372
    %v1392 = vmul.f32 %v1388, %v1155
    %v1393 = vmul.f32 %v1386, %v1391
    %v1394 = vadd.f32 %v1392, %v1393
    %v1395 = vtanh.pop %v1394
    %v1396 = vmul.f32 %v1390, %v1395
    %1397 = vst [vmem:[#allocation3 + $0x18] sm:$0xff] %v1396
    %v1398 = vld [vmem:[#allocation2 + $0x80] sm:$0xff]
    %v1399 = vld [vmem:[#allocation2 + $0x88] sm:$0xff]
    %v1400 = vld [vmem:[#allocation2 + $0x90] sm:$0xff]
    %v1401 = vld [vmem:[#allocation2 + $0x98] sm:$0xff]
    %v1402 = vld [vmem:[#allocation9] sm:$0xff]
    %v1403 = vld [vmem:[#allocation9 + $0x8] sm:$0xff]
    %v1404 = vld [vmem:[#allocation9 + $0x10] sm:$0xff]
    %v1405 = vld [vmem:[#allocation9 + $0x18] sm:$0xff]
    %v1406 = vld [vmem:[#allocation9 + $0x20] sm:$0xff]
    %v1407 = vld [vmem:[#allocation9 + $0x28] sm:$0xff]
    %v1408 = vld [vmem:[#allocation9 + $0x30] sm:$0xff]
    %v1409 = vld [vmem:[#allocation9 + $0x38] sm:$0xff]
    %v1410 = vld [vmem:[#allocation9 + $0x40] sm:$0xff]
    %v1411 = vld [vmem:[#allocation9 + $0x48] sm:$0xff]
    %v1412 = vld [vmem:[#allocation9 + $0x50] sm:$0xff]
    %v1413 = vld [vmem:[#allocation9 + $0x58] sm:$0xff]
    %v1414 = vld [vmem:[#allocation9 + $0x60] sm:$0xff]
    %v1415 = vld [vmem:[#allocation9 + $0x68] sm:$0xff]
    %v1416 = vld [vmem:[#allocation9 + $0x70] sm:$0xff]
    %v1417 = vld [vmem:[#allocation9 + $0x78] sm:$0xff]
    %v1418 = vld [vmem:[#allocation9 + $0x80] sm:$0xff]
    %v1419 = vld [vmem:[#allocation9 + $0x88] sm:$0xff]
    %v1420 = vld [vmem:[#allocation9 + $0x90] sm:$0xff]
    %v1421 = vld [vmem:[#allocation9 + $0x98] sm:$0xff]
    %v1422 = vld [vmem:[#allocation9 + $0xa0] sm:$0xff]
    %v1423 = vld [vmem:[#allocation9 + $0xa8] sm:$0xff]
    %v1424 = vld [vmem:[#allocation9 + $0xb0] sm:$0xff]
    %v1425 = vld [vmem:[#allocation9 + $0xb8] sm:$0xff]
    %v1426 = vld [vmem:[#allocation9 + $0xc0] sm:$0xff]
    %v1427 = vld [vmem:[#allocation9 + $0xc8] sm:$0xff]
    %v1428 = vld [vmem:[#allocation9 + $0xd0] sm:$0xff]
    %v1429 = vld [vmem:[#allocation9 + $0xd8] sm:$0xff]
    %v1430 = vld [vmem:[#allocation9 + $0xe0] sm:$0xff]
    %v1431 = vld [vmem:[#allocation9 + $0xe8] sm:$0xff]
    %v1432 = vld [vmem:[#allocation9 + $0xf0] sm:$0xff]
    %v1433 = vld [vmem:[#allocation9 + $0xf8] sm:$0xff]
    %v1434 = vld [vmem:[#allocation9 + $0x100] sm:$0xff]
    %v1435 = vld [vmem:[#allocation9 + $0x108] sm:$0xff]
    %v1436 = vld [vmem:[#allocation9 + $0x110] sm:$0xff]
    %v1437 = vld [vmem:[#allocation9 + $0x118] sm:$0xff]
    %v1438 = vld [vmem:[#allocation9 + $0x120] sm:$0xff]
    %v1439 = vld [vmem:[#allocation9 + $0x128] sm:$0xff]
    %v1440 = vld [vmem:[#allocation9 + $0x130] sm:$0xff]
    %v1441 = vld [vmem:[#allocation9 + $0x138] sm:$0xff]
    %v1442 = vld [vmem:[#allocation9 + $0x140] sm:$0xff]
    %v1443 = vld [vmem:[#allocation9 + $0x148] sm:$0xff]
    %v1444 = vld [vmem:[#allocation9 + $0x150] sm:$0xff]
    %v1445 = vld [vmem:[#allocation9 + $0x158] sm:$0xff]
    %v1446 = vld [vmem:[#allocation9 + $0x160] sm:$0xff]
    %v1447 = vld [vmem:[#allocation9 + $0x168] sm:$0xff]
    %v1448 = vld [vmem:[#allocation9 + $0x170] sm:$0xff]
    %v1449 = vld [vmem:[#allocation9 + $0x178] sm:$0xff]
    %v1450 = vld [vmem:[#allocation9 + $0x180] sm:$0xff]
    %v1451 = vld [vmem:[#allocation9 + $0x188] sm:$0xff]
    %v1452 = vld [vmem:[#allocation9 + $0x190] sm:$0xff]
    %v1453 = vld [vmem:[#allocation9 + $0x198] sm:$0xff]
    %v1454 = vld [vmem:[#allocation9 + $0x1a0] sm:$0xff]
    %v1455 = vld [vmem:[#allocation9 + $0x1a8] sm:$0xff]
    %v1456 = vld [vmem:[#allocation9 + $0x1b0] sm:$0xff]
    %v1457 = vld [vmem:[#allocation9 + $0x1b8] sm:$0xff]
    %v1458 = vld [vmem:[#allocation9 + $0x1c0] sm:$0xff]
    %v1459 = vld [vmem:[#allocation9 + $0x1c8] sm:$0xff]
    %v1460 = vld [vmem:[#allocation9 + $0x1d0] sm:$0xff]
    %v1461 = vld [vmem:[#allocation9 + $0x1d8] sm:$0xff]
    %v1462 = vld [vmem:[#allocation9 + $0x1e0] sm:$0xff]
    %v1463 = vld [vmem:[#allocation9 + $0x1e8] sm:$0xff]
    %v1464 = vld [vmem:[#allocation9 + $0x1f0] sm:$0xff]
    %v1465 = vld [vmem:[#allocation9 + $0x1f8] sm:$0xff]
    %1466 = vmatprep.subr.mxu0 %v1403
    %1467 = vmatpush1.msra.mxu0 %v1402
    %1468 = vmatprep.subr.mxu0 %v1407
    %1469 = vmatpush1.msra.mxu0 %v1406
    %1470 = vmatprep.subr.mxu0 %v1411
    %1471 = vmatpush1.msra.mxu0 %v1410
    %1472 = vmatprep.subr.mxu0 %v1415
    %1473 = vmatpush1.msra.mxu0 %v1414
    %1474 = vmatprep.subr.mxu0 %v1419
    %1475 = vmatpush1.msra.mxu0 %v1418
    %1476 = vmatprep.subr.mxu0 %v1423
    %1477 = vmatpush1.msra.mxu0 %v1422
    %1478 = vmatprep.subr.mxu0 %v1427
    %1479 = vmatpush1.msra.mxu0 %v1426
    %1480 = vmatprep.subr.mxu0 %v1431
    %1481 = vmatpush1.msra.mxu0 %v1430
    %1482 = vmatprep.subr.mxu0 %v1435
    %1483 = vmatpush1.msra.mxu0 %v1434
    %1484 = vmatprep.subr.mxu0 %v1439
    %1485 = vmatpush1.msra.mxu0 %v1438
    %1486 = vmatprep.subr.mxu0 %v1443
    %1487 = vmatpush1.msra.mxu0 %v1442
    %1488 = vmatprep.subr.mxu0 %v1447
    %1489 = vmatpush1.msra.mxu0 %v1446
    %1490 = vmatprep.subr.mxu0 %v1451
    %1491 = vmatpush1.msra.mxu0 %v1450
    %1492 = vmatprep.subr.mxu0 %v1455
    %1493 = vmatpush1.msra.mxu0 %v1454
    %1494 = vmatprep.subr.mxu0 %v1459
    %1495 = vmatpush1.msra.mxu0 %v1458
    %1496 = vmatprep.subr.mxu0 %v1463
    %1497 = vmatpush1.msra.mxu0 %v1462
    %1498 = vmatprep.subr.mxu0 0.0
    %1499 = vmatpush1.msra.mxu0 0.0
    %1500 = vmatprep.subr.mxu0 0.0
    %1501 = vmatpush1.msra.mxu0 0.0
    %1502 = vmatprep.subr.mxu0 0.0
    %1503 = vmatpush1.msra.mxu0 0.0
    %1504 = vmatprep.subr.mxu0 0.0
    %1505 = vmatpush1.msra.mxu0 0.0
    %1506 = vmatprep.subr.mxu0 0.0
    %1507 = vmatpush1.msra.mxu0 0.0
    %1508 = vmatprep.subr.mxu0 0.0
    %1509 = vmatpush1.msra.mxu0 0.0
    %1510 = vmatprep.subr.mxu0 0.0
    %1511 = vmatpush1.msra.mxu0 0.0
    %1512 = vmatprep.subr.mxu0 0.0
    %1513 = vmatpush1.msra.mxu0 0.0
    %1514 = vmatprep.subr.mxu0 0.0
    %1515 = vmatpush1.msra.mxu0 0.0
    %1516 = vmatprep.subr.mxu0 0.0
    %1517 = vmatpush1.msra.mxu0 0.0
    %1518 = vmatprep.subr.mxu0 0.0
    %1519 = vmatpush1.msra.mxu0 0.0
    %1520 = vmatprep.subr.mxu0 0.0
    %1521 = vmatpush1.msra.mxu0 0.0
    %1522 = vmatprep.subr.mxu0 0.0
    %1523 = vmatpush1.msra.mxu0 0.0
    %1524 = vmatprep.subr.mxu0 0.0
    %1525 = vmatpush1.msra.mxu0 0.0
    %1526 = vmatprep.subr.mxu0 0.0
    %1527 = vmatpush1.msra.mxu0 0.0
    %1528 = vmatprep.subr.mxu0 0.0
    %1529 = vmatpush1.msra.mxu0 0.0
    %1530 = vmatprep.mubr.f32.mxu0 0.0
    %1531 = vmatmul.mubr.f32.gmra.mrb[0].mxu0 %v1396
    %v1532 = vpop.f32.mrb[0].mxu0
    %v1533 = vadd.f32 0.0, %v1532
    %v1534 = vpop.f32.mrb[0].mxu0
    %v1535 = vadd.f32 0.0, %v1534
    %1536 = vdwg.mxu0
    %1537 = vmatprep.subr.mxu0 %v1405
    %1538 = vmatpush1.msra.mxu0 %v1404
    %1539 = vmatprep.subr.mxu0 %v1409
    %1540 = vmatpush1.msra.mxu0 %v1408
    %1541 = vmatprep.subr.mxu0 %v1413
    %1542 = vmatpush1.msra.mxu0 %v1412
    %1543 = vmatprep.subr.mxu0 %v1417
    %1544 = vmatpush1.msra.mxu0 %v1416
    %1545 = vmatprep.subr.mxu0 %v1421
    %1546 = vmatpush1.msra.mxu0 %v1420
    %1547 = vmatprep.subr.mxu0 %v1425
    %1548 = vmatpush1.msra.mxu0 %v1424
    %1549 = vmatprep.subr.mxu0 %v1429
    %1550 = vmatpush1.msra.mxu0 %v1428
    %1551 = vmatprep.subr.mxu0 %v1433
    %1552 = vmatpush1.msra.mxu0 %v1432
    %1553 = vmatprep.subr.mxu0 %v1437
    %1554 = vmatpush1.msra.mxu0 %v1436
    %1555 = vmatprep.subr.mxu0 %v1441
    %1556 = vmatpush1.msra.mxu0 %v1440
    %1557 = vmatprep.subr.mxu0 %v1445
    %1558 = vmatpush1.msra.mxu0 %v1444
    %1559 = vmatprep.subr.mxu0 %v1449
    %1560 = vmatpush1.msra.mxu0 %v1448
    %1561 = vmatprep.subr.mxu0 %v1453
    %1562 = vmatpush1.msra.mxu0 %v1452
    %1563 = vmatprep.subr.mxu0 %v1457
    %1564 = vmatpush1.msra.mxu0 %v1456
    %1565 = vmatprep.subr.mxu0 %v1461
    %1566 = vmatpush1.msra.mxu0 %v1460
    %1567 = vmatprep.subr.mxu0 %v1465
    %1568 = vmatpush1.msra.mxu0 %v1464
    %1569 = vmatprep.subr.mxu0 0.0
    %1570 = vmatpush1.msra.mxu0 0.0
    %1571 = vmatprep.subr.mxu0 0.0
    %1572 = vmatpush1.msra.mxu0 0.0
    %1573 = vmatprep.subr.mxu0 0.0
    %1574 = vmatpush1.msra.mxu0 0.0
    %1575 = vmatprep.subr.mxu0 0.0
    %1576 = vmatpush1.msra.mxu0 0.0
    %1577 = vmatprep.subr.mxu0 0.0
    %1578 = vmatpush1.msra.mxu0 0.0
    %1579 = vmatprep.subr.mxu0 0.0
    %1580 = vmatpush1.msra.mxu0 0.0
    %1581 = vmatprep.subr.mxu0 0.0
    %1582 = vmatpush1.msra.mxu0 0.0
    %1583 = vmatprep.subr.mxu0 0.0
    %1584 = vmatpush1.msra.mxu0 0.0
    %1585 = vmatprep.subr.mxu0 0.0
    %1586 = vmatpush1.msra.mxu0 0.0
    %1587 = vmatprep.subr.mxu0 0.0
    %1588 = vmatpush1.msra.mxu0 0.0
    %1589 = vmatprep.subr.mxu0 0.0
    %1590 = vmatpush1.msra.mxu0 0.0
    %1591 = vmatprep.subr.mxu0 0.0
    %1592 = vmatpush1.msra.mxu0 0.0
    %1593 = vmatprep.subr.mxu0 0.0
    %1594 = vmatpush1.msra.mxu0 0.0
    %1595 = vmatprep.subr.mxu0 0.0
    %1596 = vmatpush1.msra.mxu0 0.0
    %1597 = vmatprep.subr.mxu0 0.0
    %1598 = vmatpush1.msra.mxu0 0.0
    %1599 = vmatprep.subr.mxu0 0.0
    %1600 = vmatpush1.msra.mxu0 0.0
    %1601 = vmatprep.mubr.f32.mxu0 0.0
    %1602 = vmatmul.mubr.f32.gmra.mrb[0].mxu0 %v1396
    %v1603 = vpop.f32.mrb[0].mxu0
    %v1604 = vadd.f32 0.0, %v1603
    %v1605 = vpop.f32.mrb[0].mxu0
    %v1606 = vadd.f32 0.0, %v1605
    %1607 = vdwg.mxu0
    %v1608 = vadd.f32 %v1398, %v1533
    %v1609 = vadd.f32 %v1399, %v1535
    %v1610 = vadd.f32 %v1400, %v1604
    %v1611 = vadd.f32 %v1401, %v1606
    %v1612 = vxor.u32 %v1608, 2147483648
    %v1613 = vxor.u32 %v1609, 2147483648
    %v1614 = vxor.u32 %v1610, 2147483648
    %v1615 = vmul.f32 %v1612, 1.442695
    %v1616 = vpow.pop %v1615
    %v1617 = vmul.f32 %v1613, 1.442695
    %v1618 = vpow.pop %v1617
    %v1619 = vmul.f32 %v1614, 1.442695
    %v1620 = vpow.pop %v1619
    %v1621 = vadd.f32 %v1616, 1.0
    %v1622 = vadd.f32 %v1618, 1.0
    %v1623 = vadd.f32 %v1620, 1.0
    %v1624 = vrcp.pop %v1621
    %v1625 = vmul.f32 1.0, %v1624
    %v1626 = vrcp.pop %v1622
    %v1627 = vmul.f32 1.0, %v1626
    %v1628 = vrcp.pop %v1623
    %v1629 = vmul.f32 1.0, %v1628
    %v1630 = vtanh.pop %v1611
    %v1631 = vmul.f32 %v1627, %v1394
    %v1632 = vmul.f32 %v1625, %v1630
    %v1633 = vadd.f32 %v1631, %v1632
    %v1634 = vtanh.pop %v1633
    %v1635 = vmul.f32 %v1629, %v1634
    %1636 = vst [vmem:[#allocation3 + $0x20] sm:$0xff] %v1635
    %v1637 = vld [vmem:[#allocation2 + $0xa0] sm:$0xff]
    %v1638 = vld [vmem:[#allocation2 + $0xa8] sm:$0xff]
    %v1639 = vld [vmem:[#allocation2 + $0xb0] sm:$0xff]
    %v1640 = vld [vmem:[#allocation2 + $0xb8] sm:$0xff]
    %v1641 = vld [vmem:[#allocation9] sm:$0xff]
    %v1642 = vld [vmem:[#allocation9 + $0x8] sm:$0xff]
    %v1643 = vld [vmem:[#allocation9 + $0x10] sm:$0xff]
    %v1644 = vld [vmem:[#allocation9 + $0x18] sm:$0xff]
    %v1645 = vld [vmem:[#allocation9 + $0x20] sm:$0xff]
    %v1646 = vld [vmem:[#allocation9 + $0x28] sm:$0xff]
    %v1647 = vld [vmem:[#allocation9 + $0x30] sm:$0xff]
    %v1648 = vld [vmem:[#allocation9 + $0x38] sm:$0xff]
    %v1649 = vld [vmem:[#allocation9 + $0x40] sm:$0xff]
    %v1650 = vld [vmem:[#allocation9 + $0x48] sm:$0xff]
    %v1651 = vld [vmem:[#allocation9 + $0x50] sm:$0xff]
    %v1652 = vld [vmem:[#allocation9 + $0x58] sm:$0xff]
    %v1653 = vld [vmem:[#allocation9 + $0x60] sm:$0xff]
    %v1654 = vld [vmem:[#allocation9 + $0x68] sm:$0xff]
    %v1655 = vld [vmem:[#allocation9 + $0x70] sm:$0xff]
    %v1656 = vld [vmem:[#allocation9 + $0x78] sm:$0xff]
    %v1657 = vld [vmem:[#allocation9 + $0x80] sm:$0xff]
    %v1658 = vld [vmem:[#allocation9 + $0x88] sm:$0xff]
    %v1659 = vld [vmem:[#allocation9 + $0x90] sm:$0xff]
    %v1660 = vld [vmem:[#allocation9 + $0x98] sm:$0xff]
    %v1661 = vld [vmem:[#allocation9 + $0xa0] sm:$0xff]
    %v1662 = vld [vmem:[#allocation9 + $0xa8] sm:$0xff]
    %v1663 = vld [vmem:[#allocation9 + $0xb0] sm:$0xff]
    %v1664 = vld [vmem:[#allocation9 + $0xb8] sm:$0xff]
    %v1665 = vld [vmem:[#allocation9 + $0xc0] sm:$0xff]
    %v1666 = vld [vmem:[#allocation9 + $0xc8] sm:$0xff]
    %v1667 = vld [vmem:[#allocation9 + $0xd0] sm:$0xff]
    %v1668 = vld [vmem:[#allocation9 + $0xd8] sm:$0xff]
    %v1669 = vld [vmem:[#allocation9 + $0xe0] sm:$0xff]
    %v1670 = vld [vmem:[#allocation9 + $0xe8] sm:$0xff]
    %v1671 = vld [vmem:[#allocation9 + $0xf0] sm:$0xff]
    %v1672 = vld [vmem:[#allocation9 + $0xf8] sm:$0xff]
    %v1673 = vld [vmem:[#allocation9 + $0x100] sm:$0xff]
    %v1674 = vld [vmem:[#allocation9 + $0x108] sm:$0xff]
    %v1675 = vld [vmem:[#allocation9 + $0x110] sm:$0xff]
    %v1676 = vld [vmem:[#allocation9 + $0x118] sm:$0xff]
    %v1677 = vld [vmem:[#allocation9 + $0x120] sm:$0xff]
    %v1678 = vld [vmem:[#allocation9 + $0x128] sm:$0xff]
    %v1679 = vld [vmem:[#allocation9 + $0x130] sm:$0xff]
    %v1680 = vld [vmem:[#allocation9 + $0x138] sm:$0xff]
    %v1681 = vld [vmem:[#allocation9 + $0x140] sm:$0xff]
    %v1682 = vld [vmem:[#allocation9 + $0x148] sm:$0xff]
    %v1683 = vld [vmem:[#allocation9 + $0x150] sm:$0xff]
    %v1684 = vld [vmem:[#allocation9 + $0x158] sm:$0xff]
    %v1685 = vld [vmem:[#allocation9 + $0x160] sm:$0xff]
    %v1686 = vld [vmem:[#allocation9 + $0x168] sm:$0xff]
    %v1687 = vld [vmem:[#allocation9 + $0x170] sm:$0xff]
    %v1688 = vld [vmem:[#allocation9 + $0x178] sm:$0xff]
    %v1689 = vld [vmem:[#allocation9 + $0x180] sm:$0xff]
    %v1690 = vld [vmem:[#allocation9 + $0x188] sm:$0xff]
    %v1691 = vld [vmem:[#allocation9 + $0x190] sm:$0xff]
    %v1692 = vld [vmem:[#allocation9 + $0x198] sm:$0xff]
    %v1693 = vld [vmem:[#allocation9 + $0x1a0] sm:$0xff]
    %v1694 = vld [vmem:[#allocation9 + $0x1a8] sm:$0xff]
    %v1695 = vld [vmem:[#allocation9 + $0x1b0] sm:$0xff]
    %v1696 = vld [vmem:[#allocation9 + $0x1b8] sm:$0xff]
    %v1697 = vld [vmem:[#allocation9 + $0x1c0] sm:$0xff]
    %v1698 = vld [vmem:[#allocation9 + $0x1c8] sm:$0xff]
    %v1699 = vld [vmem:[#allocation9 + $0x1d0] sm:$0xff]
    %v1700 = vld [vmem:[#allocation9 + $0x1d8] sm:$0xff]
    %v1701 = vld [vmem:[#allocation9 + $0x1e0] sm:$0xff]
    %v1702 = vld [vmem:[#allocation9 + $0x1e8] sm:$0xff]
    %v1703 = vld [vmem:[#allocation9 + $0x1f0] sm:$0xff]
    %v1704 = vld [vmem:[#allocation9 + $0x1f8] sm:$0xff]
    %1705 = vmatprep.subr.mxu0 %v1642
    %1706 = vmatpush1.msra.mxu0 %v1641
    %1707 = vmatprep.subr.mxu0 %v1646
    %1708 = vmatpush1.msra.mxu0 %v1645
    %1709 = vmatprep.subr.mxu0 %v1650
    %1710 = vmatpush1.msra.mxu0 %v1649
    %1711 = vmatprep.subr.mxu0 %v1654
    %1712 = vmatpush1.msra.mxu0 %v1653
    %1713 = vmatprep.subr.mxu0 %v1658
    %1714 = vmatpush1.msra.mxu0 %v1657
    %1715 = vmatprep.subr.mxu0 %v1662
    %1716 = vmatpush1.msra.mxu0 %v1661
    %1717 = vmatprep.subr.mxu0 %v1666
    %1718 = vmatpush1.msra.mxu0 %v1665
    %1719 = vmatprep.subr.mxu0 %v1670
    %1720 = vmatpush1.msra.mxu0 %v1669
    %1721 = vmatprep.subr.mxu0 %v1674
    %1722 = vmatpush1.msra.mxu0 %v1673
    %1723 = vmatprep.subr.mxu0 %v1678
    %1724 = vmatpush1.msra.mxu0 %v1677
    %1725 = vmatprep.subr.mxu0 %v1682
    %1726 = vmatpush1.msra.mxu0 %v1681
    %1727 = vmatprep.subr.mxu0 %v1686
    %1728 = vmatpush1.msra.mxu0 %v1685
    %1729 = vmatprep.subr.mxu0 %v1690
    %1730 = vmatpush1.msra.mxu0 %v1689
    %1731 = vmatprep.subr.mxu0 %v1694
    %1732 = vmatpush1.msra.mxu0 %v1693
    %1733 = vmatprep.subr.mxu0 %v1698
    %1734 = vmatpush1.msra.mxu0 %v1697
    %1735 = vmatprep.subr.mxu0 %v1702
    %1736 = vmatpush1.msra.mxu0 %v1701
    %1737 = vmatprep.subr.mxu0 0.0
    %1738 = vmatpush1.msra.mxu0 0.0
    %1739 = vmatprep.subr.mxu0 0.0
    %1740 = vmatpush1.msra.mxu0 0.0
    %1741 = vmatprep.subr.mxu0 0.0
    %1742 = vmatpush1.msra.mxu0 0.0
    %1743 = vmatprep.subr.mxu0 0.0
    %1744 = vmatpush1.msra.mxu0 0.0
    %1745 = vmatprep.subr.mxu0 0.0
    %1746 = vmatpush1.msra.mxu0 0.0
    %1747 = vmatprep.subr.mxu0 0.0
    %1748 = vmatpush1.msra.mxu0 0.0
    %1749 = vmatprep.subr.mxu0 0.0
    %1750 = vmatpush1.msra.mxu0 0.0
    %1751 = vmatprep.subr.mxu0 0.0
    %1752 = vmatpush1.msra.mxu0 0.0
    %1753 = vmatprep.subr.mxu0 0.0
    %1754 = vmatpush1.msra.mxu0 0.0
    %1755 = vmatprep.subr.mxu0 0.0
    %1756 = vmatpush1.msra.mxu0 0.0
    %1757 = vmatprep.subr.mxu0 0.0
    %1758 = vmatpush1.msra.mxu0 0.0
    %1759 = vmatprep.subr.mxu0 0.0
    %1760 = vmatpush1.msra.mxu0 0.0
    %1761 = vmatprep.subr.mxu0 0.0
    %1762 = vmatpush1.msra.mxu0 0.0
    %1763 = vmatprep.subr.mxu0 0.0
    %1764 = vmatpush1.msra.mxu0 0.0
    %1765 = vmatprep.subr.mxu0 0.0
    %1766 = vmatpush1.msra.mxu0 0.0
    %1767 = vmatprep.subr.mxu0 0.0
    %1768 = vmatpush1.msra.mxu0 0.0
    %1769 = vmatprep.mubr.f32.mxu0 0.0
    %1770 = vmatmul.mubr.f32.gmra.mrb[0].mxu0 %v1635
    %v1771 = vpop.f32.mrb[0].mxu0
    %v1772 = vadd.f32 0.0, %v1771
    %v1773 = vpop.f32.mrb[0].mxu0
    %v1774 = vadd.f32 0.0, %v1773
    %1775 = vdwg.mxu0
    %1776 = vmatprep.subr.mxu0 %v1644
    %1777 = vmatpush1.msra.mxu0 %v1643
    %1778 = vmatprep.subr.mxu0 %v1648
    %1779 = vmatpush1.msra.mxu0 %v1647
    %1780 = vmatprep.subr.mxu0 %v1652
    %1781 = vmatpush1.msra.mxu0 %v1651
    %1782 = vmatprep.subr.mxu0 %v1656
    %1783 = vmatpush1.msra.mxu0 %v1655
    %1784 = vmatprep.subr.mxu0 %v1660
    %1785 = vmatpush1.msra.mxu0 %v1659
    %1786 = vmatprep.subr.mxu0 %v1664
    %1787 = vmatpush1.msra.mxu0 %v1663
    %1788 = vmatprep.subr.mxu0 %v1668
    %1789 = vmatpush1.msra.mxu0 %v1667
    %1790 = vmatprep.subr.mxu0 %v1672
    %1791 = vmatpush1.msra.mxu0 %v1671
    %1792 = vmatprep.subr.mxu0 %v1676
    %1793 = vmatpush1.msra.mxu0 %v1675
    %1794 = vmatprep.subr.mxu0 %v1680
    %1795 = vmatpush1.msra.mxu0 %v1679
    %1796 = vmatprep.subr.mxu0 %v1684
    %1797 = vmatpush1.msra.mxu0 %v1683
    %1798 = vmatprep.subr.mxu0 %v1688
    %1799 = vmatpush1.msra.mxu0 %v1687
    %1800 = vmatprep.subr.mxu0 %v1692
    %1801 = vmatpush1.msra.mxu0 %v1691
    %1802 = vmatprep.subr.mxu0 %v1696
    %1803 = vmatpush1.msra.mxu0 %v1695
    %1804 = vmatprep.subr.mxu0 %v1700
    %1805 = vmatpush1.msra.mxu0 %v1699
    %1806 = vmatprep.subr.mxu0 %v1704
    %1807 = vmatpush1.msra.mxu0 %v1703
    %1808 = vmatprep.subr.mxu0 0.0
    %1809 = vmatpush1.msra.mxu0 0.0
    %1810 = vmatprep.subr.mxu0 0.0
    %1811 = vmatpush1.msra.mxu0 0.0
    %1812 = vmatprep.subr.mxu0 0.0
    %1813 = vmatpush1.msra.mxu0 0.0
    %1814 = vmatprep.subr.mxu0 0.0
    %1815 = vmatpush1.msra.mxu0 0.0
    %1816 = vmatprep.subr.mxu0 0.0
    %1817 = vmatpush1.msra.mxu0 0.0
    %1818 = vmatprep.subr.mxu0 0.0
    %1819 = vmatpush1.msra.mxu0 0.0
    %1820 = vmatprep.subr.mxu0 0.0
    %1821 = vmatpush1.msra.mxu0 0.0
    %1822 = vmatprep.subr.mxu0 0.0
    %1823 = vmatpush1.msra.mxu0 0.0
    %1824 = vmatprep.subr.mxu0 0.0
    %1825 = vmatpush1.msra.mxu0 0.0
    %1826 = vmatprep.subr.mxu0 0.0
    %1827 = vmatpush1.msra.mxu0 0.0
    %1828 = vmatprep.subr.mxu0 0.0
    %1829 = vmatpush1.msra.mxu0 0.0
    %1830 = vmatprep.subr.mxu0 0.0
    %1831 = vmatpush1.msra.mxu0 0.0
    %1832 = vmatprep.subr.mxu0 0.0
    %1833 = vmatpush1.msra.mxu0 0.0
    %1834 = vmatprep.subr.mxu0 0.0
    %1835 = vmatpush1.msra.mxu0 0.0
    %1836 = vmatprep.subr.mxu0 0.0
    %1837 = vmatpush1.msra.mxu0 0.0
    %1838 = vmatprep.subr.mxu0 0.0
    %1839 = vmatpush1.msra.mxu0 0.0
    %1840 = vmatprep.mubr.f32.mxu0 0.0
    %1841 = vmatmul.mubr.f32.gmra.mrb[0].mxu0 %v1635
    %v1842 = vpop.f32.mrb[0].mxu0
    %v1843 = vadd.f32 0.0, %v1842
    %v1844 = vpop.f32.mrb[0].mxu0
    %v1845 = vadd.f32 0.0, %v1844
    %1846 = vdwg.mxu0
    %v1847 = vadd.f32 %v1637, %v1772
    %v1848 = vadd.f32 %v1638, %v1774
    %v1849 = vadd.f32 %v1639, %v1843
    %v1850 = vadd.f32 %v1640, %v1845
    %v1851 = vxor.u32 %v1847, 2147483648
    %v1852 = vxor.u32 %v1848, 2147483648
    %v1853 = vxor.u32 %v1849, 2147483648
    %v1854 = vmul.f32 %v1851, 1.442695
    %v1855 = vpow.pop %v1854
    %v1856 = vmul.f32 %v1852, 1.442695
    %v1857 = vpow.pop %v1856
    %v1858 = vmul.f32 %v1853, 1.442695
    %v1859 = vpow.pop %v1858
    %v1860 = vadd.f32 %v1855, 1.0
    %v1861 = vadd.f32 %v1857, 1.0
    %v1862 = vadd.f32 %v1859, 1.0
    %v1863 = vrcp.pop %v1860
    %v1864 = vmul.f32 1.0, %v1863
    %v1865 = vrcp.pop %v1861
    %v1866 = vmul.f32 1.0, %v1865
    %v1867 = vrcp.pop %v1862
    %v1868 = vmul.f32 1.0, %v1867
    %v1869 = vtanh.pop %v1850
    %v1870 = vmul.f32 %v1866, %v1633
    %v1871 = vmul.f32 %v1864, %v1869
    %v1872 = vadd.f32 %v1870, %v1871
    %v1873 = vtanh.pop %v1872
    %v1874 = vmul.f32 %v1868, %v1873
    %1875 = vst [vmem:[#allocation3 + $0x28] sm:$0xff] %v1874
    %v1876 = vld [vmem:[#allocation2 + $0xc0] sm:$0xff]
    %v1877 = vld [vmem:[#allocation2 + $0xc8] sm:$0xff]
    %v1878 = vld [vmem:[#allocation2 + $0xd0] sm:$0xff]
    %v1879 = vld [vmem:[#allocation2 + $0xd8] sm:$0xff]
    %v1880 = vld [vmem:[#allocation9] sm:$0xff]
    %v1881 = vld [vmem:[#allocation9 + $0x8] sm:$0xff]
    %v1882 = vld [vmem:[#allocation9 + $0x10] sm:$0xff]
    %v1883 = vld [vmem:[#allocation9 + $0x18] sm:$0xff]
    %v1884 = vld [vmem:[#allocation9 + $0x20] sm:$0xff]
    %v1885 = vld [vmem:[#allocation9 + $0x28] sm:$0xff]
    %v1886 = vld [vmem:[#allocation9 + $0x30] sm:$0xff]
    %v1887 = vld [vmem:[#allocation9 + $0x38] sm:$0xff]
    %v1888 = vld [vmem:[#allocation9 + $0x40] sm:$0xff]
    %v1889 = vld [vmem:[#allocation9 + $0x48] sm:$0xff]
    %v1890 = vld [vmem:[#allocation9 + $0x50] sm:$0xff]
    %v1891 = vld [vmem:[#allocation9 + $0x58] sm:$0xff]
    %v1892 = vld [vmem:[#allocation9 + $0x60] sm:$0xff]
    %v1893 = vld [vmem:[#allocation9 + $0x68] sm:$0xff]
    %v1894 = vld [vmem:[#allocation9 + $0x70] sm:$0xff]
    %v1895 = vld [vmem:[#allocation9 + $0x78] sm:$0xff]
    %v1896 = vld [vmem:[#allocation9 + $0x80] sm:$0xff]
    %v1897 = vld [vmem:[#allocation9 + $0x88] sm:$0xff]
    %v1898 = vld [vmem:[#allocation9 + $0x90] sm:$0xff]
    %v1899 = vld [vmem:[#allocation9 + $0x98] sm:$0xff]
    %v1900 = vld [vmem:[#allocation9 + $0xa0] sm:$0xff]
    %v1901 = vld [vmem:[#allocation9 + $0xa8] sm:$0xff]
    %v1902 = vld [vmem:[#allocation9 + $0xb0] sm:$0xff]
    %v1903 = vld [vmem:[#allocation9 + $0xb8] sm:$0xff]
    %v1904 = vld [vmem:[#allocation9 + $0xc0] sm:$0xff]
    %v1905 = vld [vmem:[#allocation9 + $0xc8] sm:$0xff]
    %v1906 = vld [vmem:[#allocation9 + $0xd0] sm:$0xff]
    %v1907 = vld [vmem:[#allocation9 + $0xd8] sm:$0xff]
    %v1908 = vld [vmem:[#allocation9 + $0xe0] sm:$0xff]
    %v1909 = vld [vmem:[#allocation9 + $0xe8] sm:$0xff]
    %v1910 = vld [vmem:[#allocation9 + $0xf0] sm:$0xff]
    %v1911 = vld [vmem:[#allocation9 + $0xf8] sm:$0xff]
    %v1912 = vld [vmem:[#allocation9 + $0x100] sm:$0xff]
    %v1913 = vld [vmem:[#allocation9 + $0x108] sm:$0xff]
    %v1914 = vld [vmem:[#allocation9 + $0x110] sm:$0xff]
    %v1915 = vld [vmem:[#allocation9 + $0x118] sm:$0xff]
    %v1916 = vld [vmem:[#allocation9 + $0x120] sm:$0xff]
    %v1917 = vld [vmem:[#allocation9 + $0x128] sm:$0xff]
    %v1918 = vld [vmem:[#allocation9 + $0x130] sm:$0xff]
    %v1919 = vld [vmem:[#allocation9 + $0x138] sm:$0xff]
    %v1920 = vld [vmem:[#allocation9 + $0x140] sm:$0xff]
    %v1921 = vld [vmem:[#allocation9 + $0x148] sm:$0xff]
    %v1922 = vld [vmem:[#allocation9 + $0x150] sm:$0xff]
    %v1923 = vld [vmem:[#allocation9 + $0x158] sm:$0xff]
    %v1924 = vld [vmem:[#allocation9 + $0x160] sm:$0xff]
    %v1925 = vld [vmem:[#allocation9 + $0x168] sm:$0xff]
    %v1926 = vld [vmem:[#allocation9 + $0x170] sm:$0xff]
    %v1927 = vld [vmem:[#allocation9 + $0x178] sm:$0xff]
    %v1928 = vld [vmem:[#allocation9 + $0x180] sm:$0xff]
    %v1929 = vld [vmem:[#allocation9 + $0x188] sm:$0xff]
    %v1930 = vld [vmem:[#allocation9 + $0x190] sm:$0xff]
    %v1931 = vld [vmem:[#allocation9 + $0x198] sm:$0xff]
    %v1932 = vld [vmem:[#allocation9 + $0x1a0] sm:$0xff]
    %v1933 = vld [vmem:[#allocation9 + $0x1a8] sm:$0xff]
    %v1934 = vld [vmem:[#allocation9 + $0x1b0] sm:$0xff]
    %v1935 = vld [vmem:[#allocation9 + $0x1b8] sm:$0xff]
    %v1936 = vld [vmem:[#allocation9 + $0x1c0] sm:$0xff]
    %v1937 = vld [vmem:[#allocation9 + $0x1c8] sm:$0xff]
    %v1938 = vld [vmem:[#allocation9 + $0x1d0] sm:$0xff]
    %v1939 = vld [vmem:[#allocation9 + $0x1d8] sm:$0xff]
    %v1940 = vld [vmem:[#allocation9 + $0x1e0] sm:$0xff]
    %v1941 = vld [vmem:[#allocation9 + $0x1e8] sm:$0xff]
    %v1942 = vld [vmem:[#allocation9 + $0x1f0] sm:$0xff]
    %v1943 = vld [vmem:[#allocation9 + $0x1f8] sm:$0xff]
    %1944 = vmatprep.subr.mxu0 %v1881
    %1945 = vmatpush1.msra.mxu0 %v1880
    %1946 = vmatprep.subr.mxu0 %v1885
    %1947 = vmatpush1.msra.mxu0 %v1884
    %1948 = vmatprep.subr.mxu0 %v1889
    %1949 = vmatpush1.msra.mxu0 %v1888
    %1950 = vmatprep.subr.mxu0 %v1893
    %1951 = vmatpush1.msra.mxu0 %v1892
    %1952 = vmatprep.subr.mxu0 %v1897
    %1953 = vmatpush1.msra.mxu0 %v1896
    %1954 = vmatprep.subr.mxu0 %v1901
    %1955 = vmatpush1.msra.mxu0 %v1900
    %1956 = vmatprep.subr.mxu0 %v1905
    %1957 = vmatpush1.msra.mxu0 %v1904
    %1958 = vmatprep.subr.mxu0 %v1909
    %1959 = vmatpush1.msra.mxu0 %v1908
    %1960 = vmatprep.subr.mxu0 %v1913
    %1961 = vmatpush1.msra.mxu0 %v1912
    %1962 = vmatprep.subr.mxu0 %v1917
    %1963 = vmatpush1.msra.mxu0 %v1916
    %1964 = vmatprep.subr.mxu0 %v1921
    %1965 = vmatpush1.msra.mxu0 %v1920
    %1966 = vmatprep.subr.mxu0 %v1925
    %1967 = vmatpush1.msra.mxu0 %v1924
    %1968 = vmatprep.subr.mxu0 %v1929
    %1969 = vmatpush1.msra.mxu0 %v1928
    %1970 = vmatprep.subr.mxu0 %v1933
    %1971 = vmatpush1.msra.mxu0 %v1932
    %1972 = vmatprep.subr.mxu0 %v1937
    %1973 = vmatpush1.msra.mxu0 %v1936
    %1974 = vmatprep.subr.mxu0 %v1941
    %1975 = vmatpush1.msra.mxu0 %v1940
    %1976 = vmatprep.subr.mxu0 0.0
    %1977 = vmatpush1.msra.mxu0 0.0
    %1978 = vmatprep.subr.mxu0 0.0
    %1979 = vmatpush1.msra.mxu0 0.0
    %1980 = vmatprep.subr.mxu0 0.0
    %1981 = vmatpush1.msra.mxu0 0.0
    %1982 = vmatprep.subr.mxu0 0.0
    %1983 = vmatpush1.msra.mxu0 0.0
    %1984 = vmatprep.subr.mxu0 0.0
    %1985 = vmatpush1.msra.mxu0 0.0
    %1986 = vmatprep.subr.mxu0 0.0
    %1987 = vmatpush1.msra.mxu0 0.0
    %1988 = vmatprep.subr.mxu0 0.0
    %1989 = vmatpush1.msra.mxu0 0.0
    %1990 = vmatprep.subr.mxu0 0.0
    %1991 = vmatpush1.msra.mxu0 0.0
    %1992 = vmatprep.subr.mxu0 0.0
    %1993 = vmatpush1.msra.mxu0 0.0
    %1994 = vmatprep.subr.mxu0 0.0
    %1995 = vmatpush1.msra.mxu0 0.0
    %1996 = vmatprep.subr.mxu0 0.0
    %1997 = vmatpush1.msra.mxu0 0.0
    %1998 = vmatprep.subr.mxu0 0.0
    %1999 = vmatpush1.msra.mxu0 0.0
    %2000 = vmatprep.subr.mxu0 0.0
    %2001 = vmatpush1.msra.mxu0 0.0
    %2002 = vmatprep.subr.mxu0 0.0
    %2003 = vmatpush1.msra.mxu0 0.0
    %2004 = vmatprep.subr.mxu0 0.0
    %2005 = vmatpush1.msra.mxu0 0.0
    %2006 = vmatprep.subr.mxu0 0.0
    %2007 = vmatpush1.msra.mxu0 0.0
    %2008 = vmatprep.mubr.f32.mxu0 0.0
    %2009 = vmatmul.mubr.f32.gmra.mrb[0].mxu0 %v1874
    %v2010 = vpop.f32.mrb[0].mxu0
    %v2011 = vadd.f32 0.0, %v2010
    %v2012 = vpop.f32.mrb[0].mxu0
    %v2013 = vadd.f32 0.0, %v2012
    %2014 = vdwg.mxu0
    %2015 = vmatprep.subr.mxu0 %v1883
    %2016 = vmatpush1.msra.mxu0 %v1882
    %2017 = vmatprep.subr.mxu0 %v1887
    %2018 = vmatpush1.msra.mxu0 %v1886
    %2019 = vmatprep.subr.mxu0 %v1891
    %2020 = vmatpush1.msra.mxu0 %v1890
    %2021 = vmatprep.subr.mxu0 %v1895
    %2022 = vmatpush1.msra.mxu0 %v1894
    %2023 = vmatprep.subr.mxu0 %v1899
    %2024 = vmatpush1.msra.mxu0 %v1898
    %2025 = vmatprep.subr.mxu0 %v1903
    %2026 = vmatpush1.msra.mxu0 %v1902
    %2027 = vmatprep.subr.mxu0 %v1907
    %2028 = vmatpush1.msra.mxu0 %v1906
    %2029 = vmatprep.subr.mxu0 %v1911
    %2030 = vmatpush1.msra.mxu0 %v1910
    %2031 = vmatprep.subr.mxu0 %v1915
    %2032 = vmatpush1.msra.mxu0 %v1914
    %2033 = vmatprep.subr.mxu0 %v1919
    %2034 = vmatpush1.msra.mxu0 %v1918
    %2035 = vmatprep.subr.mxu0 %v1923
    %2036 = vmatpush1.msra.mxu0 %v1922
    %2037 = vmatprep.subr.mxu0 %v1927
    %2038 = vmatpush1.msra.mxu0 %v1926
    %2039 = vmatprep.subr.mxu0 %v1931
    %2040 = vmatpush1.msra.mxu0 %v1930
    %2041 = vmatprep.subr.mxu0 %v1935
    %2042 = vmatpush1.msra.mxu0 %v1934
    %2043 = vmatprep.subr.mxu0 %v1939
    %2044 = vmatpush1.msra.mxu0 %v1938
    %2045 = vmatprep.subr.mxu0 %v1943
    %2046 = vmatpush1.msra.mxu0 %v1942
    %2047 = vmatprep.subr.mxu0 0.0
    %2048 = vmatpush1.msra.mxu0 0.0
    %2049 = vmatprep.subr.mxu0 0.0
    %2050 = vmatpush1.msra.mxu0 0.0
    %2051 = vmatprep.subr.mxu0 0.0
    %2052 = vmatpush1.msra.mxu0 0.0
    %2053 = vmatprep.subr.mxu0 0.0
    %2054 = vmatpush1.msra.mxu0 0.0
    %2055 = vmatprep.subr.mxu0 0.0
    %2056 = vmatpush1.msra.mxu0 0.0
    %2057 = vmatprep.subr.mxu0 0.0
    %2058 = vmatpush1.msra.mxu0 0.0
    %2059 = vmatprep.subr.mxu0 0.0
    %2060 = vmatpush1.msra.mxu0 0.0
    %2061 = vmatprep.subr.mxu0 0.0
    %2062 = vmatpush1.msra.mxu0 0.0
    %2063 = vmatprep.subr.mxu0 0.0
    %2064 = vmatpush1.msra.mxu0 0.0
    %2065 = vmatprep.subr.mxu0 0.0
    %2066 = vmatpush1.msra.mxu0 0.0
    %2067 = vmatprep.subr.mxu0 0.0
    %2068 = vmatpush1.msra.mxu0 0.0
    %2069 = vmatprep.subr.mxu0 0.0
    %2070 = vmatpush1.msra.mxu0 0.0
    %2071 = vmatprep.subr.mxu0 0.0
    %2072 = vmatpush1.msra.mxu0 0.0
    %2073 = vmatprep.subr.mxu0 0.0
    %2074 = vmatpush1.msra.mxu0 0.0
    %2075 = vmatprep.subr.mxu0 0.0
    %2076 = vmatpush1.msra.mxu0 0.0
    %2077 = vmatprep.subr.mxu0 0.0
    %2078 = vmatpush1.msra.mxu0 0.0
    %2079 = vmatprep.mubr.f32.mxu0 0.0
    %2080 = vmatmul.mubr.f32.gmra.mrb[0].mxu0 %v1874
    %v2081 = vpop.f32.mrb[0].mxu0
    %v2082 = vadd.f32 0.0, %v2081
    %v2083 = vpop.f32.mrb[0].mxu0
    %v2084 = vadd.f32 0.0, %v2083
    %2085 = vdwg.mxu0
    %v2086 = vadd.f32 %v1876, %v2011
    %v2087 = vadd.f32 %v1877, %v2013
    %v2088 = vadd.f32 %v1878, %v2082
    %v2089 = vadd.f32 %v1879, %v2084
    %v2090 = vxor.u32 %v2086, 2147483648
    %v2091 = vxor.u32 %v2087, 2147483648
    %v2092 = vxor.u32 %v2088, 2147483648
    %v2093 = vmul.f32 %v2090, 1.442695
    %v2094 = vpow.pop %v2093
    %v2095 = vmul.f32 %v2091, 1.442695
    %v2096 = vpow.pop %v2095
    %v2097 = vmul.f32 %v2092, 1.442695
    %v2098 = vpow.pop %v2097
    %v2099 = vadd.f32 %v2094, 1.0
    %v2100 = vadd.f32 %v2096, 1.0
    %v2101 = vadd.f32 %v2098, 1.0
    %v2102 = vrcp.pop %v2099
    %v2103 = vmul.f32 1.0, %v2102
    %v2104 = vrcp.pop %v2100
    %v2105 = vmul.f32 1.0, %v2104
    %v2106 = vrcp.pop %v2101
    %v2107 = vmul.f32 1.0, %v2106
    %v2108 = vtanh.pop %v2089
    %v2109 = vmul.f32 %v2105, %v1872
    %v2110 = vmul.f32 %v2103, %v2108
    %v2111 = vadd.f32 %v2109, %v2110
    %v2112 = vtanh.pop %v2111
    %v2113 = vmul.f32 %v2107, %v2112
    %2114 = vst [vmem:[#allocation3 + $0x30] sm:$0xff] %v2113
    %v2115 = vld [vmem:[#allocation2 + $0xe0] sm:$0xff]
    %v2116 = vld [vmem:[#allocation2 + $0xe8] sm:$0xff]
    %v2117 = vld [vmem:[#allocation2 + $0xf0] sm:$0xff]
    %v2118 = vld [vmem:[#allocation2 + $0xf8] sm:$0xff]
    %v2119 = vld [vmem:[#allocation9] sm:$0xff]
    %v2120 = vld [vmem:[#allocation9 + $0x8] sm:$0xff]
    %v2121 = vld [vmem:[#allocation9 + $0x10] sm:$0xff]
    %v2122 = vld [vmem:[#allocation9 + $0x18] sm:$0xff]
    %v2123 = vld [vmem:[#allocation9 + $0x20] sm:$0xff]
    %v2124 = vld [vmem:[#allocation9 + $0x28] sm:$0xff]
    %v2125 = vld [vmem:[#allocation9 + $0x30] sm:$0xff]
    %v2126 = vld [vmem:[#allocation9 + $0x38] sm:$0xff]
    %v2127 = vld [vmem:[#allocation9 + $0x40] sm:$0xff]
    %v2128 = vld [vmem:[#allocation9 + $0x48] sm:$0xff]
    %v2129 = vld [vmem:[#allocation9 + $0x50] sm:$0xff]
    %v2130 = vld [vmem:[#allocation9 + $0x58] sm:$0xff]
    %v2131 = vld [vmem:[#allocation9 + $0x60] sm:$0xff]
    %v2132 = vld [vmem:[#allocation9 + $0x68] sm:$0xff]
    %v2133 = vld [vmem:[#allocation9 + $0x70] sm:$0xff]
    %v2134 = vld [vmem:[#allocation9 + $0x78] sm:$0xff]
    %v2135 = vld [vmem:[#allocation9 + $0x80] sm:$0xff]
    %v2136 = vld [vmem:[#allocation9 + $0x88] sm:$0xff]
    %v2137 = vld [vmem:[#allocation9 + $0x90] sm:$0xff]
    %v2138 = vld [vmem:[#allocation9 + $0x98] sm:$0xff]
    %v2139 = vld [vmem:[#allocation9 + $0xa0] sm:$0xff]
    %v2140 = vld [vmem:[#allocation9 + $0xa8] sm:$0xff]
    %v2141 = vld [vmem:[#allocation9 + $0xb0] sm:$0xff]
    %v2142 = vld [vmem:[#allocation9 + $0xb8] sm:$0xff]
    %v2143 = vld [vmem:[#allocation9 + $0xc0] sm:$0xff]
    %v2144 = vld [vmem:[#allocation9 + $0xc8] sm:$0xff]
    %v2145 = vld [vmem:[#allocation9 + $0xd0] sm:$0xff]
    %v2146 = vld [vmem:[#allocation9 + $0xd8] sm:$0xff]
    %v2147 = vld [vmem:[#allocation9 + $0xe0] sm:$0xff]
    %v2148 = vld [vmem:[#allocation9 + $0xe8] sm:$0xff]
    %v2149 = vld [vmem:[#allocation9 + $0xf0] sm:$0xff]
    %v2150 = vld [vmem:[#allocation9 + $0xf8] sm:$0xff]
    %v2151 = vld [vmem:[#allocation9 + $0x100] sm:$0xff]
    %v2152 = vld [vmem:[#allocation9 + $0x108] sm:$0xff]
    %v2153 = vld [vmem:[#allocation9 + $0x110] sm:$0xff]
    %v2154 = vld [vmem:[#allocation9 + $0x118] sm:$0xff]
    %v2155 = vld [vmem:[#allocation9 + $0x120] sm:$0xff]
    %v2156 = vld [vmem:[#allocation9 + $0x128] sm:$0xff]
    %v2157 = vld [vmem:[#allocation9 + $0x130] sm:$0xff]
    %v2158 = vld [vmem:[#allocation9 + $0x138] sm:$0xff]
    %v2159 = vld [vmem:[#allocation9 + $0x140] sm:$0xff]
    %v2160 = vld [vmem:[#allocation9 + $0x148] sm:$0xff]
    %v2161 = vld [vmem:[#allocation9 + $0x150] sm:$0xff]
    %v2162 = vld [vmem:[#allocation9 + $0x158] sm:$0xff]
    %v2163 = vld [vmem:[#allocation9 + $0x160] sm:$0xff]
    %v2164 = vld [vmem:[#allocation9 + $0x168] sm:$0xff]
    %v2165 = vld [vmem:[#allocation9 + $0x170] sm:$0xff]
    %v2166 = vld [vmem:[#allocation9 + $0x178] sm:$0xff]
    %v2167 = vld [vmem:[#allocation9 + $0x180] sm:$0xff]
    %v2168 = vld [vmem:[#allocation9 + $0x188] sm:$0xff]
    %v2169 = vld [vmem:[#allocation9 + $0x190] sm:$0xff]
    %v2170 = vld [vmem:[#allocation9 + $0x198] sm:$0xff]
    %v2171 = vld [vmem:[#allocation9 + $0x1a0] sm:$0xff]
    %v2172 = vld [vmem:[#allocation9 + $0x1a8] sm:$0xff]
    %v2173 = vld [vmem:[#allocation9 + $0x1b0] sm:$0xff]
    %v2174 = vld [vmem:[#allocation9 + $0x1b8] sm:$0xff]
    %v2175 = vld [vmem:[#allocation9 + $0x1c0] sm:$0xff]
    %v2176 = vld [vmem:[#allocation9 + $0x1c8] sm:$0xff]
    %v2177 = vld [vmem:[#allocation9 + $0x1d0] sm:$0xff]
    %v2178 = vld [vmem:[#allocation9 + $0x1d8] sm:$0xff]
    %v2179 = vld [vmem:[#allocation9 + $0x1e0] sm:$0xff]
    %v2180 = vld [vmem:[#allocation9 + $0x1e8] sm:$0xff]
    %v2181 = vld [vmem:[#allocation9 + $0x1f0] sm:$0xff]
    %v2182 = vld [vmem:[#allocation9 + $0x1f8] sm:$0xff]
    %2183 = vmatprep.subr.mxu0 %v2120
    %2184 = vmatpush1.msra.mxu0 %v2119
    %2185 = vmatprep.subr.mxu0 %v2124
    %2186 = vmatpush1.msra.mxu0 %v2123
    %2187 = vmatprep.subr.mxu0 %v2128
    %2188 = vmatpush1.msra.mxu0 %v2127
    %2189 = vmatprep.subr.mxu0 %v2132
    %2190 = vmatpush1.msra.mxu0 %v2131
    %2191 = vmatprep.subr.mxu0 %v2136
    %2192 = vmatpush1.msra.mxu0 %v2135
    %2193 = vmatprep.subr.mxu0 %v2140
    %2194 = vmatpush1.msra.mxu0 %v2139
    %2195 = vmatprep.subr.mxu0 %v2144
    %2196 = vmatpush1.msra.mxu0 %v2143
    %2197 = vmatprep.subr.mxu0 %v2148
    %2198 = vmatpush1.msra.mxu0 %v2147
    %2199 = vmatprep.subr.mxu0 %v2152
    %2200 = vmatpush1.msra.mxu0 %v2151
    %2201 = vmatprep.subr.mxu0 %v2156
    %2202 = vmatpush1.msra.mxu0 %v2155
    %2203 = vmatprep.subr.mxu0 %v2160
    %2204 = vmatpush1.msra.mxu0 %v2159
    %2205 = vmatprep.subr.mxu0 %v2164
    %2206 = vmatpush1.msra.mxu0 %v2163
    %2207 = vmatprep.subr.mxu0 %v2168
    %2208 = vmatpush1.msra.mxu0 %v2167
    %2209 = vmatprep.subr.mxu0 %v2172
    %2210 = vmatpush1.msra.mxu0 %v2171
    %2211 = vmatprep.subr.mxu0 %v2176
    %2212 = vmatpush1.msra.mxu0 %v2175
    %2213 = vmatprep.subr.mxu0 %v2180
    %2214 = vmatpush1.msra.mxu0 %v2179
    %2215 = vmatprep.subr.mxu0 0.0
    %2216 = vmatpush1.msra.mxu0 0.0
    %2217 = vmatprep.subr.mxu0 0.0
    %2218 = vmatpush1.msra.mxu0 0.0
    %2219 = vmatprep.subr.mxu0 0.0
    %2220 = vmatpush1.msra.mxu0 0.0
    %2221 = vmatprep.subr.mxu0 0.0
    %2222 = vmatpush1.msra.mxu0 0.0
    %2223 = vmatprep.subr.mxu0 0.0
    %2224 = vmatpush1.msra.mxu0 0.0
    %2225 = vmatprep.subr.mxu0 0.0
    %2226 = vmatpush1.msra.mxu0 0.0
    %2227 = vmatprep.subr.mxu0 0.0
    %2228 = vmatpush1.msra.mxu0 0.0
    %2229 = vmatprep.subr.mxu0 0.0
    %2230 = vmatpush1.msra.mxu0 0.0
    %2231 = vmatprep.subr.mxu0 0.0
    %2232 = vmatpush1.msra.mxu0 0.0
    %2233 = vmatprep.subr.mxu0 0.0
    %2234 = vmatpush1.msra.mxu0 0.0
    %2235 = vmatprep.subr.mxu0 0.0
    %2236 = vmatpush1.msra.mxu0 0.0
    %2237 = vmatprep.subr.mxu0 0.0
    %2238 = vmatpush1.msra.mxu0 0.0
    %2239 = vmatprep.subr.mxu0 0.0
    %2240 = vmatpush1.msra.mxu0 0.0
    %2241 = vmatprep.subr.mxu0 0.0
    %2242 = vmatpush1.msra.mxu0 0.0
    %2243 = vmatprep.subr.mxu0 0.0
    %2244 = vmatpush1.msra.mxu0 0.0
    %2245 = vmatprep.subr.mxu0 0.0
    %2246 = vmatpush1.msra.mxu0 0.0
    %2247 = vmatprep.mubr.f32.mxu0 0.0
    %2248 = vmatmul.mubr.f32.gmra.mrb[0].mxu0 %v2113
    %v2249 = vpop.f32.mrb[0].mxu0
    %v2250 = vadd.f32 0.0, %v2249
    %v2251 = vpop.f32.mrb[0].mxu0
    %v2252 = vadd.f32 0.0, %v2251
    %2253 = vdwg.mxu0
    %2254 = vmatprep.subr.mxu0 %v2122
    %2255 = vmatpush1.msra.mxu0 %v2121
    %2256 = vmatprep.subr.mxu0 %v2126
    %2257 = vmatpush1.msra.mxu0 %v2125
    %2258 = vmatprep.subr.mxu0 %v2130
    %2259 = vmatpush1.msra.mxu0 %v2129
    %2260 = vmatprep.subr.mxu0 %v2134
    %2261 = vmatpush1.msra.mxu0 %v2133
    %2262 = vmatprep.subr.mxu0 %v2138
    %2263 = vmatpush1.msra.mxu0 %v2137
    %2264 = vmatprep.subr.mxu0 %v2142
    %2265 = vmatpush1.msra.mxu0 %v2141
    %2266 = vmatprep.subr.mxu0 %v2146
    %2267 = vmatpush1.msra.mxu0 %v2145
    %2268 = vmatprep.subr.mxu0 %v2150
    %2269 = vmatpush1.msra.mxu0 %v2149
    %2270 = vmatprep.subr.mxu0 %v2154
    %2271 = vmatpush1.msra.mxu0 %v2153
    %2272 = vmatprep.subr.mxu0 %v2158
    %2273 = vmatpush1.msra.mxu0 %v2157
    %2274 = vmatprep.subr.mxu0 %v2162
    %2275 = vmatpush1.msra.mxu0 %v2161
    %2276 = vmatprep.subr.mxu0 %v2166
    %2277 = vmatpush1.msra.mxu0 %v2165
    %2278 = vmatprep.subr.mxu0 %v2170
    %2279 = vmatpush1.msra.mxu0 %v2169
    %2280 = vmatprep.subr.mxu0 %v2174
    %2281 = vmatpush1.msra.mxu0 %v2173
    %2282 = vmatprep.subr.mxu0 %v2178
    %2283 = vmatpush1.msra.mxu0 %v2177
    %2284 = vmatprep.subr.mxu0 %v2182
    %2285 = vmatpush1.msra.mxu0 %v2181
    %2286 = vmatprep.subr.mxu0 0.0
    %2287 = vmatpush1.msra.mxu0 0.0
    %2288 = vmatprep.subr.mxu0 0.0
    %2289 = vmatpush1.msra.mxu0 0.0
    %2290 = vmatprep.subr.mxu0 0.0
    %2291 = vmatpush1.msra.mxu0 0.0
    %2292 = vmatprep.subr.mxu0 0.0
    %2293 = vmatpush1.msra.mxu0 0.0
    %2294 = vmatprep.subr.mxu0 0.0
    %2295 = vmatpush1.msra.mxu0 0.0
    %2296 = vmatprep.subr.mxu0 0.0
    %2297 = vmatpush1.msra.mxu0 0.0
    %2298 = vmatprep.subr.mxu0 0.0
    %2299 = vmatpush1.msra.mxu0 0.0
    %2300 = vmatprep.subr.mxu0 0.0
    %2301 = vmatpush1.msra.mxu0 0.0
    %2302 = vmatprep.subr.mxu0 0.0
    %2303 = vmatpush1.msra.mxu0 0.0
    %2304 = vmatprep.subr.mxu0 0.0
    %2305 = vmatpush1.msra.mxu0 0.0
    %2306 = vmatprep.subr.mxu0 0.0
    %2307 = vmatpush1.msra.mxu0 0.0
    %2308 = vmatprep.subr.mxu0 0.0
    %2309 = vmatpush1.msra.mxu0 0.0
    %2310 = vmatprep.subr.mxu0 0.0
    %2311 = vmatpush1.msra.mxu0 0.0
    %2312 = vmatprep.subr.mxu0 0.0
    %2313 = vmatpush1.msra.mxu0 0.0
    %2314 = vmatprep.subr.mxu0 0.0
    %2315 = vmatpush1.msra.mxu0 0.0
    %2316 = vmatprep.subr.mxu0 0.0
    %2317 = vmatpush1.msra.mxu0 0.0
    %2318 = vmatprep.mubr.f32.mxu0 0.0
    %2319 = vmatmul.mubr.f32.gmra.mrb[0].mxu0 %v2113
    %v2320 = vpop.f32.mrb[0].mxu0
    %v2321 = vadd.f32 0.0, %v2320
    %v2322 = vpop.f32.mrb[0].mxu0
    %v2323 = vadd.f32 0.0, %v2322
    %2324 = vdwg.mxu0
    %v2325 = vadd.f32 %v2115, %v2250
    %v2326 = vadd.f32 %v2116, %v2252
    %v2327 = vadd.f32 %v2117, %v2321
    %v2328 = vadd.f32 %v2118, %v2323
    %v2329 = vxor.u32 %v2325, 2147483648
    %v2330 = vxor.u32 %v2326, 2147483648
    %v2331 = vxor.u32 %v2327, 2147483648
    %v2332 = vmul.f32 %v2329, 1.442695
    %v2333 = vpow.pop %v2332
    %v2334 = vmul.f32 %v2330, 1.442695
    %v2335 = vpow.pop %v2334
    %v2336 = vmul.f32 %v2331, 1.442695
    %v2337 = vpow.pop %v2336
    %v2338 = vadd.f32 %v2333, 1.0
    %v2339 = vadd.f32 %v2335, 1.0
    %v2340 = vadd.f32 %v2337, 1.0
    %v2341 = vrcp.pop %v2338
    %v2342 = vmul.f32 1.0, %v2341
    %v2343 = vrcp.pop %v2339
    %v2344 = vmul.f32 1.0, %v2343
    %v2345 = vrcp.pop %v2340
    %v2346 = vmul.f32 1.0, %v2345
    %v2347 = vtanh.pop %v2328
    %v2348 = vmul.f32 %v2344, %v2111
    %v2349 = vmul.f32 %v2342, %v2347
    %v2350 = vadd.f32 %v2348, %v2349
    %v2351 = vtanh.pop %v2350
    %v2352 = vmul.f32 %v2346, %v2351
    %2353 = vst [vmem:[#allocation3 + $0x38] sm:$0xff] %v2352
    %2354 = vst [vmem:[#allocation16] sm:$0xff] %v2352
    %2355 = vst [vmem:[#allocation17] sm:$0xff] %v2350
    %v2356 = vld [vmem:[#allocation15] sm:$0xf]
    %v2357 = vld [vmem:[#allocation3] sm:$0xff]
    %v2358 = vld [vmem:[#allocation3 + $0x8] sm:$0xff]
    %v2359 = vld [vmem:[#allocation3 + $0x10] sm:$0xff]
    %v2360 = vld [vmem:[#allocation3 + $0x18] sm:$0xff]
    %v2361 = vld [vmem:[#allocation3 + $0x20] sm:$0xff]
    %v2362 = vld [vmem:[#allocation3 + $0x28] sm:$0xff]
    %v2363 = vld [vmem:[#allocation3 + $0x30] sm:$0xff]
    %v2364 = vld [vmem:[#allocation3 + $0x38] sm:$0xff]
    %v2365 = vld [vmem:[#allocation12] sm:$0xff]
    %v2366 = vld [vmem:[#allocation12 + $0x8] sm:$0xff]
    %v2367 = vld [vmem:[#allocation12 + $0x10] sm:$0xff]
    %v2368 = vld [vmem:[#allocation12 + $0x18] sm:$0xff]
    %v2369 = vld [vmem:[#allocation12 + $0x20] sm:$0xff]
    %v2370 = vld [vmem:[#allocation12 + $0x28] sm:$0xff]
    %v2371 = vld [vmem:[#allocation12 + $0x30] sm:$0xff]
    %v2372 = vld [vmem:[#allocation12 + $0x38] sm:$0xff]
    %v2373 = vld [vmem:[#allocation12 + $0x40] sm:$0xff]
    %v2374 = vld [vmem:[#allocation12 + $0x48] sm:$0xff]
    %v2375 = vld [vmem:[#allocation12 + $0x50] sm:$0xff]
    %v2376 = vld [vmem:[#allocation12 + $0x58] sm:$0xff]
    %v2377 = vld [vmem:[#allocation12 + $0x60] sm:$0xff]
    %v2378 = vld [vmem:[#allocation12 + $0x68] sm:$0xff]
    %v2379 = vld [vmem:[#allocation12 + $0x70] sm:$0xff]
    %v2380 = vld [vmem:[#allocation12 + $0x78] sm:$0xff]
    %v2381 = vld [vmem:[#allocation12 + $0x80] sm:$0xff]
    %v2382 = vld [vmem:[#allocation12 + $0x88] sm:$0xff]
    %v2383 = vld [vmem:[#allocation12 + $0x90] sm:$0xff]
    %v2384 = vld [vmem:[#allocation12 + $0x98] sm:$0xff]
    %v2385 = vld [vmem:[#allocation12 + $0xa0] sm:$0xff]
    %v2386 = vld [vmem:[#allocation12 + $0xa8] sm:$0xff]
    %v2387 = vld [vmem:[#allocation12 + $0xb0] sm:$0xff]
    %v2388 = vld [vmem:[#allocation12 + $0xb8] sm:$0xff]
    %v2389 = vld [vmem:[#allocation12 + $0xc0] sm:$0xff]
    %v2390 = vld [vmem:[#allocation12 + $0xc8] sm:$0xff]
    %v2391 = vld [vmem:[#allocation12 + $0xd0] sm:$0xff]
    %v2392 = vld [vmem:[#allocation12 + $0xd8] sm:$0xff]
    %v2393 = vld [vmem:[#allocation12 + $0xe0] sm:$0xff]
    %v2394 = vld [vmem:[#allocation12 + $0xe8] sm:$0xff]
    %v2395 = vld [vmem:[#allocation12 + $0xf0] sm:$0xff]
    %v2396 = vld [vmem:[#allocation12 + $0xf8] sm:$0xff]
    %v2397 = vld [vmem:[#allocation12 + $0x100] sm:$0xff]
    %v2398 = vld [vmem:[#allocation12 + $0x108] sm:$0xff]
    %v2399 = vld [vmem:[#allocation12 + $0x110] sm:$0xff]
    %v2400 = vld [vmem:[#allocation12 + $0x118] sm:$0xff]
    %v2401 = vld [vmem:[#allocation12 + $0x120] sm:$0xff]
    %v2402 = vld [vmem:[#allocation12 + $0x128] sm:$0xff]
    %v2403 = vld [vmem:[#allocation12 + $0x130] sm:$0xff]
    %v2404 = vld [vmem:[#allocation12 + $0x138] sm:$0xff]
    %v2405 = vld [vmem:[#allocation12 + $0x140] sm:$0xff]
    %v2406 = vld [vmem:[#allocation12 + $0x148] sm:$0xff]
    %v2407 = vld [vmem:[#allocation12 + $0x150] sm:$0xff]
    %v2408 = vld [vmem:[#allocation12 + $0x158] sm:$0xff]
    %v2409 = vld [vmem:[#allocation12 + $0x160] sm:$0xff]
    %v2410 = vld [vmem:[#allocation12 + $0x168] sm:$0xff]
    %v2411 = vld [vmem:[#allocation12 + $0x170] sm:$0xff]
    %v2412 = vld [vmem:[#allocation12 + $0x178] sm:$0xff]
    %v2413 = vld [vmem:[#allocation12 + $0x180] sm:$0xff]
    %v2414 = vld [vmem:[#allocation12 + $0x188] sm:$0xff]
    %v2415 = vld [vmem:[#allocation12 + $0x190] sm:$0xff]
    %v2416 = vld [vmem:[#allocation12 + $0x198] sm:$0xff]
    %v2417 = vld [vmem:[#allocation12 + $0x1a0] sm:$0xff]
    %v2418 = vld [vmem:[#allocation12 + $0x1a8] sm:$0xff]
    %v2419 = vld [vmem:[#allocation12 + $0x1b0] sm:$0xff]
    %v2420 = vld [vmem:[#allocation12 + $0x1b8] sm:$0xff]
    %v2421 = vld [vmem:[#allocation12 + $0x1c0] sm:$0xff]
    %v2422 = vld [vmem:[#allocation12 + $0x1c8] sm:$0xff]
    %v2423 = vld [vmem:[#allocation12 + $0x1d0] sm:$0xff]
    %v2424 = vld [vmem:[#allocation12 + $0x1d8] sm:$0xff]
    %v2425 = vld [vmem:[#allocation12 + $0x1e0] sm:$0xff]
    %v2426 = vld [vmem:[#allocation12 + $0x1e8] sm:$0xff]
    %v2427 = vld [vmem:[#allocation12 + $0x1f0] sm:$0xff]
    %v2428 = vld [vmem:[#allocation12 + $0x1f8] sm:$0xff]
    %v2430 = vlaneseq
    %v2431 = vshrl.u32 %v2430, 7
    %v2432 = vsub.s32 0, %v2431
    %v2433 = vrot.slane %v2356, %v2432
    %v2434 = vlaneseq
    %v2435 = vshrl.u32 %v2434, 7
    %v2436 = vsub.s32 1, %v2435
    %v2437 = vrot.slane %v2356, %v2436
    %v2438 = vlaneseq
    %v2439 = vshrl.u32 %v2438, 7
    %v2440 = vsub.s32 2, %v2439
    %v2441 = vrot.slane %v2356, %v2440
    %v2442 = vlaneseq
    %v2443 = vshrl.u32 %v2442, 7
    %v2444 = vsub.s32 3, %v2443
    %v2445 = vrot.slane %v2356, %v2444
    %2450 = vmatprep.subr.mxu0 %v2366
    %2451 = vmatpush1.msra.mxu0 %v2365
    %2452 = vmatprep.subr.mxu0 %v2370
    %2453 = vmatpush1.msra.mxu0 %v2369
    %2454 = vmatprep.subr.mxu0 %v2374
    %2455 = vmatpush1.msra.mxu0 %v2373
    %2456 = vmatprep.subr.mxu0 %v2378
    %2457 = vmatpush1.msra.mxu0 %v2377
    %2458 = vmatprep.subr.mxu0 %v2382
    %2459 = vmatpush1.msra.mxu0 %v2381
    %2460 = vmatprep.subr.mxu0 %v2386
    %2461 = vmatpush1.msra.mxu0 %v2385
    %2462 = vmatprep.subr.mxu0 %v2390
    %2463 = vmatpush1.msra.mxu0 %v2389
    %2464 = vmatprep.subr.mxu0 %v2394
    %2465 = vmatpush1.msra.mxu0 %v2393
    %2466 = vmatprep.subr.mxu0 %v2398
    %2467 = vmatpush1.msra.mxu0 %v2397
    %2468 = vmatprep.subr.mxu0 %v2402
    %2469 = vmatpush1.msra.mxu0 %v2401
    %2470 = vmatprep.subr.mxu0 %v2406
    %2471 = vmatpush1.msra.mxu0 %v2405
    %2472 = vmatprep.subr.mxu0 %v2410
    %2473 = vmatpush1.msra.mxu0 %v2409
    %2474 = vmatprep.subr.mxu0 %v2414
    %2475 = vmatpush1.msra.mxu0 %v2413
    %2476 = vmatprep.subr.mxu0 %v2418
    %2477 = vmatpush1.msra.mxu0 %v2417
    %2478 = vmatprep.subr.mxu0 %v2422
    %2479 = vmatpush1.msra.mxu0 %v2421
    %2480 = vmatprep.subr.mxu0 %v2426
    %2481 = vmatpush1.msra.mxu0 %v2425
    %2482 = vmatprep.subr.mxu0 0.0
    %2483 = vmatpush1.msra.mxu0 0.0
    %2484 = vmatprep.subr.mxu0 0.0
    %2485 = vmatpush1.msra.mxu0 0.0
    %2486 = vmatprep.subr.mxu0 0.0
    %2487 = vmatpush1.msra.mxu0 0.0
    %2488 = vmatprep.subr.mxu0 0.0
    %2489 = vmatpush1.msra.mxu0 0.0
    %2490 = vmatprep.subr.mxu0 0.0
    %2491 = vmatpush1.msra.mxu0 0.0
    %2492 = vmatprep.subr.mxu0 0.0
    %2493 = vmatpush1.msra.mxu0 0.0
    %2494 = vmatprep.subr.mxu0 0.0
    %2495 = vmatpush1.msra.mxu0 0.0
    %2496 = vmatprep.subr.mxu0 0.0
    %2497 = vmatpush1.msra.mxu0 0.0
    %2498 = vmatprep.subr.mxu0 0.0
    %2499 = vmatpush1.msra.mxu0 0.0
    %2500 = vmatprep.subr.mxu0 0.0
    %2501 = vmatpush1.msra.mxu0 0.0
    %2502 = vmatprep.subr.mxu0 0.0
    %2503 = vmatpush1.msra.mxu0 0.0
    %2504 = vmatprep.subr.mxu0 0.0
    %2505 = vmatpush1.msra.mxu0 0.0
    %2506 = vmatprep.subr.mxu0 0.0
    %2507 = vmatpush1.msra.mxu0 0.0
    %2508 = vmatprep.subr.mxu0 0.0
    %2509 = vmatpush1.msra.mxu0 0.0
    %2510 = vmatprep.subr.mxu0 0.0
    %2511 = vmatpush1.msra.mxu0 0.0
    %2512 = vmatprep.subr.mxu0 0.0
    %2513 = vmatpush1.msra.mxu0 0.0
    %2514 = vmatprep.mubr.f32.mxu0 0.0
    %2515 = vmatmul.mubr.f32.gmra.mrb[0].mxu0 %v2357
    %v2516 = vpop.f32.mrb[0].mxu0
    %v2517 = vadd.f32 %v2433, %v2516
    %v2518 = vpop.f32.mrb[0].mxu0
    %v2519 = vadd.f32 %v2437, %v2518
    %2520 = vmatprep.mubr.f32.mxu0 0.0
    %2521 = vmatmul.mubr.f32.gmra.mrb[0].mxu0 %v2358
    %v2522 = vpop.f32.mrb[0].mxu0
    %v2523 = vadd.f32 %v2433, %v2522
    %v2524 = vpop.f32.mrb[0].mxu0
    %v2525 = vadd.f32 %v2437, %v2524
    %2526 = vmatprep.mubr.f32.mxu0 0.0
    %2527 = vmatmul.mubr.f32.gmra.mrb[0].mxu0 %v2359
    %v2528 = vpop.f32.mrb[0].mxu0
    %v2529 = vadd.f32 %v2433, %v2528
    %v2530 = vpop.f32.mrb[0].mxu0
    %v2531 = vadd.f32 %v2437, %v2530
    %2532 = vmatprep.mubr.f32.mxu0 0.0
    %2533 = vmatmul.mubr.f32.gmra.mrb[0].mxu0 %v2360
    %v2534 = vpop.f32.mrb[0].mxu0
    %v2535 = vadd.f32 %v2433, %v2534
    %v2536 = vpop.f32.mrb[0].mxu0
    %v2537 = vadd.f32 %v2437, %v2536
    %2538 = vmatprep.mubr.f32.mxu0 0.0
    %2539 = vmatmul.mubr.f32.gmra.mrb[0].mxu0 %v2361
    %v2540 = vpop.f32.mrb[0].mxu0
    %v2541 = vadd.f32 %v2433, %v2540
    %v2542 = vpop.f32.mrb[0].mxu0
    %v2543 = vadd.f32 %v2437, %v2542
    %2544 = vmatprep.mubr.f32.mxu0 0.0
    %2545 = vmatmul.mubr.f32.gmra.mrb[0].mxu0 %v2362
    %v2546 = vpop.f32.mrb[0].mxu0
    %v2547 = vadd.f32 %v2433, %v2546
    %v2548 = vpop.f32.mrb[0].mxu0
    %v2549 = vadd.f32 %v2437, %v2548
    %2550 = vmatprep.mubr.f32.mxu0 0.0
    %2551 = vmatmul.mubr.f32.gmra.mrb[0].mxu0 %v2363
    %v2552 = vpop.f32.mrb[0].mxu0
    %v2553 = vadd.f32 %v2433, %v2552
    %v2554 = vpop.f32.mrb[0].mxu0
    %v2555 = vadd.f32 %v2437, %v2554
    %2556 = vmatprep.mubr.f32.mxu0 0.0
    %2557 = vmatmul.mubr.f32.gmra.mrb[0].mxu0 %v2364
    %v2558 = vpop.f32.mrb[0].mxu0
    %v2559 = vadd.f32 %v2433, %v2558
    %v2560 = vpop.f32.mrb[0].mxu0
    %v2561 = vadd.f32 %v2437, %v2560
    %2562 = vdwg.mxu0
    %2563 = vmatprep.subr.mxu0 %v2368
    %2564 = vmatpush1.msra.mxu0 %v2367
    %2565 = vmatprep.subr.mxu0 %v2372
    %2566 = vmatpush1.msra.mxu0 %v2371
    %2567 = vmatprep.subr.mxu0 %v2376
    %2568 = vmatpush1.msra.mxu0 %v2375
    %2569 = vmatprep.subr.mxu0 %v2380
    %2570 = vmatpush1.msra.mxu0 %v2379
    %2571 = vmatprep.subr.mxu0 %v2384
    %2572 = vmatpush1.msra.mxu0 %v2383
    %2573 = vmatprep.subr.mxu0 %v2388
    %2574 = vmatpush1.msra.mxu0 %v2387
    %2575 = vmatprep.subr.mxu0 %v2392
    %2576 = vmatpush1.msra.mxu0 %v2391
    %2577 = vmatprep.subr.mxu0 %v2396
    %2578 = vmatpush1.msra.mxu0 %v2395
    %2579 = vmatprep.subr.mxu0 %v2400
    %2580 = vmatpush1.msra.mxu0 %v2399
    %2581 = vmatprep.subr.mxu0 %v2404
    %2582 = vmatpush1.msra.mxu0 %v2403
    %2583 = vmatprep.subr.mxu0 %v2408
    %2584 = vmatpush1.msra.mxu0 %v2407
    %2585 = vmatprep.subr.mxu0 %v2412
    %2586 = vmatpush1.msra.mxu0 %v2411
    %2587 = vmatprep.subr.mxu0 %v2416
    %2588 = vmatpush1.msra.mxu0 %v2415
    %2589 = vmatprep.subr.mxu0 %v2420
    %2590 = vmatpush1.msra.mxu0 %v2419
    %2591 = vmatprep.subr.mxu0 %v2424
    %2592 = vmatpush1.msra.mxu0 %v2423
    %2593 = vmatprep.subr.mxu0 %v2428
    %2594 = vmatpush1.msra.mxu0 %v2427
    %2595 = vmatprep.subr.mxu0 0.0
    %2596 = vmatpush1.msra.mxu0 0.0
    %2597 = vmatprep.subr.mxu0 0.0
    %2598 = vmatpush1.msra.mxu0 0.0
    %2599 = vmatprep.subr.mxu0 0.0
    %2600 = vmatpush1.msra.mxu0 0.0
    %2601 = vmatprep.subr.mxu0 0.0
    %2602 = vmatpush1.msra.mxu0 0.0
    %2603 = vmatprep.subr.mxu0 0.0
    %2604 = vmatpush1.msra.mxu0 0.0
    %2605 = vmatprep.subr.mxu0 0.0
    %2606 = vmatpush1.msra.mxu0 0.0
    %2607 = vmatprep.subr.mxu0 0.0
    %2608 = vmatpush1.msra.mxu0 0.0
    %2609 = vmatprep.subr.mxu0 0.0
    %2610 = vmatpush1.msra.mxu0 0.0
    %2611 = vmatprep.subr.mxu0 0.0
    %2612 = vmatpush1.msra.mxu0 0.0
    %2613 = vmatprep.subr.mxu0 0.0
    %2614 = vmatpush1.msra.mxu0 0.0
    %2615 = vmatprep.subr.mxu0 0.0
    %2616 = vmatpush1.msra.mxu0 0.0
    %2617 = vmatprep.subr.mxu0 0.0
    %2618 = vmatpush1.msra.mxu0 0.0
    %2619 = vmatprep.subr.mxu0 0.0
    %2620 = vmatpush1.msra.mxu0 0.0
    %2621 = vmatprep.subr.mxu0 0.0
    %2622 = vmatpush1.msra.mxu0 0.0
    %2623 = vmatprep.subr.mxu0 0.0
    %2624 = vmatpush1.msra.mxu0 0.0
    %2625 = vmatprep.subr.mxu0 0.0
    %2626 = vmatpush1.msra.mxu0 0.0
    %2627 = vmatprep.mubr.f32.mxu0 0.0
    %2628 = vmatmul.mubr.f32.gmra.mrb[0].mxu0 %v2357
    %v2629 = vpop.f32.mrb[0].mxu0
    %v2630 = vadd.f32 %v2441, %v2629
    %v2631 = vpop.f32.mrb[0].mxu0
    %v2632 = vadd.f32 %v2445, %v2631
    %2633 = vmatprep.mubr.f32.mxu0 0.0
    %2634 = vmatmul.mubr.f32.gmra.mrb[0].mxu0 %v2358
    %v2635 = vpop.f32.mrb[0].mxu0
    %v2636 = vadd.f32 %v2441, %v2635
    %v2637 = vpop.f32.mrb[0].mxu0
    %v2638 = vadd.f32 %v2445, %v2637
    %2639 = vmatprep.mubr.f32.mxu0 0.0
    %2640 = vmatmul.mubr.f32.gmra.mrb[0].mxu0 %v2359
    %v2641 = vpop.f32.mrb[0].mxu0
    %v2642 = vadd.f32 %v2441, %v2641
    %v2643 = vpop.f32.mrb[0].mxu0
    %v2644 = vadd.f32 %v2445, %v2643
    %2645 = vmatprep.mubr.f32.mxu0 0.0
    %2646 = vmatmul.mubr.f32.gmra.mrb[0].mxu0 %v2360
    %v2647 = vpop.f32.mrb[0].mxu0
    %v2648 = vadd.f32 %v2441, %v2647
    %v2649 = vpop.f32.mrb[0].mxu0
    %v2650 = vadd.f32 %v2445, %v2649
    %2651 = vmatprep.mubr.f32.mxu0 0.0
    %2652 = vmatmul.mubr.f32.gmra.mrb[0].mxu0 %v2361
    %v2653 = vpop.f32.mrb[0].mxu0
    %v2654 = vadd.f32 %v2441, %v2653
    %v2655 = vpop.f32.mrb[0].mxu0
    %v2656 = vadd.f32 %v2445, %v2655
    %2657 = vmatprep.mubr.f32.mxu0 0.0
    %2658 = vmatmul.mubr.f32.gmra.mrb[0].mxu0 %v2362
    %v2659 = vpop.f32.mrb[0].mxu0
    %v2660 = vadd.f32 %v2441, %v2659
    %v2661 = vpop.f32.mrb[0].mxu0
    %v2662 = vadd.f32 %v2445, %v2661
    %2663 = vmatprep.mubr.f32.mxu0 0.0
    %2664 = vmatmul.mubr.f32.gmra.mrb[0].mxu0 %v2363
    %v2665 = vpop.f32.mrb[0].mxu0
    %v2666 = vadd.f32 %v2441, %v2665
    %v2667 = vpop.f32.mrb[0].mxu0
    %v2668 = vadd.f32 %v2445, %v2667
    %2669 = vmatprep.mubr.f32.mxu0 0.0
    %2670 = vmatmul.mubr.f32.gmra.mrb[0].mxu0 %v2364
    %v2671 = vpop.f32.mrb[0].mxu0
    %v2672 = vadd.f32 %v2441, %v2671
    %v2673 = vpop.f32.mrb[0].mxu0
    %v2674 = vadd.f32 %v2445, %v2673
    %2675 = vdwg.mxu0
    %2676 = vst [vmem:[#allocation2] sm:$0xff] %v2517
    %2677 = vst [vmem:[#allocation2 + $0x8] sm:$0xff] %v2519
    %2678 = vst [vmem:[#allocation2 + $0x10] sm:$0xff] %v2630
    %2679 = vst [vmem:[#allocation2 + $0x18] sm:$0xff] %v2632
    %2680 = vst [vmem:[#allocation2 + $0x20] sm:$0xff] %v2523
    %2681 = vst [vmem:[#allocation2 + $0x28] sm:$0xff] %v2525
    %2682 = vst [vmem:[#allocation2 + $0x30] sm:$0xff] %v2636
    %2683 = vst [vmem:[#allocation2 + $0x38] sm:$0xff] %v2638
    %2684 = vst [vmem:[#allocation2 + $0x40] sm:$0xff] %v2529
    %2685 = vst [vmem:[#allocation2 + $0x48] sm:$0xff] %v2531
    %2686 = vst [vmem:[#allocation2 + $0x50] sm:$0xff] %v2642
    %2687 = vst [vmem:[#allocation2 + $0x58] sm:$0xff] %v2644
    %2688 = vst [vmem:[#allocation2 + $0x60] sm:$0xff] %v2535
    %2689 = vst [vmem:[#allocation2 + $0x68] sm:$0xff] %v2537
    %2690 = vst [vmem:[#allocation2 + $0x70] sm:$0xff] %v2648
    %2691 = vst [vmem:[#allocation2 + $0x78] sm:$0xff] %v2650
    %2692 = vst [vmem:[#allocation2 + $0x80] sm:$0xff] %v2541
    %2693 = vst [vmem:[#allocation2 + $0x88] sm:$0xff] %v2543
    %2694 = vst [vmem:[#allocation2 + $0x90] sm:$0xff] %v2654
    %2695 = vst [vmem:[#allocation2 + $0x98] sm:$0xff] %v2656
    %2696 = vst [vmem:[#allocation2 + $0xa0] sm:$0xff] %v2547
    %2697 = vst [vmem:[#allocation2 + $0xa8] sm:$0xff] %v2549
    %2698 = vst [vmem:[#allocation2 + $0xb0] sm:$0xff] %v2660
    %2699 = vst [vmem:[#allocation2 + $0xb8] sm:$0xff] %v2662
    %2700 = vst [vmem:[#allocation2 + $0xc0] sm:$0xff] %v2553
    %2701 = vst [vmem:[#allocation2 + $0xc8] sm:$0xff] %v2555
    %2702 = vst [vmem:[#allocation2 + $0xd0] sm:$0xff] %v2666
    %2703 = vst [vmem:[#allocation2 + $0xd8] sm:$0xff] %v2668
    %2704 = vst [vmem:[#allocation2 + $0xe0] sm:$0xff] %v2559
    %2705 = vst [vmem:[#allocation2 + $0xe8] sm:$0xff] %v2561
    %2706 = vst [vmem:[#allocation2 + $0xf0] sm:$0xff] %v2672
    %2707 = vst [vmem:[#allocation2 + $0xf8] sm:$0xff] %v2674
    %v2708 = vld [vmem:[#allocation2] sm:$0xff]
    %v2709 = vld [vmem:[#allocation2 + $0x8] sm:$0xff]
    %v2710 = vld [vmem:[#allocation2 + $0x10] sm:$0xff]
    %v2711 = vld [vmem:[#allocation2 + $0x18] sm:$0xff]
    %v2712 = vld [vmem:[#allocation13] sm:$0xff]
    %v2713 = vld [vmem:[#allocation13 + $0x8] sm:$0xff]
    %v2714 = vld [vmem:[#allocation13 + $0x10] sm:$0xff]
    %v2715 = vld [vmem:[#allocation13 + $0x18] sm:$0xff]
    %v2716 = vld [vmem:[#allocation13 + $0x20] sm:$0xff]
    %v2717 = vld [vmem:[#allocation13 + $0x28] sm:$0xff]
    %v2718 = vld [vmem:[#allocation13 + $0x30] sm:$0xff]
    %v2719 = vld [vmem:[#allocation13 + $0x38] sm:$0xff]
    %v2720 = vld [vmem:[#allocation13 + $0x40] sm:$0xff]
    %v2721 = vld [vmem:[#allocation13 + $0x48] sm:$0xff]
    %v2722 = vld [vmem:[#allocation13 + $0x50] sm:$0xff]
    %v2723 = vld [vmem:[#allocation13 + $0x58] sm:$0xff]
    %v2724 = vld [vmem:[#allocation13 + $0x60] sm:$0xff]
    %v2725 = vld [vmem:[#allocation13 + $0x68] sm:$0xff]
    %v2726 = vld [vmem:[#allocation13 + $0x70] sm:$0xff]
    %v2727 = vld [vmem:[#allocation13 + $0x78] sm:$0xff]
    %v2728 = vld [vmem:[#allocation13 + $0x80] sm:$0xff]
    %v2729 = vld [vmem:[#allocation13 + $0x88] sm:$0xff]
    %v2730 = vld [vmem:[#allocation13 + $0x90] sm:$0xff]
    %v2731 = vld [vmem:[#allocation13 + $0x98] sm:$0xff]
    %v2732 = vld [vmem:[#allocation13 + $0xa0] sm:$0xff]
    %v2733 = vld [vmem:[#allocation13 + $0xa8] sm:$0xff]
    %v2734 = vld [vmem:[#allocation13 + $0xb0] sm:$0xff]
    %v2735 = vld [vmem:[#allocation13 + $0xb8] sm:$0xff]
    %v2736 = vld [vmem:[#allocation13 + $0xc0] sm:$0xff]
    %v2737 = vld [vmem:[#allocation13 + $0xc8] sm:$0xff]
    %v2738 = vld [vmem:[#allocation13 + $0xd0] sm:$0xff]
    %v2739 = vld [vmem:[#allocation13 + $0xd8] sm:$0xff]
    %v2740 = vld [vmem:[#allocation13 + $0xe0] sm:$0xff]
    %v2741 = vld [vmem:[#allocation13 + $0xe8] sm:$0xff]
    %v2742 = vld [vmem:[#allocation13 + $0xf0] sm:$0xff]
    %v2743 = vld [vmem:[#allocation13 + $0xf8] sm:$0xff]
    %v2744 = vld [vmem:[#allocation13 + $0x100] sm:$0xff]
    %v2745 = vld [vmem:[#allocation13 + $0x108] sm:$0xff]
    %v2746 = vld [vmem:[#allocation13 + $0x110] sm:$0xff]
    %v2747 = vld [vmem:[#allocation13 + $0x118] sm:$0xff]
    %v2748 = vld [vmem:[#allocation13 + $0x120] sm:$0xff]
    %v2749 = vld [vmem:[#allocation13 + $0x128] sm:$0xff]
    %v2750 = vld [vmem:[#allocation13 + $0x130] sm:$0xff]
    %v2751 = vld [vmem:[#allocation13 + $0x138] sm:$0xff]
    %v2752 = vld [vmem:[#allocation13 + $0x140] sm:$0xff]
    %v2753 = vld [vmem:[#allocation13 + $0x148] sm:$0xff]
    %v2754 = vld [vmem:[#allocation13 + $0x150] sm:$0xff]
    %v2755 = vld [vmem:[#allocation13 + $0x158] sm:$0xff]
    %v2756 = vld [vmem:[#allocation13 + $0x160] sm:$0xff]
    %v2757 = vld [vmem:[#allocation13 + $0x168] sm:$0xff]
    %v2758 = vld [vmem:[#allocation13 + $0x170] sm:$0xff]
    %v2759 = vld [vmem:[#allocation13 + $0x178] sm:$0xff]
    %v2760 = vld [vmem:[#allocation13 + $0x180] sm:$0xff]
    %v2761 = vld [vmem:[#allocation13 + $0x188] sm:$0xff]
    %v2762 = vld [vmem:[#allocation13 + $0x190] sm:$0xff]
    %v2763 = vld [vmem:[#allocation13 + $0x198] sm:$0xff]
    %v2764 = vld [vmem:[#allocation13 + $0x1a0] sm:$0xff]
    %v2765 = vld [vmem:[#allocation13 + $0x1a8] sm:$0xff]
    %v2766 = vld [vmem:[#allocation13 + $0x1b0] sm:$0xff]
    %v2767 = vld [vmem:[#allocation13 + $0x1b8] sm:$0xff]
    %v2768 = vld [vmem:[#allocation13 + $0x1c0] sm:$0xff]
    %v2769 = vld [vmem:[#allocation13 + $0x1c8] sm:$0xff]
    %v2770 = vld [vmem:[#allocation13 + $0x1d0] sm:$0xff]
    %v2771 = vld [vmem:[#allocation13 + $0x1d8] sm:$0xff]
    %v2772 = vld [vmem:[#allocation13 + $0x1e0] sm:$0xff]
    %v2773 = vld [vmem:[#allocation13 + $0x1e8] sm:$0xff]
    %v2774 = vld [vmem:[#allocation13 + $0x1f0] sm:$0xff]
    %v2775 = vld [vmem:[#allocation13 + $0x1f8] sm:$0xff]
    %2776 = vmatprep.subr.mxu0 %v2713
    %2777 = vmatpush1.msra.mxu0 %v2712
    %2778 = vmatprep.subr.mxu0 %v2717
    %2779 = vmatpush1.msra.mxu0 %v2716
    %2780 = vmatprep.subr.mxu0 %v2721
    %2781 = vmatpush1.msra.mxu0 %v2720
    %2782 = vmatprep.subr.mxu0 %v2725
    %2783 = vmatpush1.msra.mxu0 %v2724
    %2784 = vmatprep.subr.mxu0 %v2729
    %2785 = vmatpush1.msra.mxu0 %v2728
    %2786 = vmatprep.subr.mxu0 %v2733
    %2787 = vmatpush1.msra.mxu0 %v2732
    %2788 = vmatprep.subr.mxu0 %v2737
    %2789 = vmatpush1.msra.mxu0 %v2736
    %2790 = vmatprep.subr.mxu0 %v2741
    %2791 = vmatpush1.msra.mxu0 %v2740
    %2792 = vmatprep.subr.mxu0 %v2745
    %2793 = vmatpush1.msra.mxu0 %v2744
    %2794 = vmatprep.subr.mxu0 %v2749
    %2795 = vmatpush1.msra.mxu0 %v2748
    %2796 = vmatprep.subr.mxu0 %v2753
    %2797 = vmatpush1.msra.mxu0 %v2752
    %2798 = vmatprep.subr.mxu0 %v2757
    %2799 = vmatpush1.msra.mxu0 %v2756
    %2800 = vmatprep.subr.mxu0 %v2761
    %2801 = vmatpush1.msra.mxu0 %v2760
    %2802 = vmatprep.subr.mxu0 %v2765
    %2803 = vmatpush1.msra.mxu0 %v2764
    %2804 = vmatprep.subr.mxu0 %v2769
    %2805 = vmatpush1.msra.mxu0 %v2768
    %2806 = vmatprep.subr.mxu0 %v2773
    %2807 = vmatpush1.msra.mxu0 %v2772
    %2808 = vmatprep.subr.mxu0 0.0
    %2809 = vmatpush1.msra.mxu0 0.0
    %2810 = vmatprep.subr.mxu0 0.0
    %2811 = vmatpush1.msra.mxu0 0.0
    %2812 = vmatprep.subr.mxu0 0.0
    %2813 = vmatpush1.msra.mxu0 0.0
    %2814 = vmatprep.subr.mxu0 0.0
    %2815 = vmatpush1.msra.mxu0 0.0
    %2816 = vmatprep.subr.mxu0 0.0
    %2817 = vmatpush1.msra.mxu0 0.0
    %2818 = vmatprep.subr.mxu0 0.0
    %2819 = vmatpush1.msra.mxu0 0.0
    %2820 = vmatprep.subr.mxu0 0.0
    %2821 = vmatpush1.msra.mxu0 0.0
    %2822 = vmatprep.subr.mxu0 0.0
    %2823 = vmatpush1.msra.mxu0 0.0
    %2824 = vmatprep.subr.mxu0 0.0
    %2825 = vmatpush1.msra.mxu0 0.0
    %2826 = vmatprep.subr.mxu0 0.0
    %2827 = vmatpush1.msra.mxu0 0.0
    %2828 = vmatprep.subr.mxu0 0.0
    %2829 = vmatpush1.msra.mxu0 0.0
    %2830 = vmatprep.subr.mxu0 0.0
    %2831 = vmatpush1.msra.mxu0 0.0
    %2832 = vmatprep.subr.mxu0 0.0
    %2833 = vmatpush1.msra.mxu0 0.0
    %2834 = vmatprep.subr.mxu0 0.0
    %2835 = vmatpush1.msra.mxu0 0.0
    %2836 = vmatprep.subr.mxu0 0.0
    %2837 = vmatpush1.msra.mxu0 0.0
    %2838 = vmatprep.subr.mxu0 0.0
    %2839 = vmatpush1.msra.mxu0 0.0
    %2840 = vmatprep.mubr.f32.mxu0 0.0
    %2841 = vmatmul.mubr.f32.gmra.mrb[0].mxu0 0.0
    %v2842 = vpop.f32.mrb[0].mxu0
    %v2843 = vadd.f32 0.0, %v2842
    %v2844 = vpop.f32.mrb[0].mxu0
    %v2845 = vadd.f32 0.0, %v2844
    %2846 = vdwg.mxu0
    %2847 = vmatprep.subr.mxu0 %v2715
    %2848 = vmatpush1.msra.mxu0 %v2714
    %2849 = vmatprep.subr.mxu0 %v2719
    %2850 = vmatpush1.msra.mxu0 %v2718
    %2851 = vmatprep.subr.mxu0 %v2723
    %2852 = vmatpush1.msra.mxu0 %v2722
    %2853 = vmatprep.subr.mxu0 %v2727
    %2854 = vmatpush1.msra.mxu0 %v2726
    %2855 = vmatprep.subr.mxu0 %v2731
    %2856 = vmatpush1.msra.mxu0 %v2730
    %2857 = vmatprep.subr.mxu0 %v2735
    %2858 = vmatpush1.msra.mxu0 %v2734
    %2859 = vmatprep.subr.mxu0 %v2739
    %2860 = vmatpush1.msra.mxu0 %v2738
    %2861 = vmatprep.subr.mxu0 %v2743
    %2862 = vmatpush1.msra.mxu0 %v2742
    %2863 = vmatprep.subr.mxu0 %v2747
    %2864 = vmatpush1.msra.mxu0 %v2746
    %2865 = vmatprep.subr.mxu0 %v2751
    %2866 = vmatpush1.msra.mxu0 %v2750
    %2867 = vmatprep.subr.mxu0 %v2755
    %2868 = vmatpush1.msra.mxu0 %v2754
    %2869 = vmatprep.subr.mxu0 %v2759
    %2870 = vmatpush1.msra.mxu0 %v2758
    %2871 = vmatprep.subr.mxu0 %v2763
    %2872 = vmatpush1.msra.mxu0 %v2762
    %2873 = vmatprep.subr.mxu0 %v2767
    %2874 = vmatpush1.msra.mxu0 %v2766
    %2875 = vmatprep.subr.mxu0 %v2771
    %2876 = vmatpush1.msra.mxu0 %v2770
    %2877 = vmatprep.subr.mxu0 %v2775
    %2878 = vmatpush1.msra.mxu0 %v2774
    %2879 = vmatprep.subr.mxu0 0.0
    %2880 = vmatpush1.msra.mxu0 0.0
    %2881 = vmatprep.subr.mxu0 0.0
    %2882 = vmatpush1.msra.mxu0 0.0
    %2883 = vmatprep.subr.mxu0 0.0
    %2884 = vmatpush1.msra.mxu0 0.0
    %2885 = vmatprep.subr.mxu0 0.0
    %2886 = vmatpush1.msra.mxu0 0.0
    %2887 = vmatprep.subr.mxu0 0.0
    %2888 = vmatpush1.msra.mxu0 0.0
    %2889 = vmatprep.subr.mxu0 0.0
    %2890 = vmatpush1.msra.mxu0 0.0
    %2891 = vmatprep.subr.mxu0 0.0
    %2892 = vmatpush1.msra.mxu0 0.0
    %2893 = vmatprep.subr.mxu0 0.0
    %2894 = vmatpush1.msra.mxu0 0.0
    %2895 = vmatprep.subr.mxu0 0.0
    %2896 = vmatpush1.msra.mxu0 0.0
    %2897 = vmatprep.subr.mxu0 0.0
    %2898 = vmatpush1.msra.mxu0 0.0
    %2899 = vmatprep.subr.mxu0 0.0
    %2900 = vmatpush1.msra.mxu0 0.0
    %2901 = vmatprep.subr.mxu0 0.0
    %2902 = vmatpush1.msra.mxu0 0.0
    %2903 = vmatprep.subr.mxu0 0.0
    %2904 = vmatpush1.msra.mxu0 0.0
    %2905 = vmatprep.subr.mxu0 0.0
    %2906 = vmatpush1.msra.mxu0 0.0
    %2907 = vmatprep.subr.mxu0 0.0
    %2908 = vmatpush1.msra.mxu0 0.0
    %2909 = vmatprep.subr.mxu0 0.0
    %2910 = vmatpush1.msra.mxu0 0.0
    %2911 = vmatprep.mubr.f32.mxu0 0.0
    %2912 = vmatmul.mubr.f32.gmra.mrb[0].mxu0 0.0
    %v2913 = vpop.f32.mrb[0].mxu0
    %v2914 = vadd.f32 0.0, %v2913
    %v2915 = vpop.f32.mrb[0].mxu0
    %v2916 = vadd.f32 0.0, %v2915
    %2917 = vdwg.mxu0
    %v2918 = vadd.f32 %v2708, %v2843
    %v2919 = vadd.f32 %v2709, %v2845
    %v2920 = vadd.f32 %v2710, %v2914
    %v2921 = vadd.f32 %v2711, %v2916
    %v2922 = vxor.u32 %v2918, 2147483648
    %v2923 = vxor.u32 %v2919, 2147483648
    %v2924 = vxor.u32 %v2920, 2147483648
    %v2925 = vmul.f32 %v2922, 1.442695
    %v2926 = vpow.pop %v2925
    %v2927 = vmul.f32 %v2923, 1.442695
    %v2928 = vpow.pop %v2927
    %v2929 = vmul.f32 %v2924, 1.442695
    %v2930 = vpow.pop %v2929
    %v2931 = vadd.f32 %v2926, 1.0
    %v2932 = vadd.f32 %v2928, 1.0
    %v2933 = vadd.f32 %v2930, 1.0
    %v2934 = vrcp.pop %v2931
    %v2935 = vmul.f32 1.0, %v2934
    %v2936 = vrcp.pop %v2932
    %v2937 = vmul.f32 1.0, %v2936
    %v2938 = vrcp.pop %v2933
    %v2939 = vmul.f32 1.0, %v2938
    %v2940 = vtanh.pop %v2921
    %v2941 = vmul.f32 %v2937, 0.0
    %v2942 = vmul.f32 %v2935, %v2940
    %v2943 = vadd.f32 %v2941, %v2942
    %v2944 = vtanh.pop %v2943
    %v2945 = vmul.f32 %v2939, %v2944
    %v2946 = vld [vmem:[#allocation2 + $0x20] sm:$0xff]
    %v2947 = vld [vmem:[#allocation2 + $0x28] sm:$0xff]
    %v2948 = vld [vmem:[#allocation2 + $0x30] sm:$0xff]
    %v2949 = vld [vmem:[#allocation2 + $0x38] sm:$0xff]
    %2950 = vmatprep.subr.mxu0 %v2713
    %2951 = vmatpush1.msra.mxu0 %v2712
    %2952 = vmatprep.subr.mxu0 %v2717
    %2953 = vmatpush1.msra.mxu0 %v2716
    %2954 = vmatprep.subr.mxu0 %v2721
    %2955 = vmatpush1.msra.mxu0 %v2720
    %2956 = vmatprep.subr.mxu0 %v2725
    %2957 = vmatpush1.msra.mxu0 %v2724
    %2958 = vmatprep.subr.mxu0 %v2729
    %2959 = vmatpush1.msra.mxu0 %v2728
    %2960 = vmatprep.subr.mxu0 %v2733
    %2961 = vmatpush1.msra.mxu0 %v2732
    %2962 = vmatprep.subr.mxu0 %v2737
    %2963 = vmatpush1.msra.mxu0 %v2736
    %2964 = vmatprep.subr.mxu0 %v2741
    %2965 = vmatpush1.msra.mxu0 %v2740
    %2966 = vmatprep.subr.mxu0 %v2745
    %2967 = vmatpush1.msra.mxu0 %v2744
    %2968 = vmatprep.subr.mxu0 %v2749
    %2969 = vmatpush1.msra.mxu0 %v2748
    %2970 = vmatprep.subr.mxu0 %v2753
    %2971 = vmatpush1.msra.mxu0 %v2752
    %2972 = vmatprep.subr.mxu0 %v2757
    %2973 = vmatpush1.msra.mxu0 %v2756
    %2974 = vmatprep.subr.mxu0 %v2761
    %2975 = vmatpush1.msra.mxu0 %v2760
    %2976 = vmatprep.subr.mxu0 %v2765
    %2977 = vmatpush1.msra.mxu0 %v2764
    %2978 = vmatprep.subr.mxu0 %v2769
    %2979 = vmatpush1.msra.mxu0 %v2768
    %2980 = vmatprep.subr.mxu0 %v2773
    %2981 = vmatpush1.msra.mxu0 %v2772
    %2982 = vmatprep.subr.mxu0 0.0
    %2983 = vmatpush1.msra.mxu0 0.0
    %2984 = vmatprep.subr.mxu0 0.0
    %2985 = vmatpush1.msra.mxu0 0.0
    %2986 = vmatprep.subr.mxu0 0.0
    %2987 = vmatpush1.msra.mxu0 0.0
    %2988 = vmatprep.subr.mxu0 0.0
    %2989 = vmatpush1.msra.mxu0 0.0
    %2990 = vmatprep.subr.mxu0 0.0
    %2991 = vmatpush1.msra.mxu0 0.0
    %2992 = vmatprep.subr.mxu0 0.0
    %2993 = vmatpush1.msra.mxu0 0.0
    %2994 = vmatprep.subr.mxu0 0.0
    %2995 = vmatpush1.msra.mxu0 0.0
    %2996 = vmatprep.subr.mxu0 0.0
    %2997 = vmatpush1.msra.mxu0 0.0
    %2998 = vmatprep.subr.mxu0 0.0
    %2999 = vmatpush1.msra.mxu0 0.0
    %3000 = vmatprep.subr.mxu0 0.0
    %3001 = vmatpush1.msra.mxu0 0.0
    %3002 = vmatprep.subr.mxu0 0.0
    %3003 = vmatpush1.msra.mxu0 0.0
    %3004 = vmatprep.subr.mxu0 0.0
    %3005 = vmatpush1.msra.mxu0 0.0
    %3006 = vmatprep.subr.mxu0 0.0
    %3007 = vmatpush1.msra.mxu0 0.0
    %3008 = vmatprep.subr.mxu0 0.0
    %3009 = vmatpush1.msra.mxu0 0.0
    %3010 = vmatprep.subr.mxu0 0.0
    %3011 = vmatpush1.msra.mxu0 0.0
    %3012 = vmatprep.subr.mxu0 0.0
    %3013 = vmatpush1.msra.mxu0 0.0
    %3014 = vmatprep.mubr.f32.mxu0 0.0
    %3015 = vmatmul.mubr.f32.gmra.mrb[0].mxu0 %v2945
    %v3016 = vpop.f32.mrb[0].mxu0
    %v3017 = vadd.f32 0.0, %v3016
    %v3018 = vpop.f32.mrb[0].mxu0
    %v3019 = vadd.f32 0.0, %v3018
    %3020 = vdwg.mxu0
    %3021 = vmatprep.subr.mxu0 %v2715
    %3022 = vmatpush1.msra.mxu0 %v2714
    %3023 = vmatprep.subr.mxu0 %v2719
    %3024 = vmatpush1.msra.mxu0 %v2718
    %3025 = vmatprep.subr.mxu0 %v2723
    %3026 = vmatpush1.msra.mxu0 %v2722
    %3027 = vmatprep.subr.mxu0 %v2727
    %3028 = vmatpush1.msra.mxu0 %v2726
    %3029 = vmatprep.subr.mxu0 %v2731
    %3030 = vmatpush1.msra.mxu0 %v2730
    %3031 = vmatprep.subr.mxu0 %v2735
    %3032 = vmatpush1.msra.mxu0 %v2734
    %3033 = vmatprep.subr.mxu0 %v2739
    %3034 = vmatpush1.msra.mxu0 %v2738
    %3035 = vmatprep.subr.mxu0 %v2743
    %3036 = vmatpush1.msra.mxu0 %v2742
    %3037 = vmatprep.subr.mxu0 %v2747
    %3038 = vmatpush1.msra.mxu0 %v2746
    %3039 = vmatprep.subr.mxu0 %v2751
    %3040 = vmatpush1.msra.mxu0 %v2750
    %3041 = vmatprep.subr.mxu0 %v2755
    %3042 = vmatpush1.msra.mxu0 %v2754
    %3043 = vmatprep.subr.mxu0 %v2759
    %3044 = vmatpush1.msra.mxu0 %v2758
    %3045 = vmatprep.subr.mxu0 %v2763
    %3046 = vmatpush1.msra.mxu0 %v2762
    %3047 = vmatprep.subr.mxu0 %v2767
    %3048 = vmatpush1.msra.mxu0 %v2766
    %3049 = vmatprep.subr.mxu0 %v2771
    %3050 = vmatpush1.msra.mxu0 %v2770
    %3051 = vmatprep.subr.mxu0 %v2775
    %3052 = vmatpush1.msra.mxu0 %v2774
    %3053 = vmatprep.subr.mxu0 0.0
    %3054 = vmatpush1.msra.mxu0 0.0
    %3055 = vmatprep.subr.mxu0 0.0
    %3056 = vmatpush1.msra.mxu0 0.0
    %3057 = vmatprep.subr.mxu0 0.0
    %3058 = vmatpush1.msra.mxu0 0.0
    %3059 = vmatprep.subr.mxu0 0.0
    %3060 = vmatpush1.msra.mxu0 0.0
    %3061 = vmatprep.subr.mxu0 0.0
    %3062 = vmatpush1.msra.mxu0 0.0
    %3063 = vmatprep.subr.mxu0 0.0
    %3064 = vmatpush1.msra.mxu0 0.0
    %3065 = vmatprep.subr.mxu0 0.0
    %3066 = vmatpush1.msra.mxu0 0.0
    %3067 = vmatprep.subr.mxu0 0.0
    %3068 = vmatpush1.msra.mxu0 0.0
    %3069 = vmatprep.subr.mxu0 0.0
    %3070 = vmatpush1.msra.mxu0 0.0
    %3071 = vmatprep.subr.mxu0 0.0
    %3072 = vmatpush1.msra.mxu0 0.0
    %3073 = vmatprep.subr.mxu0 0.0
    %3074 = vmatpush1.msra.mxu0 0.0
    %3075 = vmatprep.subr.mxu0 0.0
    %3076 = vmatpush1.msra.mxu0 0.0
    %3077 = vmatprep.subr.mxu0 0.0
    %3078 = vmatpush1.msra.mxu0 0.0
    %3079 = vmatprep.subr.mxu0 0.0
    %3080 = vmatpush1.msra.mxu0 0.0
    %3081 = vmatprep.subr.mxu0 0.0
    %3082 = vmatpush1.msra.mxu0 0.0
    %3083 = vmatprep.subr.mxu0 0.0
    %3084 = vmatpush1.msra.mxu0 0.0
    %3085 = vmatprep.mubr.f32.mxu0 0.0
    %3086 = vmatmul.mubr.f32.gmra.mrb[0].mxu0 %v2945
    %v3087 = vpop.f32.mrb[0].mxu0
    %v3088 = vadd.f32 0.0, %v3087
    %v3089 = vpop.f32.mrb[0].mxu0
    %v3090 = vadd.f32 0.0, %v3089
    %3091 = vdwg.mxu0
    %v3092 = vadd.f32 %v2946, %v3017
    %v3093 = vadd.f32 %v2947, %v3019
    %v3094 = vadd.f32 %v2948, %v3088
    %v3095 = vadd.f32 %v2949, %v3090
    %v3096 = vxor.u32 %v3092, 2147483648
    %v3097 = vxor.u32 %v3093, 2147483648
    %v3098 = vxor.u32 %v3094, 2147483648
    %v3099 = vmul.f32 %v3096, 1.442695
    %v3100 = vpow.pop %v3099
    %v3101 = vmul.f32 %v3097, 1.442695
    %v3102 = vpow.pop %v3101
    %v3103 = vmul.f32 %v3098, 1.442695
    %v3104 = vpow.pop %v3103
    %v3105 = vadd.f32 %v3100, 1.0
    %v3106 = vadd.f32 %v3102, 1.0
    %v3107 = vadd.f32 %v3104, 1.0
    %v3108 = vrcp.pop %v3105
    %v3109 = vmul.f32 1.0, %v3108
    %v3110 = vrcp.pop %v3106
    %v3111 = vmul.f32 1.0, %v3110
    %v3112 = vrcp.pop %v3107
    %v3113 = vmul.f32 1.0, %v3112
    %v3114 = vtanh.pop %v3095
    %v3115 = vmul.f32 %v3111, %v2943
    %v3116 = vmul.f32 %v3109, %v3114
    %v3117 = vadd.f32 %v3115, %v3116
    %v3118 = vtanh.pop %v3117
    %v3119 = vmul.f32 %v3113, %v3118
    %v3120 = vld [vmem:[#allocation2 + $0x40] sm:$0xff]
    %v3121 = vld [vmem:[#allocation2 + $0x48] sm:$0xff]
    %v3122 = vld [vmem:[#allocation2 + $0x50] sm:$0xff]
    %v3123 = vld [vmem:[#allocation2 + $0x58] sm:$0xff]
    %3124 = vmatprep.subr.mxu0 %v2713
    %3125 = vmatpush1.msra.mxu0 %v2712
    %3126 = vmatprep.subr.mxu0 %v2717
    %3127 = vmatpush1.msra.mxu0 %v2716
    %3128 = vmatprep.subr.mxu0 %v2721
    %3129 = vmatpush1.msra.mxu0 %v2720
    %3130 = vmatprep.subr.mxu0 %v2725
    %3131 = vmatpush1.msra.mxu0 %v2724
    %3132 = vmatprep.subr.mxu0 %v2729
    %3133 = vmatpush1.msra.mxu0 %v2728
    %3134 = vmatprep.subr.mxu0 %v2733
    %3135 = vmatpush1.msra.mxu0 %v2732
    %3136 = vmatprep.subr.mxu0 %v2737
    %3137 = vmatpush1.msra.mxu0 %v2736
    %3138 = vmatprep.subr.mxu0 %v2741
    %3139 = vmatpush1.msra.mxu0 %v2740
    %3140 = vmatprep.subr.mxu0 %v2745
    %3141 = vmatpush1.msra.mxu0 %v2744
    %3142 = vmatprep.subr.mxu0 %v2749
    %3143 = vmatpush1.msra.mxu0 %v2748
    %3144 = vmatprep.subr.mxu0 %v2753
    %3145 = vmatpush1.msra.mxu0 %v2752
    %3146 = vmatprep.subr.mxu0 %v2757
    %3147 = vmatpush1.msra.mxu0 %v2756
    %3148 = vmatprep.subr.mxu0 %v2761
    %3149 = vmatpush1.msra.mxu0 %v2760
    %3150 = vmatprep.subr.mxu0 %v2765
    %3151 = vmatpush1.msra.mxu0 %v2764
    %3152 = vmatprep.subr.mxu0 %v2769
    %3153 = vmatpush1.msra.mxu0 %v2768
    %3154 = vmatprep.subr.mxu0 %v2773
    %3155 = vmatpush1.msra.mxu0 %v2772
    %3156 = vmatprep.subr.mxu0 0.0
    %3157 = vmatpush1.msra.mxu0 0.0
    %3158 = vmatprep.subr.mxu0 0.0
    %3159 = vmatpush1.msra.mxu0 0.0
    %3160 = vmatprep.subr.mxu0 0.0
    %3161 = vmatpush1.msra.mxu0 0.0
    %3162 = vmatprep.subr.mxu0 0.0
    %3163 = vmatpush1.msra.mxu0 0.0
    %3164 = vmatprep.subr.mxu0 0.0
    %3165 = vmatpush1.msra.mxu0 0.0
    %3166 = vmatprep.subr.mxu0 0.0
    %3167 = vmatpush1.msra.mxu0 0.0
    %3168 = vmatprep.subr.mxu0 0.0
    %3169 = vmatpush1.msra.mxu0 0.0
    %3170 = vmatprep.subr.mxu0 0.0
    %3171 = vmatpush1.msra.mxu0 0.0
    %3172 = vmatprep.subr.mxu0 0.0
    %3173 = vmatpush1.msra.mxu0 0.0
    %3174 = vmatprep.subr.mxu0 0.0
    %3175 = vmatpush1.msra.mxu0 0.0
    %3176 = vmatprep.subr.mxu0 0.0
    %3177 = vmatpush1.msra.mxu0 0.0
    %3178 = vmatprep.subr.mxu0 0.0
    %3179 = vmatpush1.msra.mxu0 0.0
    %3180 = vmatprep.subr.mxu0 0.0
    %3181 = vmatpush1.msra.mxu0 0.0
    %3182 = vmatprep.subr.mxu0 0.0
    %3183 = vmatpush1.msra.mxu0 0.0
    %3184 = vmatprep.subr.mxu0 0.0
    %3185 = vmatpush1.msra.mxu0 0.0
    %3186 = vmatprep.subr.mxu0 0.0
    %3187 = vmatpush1.msra.mxu0 0.0
    %3188 = vmatprep.mubr.f32.mxu0 0.0
    %3189 = vmatmul.mubr.f32.gmra.mrb[0].mxu0 %v3119
    %v3190 = vpop.f32.mrb[0].mxu0
    %v3191 = vadd.f32 0.0, %v3190
    %v3192 = vpop.f32.mrb[0].mxu0
    %v3193 = vadd.f32 0.0, %v3192
    %3194 = vdwg.mxu0
    %3195 = vmatprep.subr.mxu0 %v2715
    %3196 = vmatpush1.msra.mxu0 %v2714
    %3197 = vmatprep.subr.mxu0 %v2719
    %3198 = vmatpush1.msra.mxu0 %v2718
    %3199 = vmatprep.subr.mxu0 %v2723
    %3200 = vmatpush1.msra.mxu0 %v2722
    %3201 = vmatprep.subr.mxu0 %v2727
    %3202 = vmatpush1.msra.mxu0 %v2726
    %3203 = vmatprep.subr.mxu0 %v2731
    %3204 = vmatpush1.msra.mxu0 %v2730
    %3205 = vmatprep.subr.mxu0 %v2735
    %3206 = vmatpush1.msra.mxu0 %v2734
    %3207 = vmatprep.subr.mxu0 %v2739
    %3208 = vmatpush1.msra.mxu0 %v2738
    %3209 = vmatprep.subr.mxu0 %v2743
    %3210 = vmatpush1.msra.mxu0 %v2742
    %3211 = vmatprep.subr.mxu0 %v2747
    %3212 = vmatpush1.msra.mxu0 %v2746
    %3213 = vmatprep.subr.mxu0 %v2751
    %3214 = vmatpush1.msra.mxu0 %v2750
    %3215 = vmatprep.subr.mxu0 %v2755
    %3216 = vmatpush1.msra.mxu0 %v2754
    %3217 = vmatprep.subr.mxu0 %v2759
    %3218 = vmatpush1.msra.mxu0 %v2758
    %3219 = vmatprep.subr.mxu0 %v2763
    %3220 = vmatpush1.msra.mxu0 %v2762
    %3221 = vmatprep.subr.mxu0 %v2767
    %3222 = vmatpush1.msra.mxu0 %v2766
    %3223 = vmatprep.subr.mxu0 %v2771
    %3224 = vmatpush1.msra.mxu0 %v2770
    %3225 = vmatprep.subr.mxu0 %v2775
    %3226 = vmatpush1.msra.mxu0 %v2774
    %3227 = vmatprep.subr.mxu0 0.0
    %3228 = vmatpush1.msra.mxu0 0.0
    %3229 = vmatprep.subr.mxu0 0.0
    %3230 = vmatpush1.msra.mxu0 0.0
    %3231 = vmatprep.subr.mxu0 0.0
    %3232 = vmatpush1.msra.mxu0 0.0
    %3233 = vmatprep.subr.mxu0 0.0
    %3234 = vmatpush1.msra.mxu0 0.0
    %3235 = vmatprep.subr.mxu0 0.0
    %3236 = vmatpush1.msra.mxu0 0.0
    %3237 = vmatprep.subr.mxu0 0.0
    %3238 = vmatpush1.msra.mxu0 0.0
    %3239 = vmatprep.subr.mxu0 0.0
    %3240 = vmatpush1.msra.mxu0 0.0
    %3241 = vmatprep.subr.mxu0 0.0
    %3242 = vmatpush1.msra.mxu0 0.0
    %3243 = vmatprep.subr.mxu0 0.0
    %3244 = vmatpush1.msra.mxu0 0.0
    %3245 = vmatprep.subr.mxu0 0.0
    %3246 = vmatpush1.msra.mxu0 0.0
    %3247 = vmatprep.subr.mxu0 0.0
    %3248 = vmatpush1.msra.mxu0 0.0
    %3249 = vmatprep.subr.mxu0 0.0
    %3250 = vmatpush1.msra.mxu0 0.0
    %3251 = vmatprep.subr.mxu0 0.0
    %3252 = vmatpush1.msra.mxu0 0.0
    %3253 = vmatprep.subr.mxu0 0.0
    %3254 = vmatpush1.msra.mxu0 0.0
    %3255 = vmatprep.subr.mxu0 0.0
    %3256 = vmatpush1.msra.mxu0 0.0
    %3257 = vmatprep.subr.mxu0 0.0
    %3258 = vmatpush1.msra.mxu0 0.0
    %3259 = vmatprep.mubr.f32.mxu0 0.0
    %3260 = vmatmul.mubr.f32.gmra.mrb[0].mxu0 %v3119
    %v3261 = vpop.f32.mrb[0].mxu0
    %v3262 = vadd.f32 0.0, %v3261
    %v3263 = vpop.f32.mrb[0].mxu0
    %v3264 = vadd.f32 0.0, %v3263
    %3265 = vdwg.mxu0
    %v3266 = vadd.f32 %v3120, %v3191
    %v3267 = vadd.f32 %v3121, %v3193
    %v3268 = vadd.f32 %v3122, %v3262
    %v3269 = vadd.f32 %v3123, %v3264
    %v3270 = vxor.u32 %v3266, 2147483648
    %v3271 = vxor.u32 %v3267, 2147483648
    %v3272 = vxor.u32 %v3268, 2147483648
    %v3273 = vmul.f32 %v3270, 1.442695
    %v3274 = vpow.pop %v3273
    %v3275 = vmul.f32 %v3271, 1.442695
    %v3276 = vpow.pop %v3275
    %v3277 = vmul.f32 %v3272, 1.442695
    %v3278 = vpow.pop %v3277
    %v3279 = vadd.f32 %v3274, 1.0
    %v3280 = vadd.f32 %v3276, 1.0
    %v3281 = vadd.f32 %v3278, 1.0
    %v3282 = vrcp.pop %v3279
    %v3283 = vmul.f32 1.0, %v3282
    %v3284 = vrcp.pop %v3280
    %v3285 = vmul.f32 1.0, %v3284
    %v3286 = vrcp.pop %v3281
    %v3287 = vmul.f32 1.0, %v3286
    %v3288 = vtanh.pop %v3269
    %v3289 = vmul.f32 %v3285, %v3117
    %v3290 = vmul.f32 %v3283, %v3288
    %v3291 = vadd.f32 %v3289, %v3290
    %v3292 = vtanh.pop %v3291
    %v3293 = vmul.f32 %v3287, %v3292
    %v3294 = vld [vmem:[#allocation2 + $0x60] sm:$0xff]
    %v3295 = vld [vmem:[#allocation2 + $0x68] sm:$0xff]
    %v3296 = vld [vmem:[#allocation2 + $0x70] sm:$0xff]
    %v3297 = vld [vmem:[#allocation2 + $0x78] sm:$0xff]
    %3298 = vmatprep.subr.mxu0 %v2713
    %3299 = vmatpush1.msra.mxu0 %v2712
    %3300 = vmatprep.subr.mxu0 %v2717
    %3301 = vmatpush1.msra.mxu0 %v2716
    %3302 = vmatprep.subr.mxu0 %v2721
    %3303 = vmatpush1.msra.mxu0 %v2720
    %3304 = vmatprep.subr.mxu0 %v2725
    %3305 = vmatpush1.msra.mxu0 %v2724
    %3306 = vmatprep.subr.mxu0 %v2729
    %3307 = vmatpush1.msra.mxu0 %v2728
    %3308 = vmatprep.subr.mxu0 %v2733
    %3309 = vmatpush1.msra.mxu0 %v2732
    %3310 = vmatprep.subr.mxu0 %v2737
    %3311 = vmatpush1.msra.mxu0 %v2736
    %3312 = vmatprep.subr.mxu0 %v2741
    %3313 = vmatpush1.msra.mxu0 %v2740
    %3314 = vmatprep.subr.mxu0 %v2745
    %3315 = vmatpush1.msra.mxu0 %v2744
    %3316 = vmatprep.subr.mxu0 %v2749
    %3317 = vmatpush1.msra.mxu0 %v2748
    %3318 = vmatprep.subr.mxu0 %v2753
    %3319 = vmatpush1.msra.mxu0 %v2752
    %3320 = vmatprep.subr.mxu0 %v2757
    %3321 = vmatpush1.msra.mxu0 %v2756
    %3322 = vmatprep.subr.mxu0 %v2761
    %3323 = vmatpush1.msra.mxu0 %v2760
    %3324 = vmatprep.subr.mxu0 %v2765
    %3325 = vmatpush1.msra.mxu0 %v2764
    %3326 = vmatprep.subr.mxu0 %v2769
    %3327 = vmatpush1.msra.mxu0 %v2768
    %3328 = vmatprep.subr.mxu0 %v2773
    %3329 = vmatpush1.msra.mxu0 %v2772
    %3330 = vmatprep.subr.mxu0 0.0
    %3331 = vmatpush1.msra.mxu0 0.0
    %3332 = vmatprep.subr.mxu0 0.0
    %3333 = vmatpush1.msra.mxu0 0.0
    %3334 = vmatprep.subr.mxu0 0.0
    %3335 = vmatpush1.msra.mxu0 0.0
    %3336 = vmatprep.subr.mxu0 0.0
    %3337 = vmatpush1.msra.mxu0 0.0
    %3338 = vmatprep.subr.mxu0 0.0
    %3339 = vmatpush1.msra.mxu0 0.0
    %3340 = vmatprep.subr.mxu0 0.0
    %3341 = vmatpush1.msra.mxu0 0.0
    %3342 = vmatprep.subr.mxu0 0.0
    %3343 = vmatpush1.msra.mxu0 0.0
    %3344 = vmatprep.subr.mxu0 0.0
    %3345 = vmatpush1.msra.mxu0 0.0
    %3346 = vmatprep.subr.mxu0 0.0
    %3347 = vmatpush1.msra.mxu0 0.0
    %3348 = vmatprep.subr.mxu0 0.0
    %3349 = vmatpush1.msra.mxu0 0.0
    %3350 = vmatprep.subr.mxu0 0.0
    %3351 = vmatpush1.msra.mxu0 0.0
    %3352 = vmatprep.subr.mxu0 0.0
    %3353 = vmatpush1.msra.mxu0 0.0
    %3354 = vmatprep.subr.mxu0 0.0
    %3355 = vmatpush1.msra.mxu0 0.0
    %3356 = vmatprep.subr.mxu0 0.0
    %3357 = vmatpush1.msra.mxu0 0.0
    %3358 = vmatprep.subr.mxu0 0.0
    %3359 = vmatpush1.msra.mxu0 0.0
    %3360 = vmatprep.subr.mxu0 0.0
    %3361 = vmatpush1.msra.mxu0 0.0
    %3362 = vmatprep.mubr.f32.mxu0 0.0
    %3363 = vmatmul.mubr.f32.gmra.mrb[0].mxu0 %v3293
    %v3364 = vpop.f32.mrb[0].mxu0
    %v3365 = vadd.f32 0.0, %v3364
    %v3366 = vpop.f32.mrb[0].mxu0
    %v3367 = vadd.f32 0.0, %v3366
    %3368 = vdwg.mxu0
    %3369 = vmatprep.subr.mxu0 %v2715
    %3370 = vmatpush1.msra.mxu0 %v2714
    %3371 = vmatprep.subr.mxu0 %v2719
    %3372 = vmatpush1.msra.mxu0 %v2718
    %3373 = vmatprep.subr.mxu0 %v2723
    %3374 = vmatpush1.msra.mxu0 %v2722
    %3375 = vmatprep.subr.mxu0 %v2727
    %3376 = vmatpush1.msra.mxu0 %v2726
    %3377 = vmatprep.subr.mxu0 %v2731
    %3378 = vmatpush1.msra.mxu0 %v2730
    %3379 = vmatprep.subr.mxu0 %v2735
    %3380 = vmatpush1.msra.mxu0 %v2734
    %3381 = vmatprep.subr.mxu0 %v2739
    %3382 = vmatpush1.msra.mxu0 %v2738
    %3383 = vmatprep.subr.mxu0 %v2743
    %3384 = vmatpush1.msra.mxu0 %v2742
    %3385 = vmatprep.subr.mxu0 %v2747
    %3386 = vmatpush1.msra.mxu0 %v2746
    %3387 = vmatprep.subr.mxu0 %v2751
    %3388 = vmatpush1.msra.mxu0 %v2750
    %3389 = vmatprep.subr.mxu0 %v2755
    %3390 = vmatpush1.msra.mxu0 %v2754
    %3391 = vmatprep.subr.mxu0 %v2759
    %3392 = vmatpush1.msra.mxu0 %v2758
    %3393 = vmatprep.subr.mxu0 %v2763
    %3394 = vmatpush1.msra.mxu0 %v2762
    %3395 = vmatprep.subr.mxu0 %v2767
    %3396 = vmatpush1.msra.mxu0 %v2766
    %3397 = vmatprep.subr.mxu0 %v2771
    %3398 = vmatpush1.msra.mxu0 %v2770
    %3399 = vmatprep.subr.mxu0 %v2775
    %3400 = vmatpush1.msra.mxu0 %v2774
    %3401 = vmatprep.subr.mxu0 0.0
    %3402 = vmatpush1.msra.mxu0 0.0
    %3403 = vmatprep.subr.mxu0 0.0
    %3404 = vmatpush1.msra.mxu0 0.0
    %3405 = vmatprep.subr.mxu0 0.0
    %3406 = vmatpush1.msra.mxu0 0.0
    %3407 = vmatprep.subr.mxu0 0.0
    %3408 = vmatpush1.msra.mxu0 0.0
    %3409 = vmatprep.subr.mxu0 0.0
    %3410 = vmatpush1.msra.mxu0 0.0
    %3411 = vmatprep.subr.mxu0 0.0
    %3412 = vmatpush1.msra.mxu0 0.0
    %3413 = vmatprep.subr.mxu0 0.0
    %3414 = vmatpush1.msra.mxu0 0.0
    %3415 = vmatprep.subr.mxu0 0.0
    %3416 = vmatpush1.msra.mxu0 0.0
    %3417 = vmatprep.subr.mxu0 0.0
    %3418 = vmatpush1.msra.mxu0 0.0
    %3419 = vmatprep.subr.mxu0 0.0
    %3420 = vmatpush1.msra.mxu0 0.0
    %3421 = vmatprep.subr.mxu0 0.0
    %3422 = vmatpush1.msra.mxu0 0.0
    %3423 = vmatprep.subr.mxu0 0.0
    %3424 = vmatpush1.msra.mxu0 0.0
    %3425 = vmatprep.subr.mxu0 0.0
    %3426 = vmatpush1.msra.mxu0 0.0
    %3427 = vmatprep.subr.mxu0 0.0
    %3428 = vmatpush1.msra.mxu0 0.0
    %3429 = vmatprep.subr.mxu0 0.0
    %3430 = vmatpush1.msra.mxu0 0.0
    %3431 = vmatprep.subr.mxu0 0.0
    %3432 = vmatpush1.msra.mxu0 0.0
    %3433 = vmatprep.mubr.f32.mxu0 0.0
    %3434 = vmatmul.mubr.f32.gmra.mrb[0].mxu0 %v3293
    %v3435 = vpop.f32.mrb[0].mxu0
    %v3436 = vadd.f32 0.0, %v3435
    %v3437 = vpop.f32.mrb[0].mxu0
    %v3438 = vadd.f32 0.0, %v3437
    %3439 = vdwg.mxu0
    %v3440 = vadd.f32 %v3294, %v3365
    %v3441 = vadd.f32 %v3295, %v3367
    %v3442 = vadd.f32 %v3296, %v3436
    %v3443 = vadd.f32 %v3297, %v3438
    %v3444 = vxor.u32 %v3440, 2147483648
    %v3445 = vxor.u32 %v3441, 2147483648
    %v3446 = vxor.u32 %v3442, 2147483648
    %v3447 = vmul.f32 %v3444, 1.442695
    %v3448 = vpow.pop %v3447
    %v3449 = vmul.f32 %v3445, 1.442695
    %v3450 = vpow.pop %v3449
    %v3451 = vmul.f32 %v3446, 1.442695
    %v3452 = vpow.pop %v3451
    %v3453 = vadd.f32 %v3448, 1.0
    %v3454 = vadd.f32 %v3450, 1.0
    %v3455 = vadd.f32 %v3452, 1.0
    %v3456 = vrcp.pop %v3453
    %v3457 = vmul.f32 1.0, %v3456
    %v3458 = vrcp.pop %v3454
    %v3459 = vmul.f32 1.0, %v3458
    %v3460 = vrcp.pop %v3455
    %v3461 = vmul.f32 1.0, %v3460
    %v3462 = vtanh.pop %v3443
    %v3463 = vmul.f32 %v3459, %v3291
    %v3464 = vmul.f32 %v3457, %v3462
    %v3465 = vadd.f32 %v3463, %v3464
    %v3466 = vtanh.pop %v3465
    %v3467 = vmul.f32 %v3461, %v3466
    %v3468 = vld [vmem:[#allocation2 + $0x80] sm:$0xff]
    %v3469 = vld [vmem:[#allocation2 + $0x88] sm:$0xff]
    %v3470 = vld [vmem:[#allocation2 + $0x90] sm:$0xff]
    %v3471 = vld [vmem:[#allocation2 + $0x98] sm:$0xff]
    %3472 = vmatprep.subr.mxu0 %v2713
    %3473 = vmatpush1.msra.mxu0 %v2712
    %3474 = vmatprep.subr.mxu0 %v2717
    %3475 = vmatpush1.msra.mxu0 %v2716
    %3476 = vmatprep.subr.mxu0 %v2721
    %3477 = vmatpush1.msra.mxu0 %v2720
    %3478 = vmatprep.subr.mxu0 %v2725
    %3479 = vmatpush1.msra.mxu0 %v2724
    %3480 = vmatprep.subr.mxu0 %v2729
    %3481 = vmatpush1.msra.mxu0 %v2728
    %3482 = vmatprep.subr.mxu0 %v2733
    %3483 = vmatpush1.msra.mxu0 %v2732
    %3484 = vmatprep.subr.mxu0 %v2737
    %3485 = vmatpush1.msra.mxu0 %v2736
    %3486 = vmatprep.subr.mxu0 %v2741
    %3487 = vmatpush1.msra.mxu0 %v2740
    %3488 = vmatprep.subr.mxu0 %v2745
    %3489 = vmatpush1.msra.mxu0 %v2744
    %3490 = vmatprep.subr.mxu0 %v2749
    %3491 = vmatpush1.msra.mxu0 %v2748
    %3492 = vmatprep.subr.mxu0 %v2753
    %3493 = vmatpush1.msra.mxu0 %v2752
    %3494 = vmatprep.subr.mxu0 %v2757
    %3495 = vmatpush1.msra.mxu0 %v2756
    %3496 = vmatprep.subr.mxu0 %v2761
    %3497 = vmatpush1.msra.mxu0 %v2760
    %3498 = vmatprep.subr.mxu0 %v2765
    %3499 = vmatpush1.msra.mxu0 %v2764
    %3500 = vmatprep.subr.mxu0 %v2769
    %3501 = vmatpush1.msra.mxu0 %v2768
    %3502 = vmatprep.subr.mxu0 %v2773
    %3503 = vmatpush1.msra.mxu0 %v2772
    %3504 = vmatprep.subr.mxu0 0.0
    %3505 = vmatpush1.msra.mxu0 0.0
    %3506 = vmatprep.subr.mxu0 0.0
    %3507 = vmatpush1.msra.mxu0 0.0
    %3508 = vmatprep.subr.mxu0 0.0
    %3509 = vmatpush1.msra.mxu0 0.0
    %3510 = vmatprep.subr.mxu0 0.0
    %3511 = vmatpush1.msra.mxu0 0.0
    %3512 = vmatprep.subr.mxu0 0.0
    %3513 = vmatpush1.msra.mxu0 0.0
    %3514 = vmatprep.subr.mxu0 0.0
    %3515 = vmatpush1.msra.mxu0 0.0
    %3516 = vmatprep.subr.mxu0 0.0
    %3517 = vmatpush1.msra.mxu0 0.0
    %3518 = vmatprep.subr.mxu0 0.0
    %3519 = vmatpush1.msra.mxu0 0.0
    %3520 = vmatprep.subr.mxu0 0.0
    %3521 = vmatpush1.msra.mxu0 0.0
    %3522 = vmatprep.subr.mxu0 0.0
    %3523 = vmatpush1.msra.mxu0 0.0
    %3524 = vmatprep.subr.mxu0 0.0
    %3525 = vmatpush1.msra.mxu0 0.0
    %3526 = vmatprep.subr.mxu0 0.0
    %3527 = vmatpush1.msra.mxu0 0.0
    %3528 = vmatprep.subr.mxu0 0.0
    %3529 = vmatpush1.msra.mxu0 0.0
    %3530 = vmatprep.subr.mxu0 0.0
    %3531 = vmatpush1.msra.mxu0 0.0
    %3532 = vmatprep.subr.mxu0 0.0
    %3533 = vmatpush1.msra.mxu0 0.0
    %3534 = vmatprep.subr.mxu0 0.0
    %3535 = vmatpush1.msra.mxu0 0.0
    %3536 = vmatprep.mubr.f32.mxu0 0.0
    %3537 = vmatmul.mubr.f32.gmra.mrb[0].mxu0 %v3467
    %v3538 = vpop.f32.mrb[0].mxu0
    %v3539 = vadd.f32 0.0, %v3538
    %v3540 = vpop.f32.mrb[0].mxu0
    %v3541 = vadd.f32 0.0, %v3540
    %3542 = vdwg.mxu0
    %3543 = vmatprep.subr.mxu0 %v2715
    %3544 = vmatpush1.msra.mxu0 %v2714
    %3545 = vmatprep.subr.mxu0 %v2719
    %3546 = vmatpush1.msra.mxu0 %v2718
    %3547 = vmatprep.subr.mxu0 %v2723
    %3548 = vmatpush1.msra.mxu0 %v2722
    %3549 = vmatprep.subr.mxu0 %v2727
    %3550 = vmatpush1.msra.mxu0 %v2726
    %3551 = vmatprep.subr.mxu0 %v2731
    %3552 = vmatpush1.msra.mxu0 %v2730
    %3553 = vmatprep.subr.mxu0 %v2735
    %3554 = vmatpush1.msra.mxu0 %v2734
    %3555 = vmatprep.subr.mxu0 %v2739
    %3556 = vmatpush1.msra.mxu0 %v2738
    %3557 = vmatprep.subr.mxu0 %v2743
    %3558 = vmatpush1.msra.mxu0 %v2742
    %3559 = vmatprep.subr.mxu0 %v2747
    %3560 = vmatpush1.msra.mxu0 %v2746
    %3561 = vmatprep.subr.mxu0 %v2751
    %3562 = vmatpush1.msra.mxu0 %v2750
    %3563 = vmatprep.subr.mxu0 %v2755
    %3564 = vmatpush1.msra.mxu0 %v2754
    %3565 = vmatprep.subr.mxu0 %v2759
    %3566 = vmatpush1.msra.mxu0 %v2758
    %3567 = vmatprep.subr.mxu0 %v2763
    %3568 = vmatpush1.msra.mxu0 %v2762
    %3569 = vmatprep.subr.mxu0 %v2767
    %3570 = vmatpush1.msra.mxu0 %v2766
    %3571 = vmatprep.subr.mxu0 %v2771
    %3572 = vmatpush1.msra.mxu0 %v2770
    %3573 = vmatprep.subr.mxu0 %v2775
    %3574 = vmatpush1.msra.mxu0 %v2774
    %3575 = vmatprep.subr.mxu0 0.0
    %3576 = vmatpush1.msra.mxu0 0.0
    %3577 = vmatprep.subr.mxu0 0.0
    %3578 = vmatpush1.msra.mxu0 0.0
    %3579 = vmatprep.subr.mxu0 0.0
    %3580 = vmatpush1.msra.mxu0 0.0
    %3581 = vmatprep.subr.mxu0 0.0
    %3582 = vmatpush1.msra.mxu0 0.0
    %3583 = vmatprep.subr.mxu0 0.0
    %3584 = vmatpush1.msra.mxu0 0.0
    %3585 = vmatprep.subr.mxu0 0.0
    %3586 = vmatpush1.msra.mxu0 0.0
    %3587 = vmatprep.subr.mxu0 0.0
    %3588 = vmatpush1.msra.mxu0 0.0
    %3589 = vmatprep.subr.mxu0 0.0
    %3590 = vmatpush1.msra.mxu0 0.0
    %3591 = vmatprep.subr.mxu0 0.0
    %3592 = vmatpush1.msra.mxu0 0.0
    %3593 = vmatprep.subr.mxu0 0.0
    %3594 = vmatpush1.msra.mxu0 0.0
    %3595 = vmatprep.subr.mxu0 0.0
    %3596 = vmatpush1.msra.mxu0 0.0
    %3597 = vmatprep.subr.mxu0 0.0
    %3598 = vmatpush1.msra.mxu0 0.0
    %3599 = vmatprep.subr.mxu0 0.0
    %3600 = vmatpush1.msra.mxu0 0.0
    %3601 = vmatprep.subr.mxu0 0.0
    %3602 = vmatpush1.msra.mxu0 0.0
    %3603 = vmatprep.subr.mxu0 0.0
    %3604 = vmatpush1.msra.mxu0 0.0
    %3605 = vmatprep.subr.mxu0 0.0
    %3606 = vmatpush1.msra.mxu0 0.0
    %3607 = vmatprep.mubr.f32.mxu0 0.0
    %3608 = vmatmul.mubr.f32.gmra.mrb[0].mxu0 %v3467
    %v3609 = vpop.f32.mrb[0].mxu0
    %v3610 = vadd.f32 0.0, %v3609
    %v3611 = vpop.f32.mrb[0].mxu0
    %v3612 = vadd.f32 0.0, %v3611
    %3613 = vdwg.mxu0
    %v3614 = vadd.f32 %v3468, %v3539
    %v3615 = vadd.f32 %v3469, %v3541
    %v3616 = vadd.f32 %v3470, %v3610
    %v3617 = vadd.f32 %v3471, %v3612
    %v3618 = vxor.u32 %v3614, 2147483648
    %v3619 = vxor.u32 %v3615, 2147483648
    %v3620 = vxor.u32 %v3616, 2147483648
    %v3621 = vmul.f32 %v3618, 1.442695
    %v3622 = vpow.pop %v3621
    %v3623 = vmul.f32 %v3619, 1.442695
    %v3624 = vpow.pop %v3623
    %v3625 = vmul.f32 %v3620, 1.442695
    %v3626 = vpow.pop %v3625
    %v3627 = vadd.f32 %v3622, 1.0
    %v3628 = vadd.f32 %v3624, 1.0
    %v3629 = vadd.f32 %v3626, 1.0
    %v3630 = vrcp.pop %v3627
    %v3631 = vmul.f32 1.0, %v3630
    %v3632 = vrcp.pop %v3628
    %v3633 = vmul.f32 1.0, %v3632
    %v3634 = vrcp.pop %v3629
    %v3635 = vmul.f32 1.0, %v3634
    %v3636 = vtanh.pop %v3617
    %v3637 = vmul.f32 %v3633, %v3465
    %v3638 = vmul.f32 %v3631, %v3636
    %v3639 = vadd.f32 %v3637, %v3638
    %v3640 = vtanh.pop %v3639
    %v3641 = vmul.f32 %v3635, %v3640
    %v3642 = vld [vmem:[#allocation2 + $0xa0] sm:$0xff]
    %v3643 = vld [vmem:[#allocation2 + $0xa8] sm:$0xff]
    %v3644 = vld [vmem:[#allocation2 + $0xb0] sm:$0xff]
    %v3645 = vld [vmem:[#allocation2 + $0xb8] sm:$0xff]
    %3646 = vmatprep.subr.mxu0 %v2713
    %3647 = vmatpush1.msra.mxu0 %v2712
    %3648 = vmatprep.subr.mxu0 %v2717
    %3649 = vmatpush1.msra.mxu0 %v2716
    %3650 = vmatprep.subr.mxu0 %v2721
    %3651 = vmatpush1.msra.mxu0 %v2720
    %3652 = vmatprep.subr.mxu0 %v2725
    %3653 = vmatpush1.msra.mxu0 %v2724
    %3654 = vmatprep.subr.mxu0 %v2729
    %3655 = vmatpush1.msra.mxu0 %v2728
    %3656 = vmatprep.subr.mxu0 %v2733
    %3657 = vmatpush1.msra.mxu0 %v2732
    %3658 = vmatprep.subr.mxu0 %v2737
    %3659 = vmatpush1.msra.mxu0 %v2736
    %3660 = vmatprep.subr.mxu0 %v2741
    %3661 = vmatpush1.msra.mxu0 %v2740
    %3662 = vmatprep.subr.mxu0 %v2745
    %3663 = vmatpush1.msra.mxu0 %v2744
    %3664 = vmatprep.subr.mxu0 %v2749
    %3665 = vmatpush1.msra.mxu0 %v2748
    %3666 = vmatprep.subr.mxu0 %v2753
    %3667 = vmatpush1.msra.mxu0 %v2752
    %3668 = vmatprep.subr.mxu0 %v2757
    %3669 = vmatpush1.msra.mxu0 %v2756
    %3670 = vmatprep.subr.mxu0 %v2761
    %3671 = vmatpush1.msra.mxu0 %v2760
    %3672 = vmatprep.subr.mxu0 %v2765
    %3673 = vmatpush1.msra.mxu0 %v2764
    %3674 = vmatprep.subr.mxu0 %v2769
    %3675 = vmatpush1.msra.mxu0 %v2768
    %3676 = vmatprep.subr.mxu0 %v2773
    %3677 = vmatpush1.msra.mxu0 %v2772
    %3678 = vmatprep.subr.mxu0 0.0
    %3679 = vmatpush1.msra.mxu0 0.0
    %3680 = vmatprep.subr.mxu0 0.0
    %3681 = vmatpush1.msra.mxu0 0.0
    %3682 = vmatprep.subr.mxu0 0.0
    %3683 = vmatpush1.msra.mxu0 0.0
    %3684 = vmatprep.subr.mxu0 0.0
    %3685 = vmatpush1.msra.mxu0 0.0
    %3686 = vmatprep.subr.mxu0 0.0
    %3687 = vmatpush1.msra.mxu0 0.0
    %3688 = vmatprep.subr.mxu0 0.0
    %3689 = vmatpush1.msra.mxu0 0.0
    %3690 = vmatprep.subr.mxu0 0.0
    %3691 = vmatpush1.msra.mxu0 0.0
    %3692 = vmatprep.subr.mxu0 0.0
    %3693 = vmatpush1.msra.mxu0 0.0
    %3694 = vmatprep.subr.mxu0 0.0
    %3695 = vmatpush1.msra.mxu0 0.0
    %3696 = vmatprep.subr.mxu0 0.0
    %3697 = vmatpush1.msra.mxu0 0.0
    %3698 = vmatprep.subr.mxu0 0.0
    %3699 = vmatpush1.msra.mxu0 0.0
    %3700 = vmatprep.subr.mxu0 0.0
    %3701 = vmatpush1.msra.mxu0 0.0
    %3702 = vmatprep.subr.mxu0 0.0
    %3703 = vmatpush1.msra.mxu0 0.0
    %3704 = vmatprep.subr.mxu0 0.0
    %3705 = vmatpush1.msra.mxu0 0.0
    %3706 = vmatprep.subr.mxu0 0.0
    %3707 = vmatpush1.msra.mxu0 0.0
    %3708 = vmatprep.subr.mxu0 0.0
    %3709 = vmatpush1.msra.mxu0 0.0
    %3710 = vmatprep.mubr.f32.mxu0 0.0
    %3711 = vmatmul.mubr.f32.gmra.mrb[0].mxu0 %v3641
    %v3712 = vpop.f32.mrb[0].mxu0
    %v3713 = vadd.f32 0.0, %v3712
    %v3714 = vpop.f32.mrb[0].mxu0
    %v3715 = vadd.f32 0.0, %v3714
    %3716 = vdwg.mxu0
    %3717 = vmatprep.subr.mxu0 %v2715
    %3718 = vmatpush1.msra.mxu0 %v2714
    %3719 = vmatprep.subr.mxu0 %v2719
    %3720 = vmatpush1.msra.mxu0 %v2718
    %3721 = vmatprep.subr.mxu0 %v2723
    %3722 = vmatpush1.msra.mxu0 %v2722
    %3723 = vmatprep.subr.mxu0 %v2727
    %3724 = vmatpush1.msra.mxu0 %v2726
    %3725 = vmatprep.subr.mxu0 %v2731
    %3726 = vmatpush1.msra.mxu0 %v2730
    %3727 = vmatprep.subr.mxu0 %v2735
    %3728 = vmatpush1.msra.mxu0 %v2734
    %3729 = vmatprep.subr.mxu0 %v2739
    %3730 = vmatpush1.msra.mxu0 %v2738
    %3731 = vmatprep.subr.mxu0 %v2743
    %3732 = vmatpush1.msra.mxu0 %v2742
    %3733 = vmatprep.subr.mxu0 %v2747
    %3734 = vmatpush1.msra.mxu0 %v2746
    %3735 = vmatprep.subr.mxu0 %v2751
    %3736 = vmatpush1.msra.mxu0 %v2750
    %3737 = vmatprep.subr.mxu0 %v2755
    %3738 = vmatpush1.msra.mxu0 %v2754
    %3739 = vmatprep.subr.mxu0 %v2759
    %3740 = vmatpush1.msra.mxu0 %v2758
    %3741 = vmatprep.subr.mxu0 %v2763
    %3742 = vmatpush1.msra.mxu0 %v2762
    %3743 = vmatprep.subr.mxu0 %v2767
    %3744 = vmatpush1.msra.mxu0 %v2766
    %3745 = vmatprep.subr.mxu0 %v2771
    %3746 = vmatpush1.msra.mxu0 %v2770
    %3747 = vmatprep.subr.mxu0 %v2775
    %3748 = vmatpush1.msra.mxu0 %v2774
    %3749 = vmatprep.subr.mxu0 0.0
    %3750 = vmatpush1.msra.mxu0 0.0
    %3751 = vmatprep.subr.mxu0 0.0
    %3752 = vmatpush1.msra.mxu0 0.0
    %3753 = vmatprep.subr.mxu0 0.0
    %3754 = vmatpush1.msra.mxu0 0.0
    %3755 = vmatprep.subr.mxu0 0.0
    %3756 = vmatpush1.msra.mxu0 0.0
    %3757 = vmatprep.subr.mxu0 0.0
    %3758 = vmatpush1.msra.mxu0 0.0
    %3759 = vmatprep.subr.mxu0 0.0
    %3760 = vmatpush1.msra.mxu0 0.0
    %3761 = vmatprep.subr.mxu0 0.0
    %3762 = vmatpush1.msra.mxu0 0.0
    %3763 = vmatprep.subr.mxu0 0.0
    %3764 = vmatpush1.msra.mxu0 0.0
    %3765 = vmatprep.subr.mxu0 0.0
    %3766 = vmatpush1.msra.mxu0 0.0
    %3767 = vmatprep.subr.mxu0 0.0
    %3768 = vmatpush1.msra.mxu0 0.0
    %3769 = vmatprep.subr.mxu0 0.0
    %3770 = vmatpush1.msra.mxu0 0.0
    %3771 = vmatprep.subr.mxu0 0.0
    %3772 = vmatpush1.msra.mxu0 0.0
    %3773 = vmatprep.subr.mxu0 0.0
    %3774 = vmatpush1.msra.mxu0 0.0
    %3775 = vmatprep.subr.mxu0 0.0
    %3776 = vmatpush1.msra.mxu0 0.0
    %3777 = vmatprep.subr.mxu0 0.0
    %3778 = vmatpush1.msra.mxu0 0.0
    %3779 = vmatprep.subr.mxu0 0.0
    %3780 = vmatpush1.msra.mxu0 0.0
    %3781 = vmatprep.mubr.f32.mxu0 0.0
    %3782 = vmatmul.mubr.f32.gmra.mrb[0].mxu0 %v3641
    %v3783 = vpop.f32.mrb[0].mxu0
    %v3784 = vadd.f32 0.0, %v3783
    %v3785 = vpop.f32.mrb[0].mxu0
    %v3786 = vadd.f32 0.0, %v3785
    %3787 = vdwg.mxu0
    %v3788 = vadd.f32 %v3642, %v3713
    %v3789 = vadd.f32 %v3643, %v3715
    %v3790 = vadd.f32 %v3644, %v3784
    %v3791 = vadd.f32 %v3645, %v3786
    %v3792 = vxor.u32 %v3788, 2147483648
    %v3793 = vxor.u32 %v3789, 2147483648
    %v3794 = vxor.u32 %v3790, 2147483648
    %v3795 = vmul.f32 %v3792, 1.442695
    %v3796 = vpow.pop %v3795
    %v3797 = vmul.f32 %v3793, 1.442695
    %v3798 = vpow.pop %v3797
    %v3799 = vmul.f32 %v3794, 1.442695
    %v3800 = vpow.pop %v3799
    %v3801 = vadd.f32 %v3796, 1.0
    %v3802 = vadd.f32 %v3798, 1.0
    %v3803 = vadd.f32 %v3800, 1.0
    %v3804 = vrcp.pop %v3801
    %v3805 = vmul.f32 1.0, %v3804
    %v3806 = vrcp.pop %v3802
    %v3807 = vmul.f32 1.0, %v3806
    %v3808 = vrcp.pop %v3803
    %v3809 = vmul.f32 1.0, %v3808
    %v3810 = vtanh.pop %v3791
    %v3811 = vmul.f32 %v3807, %v3639
    %v3812 = vmul.f32 %v3805, %v3810
    %v3813 = vadd.f32 %v3811, %v3812
    %v3814 = vtanh.pop %v3813
    %v3815 = vmul.f32 %v3809, %v3814
    %v3816 = vld [vmem:[#allocation2 + $0xc0] sm:$0xff]
    %v3817 = vld [vmem:[#allocation2 + $0xc8] sm:$0xff]
    %v3818 = vld [vmem:[#allocation2 + $0xd0] sm:$0xff]
    %v3819 = vld [vmem:[#allocation2 + $0xd8] sm:$0xff]
    %3820 = vmatprep.subr.mxu0 %v2713
    %3821 = vmatpush1.msra.mxu0 %v2712
    %3822 = vmatprep.subr.mxu0 %v2717
    %3823 = vmatpush1.msra.mxu0 %v2716
    %3824 = vmatprep.subr.mxu0 %v2721
    %3825 = vmatpush1.msra.mxu0 %v2720
    %3826 = vmatprep.subr.mxu0 %v2725
    %3827 = vmatpush1.msra.mxu0 %v2724
    %3828 = vmatprep.subr.mxu0 %v2729
    %3829 = vmatpush1.msra.mxu0 %v2728
    %3830 = vmatprep.subr.mxu0 %v2733
    %3831 = vmatpush1.msra.mxu0 %v2732
    %3832 = vmatprep.subr.mxu0 %v2737
    %3833 = vmatpush1.msra.mxu0 %v2736
    %3834 = vmatprep.subr.mxu0 %v2741
    %3835 = vmatpush1.msra.mxu0 %v2740
    %3836 = vmatprep.subr.mxu0 %v2745
    %3837 = vmatpush1.msra.mxu0 %v2744
    %3838 = vmatprep.subr.mxu0 %v2749
    %3839 = vmatpush1.msra.mxu0 %v2748
    %3840 = vmatprep.subr.mxu0 %v2753
    %3841 = vmatpush1.msra.mxu0 %v2752
    %3842 = vmatprep.subr.mxu0 %v2757
    %3843 = vmatpush1.msra.mxu0 %v2756
    %3844 = vmatprep.subr.mxu0 %v2761
    %3845 = vmatpush1.msra.mxu0 %v2760
    %3846 = vmatprep.subr.mxu0 %v2765
    %3847 = vmatpush1.msra.mxu0 %v2764
    %3848 = vmatprep.subr.mxu0 %v2769
    %3849 = vmatpush1.msra.mxu0 %v2768
    %3850 = vmatprep.subr.mxu0 %v2773
    %3851 = vmatpush1.msra.mxu0 %v2772
    %3852 = vmatprep.subr.mxu0 0.0
    %3853 = vmatpush1.msra.mxu0 0.0
    %3854 = vmatprep.subr.mxu0 0.0
    %3855 = vmatpush1.msra.mxu0 0.0
    %3856 = vmatprep.subr.mxu0 0.0
    %3857 = vmatpush1.msra.mxu0 0.0
    %3858 = vmatprep.subr.mxu0 0.0
    %3859 = vmatpush1.msra.mxu0 0.0
    %3860 = vmatprep.subr.mxu0 0.0
    %3861 = vmatpush1.msra.mxu0 0.0
    %3862 = vmatprep.subr.mxu0 0.0
    %3863 = vmatpush1.msra.mxu0 0.0
    %3864 = vmatprep.subr.mxu0 0.0
    %3865 = vmatpush1.msra.mxu0 0.0
    %3866 = vmatprep.subr.mxu0 0.0
    %3867 = vmatpush1.msra.mxu0 0.0
    %3868 = vmatprep.subr.mxu0 0.0
    %3869 = vmatpush1.msra.mxu0 0.0
    %3870 = vmatprep.subr.mxu0 0.0
    %3871 = vmatpush1.msra.mxu0 0.0
    %3872 = vmatprep.subr.mxu0 0.0
    %3873 = vmatpush1.msra.mxu0 0.0
    %3874 = vmatprep.subr.mxu0 0.0
    %3875 = vmatpush1.msra.mxu0 0.0
    %3876 = vmatprep.subr.mxu0 0.0
    %3877 = vmatpush1.msra.mxu0 0.0
    %3878 = vmatprep.subr.mxu0 0.0
    %3879 = vmatpush1.msra.mxu0 0.0
    %3880 = vmatprep.subr.mxu0 0.0
    %3881 = vmatpush1.msra.mxu0 0.0
    %3882 = vmatprep.subr.mxu0 0.0
    %3883 = vmatpush1.msra.mxu0 0.0
    %3884 = vmatprep.mubr.f32.mxu0 0.0
    %3885 = vmatmul.mubr.f32.gmra.mrb[0].mxu0 %v3815
    %v3886 = vpop.f32.mrb[0].mxu0
    %v3887 = vadd.f32 0.0, %v3886
    %v3888 = vpop.f32.mrb[0].mxu0
    %v3889 = vadd.f32 0.0, %v3888
    %3890 = vdwg.mxu0
    %3891 = vmatprep.subr.mxu0 %v2715
    %3892 = vmatpush1.msra.mxu0 %v2714
    %3893 = vmatprep.subr.mxu0 %v2719
    %3894 = vmatpush1.msra.mxu0 %v2718
    %3895 = vmatprep.subr.mxu0 %v2723
    %3896 = vmatpush1.msra.mxu0 %v2722
    %3897 = vmatprep.subr.mxu0 %v2727
    %3898 = vmatpush1.msra.mxu0 %v2726
    %3899 = vmatprep.subr.mxu0 %v2731
    %3900 = vmatpush1.msra.mxu0 %v2730
    %3901 = vmatprep.subr.mxu0 %v2735
    %3902 = vmatpush1.msra.mxu0 %v2734
    %3903 = vmatprep.subr.mxu0 %v2739
    %3904 = vmatpush1.msra.mxu0 %v2738
    %3905 = vmatprep.subr.mxu0 %v2743
    %3906 = vmatpush1.msra.mxu0 %v2742
    %3907 = vmatprep.subr.mxu0 %v2747
    %3908 = vmatpush1.msra.mxu0 %v2746
    %3909 = vmatprep.subr.mxu0 %v2751
    %3910 = vmatpush1.msra.mxu0 %v2750
    %3911 = vmatprep.subr.mxu0 %v2755
    %3912 = vmatpush1.msra.mxu0 %v2754
    %3913 = vmatprep.subr.mxu0 %v2759
    %3914 = vmatpush1.msra.mxu0 %v2758
    %3915 = vmatprep.subr.mxu0 %v2763
    %3916 = vmatpush1.msra.mxu0 %v2762
    %3917 = vmatprep.subr.mxu0 %v2767
    %3918 = vmatpush1.msra.mxu0 %v2766
    %3919 = vmatprep.subr.mxu0 %v2771
    %3920 = vmatpush1.msra.mxu0 %v2770
    %3921 = vmatprep.subr.mxu0 %v2775
    %3922 = vmatpush1.msra.mxu0 %v2774
    %3923 = vmatprep.subr.mxu0 0.0
    %3924 = vmatpush1.msra.mxu0 0.0
    %3925 = vmatprep.subr.mxu0 0.0
    %3926 = vmatpush1.msra.mxu0 0.0
    %3927 = vmatprep.subr.mxu0 0.0
    %3928 = vmatpush1.msra.mxu0 0.0
    %3929 = vmatprep.subr.mxu0 0.0
    %3930 = vmatpush1.msra.mxu0 0.0
    %3931 = vmatprep.subr.mxu0 0.0
    %3932 = vmatpush1.msra.mxu0 0.0
    %3933 = vmatprep.subr.mxu0 0.0
    %3934 = vmatpush1.msra.mxu0 0.0
    %3935 = vmatprep.subr.mxu0 0.0
    %3936 = vmatpush1.msra.mxu0 0.0
    %3937 = vmatprep.subr.mxu0 0.0
    %3938 = vmatpush1.msra.mxu0 0.0
    %3939 = vmatprep.subr.mxu0 0.0
    %3940 = vmatpush1.msra.mxu0 0.0
    %3941 = vmatprep.subr.mxu0 0.0
    %3942 = vmatpush1.msra.mxu0 0.0
    %3943 = vmatprep.subr.mxu0 0.0
    %3944 = vmatpush1.msra.mxu0 0.0
    %3945 = vmatprep.subr.mxu0 0.0
    %3946 = vmatpush1.msra.mxu0 0.0
    %3947 = vmatprep.subr.mxu0 0.0
    %3948 = vmatpush1.msra.mxu0 0.0
    %3949 = vmatprep.subr.mxu0 0.0
    %3950 = vmatpush1.msra.mxu0 0.0
    %3951 = vmatprep.subr.mxu0 0.0
    %3952 = vmatpush1.msra.mxu0 0.0
    %3953 = vmatprep.subr.mxu0 0.0
    %3954 = vmatpush1.msra.mxu0 0.0
    %3955 = vmatprep.mubr.f32.mxu0 0.0
    %3956 = vmatmul.mubr.f32.gmra.mrb[0].mxu0 %v3815
    %v3957 = vpop.f32.mrb[0].mxu0
    %v3958 = vadd.f32 0.0, %v3957
    %v3959 = vpop.f32.mrb[0].mxu0
    %v3960 = vadd.f32 0.0, %v3959
    %3961 = vdwg.mxu0
    %v3962 = vadd.f32 %v3816, %v3887
    %v3963 = vadd.f32 %v3817, %v3889
    %v3964 = vadd.f32 %v3818, %v3958
    %v3965 = vadd.f32 %v3819, %v3960
    %v3966 = vxor.u32 %v3962, 2147483648
    %v3967 = vxor.u32 %v3963, 2147483648
    %v3968 = vxor.u32 %v3964, 2147483648
    %v3969 = vmul.f32 %v3966, 1.442695
    %v3970 = vpow.pop %v3969
    %v3971 = vmul.f32 %v3967, 1.442695
    %v3972 = vpow.pop %v3971
    %v3973 = vmul.f32 %v3968, 1.442695
    %v3974 = vpow.pop %v3973
    %v3975 = vadd.f32 %v3970, 1.0
    %v3976 = vadd.f32 %v3972, 1.0
    %v3977 = vadd.f32 %v3974, 1.0
    %v3978 = vrcp.pop %v3975
    %v3979 = vmul.f32 1.0, %v3978
    %v3980 = vrcp.pop %v3976
    %v3981 = vmul.f32 1.0, %v3980
    %v3982 = vrcp.pop %v3977
    %v3983 = vmul.f32 1.0, %v3982
    %v3984 = vtanh.pop %v3965
    %v3985 = vmul.f32 %v3981, %v3813
    %v3986 = vmul.f32 %v3979, %v3984
    %v3987 = vadd.f32 %v3985, %v3986
    %v3988 = vtanh.pop %v3987
    %v3989 = vmul.f32 %v3983, %v3988
    %v3990 = vld [vmem:[#allocation2 + $0xe0] sm:$0xff]
    %v3991 = vld [vmem:[#allocation2 + $0xe8] sm:$0xff]
    %v3992 = vld [vmem:[#allocation2 + $0xf0] sm:$0xff]
    %v3993 = vld [vmem:[#allocation2 + $0xf8] sm:$0xff]
    %3994 = vmatprep.subr.mxu0 %v2713
    %3995 = vmatpush1.msra.mxu0 %v2712
    %3996 = vmatprep.subr.mxu0 %v2717
    %3997 = vmatpush1.msra.mxu0 %v2716
    %3998 = vmatprep.subr.mxu0 %v2721
    %3999 = vmatpush1.msra.mxu0 %v2720
    %4000 = vmatprep.subr.mxu0 %v2725
    %4001 = vmatpush1.msra.mxu0 %v2724
    %4002 = vmatprep.subr.mxu0 %v2729
    %4003 = vmatpush1.msra.mxu0 %v2728
    %4004 = vmatprep.subr.mxu0 %v2733
    %4005 = vmatpush1.msra.mxu0 %v2732
    %4006 = vmatprep.subr.mxu0 %v2737
    %4007 = vmatpush1.msra.mxu0 %v2736
    %4008 = vmatprep.subr.mxu0 %v2741
    %4009 = vmatpush1.msra.mxu0 %v2740
    %4010 = vmatprep.subr.mxu0 %v2745
    %4011 = vmatpush1.msra.mxu0 %v2744
    %4012 = vmatprep.subr.mxu0 %v2749
    %4013 = vmatpush1.msra.mxu0 %v2748
    %4014 = vmatprep.subr.mxu0 %v2753
    %4015 = vmatpush1.msra.mxu0 %v2752
    %4016 = vmatprep.subr.mxu0 %v2757
    %4017 = vmatpush1.msra.mxu0 %v2756
    %4018 = vmatprep.subr.mxu0 %v2761
    %4019 = vmatpush1.msra.mxu0 %v2760
    %4020 = vmatprep.subr.mxu0 %v2765
    %4021 = vmatpush1.msra.mxu0 %v2764
    %4022 = vmatprep.subr.mxu0 %v2769
    %4023 = vmatpush1.msra.mxu0 %v2768
    %4024 = vmatprep.subr.mxu0 %v2773
    %4025 = vmatpush1.msra.mxu0 %v2772
    %4026 = vmatprep.subr.mxu0 0.0
    %4027 = vmatpush1.msra.mxu0 0.0
    %4028 = vmatprep.subr.mxu0 0.0
    %4029 = vmatpush1.msra.mxu0 0.0
    %4030 = vmatprep.subr.mxu0 0.0
    %4031 = vmatpush1.msra.mxu0 0.0
    %4032 = vmatprep.subr.mxu0 0.0
    %4033 = vmatpush1.msra.mxu0 0.0
    %4034 = vmatprep.subr.mxu0 0.0
    %4035 = vmatpush1.msra.mxu0 0.0
    %4036 = vmatprep.subr.mxu0 0.0
    %4037 = vmatpush1.msra.mxu0 0.0
    %4038 = vmatprep.subr.mxu0 0.0
    %4039 = vmatpush1.msra.mxu0 0.0
    %4040 = vmatprep.subr.mxu0 0.0
    %4041 = vmatpush1.msra.mxu0 0.0
    %4042 = vmatprep.subr.mxu0 0.0
    %4043 = vmatpush1.msra.mxu0 0.0
    %4044 = vmatprep.subr.mxu0 0.0
    %4045 = vmatpush1.msra.mxu0 0.0
    %4046 = vmatprep.subr.mxu0 0.0
    %4047 = vmatpush1.msra.mxu0 0.0
    %4048 = vmatprep.subr.mxu0 0.0
    %4049 = vmatpush1.msra.mxu0 0.0
    %4050 = vmatprep.subr.mxu0 0.0
    %4051 = vmatpush1.msra.mxu0 0.0
    %4052 = vmatprep.subr.mxu0 0.0
    %4053 = vmatpush1.msra.mxu0 0.0
    %4054 = vmatprep.subr.mxu0 0.0
    %4055 = vmatpush1.msra.mxu0 0.0
    %4056 = vmatprep.subr.mxu0 0.0
    %4057 = vmatpush1.msra.mxu0 0.0
    %4058 = vmatprep.mubr.f32.mxu0 0.0
    %4059 = vmatmul.mubr.f32.gmra.mrb[0].mxu0 %v3989
    %v4060 = vpop.f32.mrb[0].mxu0
    %v4061 = vadd.f32 0.0, %v4060
    %v4062 = vpop.f32.mrb[0].mxu0
    %v4063 = vadd.f32 0.0, %v4062
    %4064 = vdwg.mxu0
    %4065 = vmatprep.subr.mxu0 %v2715
    %4066 = vmatpush1.msra.mxu0 %v2714
    %4067 = vmatprep.subr.mxu0 %v2719
    %4068 = vmatpush1.msra.mxu0 %v2718
    %4069 = vmatprep.subr.mxu0 %v2723
    %4070 = vmatpush1.msra.mxu0 %v2722
    %4071 = vmatprep.subr.mxu0 %v2727
    %4072 = vmatpush1.msra.mxu0 %v2726
    %4073 = vmatprep.subr.mxu0 %v2731
    %4074 = vmatpush1.msra.mxu0 %v2730
    %4075 = vmatprep.subr.mxu0 %v2735
    %4076 = vmatpush1.msra.mxu0 %v2734
    %4077 = vmatprep.subr.mxu0 %v2739
    %4078 = vmatpush1.msra.mxu0 %v2738
    %4079 = vmatprep.subr.mxu0 %v2743
    %4080 = vmatpush1.msra.mxu0 %v2742
    %4081 = vmatprep.subr.mxu0 %v2747
    %4082 = vmatpush1.msra.mxu0 %v2746
    %4083 = vmatprep.subr.mxu0 %v2751
    %4084 = vmatpush1.msra.mxu0 %v2750
    %4085 = vmatprep.subr.mxu0 %v2755
    %4086 = vmatpush1.msra.mxu0 %v2754
    %4087 = vmatprep.subr.mxu0 %v2759
    %4088 = vmatpush1.msra.mxu0 %v2758
    %4089 = vmatprep.subr.mxu0 %v2763
    %4090 = vmatpush1.msra.mxu0 %v2762
    %4091 = vmatprep.subr.mxu0 %v2767
    %4092 = vmatpush1.msra.mxu0 %v2766
    %4093 = vmatprep.subr.mxu0 %v2771
    %4094 = vmatpush1.msra.mxu0 %v2770
    %4095 = vmatprep.subr.mxu0 %v2775
    %4096 = vmatpush1.msra.mxu0 %v2774
    %4097 = vmatprep.subr.mxu0 0.0
    %4098 = vmatpush1.msra.mxu0 0.0
    %4099 = vmatprep.subr.mxu0 0.0
    %4100 = vmatpush1.msra.mxu0 0.0
    %4101 = vmatprep.subr.mxu0 0.0
    %4102 = vmatpush1.msra.mxu0 0.0
    %4103 = vmatprep.subr.mxu0 0.0
    %4104 = vmatpush1.msra.mxu0 0.0
    %4105 = vmatprep.subr.mxu0 0.0
    %4106 = vmatpush1.msra.mxu0 0.0
    %4107 = vmatprep.subr.mxu0 0.0
    %4108 = vmatpush1.msra.mxu0 0.0
    %4109 = vmatprep.subr.mxu0 0.0
    %4110 = vmatpush1.msra.mxu0 0.0
    %4111 = vmatprep.subr.mxu0 0.0
    %4112 = vmatpush1.msra.mxu0 0.0
    %4113 = vmatprep.subr.mxu0 0.0
    %4114 = vmatpush1.msra.mxu0 0.0
    %4115 = vmatprep.subr.mxu0 0.0
    %4116 = vmatpush1.msra.mxu0 0.0
    %4117 = vmatprep.subr.mxu0 0.0
    %4118 = vmatpush1.msra.mxu0 0.0
    %4119 = vmatprep.subr.mxu0 0.0
    %4120 = vmatpush1.msra.mxu0 0.0
    %4121 = vmatprep.subr.mxu0 0.0
    %4122 = vmatpush1.msra.mxu0 0.0
    %4123 = vmatprep.subr.mxu0 0.0
    %4124 = vmatpush1.msra.mxu0 0.0
    %4125 = vmatprep.subr.mxu0 0.0
    %4126 = vmatpush1.msra.mxu0 0.0
    %4127 = vmatprep.subr.mxu0 0.0
    %4128 = vmatpush1.msra.mxu0 0.0
    %4129 = vmatprep.mubr.f32.mxu0 0.0
    %4130 = vmatmul.mubr.f32.gmra.mrb[0].mxu0 %v3989
    %v4131 = vpop.f32.mrb[0].mxu0
    %v4132 = vadd.f32 0.0, %v4131
    %v4133 = vpop.f32.mrb[0].mxu0
    %v4134 = vadd.f32 0.0, %v4133
    %4135 = vdwg.mxu0
    %v4136 = vadd.f32 %v3990, %v4061
    %v4137 = vadd.f32 %v3991, %v4063
    %v4138 = vadd.f32 %v3992, %v4132
    %v4139 = vadd.f32 %v3993, %v4134
    %v4140 = vxor.u32 %v4136, 2147483648
    %v4141 = vxor.u32 %v4137, 2147483648
    %v4142 = vxor.u32 %v4138, 2147483648
    %v4143 = vmul.f32 %v4140, 1.442695
    %v4144 = vpow.pop %v4143
    %v4145 = vmul.f32 %v4141, 1.442695
    %v4146 = vpow.pop %v4145
    %v4147 = vmul.f32 %v4142, 1.442695
    %v4148 = vpow.pop %v4147
    %v4149 = vadd.f32 %v4144, 1.0
    %v4150 = vadd.f32 %v4146, 1.0
    %v4151 = vadd.f32 %v4148, 1.0
    %v4152 = vrcp.pop %v4149
    %v4153 = vmul.f32 1.0, %v4152
    %v4154 = vrcp.pop %v4150
    %v4155 = vmul.f32 1.0, %v4154
    %v4156 = vrcp.pop %v4151
    %v4157 = vmul.f32 1.0, %v4156
    %v4158 = vtanh.pop %v4139
    %v4159 = vmul.f32 %v4155, %v3987
    %v4160 = vmul.f32 %v4153, %v4158
    %v4161 = vadd.f32 %v4159, %v4160
    %v4162 = vtanh.pop %v4161
    %v4163 = vmul.f32 %v4157, %v4162
    %s4164 = scalar_lea.vmem [#allocation16], 8
    %4165 = vst [vmem:[%s4164] sm:$0xff] %v4163
    %s4166 = scalar_lea.vmem [#allocation17], 8
    %4167 = vst [vmem:[%s4166] sm:$0xff] %v4161
    // Predicated region
    $region58: #{tpu_custom_call.1} parent=1 // pred_check
      _
    $region59: #{tpu_custom_call.1} parent=1 // pred_check_branch
      %4169 = sbr.rel (0) target = $region61
    $region60: #{tpu_custom_call.1} parent=1 // pred_region
      %s4171 = ssub.s32 256, 256
      %4172 = vsyncadd [#allocation6], %s4171
      %s4173 = sshll.u32 [#allocation16], 4
      %s4174 = int_to_ptr.vmem [resolvable:$true] %s4173
      %4179 = dma.vmem_to_hbm [thread:$0]  %s4174, 256, %s7, [#allocation6], 128, 128, 8
    $region61: #{tpu_custom_call.1} parent=1 // pred_fallthru
      _
    // Predicated region
    $region62: #{tpu_custom_call.1} parent=1 // pred_check
      _
    $region63: #{tpu_custom_call.1} parent=1 // pred_check_branch
      %4181 = sbr.rel (0) target = $region65
    $region64: #{tpu_custom_call.1} parent=1 // pred_region
      %s4183 = ssub.s32 256, 256
      %4184 = vsyncadd [#allocation18], %s4183
      %s4185 = sshll.u32 [#allocation17], 4
      %s4186 = int_to_ptr.vmem [resolvable:$true] %s4185
      %4191 = dma.vmem_to_hbm [thread:$0]  %s4186, 256, %s8, [#allocation18], 128, 128, 8
    $region65: #{tpu_custom_call.1} parent=1 // pred_fallthru
      _
    // Predicated region
    $region66: #{tpu_custom_call.1} parent=1 // pred_check
      _
    $region67: #{tpu_custom_call.1} parent=1 // pred_check_branch
      %4193 = sbr.rel (0) target = $region69
    $region68: #{tpu_custom_call.1} parent=1 // pred_region
      %4194 = dma.done [#allocation6], 256
    $region69: #{tpu_custom_call.1} parent=1 // pred_fallthru
      _
    // Predicated region
    $region70: #{tpu_custom_call.1} parent=1 // pred_check
      _
    $region71: #{tpu_custom_call.1} parent=1 // pred_check_branch
      %4196 = sbr.rel (0) target = $region73
    $region72: #{tpu_custom_call.1} parent=1 // pred_region
      %4197 = dma.done [#allocation18], 256
    $region73: #{tpu_custom_call.1} parent=1 // pred_fallthru
      _
    %4198 = vsyncpa [#allocation5], 1
    %4199 = vsyncpa [#allocation8], 1
    %4200 = vsyncpa [#allocation11], 1
    %4201 = vsyncpa [#allocation14], 1
    %4202 = vsyncpa [#allocation6], 1
    %4203 = vsyncpa [#allocation18], 1

</llo_original>
